<compile_context>
chip_gen: v6e
topology: v6e:2x2x1
jax: 0.10.0
libtpu: 0.0.40
codegen_flags: <defaults>
</compile_context>

<pallas_src>
import functools

import jax
import jax.numpy as jnp
from jax import lax
from jax.experimental import pallas as pl
from jax.experimental.pallas import tpu as pltpu

_LANE = 128
_SUBLANE = 8


def _round_up(a, b):
    return ((a + b - 1) // b) * b


def _cdiv(a, b):
    return (a + b - 1) // b


def _pick_col_tile(dim_pad, cap=512):
    """Largest multiple of 128 that divides dim_pad and is <= cap."""
    td = max(_LANE, (min(dim_pad, cap) // _LANE) * _LANE)
    while dim_pad % td != 0:
        td -= _LANE
    return td


def _pick_row_tile(n_rows, per_row_bytes, budget_bytes, cap=2048):
    """Largest row tile (multiple of 8) whose buffers fit the VMEM budget."""
    tn = cap
    while tn > _SUBLANE and tn * per_row_bytes > budget_bytes:
        tn //= 2
    return max(_SUBLANE, min(tn, _round_up(n_rows, _SUBLANE)))


def _vmem_limit_bytes():
    # 128 MiB parts (v5e / v6e) -> ~96 MiB; 64 MiB parts (v7x) -> ~48 MiB.
    try:
        cap = int(pltpu.get_tpu_info().vmem_capacity_bytes)
    except Exception:  # unknown part / interpreter: stay conservative
        cap = 64 * 1024 * 1024
    return min(cap * 3 // 4, 100 * 1024 * 1024)


# ----------------------------------------------------------------------------
# Kernel 1: covariance (Gram matrix of the centered data)
# ----------------------------------------------------------------------------
def _cov_body(n_idx, mean_i_ref, mean_j_ref, xi_ref, xj_ref, cov_ref, *,
              block_rows, total_rows, mask_rows, mxu_dtype):
    """cov_block += (Xi - mu_i)^T @ (Xj - mu_j), accumulated in f32."""
    @pl.when(n_idx == 0)
    def _():
        cov_ref[...] = jnp.zeros_like(cov_ref)

    shared = xi_ref is xj_ref
    # Centering stays f32 on the VPU (v5e has no bf16 VALU; only the cast below
    # touches bf16).
    xci = xi_ref[...] - mean_i_ref[...]
    xcj = xci if shared else xj_ref[...] - mean_j_ref[...]

    if mask_rows:
        # The last row tile reads past the end of x (unspecified values); zero
        # those rows so they contribute nothing to the covariance.
        rows = lax.broadcasted_iota(jnp.int32, xci.shape, 0) + n_idx * block_rows
        keep = rows < total_rows
        xci = jnp.where(keep, xci, 0.0)
        xcj = xci if shared else jnp.where(keep, xcj, 0.0)

    lhs = xci.astype(mxu_dtype)
    rhs = lhs if shared else xcj.astype(mxu_dtype)
    # Contract over the row (sample) axis of both operands so the MXU is fed
    # without an explicit XLU transpose of the (rows, feat) tiles.
    cov_ref[...] += lax.dot_general(
        lhs, rhs,
        dimension_numbers=(((0,), (0,)), ((), ())),
        preferred_element_type=jnp.float32,
    )


def _make_cov_kernel(*, tiled, row_axis, block_rows, total_rows, mask_rows,
                     mxu_dtype):
    if tiled:
        def kernel(mean_i_ref, mean_j_ref, xi_ref, xj_ref, cov_ref):
            _cov_body(pl.program_id(row_axis), mean_i_ref, mean_j_ref,
                      xi_ref, xj_ref, cov_ref,
                      block_rows=block_rows, total_rows=total_rows,
                      mask_rows=mask_rows, mxu_dtype=mxu_dtype)
    else:
        def kernel(mean_ref, x_ref, cov_ref):
            _cov_body(pl.program_id(row_axis), mean_ref, mean_ref,
                      x_ref, x_ref, cov_ref,
                      block_rows=block_rows, total_rows=total_rows,
                      mask_rows=mask_rows, mxu_dtype=mxu_dtype)
    return kernel


# ----------------------------------------------------------------------------
# Kernel 2: projection (centering folded into a tiny (1, k) row)
# ----------------------------------------------------------------------------
def _project_kernel(x_ref, v_ref, mv_ref, out_ref, *, mxu_dtype):
    """out = X @ Vk - mu @ Vk  ==  (X - mu) @ Vk, f32 accumulate/output."""
    out_ref[...] = (
        jnp.dot(x_ref[...].astype(mxu_dtype), v_ref[...].astype(mxu_dtype),
                preferred_element_type=jnp.float32)
        - mv_ref[...]
    )


# ----------------------------------------------------------------------------
# Wrapper
# ----------------------------------------------------------------------------
@functools.partial(jax.jit, static_argnums=(1,),
                   static_argnames=("mxu_dtype", "row_tile", "col_tile"))
def pca_forward(x, n_components, *, mxu_dtype=jnp.bfloat16,
                row_tile=None, col_tile=None):
    """PCA linear projection from (N, din) to (N, n_components)."""
    x = x.astype(jnp.float32)
    N, din = x.shape
    itemsize = 4

    vmem_limit = _vmem_limit_bytes()
    budget = int(vmem_limit * 0.8)

    # ----- lane-dense feature padding (exact: zero columns, sliced off) ------
    din_pad = _round_up(din, _LANE)
    mean = jnp.mean(x, axis=0, keepdims=True)                 # (1, din), f32
    if din_pad != din:
        x = jnp.pad(x, ((0, 0), (0, din_pad - din)))
        mean = jnp.pad(mean, ((0, 0), (0, din_pad - din)))

    # ----- Kernel 1: covariance ----------------------------------------------
    td = col_tile if col_tile is not None else _pick_col_tile(din_pad)
    assert din_pad % td == 0 and td % _LANE == 0
    nd = din_pad // td
    tiled = nd > 1                        # din-tiled output (large din / v7x)

    n_operands = 2 if tiled else 1
    acc_bytes = 2 * td * td * itemsize
    per_row = 2 * n_operands * td * itemsize        # double-buffered x tiles
    if row_tile is not None:
        tn = row_tile
    else:
        tn = _pick_row_tile(N, per_row, max(budget - acc_bytes, per_row * _SUBLANE))
    assert tn % _SUBLANE == 0
    n_row_tiles = _cdiv(N, tn)
    mask_rows = (N % tn) != 0
    n_ceil = n_row_tiles * tn

    cov_kernel = _make_cov_kernel(
        tiled=tiled, row_axis=2 if tiled else 0, block_rows=tn, total_rows=N,
        mask_rows=mask_rows, mxu_dtype=mxu_dtype)

    if tiled:
        grid = (nd, nd, n_row_tiles)                 # reduction axis last
        in_specs = [
            pl.BlockSpec((1, td), lambda i, j, n: (0, i)),
            pl.BlockSpec((1, td), lambda i, j, n: (0, j)),
            pl.BlockSpec((tn, td), lambda i, j, n: (n, i)),
            pl.BlockSpec((tn, td), lambda i, j, n: (n, j)),
        ]
        out_specs = pl.BlockSpec((td, td), lambda i, j, n: (i, j))
        dims = ("parallel", "parallel", "arbitrary")
        operands = (mean, mean, x, x)
        cov_bytes = (2 * nd * n_ceil * din_pad + din_pad * din_pad
                     + 2 * nd * din_pad) * itemsize
    else:
        grid = (n_row_tiles,)
        in_specs = [
            pl.BlockSpec((1, din_pad), lambda n: (0, 0)),
            pl.BlockSpec((tn, din_pad), lambda n: (n, 0)),
        ]
        out_specs = pl.BlockSpec((din_pad, din_pad), lambda n: (0, 0))
        dims = ("arbitrary",)
        operands = (mean, x)
        cov_bytes = (n_ceil * din_pad + din_pad * din_pad + din_pad) * itemsize

    cov = pl.pallas_call(
        cov_kernel,
        out_shape=jax.ShapeDtypeStruct((din_pad, din_pad), jnp.float32),
        grid=grid,
        in_specs=in_specs,
        out_specs=out_specs,
        compiler_params=pltpu.CompilerParams(
            dimension_semantics=dims, vmem_limit_bytes=vmem_limit),
        cost_estimate=pl.CostEstimate(
            flops=int(2 * n_ceil * din_pad * din_pad),
            transcendentals=0,
            bytes_accessed=int(cov_bytes)),
    )(*operands)

    if din_pad != din:
        cov = cov[:din, :din]            # padded columns contribute exact zeros

    # ----- eigendecomposition -------------------------------------------------
    # TODO(synk): torch.linalg.eigh has no Pallas equivalent; plain JAX/XLA.
    eigen_values, eigen_vectors = jnp.linalg.eigh(cov)
    order = jnp.argsort(-eigen_values)                        # descending
    vk = eigen_vectors[:, order][:, :n_components].astype(jnp.float32)

    # ----- Kernel 2: projection ------------------------------------------------
    k_pad = _round_up(n_components, _LANE)                    # lane-dense stores
    tk = _pick_col_tile(k_pad)
    nk = k_pad // tk
    v_padded = jnp.zeros((din_pad, k_pad), jnp.float32)
    v_padded = v_padded.at[:din, :n_components].set(vk)
    mean_v = mean @ v_padded                                  # (1, k_pad), f32

    v_bytes = 2 * din_pad * tk * itemsize
    per_row_p = 2 * (din_pad + tk) * itemsize
    if row_tile is not None:
        tn_p = row_tile
    else:
        tn_p = _pick_row_tile(N, per_row_p, max(budget - v_bytes, per_row_p * _SUBLANE))
    assert tn_p % _SUBLANE == 0
    n_row_tiles_p = _cdiv(N, tn_p)
    n_out = n_row_tiles_p * tn_p          # whole tiles: tail rows written, sliced

    out_padded = pl.pallas_call(
        functools.partial(_project_kernel, mxu_dtype=mxu_dtype),
        out_shape=jax.ShapeDtypeStruct((n_out, k_pad), jnp.float32),
        grid=(n_row_tiles_p, nk),
        in_specs=[
            pl.BlockSpec((tn_p, din_pad), lambda i, k: (i, 0)),
            pl.BlockSpec((din_pad, tk), lambda i, k: (0, k)),
            pl.BlockSpec((1, tk), lambda i, k: (0, k)),
        ],
        out_specs=pl.BlockSpec((tn_p, tk), lambda i, k: (i, k)),
        compiler_params=pltpu.CompilerParams(
            dimension_semantics=("parallel", "parallel"),
            vmem_limit_bytes=vmem_limit),
        cost_estimate=pl.CostEstimate(
            flops=int(2 * n_out * din_pad * k_pad),
            transcendentals=0,
            bytes_accessed=int((n_out * din_pad
                                + n_row_tiles_p * din_pad * k_pad
                                + k_pad + n_out * k_pad) * itemsize)),
    )(x, v_padded, mean_v)

    return out_padded[:N, :n_components]


# ----------------------------------------------------------------------------
# Self-test
# ----------------------------------------------------------------------------
def _align_column_signs(a, ref):
    """Flip column signs of `a` to match `ref` (eigenvector sign is arbitrary)."""
    idx = jnp.argmax(jnp.abs(ref), axis=0)
    cols = jnp.arange(ref.shape[1])
    signs = jnp.sign(a[idx, cols]) * jnp.sign(ref[idx, cols])
    return a * signs


def _pca_ref(x, k, mxu_dtype):
    """Plain-JAX reference mirroring the kernel's MXU-input rounding."""
    x = x.astype(jnp.float32)
    mean = jnp.mean(x, axis=0, keepdims=True)
    xc = x - mean
    xc_m = xc.astype(mxu_dtype).astype(jnp.float32)
    cov = xc_m.T @ xc_m
    w, v = jnp.linalg.eigh(cov)
    vk = v[:, jnp.argsort(-w)][:, :k]
    x_m = x.astype(mxu_dtype).astype(jnp.float32)
    vk_m = vk.astype(mxu_dtype).astype(jnp.float32)
    return x_m @ vk_m - mean @ vk


if __name__ == "__main__":
    key = jax.random.PRNGKey(0)
    k1, k2 = jax.random.split(key)
    n_components = 8

    # Test 1: exact-f32 MXU feed with forced small tiles, exercising the
    # din-tiled covariance grid (2x2 feature tiles), multi-row-tile
    # accumulation, in-kernel tail masking (50 % 16 != 0) and feature padding
    # (200 -> 256 lanes).  Checked tightly against the plain-f32 reference.
    N1, d1 = 50, 200
    x1 = jax.random.normal(k1, (N1, d1), dtype=jnp.float32)
    out1 = pca_forward(x1, n_components, mxu_dtype=jnp.float32,
                       row_tile=16, col_tile=128)
    jax.block_until_ready(out1)
    assert out1.shape == (N1, n_components) and out1.dtype == jnp.float32
    ref1 = _pca_ref(x1, n_components, jnp.float32)
    assert jnp.allclose(_align_column_signs(out1, ref1), ref1,
                        atol=2e-3, rtol=2e-3)

    # Test 2: default fast path (bf16 MXU feed, f32 accumulation, auto tiles,
    # single-block resident covariance), checked against a reference that
    # applies the same bf16 rounding at the matmul boundaries.
    N2, d2 = 50, 40
    x2 = jax.random.normal(k2, (N2, d2), dtype=jnp.float32)
    out2 = pca_forward(x2, n_components)
    jax.block_until_ready(out2)
    assert out2.shape == (N2, n_components) and out2.dtype == jnp.float32
    ref2 = _pca_ref(x2, n_components, jnp.bfloat16)
    assert jnp.allclose(_align_column_signs(out2, ref2), ref2,
                        atol=2e-2, rtol=2e-2)

    print("KERNEL_OK")
</pallas_src>

<mosaic_0001>
module attributes {stable_mosaic.version = 11 : i64} {
  func.func @kernel(%arg0: i32, %arg1: i32, %arg2: i32, %arg3: memref<1x128xf32, #tpu.memory_space<vmem>>, %arg4: memref<1x128xf32, #tpu.memory_space<vmem>>, %arg5: memref<16x128xf32, #tpu.memory_space<vmem>>, %arg6: memref<16x128xf32, #tpu.memory_space<vmem>>, %arg7: memref<128x128xf32, #tpu.memory_space<vmem>>) attributes {dimension_semantics = [#tpu.dimension_semantics<parallel>, #tpu.dimension_semantics<parallel>, #tpu.dimension_semantics<arbitrary>], iteration_bounds = array<i64: 2, 2, 4>, scalar_prefetch = 0 : i64, scratch_operands = 0 : i64, tpu.core_type = #tpu.core_type<tc>, window_params = [{transform_indices = @transform_0, window_bounds = array<i64: 1, 128>}, {transform_indices = @transform_1, window_bounds = array<i64: 1, 128>}, {transform_indices = @transform_2, window_bounds = array<i64: 16, 128>}, {transform_indices = @transform_3, window_bounds = array<i64: 16, 128>}, {transform_indices = @transform_4, window_bounds = array<i64: 128, 128>}]} {
    %c0_i32 = arith.constant 0 : i32
    %0 = arith.cmpi eq, %arg2, %c0_i32 : i32
    %1 = arith.extui %0 : i1 to i32
    %c0_i32_0 = arith.constant 0 : i32
    %2 = arith.cmpi ne, %1, %c0_i32_0 : i32
    scf.if %2 {
      %cst_14 = arith.constant 0.000000e+00 : f32
      %25 = vector.broadcast %cst_14 : f32 to vector<128x128xf32>
      %c0_15 = arith.constant 0 : index
      %c0_16 = arith.constant 0 : index
      %26 = vector.load %arg7[%c0_15, %c0_16] : memref<128x128xf32, #tpu.memory_space<vmem>>, vector<128x128xf32>
      tpu.vector_store %arg7[%c0_15, %c0_16], %25 {strides = array<i32>} : memref<128x128xf32, #tpu.memory_space<vmem>>, vector<128x128xf32>,
    } else {
    }
    %c0 = arith.constant 0 : index
    %c0_1 = arith.constant 0 : index
    %3 = vector.load %arg5[%c0, %c0_1] : memref<16x128xf32, #tpu.memory_space<vmem>>, vector<16x128xf32>
    %c0_2 = arith.constant 0 : index
    %c0_3 = arith.constant 0 : index
    %4 = vector.load %arg3[%c0_2, %c0_3] : memref<1x128xf32, #tpu.memory_space<vmem>>, vector<1x128xf32>
    %5 = vector.broadcast %4 : vector<1x128xf32> to vector<16x128xf32>
    %6 = arith.subf %3, %5 : vector<16x128xf32>
    %c0_4 = arith.constant 0 : index
    %c0_5 = arith.constant 0 : index
    %7 = vector.load %arg6[%c0_4, %c0_5] : memref<16x128xf32, #tpu.memory_space<vmem>>, vector<16x128xf32>
    %c0_6 = arith.constant 0 : index
    %c0_7 = arith.constant 0 : index
    %8 = vector.load %arg4[%c0_6, %c0_7] : memref<1x128xf32, #tpu.memory_space<vmem>>, vector<1x128xf32>
    %9 = vector.broadcast %8 : vector<1x128xf32> to vector<16x128xf32>
    %10 = arith.subf %7, %9 : vector<16x128xf32>
    %11 = tpu.iota {dimensions = array<i32: 0>} : vector<16x128xi32>
    %c16_i32 = arith.constant 16 : i32
    %12 = arith.muli %arg2, %c16_i32 : i32
    %13 = vector.broadcast %12 : i32 to vector<16x128xi32>
    %14 = arith.addi %11, %13 : vector<16x128xi32>
    %c50_i32 = arith.constant 50 : i32
    %15 = vector.broadcast %c50_i32 : i32 to vector<16x128xi32>
    %16 = arith.cmpi slt, %14, %15 : vector<16x128xi32>
    %cst = arith.constant 0.000000e+00 : f32
    %17 = vector.broadcast %cst : f32 to vector<16x128xf32>
    %18 = arith.select %16, %6, %17 : vector<16x128xi1>, vector<16x128xf32>
    %cst_8 = arith.constant 0.000000e+00 : f32
    %19 = vector.broadcast %cst_8 : f32 to vector<16x128xf32>
    %20 = arith.select %16, %10, %19 : vector<16x128xi1>, vector<16x128xf32>
    %c0_9 = arith.constant 0 : index
    %c0_10 = arith.constant 0 : index
    %21 = vector.load %arg7[%c0_9, %c0_10] : memref<128x128xf32, #tpu.memory_space<vmem>>, vector<128x128xf32>
    %cst_11 = arith.constant dense<0.000000e+00> : vector<128x128xf32>
    %22 = tpu.matmul %18, %20, %cst_11 {dimension_numbers = #tpu.dot_dimension_numbers<[0], [0], [1], [1], [0, 1, 1, 1], [], []>} : vector<16x128xf32>, vector<16x128xf32>, vector<128x128xf32> -> vector<128x128xf32>
    %23 = arith.addf %21, %22 : vector<128x128xf32>
    %c0_12 = arith.constant 0 : index
    %c0_13 = arith.constant 0 : index
    %24 = vector.load %arg7[%c0_12, %c0_13] : memref<128x128xf32, #tpu.memory_space<vmem>>, vector<128x128xf32>
    tpu.vector_store %arg7[%c0_12, %c0_13], %23 {strides = array<i32>} : memref<128x128xf32, #tpu.memory_space<vmem>>, vector<128x128xf32>,
    return
  }
  func.func @transform_0(%arg0: i32, %arg1: i32, %arg2: i32) -> (i32, i32) {
    %c0_i32 = arith.constant 0 : i32
    %c0_i32_0 = arith.constant 0 : i32
    return %c0_i32, %arg0 : i32, i32
  }
  func.func @transform_1(%arg0: i32, %arg1: i32, %arg2: i32) -> (i32, i32) {
    %c0_i32 = arith.constant 0 : i32
    %c0_i32_0 = arith.constant 0 : i32
    return %c0_i32, %arg1 : i32, i32
  }
  func.func @transform_2(%arg0: i32, %arg1: i32, %arg2: i32) -> (i32, i32) {
    %c0_i32 = arith.constant 0 : i32
    return %arg2, %arg0 : i32, i32
  }
  func.func @transform_3(%arg0: i32, %arg1: i32, %arg2: i32) -> (i32, i32) {
    %c0_i32 = arith.constant 0 : i32
    return %arg2, %arg1 : i32, i32
  }
  func.func @transform_4(%arg0: i32, %arg1: i32, %arg2: i32) -> (i32, i32) {
    %c0_i32 = arith.constant 0 : i32
    return %arg0, %arg1 : i32, i32
  }
}

module attributes {stable_mosaic.version = 11 : i64} {
  func.func @_project_kernel(%arg0: i32, %arg1: i32, %arg2: memref<16x256xf32, #tpu.memory_space<vmem>>, %arg3: memref<256x128xf32, #tpu.memory_space<vmem>>, %arg4: memref<1x128xf32, #tpu.memory_space<vmem>>, %arg5: memref<16x128xf32, #tpu.memory_space<vmem>>) attributes {dimension_semantics = [#tpu.dimension_semantics<parallel>, #tpu.dimension_semantics<parallel>], iteration_bounds = array<i64: 4, 1>, scalar_prefetch = 0 : i64, scratch_operands = 0 : i64, tpu.core_type = #tpu.core_type<tc>, window_params = [{transform_indices = @transform_0, window_bounds = array<i64: 16, 256>}, {transform_indices = @transform_1, window_bounds = array<i64: 256, 128>}, {transform_indices = @transform_2, window_bounds = array<i64: 1, 128>}, {transform_indices = @transform_3, window_bounds = array<i64: 16, 128>}]} {
    %c0 = arith.constant 0 : index
    %c0_0 = arith.constant 0 : index
    %0 = vector.load %arg2[%c0, %c0_0] : memref<16x256xf32, #tpu.memory_space<vmem>>, vector<16x256xf32>
    %c0_1 = arith.constant 0 : index
    %c0_2 = arith.constant 0 : index
    %1 = vector.load %arg3[%c0_1, %c0_2] : memref<256x128xf32, #tpu.memory_space<vmem>>, vector<256x128xf32>
    %cst = arith.constant dense<0.000000e+00> : vector<16x128xf32>
    %2 = tpu.matmul %0, %1, %cst {dimension_numbers = #tpu.dot_dimension_numbers<[1], [0], [0], [1], [0, 0, 1, 1], [], []>} : vector<16x256xf32>, vector<256x128xf32>, vector<16x128xf32> -> vector<16x128xf32>
    %c0_3 = arith.constant 0 : index
    %c0_4 = arith.constant 0 : index
    %3 = vector.load %arg4[%c0_3, %c0_4] : memref<1x128xf32, #tpu.memory_space<vmem>>, vector<1x128xf32>
    %4 = vector.broadcast %3 : vector<1x128xf32> to vector<16x128xf32>
    %5 = arith.subf %2, %4 : vector<16x128xf32>
    %c0_5 = arith.constant 0 : index
    %c0_6 = arith.constant 0 : index
    %6 = vector.load %arg5[%c0_5, %c0_6] : memref<16x128xf32, #tpu.memory_space<vmem>>, vector<16x128xf32>
    tpu.vector_store %arg5[%c0_5, %c0_6], %5 {strides = array<i32>} : memref<16x128xf32, #tpu.memory_space<vmem>>, vector<16x128xf32>,
    return
  }
  func.func @transform_0(%arg0: i32, %arg1: i32) -> (i32, i32) {
    %c0_i32 = arith.constant 0 : i32
    %c0_i32_0 = arith.constant 0 : i32
    return %arg0, %c0_i32 : i32, i32
  }
  func.func @transform_1(%arg0: i32, %arg1: i32) -> (i32, i32) {
    %c0_i32 = arith.constant 0 : i32
    %c0_i32_0 = arith.constant 0 : i32
    return %c0_i32, %arg1 : i32, i32
  }
  func.func @transform_2(%arg0: i32, %arg1: i32) -> (i32, i32) {
    %c0_i32 = arith.constant 0 : i32
    %c0_i32_0 = arith.constant 0 : i32
    return %c0_i32, %arg1 : i32, i32
  }
  func.func @transform_3(%arg0: i32, %arg1: i32) -> (i32, i32) {
    %c0_i32 = arith.constant 0 : i32
    return %arg0, %arg1 : i32, i32
  }
}

</mosaic_0001>

<llo_original>
// kernel: custom-call.2
$region0: #{custom-call.2}
  %s0 = inlined_call_operand.vmem [shape: f32[100,100], index: 0, kind: input, shape index: {}]
  %s1 = inlined_call_operand.vmem [shape: f32[100,100], index: 1, kind: input, shape index: {}]
  %s2 = inlined_call_operand.vmem [shape: f32[100,100], index: 2, kind: input, shape index: {}]
  %s3 = inlined_call_operand.vmem [shape: f32[100,100], index: 3, kind: input, shape index: {}]
  %s4 = inlined_call_operand.vmem [shape: f32[100], index: 4, kind: output, shape index: {0}]
  %s5 = inlined_call_operand.vmem [shape: f32[100], index: 5, kind: output, shape index: {1}]
  %s6 = inlined_call_operand.vmem [shape: f32[100,100], index: 6, kind: output, shape index: {2}]
  %s7 = inlined_call_operand.vmem [shape: f32[100,100], index: 7, kind: output, shape index: {3}]
  %s8 = inlined_call_operand.vmem [shape: f32[100,100], index: 8, kind: output, shape index: {4}]
  %s9 = inlined_call_operand.vmem [shape: f32[100,100], index: 9, kind: output, shape index: {5}]
  %10 = xla_tuple %s4, %s5, %s6, %s7, %s8, %s9
  $region1: #{custom-call.2} parent=0
    #allocation0 [shape = 'u8[53248]{0}', space=vmem, size = 0xd000, scoped, tag = 'operand span for operand 0']
    #allocation1 [shape = 'u8[53248]{0}', space=vmem, size = 0xd000, scoped, tag = 'operand span for operand 1']
    #allocation2 [shape = 'u8[53248]{0}', space=vmem, size = 0xd000, scoped, tag = 'operand span for operand 2']
    #allocation3 [shape = 'u8[53248]{0}', space=vmem, size = 0xd000, scoped, tag = 'operand span for operand 3']
    #allocation4 [shape = 'u8[4096]{0}', space=vmem, size = 0x1000, scoped, tag = 'operand span for operand 4']
    #allocation5 [shape = 'u8[512]{0}', space=vmem, size = 0x400, scoped, tag = 'packed  for operand 4']
    #allocation6 [shape = 'u8[4096]{0}', space=vmem, size = 0x1000, scoped, tag = 'operand span for operand 5']
    #allocation7 [shape = 'u8[512]{0}', space=vmem, size = 0x400, scoped, tag = 'packed  for operand 5']
    #allocation8 [shape = 'u8[53248]{0}', space=vmem, size = 0xd000, scoped, tag = 'operand span for operand 6']
    #allocation9 [shape = 'u8[53248]{0}', space=vmem, size = 0xd000, scoped, tag = 'operand span for operand 7']
    #allocation10 [shape = 'u8[53248]{0}', space=vmem, size = 0xd000, scoped, tag = 'operand span for operand 8']
    #allocation11 [shape = 'u8[53248]{0}', space=vmem, size = 0xd000, scoped, tag = 'operand span for operand 9']
    #allocation12 [shape = 'f32[100,100]{1,0}', space=vmem, size = 0xd000, scoped, tag = 'a top-left matrix']
    #allocation13 [shape = 'f32[100,100]{1,0}', space=vmem, size = 0xd000, scoped, tag = 'a top-right matrix']
    #allocation14 [shape = 'f32[100,100]{1,0}', space=vmem, size = 0xd000, scoped, tag = 'a bottom-left matrix']
    #allocation15 [shape = 'f32[100,100]{1,0}', space=vmem, size = 0xd000, scoped, tag = 'a bottom-right matrix']
    %p12 = scmp.gt.s32.totalorder 104, 0
    // Predicated region
    $region2: #{custom-call.2} parent=1 // pred_check
      %p13 = pneg %p12
    $region3: #{custom-call.2} parent=1 // pred_check_branch
      %15 = sbr.rel (%p13) target = $region5
    $region4: #{custom-call.2} parent=1 // pred_region
      %s16 = sshra.s32 104, 3
      %p17 = scmp.gt.s32.totalorder %s16, 0
      // Predicated region
      $region6: #{custom-call.2} parent=4 // pred_check
        %p18 = pneg %p17
      $region7: #{custom-call.2} parent=4 // pred_check_branch
        %20 = sbr.rel (%p18) target = $region9
      $region8: #{custom-call.2} parent=4 // pred_region
        %s21 = ssub.s32 %s16, 1
        %s22 = smul.u32 %s21, 128
        %s23 = sshra.s32 %s22, 4
        %s24 = scalar_lea.vmem %s0, %s23
        %v25 = vld [vmem:[%s0] sm:$0xff]
        // While loop
        $region10: #{custom-call.2} parent=8 // loop_pre_header
          _
        $region11: #{custom-call.2} parent=8 // loop_header
          %s26 = sphi %s0, %s48
          %s27 = sphi [#allocation0], %s49
          %v28 = vphi %v25, %v50
          %s29 = ssub.s32 %s24, 64
          %p30 = scmp.gt.s32.totalorder %s26, %s29
        $region12: #{custom-call.2} parent=8 // loop_header_branch
          %32 = sbr.rel (%p30) target = $region16
        $region13: #{custom-call.2} parent=8 // loop_body
          %33 = vst [vmem:[%s27] sm:$0xff] %v28
          %v34 = vld [vmem:[%s26 + $0x8] sm:$0xff]
          %35 = vst [vmem:[%s27 + $0x8] sm:$0xff] %v34
          %v36 = vld [vmem:[%s26 + $0x10] sm:$0xff]
          %37 = vst [vmem:[%s27 + $0x10] sm:$0xff] %v36
          %v38 = vld [vmem:[%s26 + $0x18] sm:$0xff]
          %39 = vst [vmem:[%s27 + $0x18] sm:$0xff] %v38
          %v40 = vld [vmem:[%s26 + $0x20] sm:$0xff]
          %41 = vst [vmem:[%s27 + $0x20] sm:$0xff] %v40
          %v42 = vld [vmem:[%s26 + $0x28] sm:$0xff]
          %43 = vst [vmem:[%s27 + $0x28] sm:$0xff] %v42
          %v44 = vld [vmem:[%s26 + $0x30] sm:$0xff]
          %45 = vst [vmem:[%s27 + $0x30] sm:$0xff] %v44
          %v46 = vld [vmem:[%s26 + $0x38] sm:$0xff]
          %47 = vst [vmem:[%s27 + $0x38] sm:$0xff] %v46
        $region14: #{custom-call.2} parent=8 // loop_footer
          %s48 = scalar_lea.vmem %s26, 64
          %s49 = scalar_lea.vmem %s27, 64
          %v50 = vld [vmem:[%s26 + $0x40] sm:$0xff]
        $region15: #{custom-call.2} parent=8 // loop_footer_branch
          %51 = sbr.rel target = $region11
        $region16: #{custom-call.2} parent=8 // loop_exit
          _
        // While loop
        $region17: #{custom-call.2} parent=8 // loop_pre_header
          _
        $region18: #{custom-call.2} parent=8 // loop_header
          %s52 = sphi %s26, %s60
          %s53 = sphi %s27, %s61
          %v54 = vphi %v28, %v54
          %p55 = scmp.gt.s32.totalorder %s52, %s24
        $region19: #{custom-call.2} parent=8 // loop_header_branch
          %57 = sbr.rel (%p55) target = $region23
        $region20: #{custom-call.2} parent=8 // loop_body
          %v58 = vld [vmem:[%s52] sm:$0xff]
          %59 = vst [vmem:[%s53] sm:$0xff] %v58
        $region21: #{custom-call.2} parent=8 // loop_footer
          %s60 = scalar_lea.vmem %s52, 8
          %s61 = scalar_lea.vmem %s53, 8
        $region22: #{custom-call.2} parent=8 // loop_footer_branch
          %62 = sbr.rel target = $region18
        $region23: #{custom-call.2} parent=8 // loop_exit
          _
      $region9: #{custom-call.2} parent=4 // pred_fallthru
        _
      %s63 = sand.u32 104, 7
      %s64 = sshll.u32 1, %s63
      %s65 = ssub.s32 %s64, 1
      %s66 = smul.u32 %s16, 128
      %s67 = sshra.s32 %s66, 4
      %s68 = scalar_lea.vmem [#allocation0], %s67
      %s69 = smul.u32 %s16, 128
      %s70 = sshra.s32 %s69, 4
      %s71 = scalar_lea.vmem %s0, %s70
      %v72 = vld [vmem:[%s71] sm:%s65]
      %73 = vst [vmem:[%s68] sm:%s65] %v72
    $region5: #{custom-call.2} parent=1 // pred_fallthru
      _
    %p75 = scmp.gt.s32.totalorder 104, 0
    // Predicated region
    $region24: #{custom-call.2} parent=1 // pred_check
      %p76 = pneg %p75
    $region25: #{custom-call.2} parent=1 // pred_check_branch
      %78 = sbr.rel (%p76) target = $region27
    $region26: #{custom-call.2} parent=1 // pred_region
      %s79 = sshra.s32 104, 3
      %p80 = scmp.gt.s32.totalorder %s79, 0
      // Predicated region
      $region28: #{custom-call.2} parent=26 // pred_check
        %p81 = pneg %p80
      $region29: #{custom-call.2} parent=26 // pred_check_branch
        %83 = sbr.rel (%p81) target = $region31
      $region30: #{custom-call.2} parent=26 // pred_region
        %s84 = ssub.s32 %s79, 1
        %s85 = smul.u32 %s84, 128
        %s86 = sshra.s32 %s85, 4
        %s87 = scalar_lea.vmem %s1, %s86
        %v88 = vld [vmem:[%s1] sm:$0xff]
        // While loop
        $region32: #{custom-call.2} parent=30 // loop_pre_header
          _
        $region33: #{custom-call.2} parent=30 // loop_header
          %s89 = sphi %s1, %s111
          %s90 = sphi [#allocation1], %s112
          %v91 = vphi %v88, %v113
          %s92 = ssub.s32 %s87, 64
          %p93 = scmp.gt.s32.totalorder %s89, %s92
        $region34: #{custom-call.2} parent=30 // loop_header_branch
          %95 = sbr.rel (%p93) target = $region38
        $region35: #{custom-call.2} parent=30 // loop_body
          %96 = vst [vmem:[%s90] sm:$0xff] %v91
          %v97 = vld [vmem:[%s89 + $0x8] sm:$0xff]
          %98 = vst [vmem:[%s90 + $0x8] sm:$0xff] %v97
          %v99 = vld [vmem:[%s89 + $0x10] sm:$0xff]
          %100 = vst [vmem:[%s90 + $0x10] sm:$0xff] %v99
          %v101 = vld [vmem:[%s89 + $0x18] sm:$0xff]
          %102 = vst [vmem:[%s90 + $0x18] sm:$0xff] %v101
          %v103 = vld [vmem:[%s89 + $0x20] sm:$0xff]
          %104 = vst [vmem:[%s90 + $0x20] sm:$0xff] %v103
          %v105 = vld [vmem:[%s89 + $0x28] sm:$0xff]
          %106 = vst [vmem:[%s90 + $0x28] sm:$0xff] %v105
          %v107 = vld [vmem:[%s89 + $0x30] sm:$0xff]
          %108 = vst [vmem:[%s90 + $0x30] sm:$0xff] %v107
          %v109 = vld [vmem:[%s89 + $0x38] sm:$0xff]
          %110 = vst [vmem:[%s90 + $0x38] sm:$0xff] %v109
        $region36: #{custom-call.2} parent=30 // loop_footer
          %s111 = scalar_lea.vmem %s89, 64
          %s112 = scalar_lea.vmem %s90, 64
          %v113 = vld [vmem:[%s89 + $0x40] sm:$0xff]
        $region37: #{custom-call.2} parent=30 // loop_footer_branch
          %114 = sbr.rel target = $region33
        $region38: #{custom-call.2} parent=30 // loop_exit
          _
        // While loop
        $region39: #{custom-call.2} parent=30 // loop_pre_header
          _
        $region40: #{custom-call.2} parent=30 // loop_header
          %s115 = sphi %s89, %s123
          %s116 = sphi %s90, %s124
          %v117 = vphi %v91, %v117
          %p118 = scmp.gt.s32.totalorder %s115, %s87
        $region41: #{custom-call.2} parent=30 // loop_header_branch
          %120 = sbr.rel (%p118) target = $region45
        $region42: #{custom-call.2} parent=30 // loop_body
          %v121 = vld [vmem:[%s115] sm:$0xff]
          %122 = vst [vmem:[%s116] sm:$0xff] %v121
        $region43: #{custom-call.2} parent=30 // loop_footer
          %s123 = scalar_lea.vmem %s115, 8
          %s124 = scalar_lea.vmem %s116, 8
        $region44: #{custom-call.2} parent=30 // loop_footer_branch
          %125 = sbr.rel target = $region40
        $region45: #{custom-call.2} parent=30 // loop_exit
          _
      $region31: #{custom-call.2} parent=26 // pred_fallthru
        _
      %s126 = sand.u32 104, 7
      %s127 = sshll.u32 1, %s126
      %s128 = ssub.s32 %s127, 1
      %s129 = smul.u32 %s79, 128
      %s130 = sshra.s32 %s129, 4
      %s131 = scalar_lea.vmem [#allocation1], %s130
      %s132 = smul.u32 %s79, 128
      %s133 = sshra.s32 %s132, 4
      %s134 = scalar_lea.vmem %s1, %s133
      %v135 = vld [vmem:[%s134] sm:%s128]
      %136 = vst [vmem:[%s131] sm:%s128] %v135
    $region27: #{custom-call.2} parent=1 // pred_fallthru
      _
    %p138 = scmp.gt.s32.totalorder 104, 0
    // Predicated region
    $region46: #{custom-call.2} parent=1 // pred_check
      %p139 = pneg %p138
    $region47: #{custom-call.2} parent=1 // pred_check_branch
      %141 = sbr.rel (%p139) target = $region49
    $region48: #{custom-call.2} parent=1 // pred_region
      %s142 = sshra.s32 104, 3
      %p143 = scmp.gt.s32.totalorder %s142, 0
      // Predicated region
      $region50: #{custom-call.2} parent=48 // pred_check
        %p144 = pneg %p143
      $region51: #{custom-call.2} parent=48 // pred_check_branch
        %146 = sbr.rel (%p144) target = $region53
      $region52: #{custom-call.2} parent=48 // pred_region
        %s147 = ssub.s32 %s142, 1
        %s148 = smul.u32 %s147, 128
        %s149 = sshra.s32 %s148, 4
        %s150 = scalar_lea.vmem %s2, %s149
        %v151 = vld [vmem:[%s2] sm:$0xff]
        // While loop
        $region54: #{custom-call.2} parent=52 // loop_pre_header
          _
        $region55: #{custom-call.2} parent=52 // loop_header
          %s152 = sphi %s2, %s174
          %s153 = sphi [#allocation2], %s175
          %v154 = vphi %v151, %v176
          %s155 = ssub.s32 %s150, 64
          %p156 = scmp.gt.s32.totalorder %s152, %s155
        $region56: #{custom-call.2} parent=52 // loop_header_branch
          %158 = sbr.rel (%p156) target = $region60
        $region57: #{custom-call.2} parent=52 // loop_body
          %159 = vst [vmem:[%s153] sm:$0xff] %v154
          %v160 = vld [vmem:[%s152 + $0x8] sm:$0xff]
          %161 = vst [vmem:[%s153 + $0x8] sm:$0xff] %v160
          %v162 = vld [vmem:[%s152 + $0x10] sm:$0xff]
          %163 = vst [vmem:[%s153 + $0x10] sm:$0xff] %v162
          %v164 = vld [vmem:[%s152 + $0x18] sm:$0xff]
          %165 = vst [vmem:[%s153 + $0x18] sm:$0xff] %v164
          %v166 = vld [vmem:[%s152 + $0x20] sm:$0xff]
          %167 = vst [vmem:[%s153 + $0x20] sm:$0xff] %v166
          %v168 = vld [vmem:[%s152 + $0x28] sm:$0xff]
          %169 = vst [vmem:[%s153 + $0x28] sm:$0xff] %v168
          %v170 = vld [vmem:[%s152 + $0x30] sm:$0xff]
          %171 = vst [vmem:[%s153 + $0x30] sm:$0xff] %v170
          %v172 = vld [vmem:[%s152 + $0x38] sm:$0xff]
          %173 = vst [vmem:[%s153 + $0x38] sm:$0xff] %v172
        $region58: #{custom-call.2} parent=52 // loop_footer
          %s174 = scalar_lea.vmem %s152, 64
          %s175 = scalar_lea.vmem %s153, 64
          %v176 = vld [vmem:[%s152 + $0x40] sm:$0xff]
        $region59: #{custom-call.2} parent=52 // loop_footer_branch
          %177 = sbr.rel target = $region55
        $region60: #{custom-call.2} parent=52 // loop_exit
          _
        // While loop
        $region61: #{custom-call.2} parent=52 // loop_pre_header
          _
        $region62: #{custom-call.2} parent=52 // loop_header
          %s178 = sphi %s152, %s186
          %s179 = sphi %s153, %s187
          %v180 = vphi %v154, %v180
          %p181 = scmp.gt.s32.totalorder %s178, %s150
        $region63: #{custom-call.2} parent=52 // loop_header_branch
          %183 = sbr.rel (%p181) target = $region67
        $region64: #{custom-call.2} parent=52 // loop_body
          %v184 = vld [vmem:[%s178] sm:$0xff]
          %185 = vst [vmem:[%s179] sm:$0xff] %v184
        $region65: #{custom-call.2} parent=52 // loop_footer
          %s186 = scalar_lea.vmem %s178, 8
          %s187 = scalar_lea.vmem %s179, 8
        $region66: #{custom-call.2} parent=52 // loop_footer_branch
          %188 = sbr.rel target = $region62
        $region67: #{custom-call.2} parent=52 // loop_exit
          _
      $region53: #{custom-call.2} parent=48 // pred_fallthru
        _
      %s189 = sand.u32 104, 7
      %s190 = sshll.u32 1, %s189
      %s191 = ssub.s32 %s190, 1
      %s192 = smul.u32 %s142, 128
      %s193 = sshra.s32 %s192, 4
      %s194 = scalar_lea.vmem [#allocation2], %s193
      %s195 = smul.u32 %s142, 128
      %s196 = sshra.s32 %s195, 4
      %s197 = scalar_lea.vmem %s2, %s196
      %v198 = vld [vmem:[%s197] sm:%s191]
      %199 = vst [vmem:[%s194] sm:%s191] %v198
    $region49: #{custom-call.2} parent=1 // pred_fallthru
      _
    %p201 = scmp.gt.s32.totalorder 104, 0
    // Predicated region
    $region68: #{custom-call.2} parent=1 // pred_check
      %p202 = pneg %p201
    $region69: #{custom-call.2} parent=1 // pred_check_branch
      %204 = sbr.rel (%p202) target = $region71
    $region70: #{custom-call.2} parent=1 // pred_region
      %s205 = sshra.s32 104, 3
      %p206 = scmp.gt.s32.totalorder %s205, 0
      // Predicated region
      $region72: #{custom-call.2} parent=70 // pred_check
        %p207 = pneg %p206
      $region73: #{custom-call.2} parent=70 // pred_check_branch
        %209 = sbr.rel (%p207) target = $region75
      $region74: #{custom-call.2} parent=70 // pred_region
        %s210 = ssub.s32 %s205, 1
        %s211 = smul.u32 %s210, 128
        %s212 = sshra.s32 %s211, 4
        %s213 = scalar_lea.vmem %s3, %s212
        %v214 = vld [vmem:[%s3] sm:$0xff]
        // While loop
        $region76: #{custom-call.2} parent=74 // loop_pre_header
          _
        $region77: #{custom-call.2} parent=74 // loop_header
          %s215 = sphi %s3, %s237
          %s216 = sphi [#allocation3], %s238
          %v217 = vphi %v214, %v239
          %s218 = ssub.s32 %s213, 64
          %p219 = scmp.gt.s32.totalorder %s215, %s218
        $region78: #{custom-call.2} parent=74 // loop_header_branch
          %221 = sbr.rel (%p219) target = $region82
        $region79: #{custom-call.2} parent=74 // loop_body
          %222 = vst [vmem:[%s216] sm:$0xff] %v217
          %v223 = vld [vmem:[%s215 + $0x8] sm:$0xff]
          %224 = vst [vmem:[%s216 + $0x8] sm:$0xff] %v223
          %v225 = vld [vmem:[%s215 + $0x10] sm:$0xff]
          %226 = vst [vmem:[%s216 + $0x10] sm:$0xff] %v225
          %v227 = vld [vmem:[%s215 + $0x18] sm:$0xff]
          %228 = vst [vmem:[%s216 + $0x18] sm:$0xff] %v227
          %v229 = vld [vmem:[%s215 + $0x20] sm:$0xff]
          %230 = vst [vmem:[%s216 + $0x20] sm:$0xff] %v229
          %v231 = vld [vmem:[%s215 + $0x28] sm:$0xff]
          %232 = vst [vmem:[%s216 + $0x28] sm:$0xff] %v231
          %v233 = vld [vmem:[%s215 + $0x30] sm:$0xff]
          %234 = vst [vmem:[%s216 + $0x30] sm:$0xff] %v233
          %v235 = vld [vmem:[%s215 + $0x38] sm:$0xff]
          %236 = vst [vmem:[%s216 + $0x38] sm:$0xff] %v235
        $region80: #{custom-call.2} parent=74 // loop_footer
          %s237 = scalar_lea.vmem %s215, 64
          %s238 = scalar_lea.vmem %s216, 64
          %v239 = vld [vmem:[%s215 + $0x40] sm:$0xff]
        $region81: #{custom-call.2} parent=74 // loop_footer_branch
          %240 = sbr.rel target = $region77
        $region82: #{custom-call.2} parent=74 // loop_exit
          _
        // While loop
        $region83: #{custom-call.2} parent=74 // loop_pre_header
          _
        $region84: #{custom-call.2} parent=74 // loop_header
          %s241 = sphi %s215, %s249
          %s242 = sphi %s216, %s250
          %v243 = vphi %v217, %v243
          %p244 = scmp.gt.s32.totalorder %s241, %s213
        $region85: #{custom-call.2} parent=74 // loop_header_branch
          %246 = sbr.rel (%p244) target = $region89
        $region86: #{custom-call.2} parent=74 // loop_body
          %v247 = vld [vmem:[%s241] sm:$0xff]
          %248 = vst [vmem:[%s242] sm:$0xff] %v247
        $region87: #{custom-call.2} parent=74 // loop_footer
          %s249 = scalar_lea.vmem %s241, 8
          %s250 = scalar_lea.vmem %s242, 8
        $region88: #{custom-call.2} parent=74 // loop_footer_branch
          %251 = sbr.rel target = $region84
        $region89: #{custom-call.2} parent=74 // loop_exit
          _
      $region75: #{custom-call.2} parent=70 // pred_fallthru
        _
      %s252 = sand.u32 104, 7
      %s253 = sshll.u32 1, %s252
      %s254 = ssub.s32 %s253, 1
      %s255 = smul.u32 %s205, 128
      %s256 = sshra.s32 %s255, 4
      %s257 = scalar_lea.vmem [#allocation3], %s256
      %s258 = smul.u32 %s205, 128
      %s259 = sshra.s32 %s258, 4
      %s260 = scalar_lea.vmem %s3, %s259
      %v261 = vld [vmem:[%s260] sm:%s254]
      %262 = vst [vmem:[%s257] sm:%s254] %v261
    $region71: #{custom-call.2} parent=1 // pred_fallthru
      _
    %s263 = smov [#allocation12]
    %v264 = vld [vmem:[#allocation0] sm:$0xff]
    %265 = vst [vmem:[%s263] sm:$0xff] %v264
    %s266 = scalar_lea.vmem %s263, 8
    %s267 = scalar_lea.vmem [#allocation0], 8
    %v268 = vld [vmem:[%s267] sm:$0xff]
    %269 = vst [vmem:[%s266] sm:$0xff] %v268
    %s270 = scalar_lea.vmem %s263, 16
    %s271 = scalar_lea.vmem [#allocation0], 16
    %v272 = vld [vmem:[%s271] sm:$0xff]
    %273 = vst [vmem:[%s270] sm:$0xff] %v272
    %s274 = scalar_lea.vmem %s263, 24
    %s275 = scalar_lea.vmem [#allocation0], 24
    %v276 = vld [vmem:[%s275] sm:$0xff]
    %277 = vst [vmem:[%s274] sm:$0xff] %v276
    %s278 = scalar_lea.vmem %s263, 32
    %s279 = scalar_lea.vmem [#allocation0], 32
    %v280 = vld [vmem:[%s279] sm:$0xff]
    %281 = vst [vmem:[%s278] sm:$0xff] %v280
    %s282 = scalar_lea.vmem %s263, 40
    %s283 = scalar_lea.vmem [#allocation0], 40
    %v284 = vld [vmem:[%s283] sm:$0xff]
    %285 = vst [vmem:[%s282] sm:$0xff] %v284
    %s286 = scalar_lea.vmem %s263, 48
    %s287 = scalar_lea.vmem [#allocation0], 48
    %v288 = vld [vmem:[%s287] sm:$0xff]
    %289 = vst [vmem:[%s286] sm:$0xff] %v288
    %s290 = scalar_lea.vmem %s263, 56
    %s291 = scalar_lea.vmem [#allocation0], 56
    %v292 = vld [vmem:[%s291] sm:$0xff]
    %293 = vst [vmem:[%s290] sm:$0xff] %v292
    %s294 = scalar_lea.vmem %s263, 64
    %s295 = scalar_lea.vmem [#allocation0], 64
    %v296 = vld [vmem:[%s295] sm:$0xff]
    %297 = vst [vmem:[%s294] sm:$0xff] %v296
    %s298 = scalar_lea.vmem %s263, 72
    %s299 = scalar_lea.vmem [#allocation0], 72
    %v300 = vld [vmem:[%s299] sm:$0xff]
    %301 = vst [vmem:[%s298] sm:$0xff] %v300
    %s302 = scalar_lea.vmem %s263, 80
    %s303 = scalar_lea.vmem [#allocation0], 80
    %v304 = vld [vmem:[%s303] sm:$0xff]
    %305 = vst [vmem:[%s302] sm:$0xff] %v304
    %s306 = scalar_lea.vmem %s263, 88
    %s307 = scalar_lea.vmem [#allocation0], 88
    %v308 = vld [vmem:[%s307] sm:$0xff]
    %309 = vst [vmem:[%s306] sm:$0xff] %v308
    %s310 = scalar_lea.vmem %s263, 96
    %s311 = scalar_lea.vmem [#allocation0], 96
    %v312 = vld [vmem:[%s311] sm:$0xff]
    %313 = vst [vmem:[%s310] sm:$0xff] %v312
    %s314 = smov [#allocation13]
    %v315 = vld [vmem:[#allocation1] sm:$0xff]
    %316 = vst [vmem:[%s314] sm:$0xff] %v315
    %s317 = scalar_lea.vmem %s314, 8
    %s318 = scalar_lea.vmem [#allocation1], 8
    %v319 = vld [vmem:[%s318] sm:$0xff]
    %320 = vst [vmem:[%s317] sm:$0xff] %v319
    %s321 = scalar_lea.vmem %s314, 16
    %s322 = scalar_lea.vmem [#allocation1], 16
    %v323 = vld [vmem:[%s322] sm:$0xff]
    %324 = vst [vmem:[%s321] sm:$0xff] %v323
    %s325 = scalar_lea.vmem %s314, 24
    %s326 = scalar_lea.vmem [#allocation1], 24
    %v327 = vld [vmem:[%s326] sm:$0xff]
    %328 = vst [vmem:[%s325] sm:$0xff] %v327
    %s329 = scalar_lea.vmem %s314, 32
    %s330 = scalar_lea.vmem [#allocation1], 32
    %v331 = vld [vmem:[%s330] sm:$0xff]
    %332 = vst [vmem:[%s329] sm:$0xff] %v331
    %s333 = scalar_lea.vmem %s314, 40
    %s334 = scalar_lea.vmem [#allocation1], 40
    %v335 = vld [vmem:[%s334] sm:$0xff]
    %336 = vst [vmem:[%s333] sm:$0xff] %v335
    %s337 = scalar_lea.vmem %s314, 48
    %s338 = scalar_lea.vmem [#allocation1], 48
    %v339 = vld [vmem:[%s338] sm:$0xff]
    %340 = vst [vmem:[%s337] sm:$0xff] %v339
    %s341 = scalar_lea.vmem %s314, 56
    %s342 = scalar_lea.vmem [#allocation1], 56
    %v343 = vld [vmem:[%s342] sm:$0xff]
    %344 = vst [vmem:[%s341] sm:$0xff] %v343
    %s345 = scalar_lea.vmem %s314, 64
    %s346 = scalar_lea.vmem [#allocation1], 64
    %v347 = vld [vmem:[%s346] sm:$0xff]
    %348 = vst [vmem:[%s345] sm:$0xff] %v347
    %s349 = scalar_lea.vmem %s314, 72
    %s350 = scalar_lea.vmem [#allocation1], 72
    %v351 = vld [vmem:[%s350] sm:$0xff]
    %352 = vst [vmem:[%s349] sm:$0xff] %v351
    %s353 = scalar_lea.vmem %s314, 80
    %s354 = scalar_lea.vmem [#allocation1], 80
    %v355 = vld [vmem:[%s354] sm:$0xff]
    %356 = vst [vmem:[%s353] sm:$0xff] %v355
    %s357 = scalar_lea.vmem %s314, 88
    %s358 = scalar_lea.vmem [#allocation1], 88
    %v359 = vld [vmem:[%s358] sm:$0xff]
    %360 = vst [vmem:[%s357] sm:$0xff] %v359
    %s361 = scalar_lea.vmem %s314, 96
    %s362 = scalar_lea.vmem [#allocation1], 96
    %v363 = vld [vmem:[%s362] sm:$0xff]
    %364 = vst [vmem:[%s361] sm:$0xff] %v363
    %s365 = smov [#allocation14]
    %v366 = vld [vmem:[#allocation2] sm:$0xff]
    %367 = vst [vmem:[%s365] sm:$0xff] %v366
    %s368 = scalar_lea.vmem %s365, 8
    %s369 = scalar_lea.vmem [#allocation2], 8
    %v370 = vld [vmem:[%s369] sm:$0xff]
    %371 = vst [vmem:[%s368] sm:$0xff] %v370
    %s372 = scalar_lea.vmem %s365, 16
    %s373 = scalar_lea.vmem [#allocation2], 16
    %v374 = vld [vmem:[%s373] sm:$0xff]
    %375 = vst [vmem:[%s372] sm:$0xff] %v374
    %s376 = scalar_lea.vmem %s365, 24
    %s377 = scalar_lea.vmem [#allocation2], 24
    %v378 = vld [vmem:[%s377] sm:$0xff]
    %379 = vst [vmem:[%s376] sm:$0xff] %v378
    %s380 = scalar_lea.vmem %s365, 32
    %s381 = scalar_lea.vmem [#allocation2], 32
    %v382 = vld [vmem:[%s381] sm:$0xff]
    %383 = vst [vmem:[%s380] sm:$0xff] %v382
    %s384 = scalar_lea.vmem %s365, 40
    %s385 = scalar_lea.vmem [#allocation2], 40
    %v386 = vld [vmem:[%s385] sm:$0xff]
    %387 = vst [vmem:[%s384] sm:$0xff] %v386
    %s388 = scalar_lea.vmem %s365, 48
    %s389 = scalar_lea.vmem [#allocation2], 48
    %v390 = vld [vmem:[%s389] sm:$0xff]
    %391 = vst [vmem:[%s388] sm:$0xff] %v390
    %s392 = scalar_lea.vmem %s365, 56
    %s393 = scalar_lea.vmem [#allocation2], 56
    %v394 = vld [vmem:[%s393] sm:$0xff]
    %395 = vst [vmem:[%s392] sm:$0xff] %v394
    %s396 = scalar_lea.vmem %s365, 64
    %s397 = scalar_lea.vmem [#allocation2], 64
    %v398 = vld [vmem:[%s397] sm:$0xff]
    %399 = vst [vmem:[%s396] sm:$0xff] %v398
    %s400 = scalar_lea.vmem %s365, 72
    %s401 = scalar_lea.vmem [#allocation2], 72
    %v402 = vld [vmem:[%s401] sm:$0xff]
    %403 = vst [vmem:[%s400] sm:$0xff] %v402
    %s404 = scalar_lea.vmem %s365, 80
    %s405 = scalar_lea.vmem [#allocation2], 80
    %v406 = vld [vmem:[%s405] sm:$0xff]
    %407 = vst [vmem:[%s404] sm:$0xff] %v406
    %s408 = scalar_lea.vmem %s365, 88
    %s409 = scalar_lea.vmem [#allocation2], 88
    %v410 = vld [vmem:[%s409] sm:$0xff]
    %411 = vst [vmem:[%s408] sm:$0xff] %v410
    %s412 = scalar_lea.vmem %s365, 96
    %s413 = scalar_lea.vmem [#allocation2], 96
    %v414 = vld [vmem:[%s413] sm:$0xff]
    %415 = vst [vmem:[%s412] sm:$0xff] %v414
    %s416 = smov [#allocation15]
    %v417 = vld [vmem:[#allocation3] sm:$0xff]
    %418 = vst [vmem:[%s416] sm:$0xff] %v417
    %s419 = scalar_lea.vmem %s416, 8
    %s420 = scalar_lea.vmem [#allocation3], 8
    %v421 = vld [vmem:[%s420] sm:$0xff]
    %422 = vst [vmem:[%s419] sm:$0xff] %v421
    %s423 = scalar_lea.vmem %s416, 16
    %s424 = scalar_lea.vmem [#allocation3], 16
    %v425 = vld [vmem:[%s424] sm:$0xff]
    %426 = vst [vmem:[%s423] sm:$0xff] %v425
    %s427 = scalar_lea.vmem %s416, 24
    %s428 = scalar_lea.vmem [#allocation3], 24
    %v429 = vld [vmem:[%s428] sm:$0xff]
    %430 = vst [vmem:[%s427] sm:$0xff] %v429
    %s431 = scalar_lea.vmem %s416, 32
    %s432 = scalar_lea.vmem [#allocation3], 32
    %v433 = vld [vmem:[%s432] sm:$0xff]
    %434 = vst [vmem:[%s431] sm:$0xff] %v433
    %s435 = scalar_lea.vmem %s416, 40
    %s436 = scalar_lea.vmem [#allocation3], 40
    %v437 = vld [vmem:[%s436] sm:$0xff]
    %438 = vst [vmem:[%s435] sm:$0xff] %v437
    %s439 = scalar_lea.vmem %s416, 48
    %s440 = scalar_lea.vmem [#allocation3], 48
    %v441 = vld [vmem:[%s440] sm:$0xff]
    %442 = vst [vmem:[%s439] sm:$0xff] %v441
    %s443 = scalar_lea.vmem %s416, 56
    %s444 = scalar_lea.vmem [#allocation3], 56
    %v445 = vld [vmem:[%s444] sm:$0xff]
    %446 = vst [vmem:[%s443] sm:$0xff] %v445
    %s447 = scalar_lea.vmem %s416, 64
    %s448 = scalar_lea.vmem [#allocation3], 64
    %v449 = vld [vmem:[%s448] sm:$0xff]
    %450 = vst [vmem:[%s447] sm:$0xff] %v449
    %s451 = scalar_lea.vmem %s416, 72
    %s452 = scalar_lea.vmem [#allocation3], 72
    %v453 = vld [vmem:[%s452] sm:$0xff]
    %454 = vst [vmem:[%s451] sm:$0xff] %v453
    %s455 = scalar_lea.vmem %s416, 80
    %s456 = scalar_lea.vmem [#allocation3], 80
    %v457 = vld [vmem:[%s456] sm:$0xff]
    %458 = vst [vmem:[%s455] sm:$0xff] %v457
    %s459 = scalar_lea.vmem %s416, 88
    %s460 = scalar_lea.vmem [#allocation3], 88
    %v461 = vld [vmem:[%s460] sm:$0xff]
    %462 = vst [vmem:[%s459] sm:$0xff] %v461
    %s463 = scalar_lea.vmem %s416, 96
    %s464 = scalar_lea.vmem [#allocation3], 96
    %v465 = vld [vmem:[%s464] sm:$0xff]
    %466 = vst [vmem:[%s463] sm:$0xff] %v465
    %467 = vst [vmem:[#allocation8] sm:$0xff] 0.0
    %s468 = scalar_lea.vmem [#allocation8], 8
    %469 = vst [vmem:[%s468] sm:$0xff] 0.0
    %s470 = scalar_lea.vmem [#allocation8], 16
    %471 = vst [vmem:[%s470] sm:$0xff] 0.0
    %s472 = scalar_lea.vmem [#allocation8], 24
    %473 = vst [vmem:[%s472] sm:$0xff] 0.0
    %s474 = scalar_lea.vmem [#allocation8], 32
    %475 = vst [vmem:[%s474] sm:$0xff] 0.0
    %s476 = scalar_lea.vmem [#allocation8], 40
    %477 = vst [vmem:[%s476] sm:$0xff] 0.0
    %s478 = scalar_lea.vmem [#allocation8], 48
    %479 = vst [vmem:[%s478] sm:$0xff] 0.0
    %s480 = scalar_lea.vmem [#allocation8], 56
    %481 = vst [vmem:[%s480] sm:$0xff] 0.0
    %s482 = scalar_lea.vmem [#allocation8], 64
    %483 = vst [vmem:[%s482] sm:$0xff] 0.0
    %s484 = scalar_lea.vmem [#allocation8], 72
    %485 = vst [vmem:[%s484] sm:$0xff] 0.0
    %s486 = scalar_lea.vmem [#allocation8], 80
    %487 = vst [vmem:[%s486] sm:$0xff] 0.0
    %s488 = scalar_lea.vmem [#allocation8], 88
    %489 = vst [vmem:[%s488] sm:$0xff] 0.0
    %s490 = scalar_lea.vmem [#allocation8], 96
    %491 = vst [vmem:[%s490] sm:$0xff] 0.0
    %492 = vst [vmem:[#allocation9] sm:$0xff] 0.0
    %s493 = scalar_lea.vmem [#allocation9], 8
    %494 = vst [vmem:[%s493] sm:$0xff] 0.0
    %s495 = scalar_lea.vmem [#allocation9], 16
    %496 = vst [vmem:[%s495] sm:$0xff] 0.0
    %s497 = scalar_lea.vmem [#allocation9], 24
    %498 = vst [vmem:[%s497] sm:$0xff] 0.0
    %s499 = scalar_lea.vmem [#allocation9], 32
    %500 = vst [vmem:[%s499] sm:$0xff] 0.0
    %s501 = scalar_lea.vmem [#allocation9], 40
    %502 = vst [vmem:[%s501] sm:$0xff] 0.0
    %s503 = scalar_lea.vmem [#allocation9], 48
    %504 = vst [vmem:[%s503] sm:$0xff] 0.0
    %s505 = scalar_lea.vmem [#allocation9], 56
    %506 = vst [vmem:[%s505] sm:$0xff] 0.0
    %s507 = scalar_lea.vmem [#allocation9], 64
    %508 = vst [vmem:[%s507] sm:$0xff] 0.0
    %s509 = scalar_lea.vmem [#allocation9], 72
    %510 = vst [vmem:[%s509] sm:$0xff] 0.0
    %s511 = scalar_lea.vmem [#allocation9], 80
    %512 = vst [vmem:[%s511] sm:$0xff] 0.0
    %s513 = scalar_lea.vmem [#allocation9], 88
    %514 = vst [vmem:[%s513] sm:$0xff] 0.0
    %s515 = scalar_lea.vmem [#allocation9], 96
    %516 = vst [vmem:[%s515] sm:$0xff] 0.0
    %517 = vst [vmem:[#allocation10] sm:$0xff] 0.0
    %s518 = scalar_lea.vmem [#allocation10], 8
    %519 = vst [vmem:[%s518] sm:$0xff] 0.0
    %s520 = scalar_lea.vmem [#allocation10], 16
    %521 = vst [vmem:[%s520] sm:$0xff] 0.0
    %s522 = scalar_lea.vmem [#allocation10], 24
    %523 = vst [vmem:[%s522] sm:$0xff] 0.0
    %s524 = scalar_lea.vmem [#allocation10], 32
    %525 = vst [vmem:[%s524] sm:$0xff] 0.0
    %s526 = scalar_lea.vmem [#allocation10], 40
    %527 = vst [vmem:[%s526] sm:$0xff] 0.0
    %s528 = scalar_lea.vmem [#allocation10], 48
    %529 = vst [vmem:[%s528] sm:$0xff] 0.0
    %s530 = scalar_lea.vmem [#allocation10], 56
    %531 = vst [vmem:[%s530] sm:$0xff] 0.0
    %s532 = scalar_lea.vmem [#allocation10], 64
    %533 = vst [vmem:[%s532] sm:$0xff] 0.0
    %s534 = scalar_lea.vmem [#allocation10], 72
    %535 = vst [vmem:[%s534] sm:$0xff] 0.0
    %s536 = scalar_lea.vmem [#allocation10], 80
    %537 = vst [vmem:[%s536] sm:$0xff] 0.0
    %s538 = scalar_lea.vmem [#allocation10], 88
    %539 = vst [vmem:[%s538] sm:$0xff] 0.0
    %s540 = scalar_lea.vmem [#allocation10], 96
    %541 = vst [vmem:[%s540] sm:$0xff] 0.0
    %542 = vst [vmem:[#allocation11] sm:$0xff] 0.0
    %s543 = scalar_lea.vmem [#allocation11], 8
    %544 = vst [vmem:[%s543] sm:$0xff] 0.0
    %s545 = scalar_lea.vmem [#allocation11], 16
    %546 = vst [vmem:[%s545] sm:$0xff] 0.0
    %s547 = scalar_lea.vmem [#allocation11], 24
    %548 = vst [vmem:[%s547] sm:$0xff] 0.0
    %s549 = scalar_lea.vmem [#allocation11], 32
    %550 = vst [vmem:[%s549] sm:$0xff] 0.0
    %s551 = scalar_lea.vmem [#allocation11], 40
    %552 = vst [vmem:[%s551] sm:$0xff] 0.0
    %s553 = scalar_lea.vmem [#allocation11], 48
    %554 = vst [vmem:[%s553] sm:$0xff] 0.0
    %s555 = scalar_lea.vmem [#allocation11], 56
    %556 = vst [vmem:[%s555] sm:$0xff] 0.0
    %s557 = scalar_lea.vmem [#allocation11], 64
    %558 = vst [vmem:[%s557] sm:$0xff] 0.0
    %s559 = scalar_lea.vmem [#allocation11], 72
    %560 = vst [vmem:[%s559] sm:$0xff] 0.0
    %s561 = scalar_lea.vmem [#allocation11], 80
    %562 = vst [vmem:[%s561] sm:$0xff] 0.0
    %s563 = scalar_lea.vmem [#allocation11], 88
    %564 = vst [vmem:[%s563] sm:$0xff] 0.0
    %s565 = scalar_lea.vmem [#allocation11], 96
    %566 = vst [vmem:[%s565] sm:$0xff] 0.0
    %s567 = smov [#allocation8]
    %v568 = vlaneseq
    %v569 = vand.u32 %v568, 127
    %v570 = vmov %v569
    %v571 = vlaneseq
    %v572 = vshrl.u32 %v571, 7
    %v573 = vmov %v572
    %v574 = vld [vmem:[%s567] sm:$0xff]
    %vm577 = vcmp.eq.s32.totalorder %v573, %v570
    %v578 = vsel %vm577, 1.0, %v574
    %579 = vst [vmem:[%s567] sm:$0xff] %v578
    %s580 = scalar_lea.vmem %s567, 8
    %v581 = vld [vmem:[%s580] sm:$0xff]
    %v583 = vadd.s32 %v573, 8
    %vm584 = vcmp.eq.s32.totalorder %v583, %v570
    %v585 = vsel %vm584, 1.0, %v581
    %586 = vst [vmem:[%s580] sm:$0xff] %v585
    %s587 = scalar_lea.vmem %s567, 16
    %v588 = vld [vmem:[%s587] sm:$0xff]
    %v590 = vadd.s32 %v573, 16
    %vm591 = vcmp.eq.s32.totalorder %v590, %v570
    %v592 = vsel %vm591, 1.0, %v588
    %593 = vst [vmem:[%s587] sm:$0xff] %v592
    %s594 = scalar_lea.vmem %s567, 24
    %v595 = vld [vmem:[%s594] sm:$0xff]
    %v597 = vadd.s32 %v573, 24
    %vm598 = vcmp.eq.s32.totalorder %v597, %v570
    %v599 = vsel %vm598, 1.0, %v595
    %600 = vst [vmem:[%s594] sm:$0xff] %v599
    %s601 = scalar_lea.vmem %s567, 32
    %v602 = vld [vmem:[%s601] sm:$0xff]
    %v604 = vadd.s32 %v573, 32
    %vm605 = vcmp.eq.s32.totalorder %v604, %v570
    %v606 = vsel %vm605, 1.0, %v602
    %607 = vst [vmem:[%s601] sm:$0xff] %v606
    %s608 = scalar_lea.vmem %s567, 40
    %v609 = vld [vmem:[%s608] sm:$0xff]
    %v611 = vadd.s32 %v573, 40
    %vm612 = vcmp.eq.s32.totalorder %v611, %v570
    %v613 = vsel %vm612, 1.0, %v609
    %614 = vst [vmem:[%s608] sm:$0xff] %v613
    %s615 = scalar_lea.vmem %s567, 48
    %v616 = vld [vmem:[%s615] sm:$0xff]
    %v618 = vadd.s32 %v573, 48
    %vm619 = vcmp.eq.s32.totalorder %v618, %v570
    %v620 = vsel %vm619, 1.0, %v616
    %621 = vst [vmem:[%s615] sm:$0xff] %v620
    %s622 = scalar_lea.vmem %s567, 56
    %v623 = vld [vmem:[%s622] sm:$0xff]
    %v625 = vadd.s32 %v573, 56
    %vm626 = vcmp.eq.s32.totalorder %v625, %v570
    %v627 = vsel %vm626, 1.0, %v623
    %628 = vst [vmem:[%s622] sm:$0xff] %v627
    %s629 = scalar_lea.vmem %s567, 64
    %v630 = vld [vmem:[%s629] sm:$0xff]
    %v632 = vadd.s32 %v573, 64
    %vm633 = vcmp.eq.s32.totalorder %v632, %v570
    %v634 = vsel %vm633, 1.0, %v630
    %635 = vst [vmem:[%s629] sm:$0xff] %v634
    %s636 = scalar_lea.vmem %s567, 72
    %v637 = vld [vmem:[%s636] sm:$0xff]
    %v639 = vadd.s32 %v573, 72
    %vm640 = vcmp.eq.s32.totalorder %v639, %v570
    %v641 = vsel %vm640, 1.0, %v637
    %642 = vst [vmem:[%s636] sm:$0xff] %v641
    %s643 = scalar_lea.vmem %s567, 80
    %v644 = vld [vmem:[%s643] sm:$0xff]
    %v646 = vadd.s32 %v573, 80
    %vm647 = vcmp.eq.s32.totalorder %v646, %v570
    %v648 = vsel %vm647, 1.0, %v644
    %649 = vst [vmem:[%s643] sm:$0xff] %v648
    %s650 = scalar_lea.vmem %s567, 88
    %v651 = vld [vmem:[%s650] sm:$0xff]
    %v653 = vadd.s32 %v573, 88
    %vm654 = vcmp.eq.s32.totalorder %v653, %v570
    %v655 = vsel %vm654, 1.0, %v651
    %656 = vst [vmem:[%s650] sm:$0xff] %v655
    %s657 = scalar_lea.vmem %s567, 96
    %v658 = vld [vmem:[%s657] sm:$0xf]
    %v660 = vadd.s32 %v573, 96
    %vm661 = vcmp.eq.s32.totalorder %v660, %v570
    %v662 = vsel %vm661, 1.0, %v658
    %663 = vst [vmem:[%s657] sm:$0xf] %v662
    %s664 = smov [#allocation11]
    %v665 = vlaneseq
    %v666 = vand.u32 %v665, 127
    %v667 = vmov %v666
    %v668 = vlaneseq
    %v669 = vshrl.u32 %v668, 7
    %v670 = vmov %v669
    %v671 = vld [vmem:[%s664] sm:$0xff]
    %vm674 = vcmp.eq.s32.totalorder %v670, %v667
    %v675 = vsel %vm674, 1.0, %v671
    %676 = vst [vmem:[%s664] sm:$0xff] %v675
    %s677 = scalar_lea.vmem %s664, 8
    %v678 = vld [vmem:[%s677] sm:$0xff]
    %v680 = vadd.s32 %v670, 8
    %vm681 = vcmp.eq.s32.totalorder %v680, %v667
    %v682 = vsel %vm681, 1.0, %v678
    %683 = vst [vmem:[%s677] sm:$0xff] %v682
    %s684 = scalar_lea.vmem %s664, 16
    %v685 = vld [vmem:[%s684] sm:$0xff]
    %v687 = vadd.s32 %v670, 16
    %vm688 = vcmp.eq.s32.totalorder %v687, %v667
    %v689 = vsel %vm688, 1.0, %v685
    %690 = vst [vmem:[%s684] sm:$0xff] %v689
    %s691 = scalar_lea.vmem %s664, 24
    %v692 = vld [vmem:[%s691] sm:$0xff]
    %v694 = vadd.s32 %v670, 24
    %vm695 = vcmp.eq.s32.totalorder %v694, %v667
    %v696 = vsel %vm695, 1.0, %v692
    %697 = vst [vmem:[%s691] sm:$0xff] %v696
    %s698 = scalar_lea.vmem %s664, 32
    %v699 = vld [vmem:[%s698] sm:$0xff]
    %v701 = vadd.s32 %v670, 32
    %vm702 = vcmp.eq.s32.totalorder %v701, %v667
    %v703 = vsel %vm702, 1.0, %v699
    %704 = vst [vmem:[%s698] sm:$0xff] %v703
    %s705 = scalar_lea.vmem %s664, 40
    %v706 = vld [vmem:[%s705] sm:$0xff]
    %v708 = vadd.s32 %v670, 40
    %vm709 = vcmp.eq.s32.totalorder %v708, %v667
    %v710 = vsel %vm709, 1.0, %v706
    %711 = vst [vmem:[%s705] sm:$0xff] %v710
    %s712 = scalar_lea.vmem %s664, 48
    %v713 = vld [vmem:[%s712] sm:$0xff]
    %v715 = vadd.s32 %v670, 48
    %vm716 = vcmp.eq.s32.totalorder %v715, %v667
    %v717 = vsel %vm716, 1.0, %v713
    %718 = vst [vmem:[%s712] sm:$0xff] %v717
    %s719 = scalar_lea.vmem %s664, 56
    %v720 = vld [vmem:[%s719] sm:$0xff]
    %v722 = vadd.s32 %v670, 56
    %vm723 = vcmp.eq.s32.totalorder %v722, %v667
    %v724 = vsel %vm723, 1.0, %v720
    %725 = vst [vmem:[%s719] sm:$0xff] %v724
    %s726 = scalar_lea.vmem %s664, 64
    %v727 = vld [vmem:[%s726] sm:$0xff]
    %v729 = vadd.s32 %v670, 64
    %vm730 = vcmp.eq.s32.totalorder %v729, %v667
    %v731 = vsel %vm730, 1.0, %v727
    %732 = vst [vmem:[%s726] sm:$0xff] %v731
    %s733 = scalar_lea.vmem %s664, 72
    %v734 = vld [vmem:[%s733] sm:$0xff]
    %v736 = vadd.s32 %v670, 72
    %vm737 = vcmp.eq.s32.totalorder %v736, %v667
    %v738 = vsel %vm737, 1.0, %v734
    %739 = vst [vmem:[%s733] sm:$0xff] %v738
    %s740 = scalar_lea.vmem %s664, 80
    %v741 = vld [vmem:[%s740] sm:$0xff]
    %v743 = vadd.s32 %v670, 80
    %vm744 = vcmp.eq.s32.totalorder %v743, %v667
    %v745 = vsel %vm744, 1.0, %v741
    %746 = vst [vmem:[%s740] sm:$0xff] %v745
    %s747 = scalar_lea.vmem %s664, 88
    %v748 = vld [vmem:[%s747] sm:$0xff]
    %v750 = vadd.s32 %v670, 88
    %vm751 = vcmp.eq.s32.totalorder %v750, %v667
    %v752 = vsel %vm751, 1.0, %v748
    %753 = vst [vmem:[%s747] sm:$0xff] %v752
    %s754 = scalar_lea.vmem %s664, 96
    %v755 = vld [vmem:[%s754] sm:$0xf]
    %v757 = vadd.s32 %v670, 96
    %vm758 = vcmp.eq.s32.totalorder %v757, %v667
    %v759 = vsel %vm758, 1.0, %v755
    %760 = vst [vmem:[%s754] sm:$0xf] %v759
    // While loop
    $region90: #{custom-call.2} parent=1 // loop_pre_header
      _
    $region91: #{custom-call.2} parent=1 // loop_header
      %s762 = sphi 0, %s5576
      %v763 = vlaneseq
      %v764 = vand.u32 %v763, 127
      %v765 = vmov %v764
      %v766 = vlaneseq
      %v767 = vshrl.u32 %v766, 7
      %v768 = vmov %v767
      %s769 = smov [#allocation12]
      %v770 = vlaneseq
      %v771 = vand.u32 %v770, 127
      %vm772 = vcmp.ge.s32.totalorder %v771, 0
      %vm773 = vcmp.lt.s32.totalorder %v771, 100
      %vm774 = vmand %vm772, %vm773
      %v775 = vld [vmem:[%s769] sm:$0xff]
      %v776 = vsel %vm774, %v775, 0.0
      %v777 = vmul.f32 %v776, %v776
      %vm780 = vcmp.eq.s32.totalorder %v768, %v765
      %v781 = vsel %vm780, 0.0, %v777
      %s782 = scalar_lea.vmem %s769, 8
      %v783 = vld [vmem:[%s782] sm:$0xff]
      %v784 = vsel %vm774, %v783, 0.0
      %v785 = vmul.f32 %v784, %v784
      %v787 = vadd.s32 %v768, 8
      %vm788 = vcmp.eq.s32.totalorder %v787, %v765
      %v789 = vsel %vm788, 0.0, %v785
      %v790 = vadd.f32 %v781, %v789
      %v791 = vadd.f32 %v777, %v785
      %s792 = scalar_lea.vmem %s769, 16
      %v793 = vld [vmem:[%s792] sm:$0xff]
      %v794 = vsel %vm774, %v793, 0.0
      %v795 = vmul.f32 %v794, %v794
      %v797 = vadd.s32 %v768, 16
      %vm798 = vcmp.eq.s32.totalorder %v797, %v765
      %v799 = vsel %vm798, 0.0, %v795
      %v800 = vadd.f32 %v790, %v799
      %v801 = vadd.f32 %v791, %v795
      %s802 = scalar_lea.vmem %s769, 24
      %v803 = vld [vmem:[%s802] sm:$0xff]
      %v804 = vsel %vm774, %v803, 0.0
      %v805 = vmul.f32 %v804, %v804
      %v807 = vadd.s32 %v768, 24
      %vm808 = vcmp.eq.s32.totalorder %v807, %v765
      %v809 = vsel %vm808, 0.0, %v805
      %v810 = vadd.f32 %v800, %v809
      %v811 = vadd.f32 %v801, %v805
      %s812 = scalar_lea.vmem %s769, 32
      %v813 = vld [vmem:[%s812] sm:$0xff]
      %v814 = vsel %vm774, %v813, 0.0
      %v815 = vmul.f32 %v814, %v814
      %v817 = vadd.s32 %v768, 32
      %vm818 = vcmp.eq.s32.totalorder %v817, %v765
      %v819 = vsel %vm818, 0.0, %v815
      %v820 = vadd.f32 %v810, %v819
      %v821 = vadd.f32 %v811, %v815
      %s822 = scalar_lea.vmem %s769, 40
      %v823 = vld [vmem:[%s822] sm:$0xff]
      %v824 = vsel %vm774, %v823, 0.0
      %v825 = vmul.f32 %v824, %v824
      %v827 = vadd.s32 %v768, 40
      %vm828 = vcmp.eq.s32.totalorder %v827, %v765
      %v829 = vsel %vm828, 0.0, %v825
      %v830 = vadd.f32 %v820, %v829
      %v831 = vadd.f32 %v821, %v825
      %s832 = scalar_lea.vmem %s769, 48
      %v833 = vld [vmem:[%s832] sm:$0xff]
      %v834 = vsel %vm774, %v833, 0.0
      %v835 = vmul.f32 %v834, %v834
      %v837 = vadd.s32 %v768, 48
      %vm838 = vcmp.eq.s32.totalorder %v837, %v765
      %v839 = vsel %vm838, 0.0, %v835
      %v840 = vadd.f32 %v830, %v839
      %v841 = vadd.f32 %v831, %v835
      %s842 = scalar_lea.vmem %s769, 56
      %v843 = vld [vmem:[%s842] sm:$0xff]
      %v844 = vsel %vm774, %v843, 0.0
      %v845 = vmul.f32 %v844, %v844
      %v847 = vadd.s32 %v768, 56
      %vm848 = vcmp.eq.s32.totalorder %v847, %v765
      %v849 = vsel %vm848, 0.0, %v845
      %v850 = vadd.f32 %v840, %v849
      %v851 = vadd.f32 %v841, %v845
      %s852 = scalar_lea.vmem %s769, 64
      %v853 = vld [vmem:[%s852] sm:$0xff]
      %v854 = vsel %vm774, %v853, 0.0
      %v855 = vmul.f32 %v854, %v854
      %v857 = vadd.s32 %v768, 64
      %vm858 = vcmp.eq.s32.totalorder %v857, %v765
      %v859 = vsel %vm858, 0.0, %v855
      %v860 = vadd.f32 %v850, %v859
      %v861 = vadd.f32 %v851, %v855
      %s862 = scalar_lea.vmem %s769, 72
      %v863 = vld [vmem:[%s862] sm:$0xff]
      %v864 = vsel %vm774, %v863, 0.0
      %v865 = vmul.f32 %v864, %v864
      %v867 = vadd.s32 %v768, 72
      %vm868 = vcmp.eq.s32.totalorder %v867, %v765
      %v869 = vsel %vm868, 0.0, %v865
      %v870 = vadd.f32 %v860, %v869
      %v871 = vadd.f32 %v861, %v865
      %s872 = scalar_lea.vmem %s769, 80
      %v873 = vld [vmem:[%s872] sm:$0xff]
      %v874 = vsel %vm774, %v873, 0.0
      %v875 = vmul.f32 %v874, %v874
      %v877 = vadd.s32 %v768, 80
      %vm878 = vcmp.eq.s32.totalorder %v877, %v765
      %v879 = vsel %vm878, 0.0, %v875
      %v880 = vadd.f32 %v870, %v879
      %v881 = vadd.f32 %v871, %v875
      %s882 = scalar_lea.vmem %s769, 88
      %v883 = vld [vmem:[%s882] sm:$0xff]
      %v884 = vsel %vm774, %v883, 0.0
      %v885 = vmul.f32 %v884, %v884
      %v887 = vadd.s32 %v768, 88
      %vm888 = vcmp.eq.s32.totalorder %v887, %v765
      %v889 = vsel %vm888, 0.0, %v885
      %v890 = vadd.f32 %v880, %v889
      %v891 = vadd.f32 %v881, %v885
      %s892 = scalar_lea.vmem %s769, 96
      %v893 = vld [vmem:[%s892] sm:$0xf]
      %v894 = vsel %vm774, %v893, 0.0
      %v895 = vmul.f32 %v894, %v894
      %v897 = vadd.s32 %v768, 96
      %vm898 = vcmp.eq.s32.totalorder %v897, %v765
      %v899 = vsel %vm898, 0.0, %v895
      %v900 = vadd.f32 %v890, %v899
      %v901 = vadd.f32 %v891, %v895
      %v902 = vlaneseq
      %v903 = vand.u32 %v902, 127
      %v904 = vmov %v903
      %v905 = vlaneseq
      %v906 = vshrl.u32 %v905, 7
      %v907 = vmov %v906
      %s908 = smov [#allocation13]
      %v909 = vlaneseq
      %v910 = vand.u32 %v909, 127
      %vm911 = vcmp.ge.s32.totalorder %v910, 0
      %vm912 = vcmp.lt.s32.totalorder %v910, 100
      %vm913 = vmand %vm911, %vm912
      %v914 = vld [vmem:[%s908] sm:$0xff]
      %v915 = vsel %vm913, %v914, 0.0
      %v916 = vmul.f32 %v915, %v915
      %v917 = vadd.f32 %v900, %v916
      %v918 = vadd.f32 %v901, %v916
      %s919 = scalar_lea.vmem %s908, 8
      %v920 = vld [vmem:[%s919] sm:$0xff]
      %v921 = vsel %vm913, %v920, 0.0
      %v922 = vmul.f32 %v921, %v921
      %v923 = vadd.f32 %v917, %v922
      %v924 = vadd.f32 %v918, %v922
      %s925 = scalar_lea.vmem %s908, 16
      %v926 = vld [vmem:[%s925] sm:$0xff]
      %v927 = vsel %vm913, %v926, 0.0
      %v928 = vmul.f32 %v927, %v927
      %v929 = vadd.f32 %v923, %v928
      %v930 = vadd.f32 %v924, %v928
      %s931 = scalar_lea.vmem %s908, 24
      %v932 = vld [vmem:[%s931] sm:$0xff]
      %v933 = vsel %vm913, %v932, 0.0
      %v934 = vmul.f32 %v933, %v933
      %v935 = vadd.f32 %v929, %v934
      %v936 = vadd.f32 %v930, %v934
      %s937 = scalar_lea.vmem %s908, 32
      %v938 = vld [vmem:[%s937] sm:$0xff]
      %v939 = vsel %vm913, %v938, 0.0
      %v940 = vmul.f32 %v939, %v939
      %v941 = vadd.f32 %v935, %v940
      %v942 = vadd.f32 %v936, %v940
      %s943 = scalar_lea.vmem %s908, 40
      %v944 = vld [vmem:[%s943] sm:$0xff]
      %v945 = vsel %vm913, %v944, 0.0
      %v946 = vmul.f32 %v945, %v945
      %v947 = vadd.f32 %v941, %v946
      %v948 = vadd.f32 %v942, %v946
      %s949 = scalar_lea.vmem %s908, 48
      %v950 = vld [vmem:[%s949] sm:$0xff]
      %v951 = vsel %vm913, %v950, 0.0
      %v952 = vmul.f32 %v951, %v951
      %v953 = vadd.f32 %v947, %v952
      %v954 = vadd.f32 %v948, %v952
      %s955 = scalar_lea.vmem %s908, 56
      %v956 = vld [vmem:[%s955] sm:$0xff]
      %v957 = vsel %vm913, %v956, 0.0
      %v958 = vmul.f32 %v957, %v957
      %v959 = vadd.f32 %v953, %v958
      %v960 = vadd.f32 %v954, %v958
      %s961 = scalar_lea.vmem %s908, 64
      %v962 = vld [vmem:[%s961] sm:$0xff]
      %v963 = vsel %vm913, %v962, 0.0
      %v964 = vmul.f32 %v963, %v963
      %v965 = vadd.f32 %v959, %v964
      %v966 = vadd.f32 %v960, %v964
      %s967 = scalar_lea.vmem %s908, 72
      %v968 = vld [vmem:[%s967] sm:$0xff]
      %v969 = vsel %vm913, %v968, 0.0
      %v970 = vmul.f32 %v969, %v969
      %v971 = vadd.f32 %v965, %v970
      %v972 = vadd.f32 %v966, %v970
      %s973 = scalar_lea.vmem %s908, 80
      %v974 = vld [vmem:[%s973] sm:$0xff]
      %v975 = vsel %vm913, %v974, 0.0
      %v976 = vmul.f32 %v975, %v975
      %v977 = vadd.f32 %v971, %v976
      %v978 = vadd.f32 %v972, %v976
      %s979 = scalar_lea.vmem %s908, 88
      %v980 = vld [vmem:[%s979] sm:$0xff]
      %v981 = vsel %vm913, %v980, 0.0
      %v982 = vmul.f32 %v981, %v981
      %v983 = vadd.f32 %v977, %v982
      %v984 = vadd.f32 %v978, %v982
      %s985 = scalar_lea.vmem %s908, 96
      %v986 = vld [vmem:[%s985] sm:$0xf]
      %v987 = vsel %vm913, %v986, 0.0
      %v988 = vmul.f32 %v987, %v987
      %v989 = vadd.f32 %v983, %v988
      %v990 = vadd.f32 %v984, %v988
      %v991 = vlaneseq
      %v992 = vand.u32 %v991, 127
      %v993 = vmov %v992
      %v994 = vlaneseq
      %v995 = vshrl.u32 %v994, 7
      %v996 = vmov %v995
      %s997 = smov [#allocation14]
      %v998 = vlaneseq
      %v999 = vand.u32 %v998, 127
      %vm1000 = vcmp.ge.s32.totalorder %v999, 0
      %vm1001 = vcmp.lt.s32.totalorder %v999, 100
      %vm1002 = vmand %vm1000, %vm1001
      %v1003 = vld [vmem:[%s997] sm:$0xff]
      %v1004 = vsel %vm1002, %v1003, 0.0
      %v1005 = vmul.f32 %v1004, %v1004
      %v1006 = vadd.f32 %v989, %v1005
      %v1007 = vadd.f32 %v990, %v1005
      %s1008 = scalar_lea.vmem %s997, 8
      %v1009 = vld [vmem:[%s1008] sm:$0xff]
      %v1010 = vsel %vm1002, %v1009, 0.0
      %v1011 = vmul.f32 %v1010, %v1010
      %v1012 = vadd.f32 %v1006, %v1011
      %v1013 = vadd.f32 %v1007, %v1011
      %s1014 = scalar_lea.vmem %s997, 16
      %v1015 = vld [vmem:[%s1014] sm:$0xff]
      %v1016 = vsel %vm1002, %v1015, 0.0
      %v1017 = vmul.f32 %v1016, %v1016
      %v1018 = vadd.f32 %v1012, %v1017
      %v1019 = vadd.f32 %v1013, %v1017
      %s1020 = scalar_lea.vmem %s997, 24
      %v1021 = vld [vmem:[%s1020] sm:$0xff]
      %v1022 = vsel %vm1002, %v1021, 0.0
      %v1023 = vmul.f32 %v1022, %v1022
      %v1024 = vadd.f32 %v1018, %v1023
      %v1025 = vadd.f32 %v1019, %v1023
      %s1026 = scalar_lea.vmem %s997, 32
      %v1027 = vld [vmem:[%s1026] sm:$0xff]
      %v1028 = vsel %vm1002, %v1027, 0.0
      %v1029 = vmul.f32 %v1028, %v1028
      %v1030 = vadd.f32 %v1024, %v1029
      %v1031 = vadd.f32 %v1025, %v1029
      %s1032 = scalar_lea.vmem %s997, 40
      %v1033 = vld [vmem:[%s1032] sm:$0xff]
      %v1034 = vsel %vm1002, %v1033, 0.0
      %v1035 = vmul.f32 %v1034, %v1034
      %v1036 = vadd.f32 %v1030, %v1035
      %v1037 = vadd.f32 %v1031, %v1035
      %s1038 = scalar_lea.vmem %s997, 48
      %v1039 = vld [vmem:[%s1038] sm:$0xff]
      %v1040 = vsel %vm1002, %v1039, 0.0
      %v1041 = vmul.f32 %v1040, %v1040
      %v1042 = vadd.f32 %v1036, %v1041
      %v1043 = vadd.f32 %v1037, %v1041
      %s1044 = scalar_lea.vmem %s997, 56
      %v1045 = vld [vmem:[%s1044] sm:$0xff]
      %v1046 = vsel %vm1002, %v1045, 0.0
      %v1047 = vmul.f32 %v1046, %v1046
      %v1048 = vadd.f32 %v1042, %v1047
      %v1049 = vadd.f32 %v1043, %v1047
      %s1050 = scalar_lea.vmem %s997, 64
      %v1051 = vld [vmem:[%s1050] sm:$0xff]
      %v1052 = vsel %vm1002, %v1051, 0.0
      %v1053 = vmul.f32 %v1052, %v1052
      %v1054 = vadd.f32 %v1048, %v1053
      %v1055 = vadd.f32 %v1049, %v1053
      %s1056 = scalar_lea.vmem %s997, 72
      %v1057 = vld [vmem:[%s1056] sm:$0xff]
      %v1058 = vsel %vm1002, %v1057, 0.0
      %v1059 = vmul.f32 %v1058, %v1058
      %v1060 = vadd.f32 %v1054, %v1059
      %v1061 = vadd.f32 %v1055, %v1059
      %s1062 = scalar_lea.vmem %s997, 80
      %v1063 = vld [vmem:[%s1062] sm:$0xff]
      %v1064 = vsel %vm1002, %v1063, 0.0
      %v1065 = vmul.f32 %v1064, %v1064
      %v1066 = vadd.f32 %v1060, %v1065
      %v1067 = vadd.f32 %v1061, %v1065
      %s1068 = scalar_lea.vmem %s997, 88
      %v1069 = vld [vmem:[%s1068] sm:$0xff]
      %v1070 = vsel %vm1002, %v1069, 0.0
      %v1071 = vmul.f32 %v1070, %v1070
      %v1072 = vadd.f32 %v1066, %v1071
      %v1073 = vadd.f32 %v1067, %v1071
      %s1074 = scalar_lea.vmem %s997, 96
      %v1075 = vld [vmem:[%s1074] sm:$0xf]
      %v1076 = vsel %vm1002, %v1075, 0.0
      %v1077 = vmul.f32 %v1076, %v1076
      %v1078 = vadd.f32 %v1072, %v1077
      %v1079 = vadd.f32 %v1073, %v1077
      %v1080 = vlaneseq
      %v1081 = vand.u32 %v1080, 127
      %v1082 = vmov %v1081
      %v1083 = vlaneseq
      %v1084 = vshrl.u32 %v1083, 7
      %v1085 = vmov %v1084
      %s1086 = smov [#allocation15]
      %v1087 = vlaneseq
      %v1088 = vand.u32 %v1087, 127
      %vm1089 = vcmp.ge.s32.totalorder %v1088, 0
      %vm1090 = vcmp.lt.s32.totalorder %v1088, 100
      %vm1091 = vmand %vm1089, %vm1090
      %v1092 = vld [vmem:[%s1086] sm:$0xff]
      %v1093 = vsel %vm1091, %v1092, 0.0
      %v1094 = vmul.f32 %v1093, %v1093
      %vm1097 = vcmp.eq.s32.totalorder %v1085, %v1082
      %v1098 = vsel %vm1097, 0.0, %v1094
      %v1099 = vadd.f32 %v1078, %v1098
      %v1100 = vadd.f32 %v1079, %v1094
      %s1101 = scalar_lea.vmem %s1086, 8
      %v1102 = vld [vmem:[%s1101] sm:$0xff]
      %v1103 = vsel %vm1091, %v1102, 0.0
      %v1104 = vmul.f32 %v1103, %v1103
      %v1106 = vadd.s32 %v1085, 8
      %vm1107 = vcmp.eq.s32.totalorder %v1106, %v1082
      %v1108 = vsel %vm1107, 0.0, %v1104
      %v1109 = vadd.f32 %v1099, %v1108
      %v1110 = vadd.f32 %v1100, %v1104
      %s1111 = scalar_lea.vmem %s1086, 16
      %v1112 = vld [vmem:[%s1111] sm:$0xff]
      %v1113 = vsel %vm1091, %v1112, 0.0
      %v1114 = vmul.f32 %v1113, %v1113
      %v1116 = vadd.s32 %v1085, 16
      %vm1117 = vcmp.eq.s32.totalorder %v1116, %v1082
      %v1118 = vsel %vm1117, 0.0, %v1114
      %v1119 = vadd.f32 %v1109, %v1118
      %v1120 = vadd.f32 %v1110, %v1114
      %s1121 = scalar_lea.vmem %s1086, 24
      %v1122 = vld [vmem:[%s1121] sm:$0xff]
      %v1123 = vsel %vm1091, %v1122, 0.0
      %v1124 = vmul.f32 %v1123, %v1123
      %v1126 = vadd.s32 %v1085, 24
      %vm1127 = vcmp.eq.s32.totalorder %v1126, %v1082
      %v1128 = vsel %vm1127, 0.0, %v1124
      %v1129 = vadd.f32 %v1119, %v1128
      %v1130 = vadd.f32 %v1120, %v1124
      %s1131 = scalar_lea.vmem %s1086, 32
      %v1132 = vld [vmem:[%s1131] sm:$0xff]
      %v1133 = vsel %vm1091, %v1132, 0.0
      %v1134 = vmul.f32 %v1133, %v1133
      %v1136 = vadd.s32 %v1085, 32
      %vm1137 = vcmp.eq.s32.totalorder %v1136, %v1082
      %v1138 = vsel %vm1137, 0.0, %v1134
      %v1139 = vadd.f32 %v1129, %v1138
      %v1140 = vadd.f32 %v1130, %v1134
      %s1141 = scalar_lea.vmem %s1086, 40
      %v1142 = vld [vmem:[%s1141] sm:$0xff]
      %v1143 = vsel %vm1091, %v1142, 0.0
      %v1144 = vmul.f32 %v1143, %v1143
      %v1146 = vadd.s32 %v1085, 40
      %vm1147 = vcmp.eq.s32.totalorder %v1146, %v1082
      %v1148 = vsel %vm1147, 0.0, %v1144
      %v1149 = vadd.f32 %v1139, %v1148
      %v1150 = vadd.f32 %v1140, %v1144
      %s1151 = scalar_lea.vmem %s1086, 48
      %v1152 = vld [vmem:[%s1151] sm:$0xff]
      %v1153 = vsel %vm1091, %v1152, 0.0
      %v1154 = vmul.f32 %v1153, %v1153
      %v1156 = vadd.s32 %v1085, 48
      %vm1157 = vcmp.eq.s32.totalorder %v1156, %v1082
      %v1158 = vsel %vm1157, 0.0, %v1154
      %v1159 = vadd.f32 %v1149, %v1158
      %v1160 = vadd.f32 %v1150, %v1154
      %s1161 = scalar_lea.vmem %s1086, 56
      %v1162 = vld [vmem:[%s1161] sm:$0xff]
      %v1163 = vsel %vm1091, %v1162, 0.0
      %v1164 = vmul.f32 %v1163, %v1163
      %v1166 = vadd.s32 %v1085, 56
      %vm1167 = vcmp.eq.s32.totalorder %v1166, %v1082
      %v1168 = vsel %vm1167, 0.0, %v1164
      %v1169 = vadd.f32 %v1159, %v1168
      %v1170 = vadd.f32 %v1160, %v1164
      %s1171 = scalar_lea.vmem %s1086, 64
      %v1172 = vld [vmem:[%s1171] sm:$0xff]
      %v1173 = vsel %vm1091, %v1172, 0.0
      %v1174 = vmul.f32 %v1173, %v1173
      %v1176 = vadd.s32 %v1085, 64
      %vm1177 = vcmp.eq.s32.totalorder %v1176, %v1082
      %v1178 = vsel %vm1177, 0.0, %v1174
      %v1179 = vadd.f32 %v1169, %v1178
      %v1180 = vadd.f32 %v1170, %v1174
      %s1181 = scalar_lea.vmem %s1086, 72
      %v1182 = vld [vmem:[%s1181] sm:$0xff]
      %v1183 = vsel %vm1091, %v1182, 0.0
      %v1184 = vmul.f32 %v1183, %v1183
      %v1186 = vadd.s32 %v1085, 72
      %vm1187 = vcmp.eq.s32.totalorder %v1186, %v1082
      %v1188 = vsel %vm1187, 0.0, %v1184
      %v1189 = vadd.f32 %v1179, %v1188
      %v1190 = vadd.f32 %v1180, %v1184
      %s1191 = scalar_lea.vmem %s1086, 80
      %v1192 = vld [vmem:[%s1191] sm:$0xff]
      %v1193 = vsel %vm1091, %v1192, 0.0
      %v1194 = vmul.f32 %v1193, %v1193
      %v1196 = vadd.s32 %v1085, 80
      %vm1197 = vcmp.eq.s32.totalorder %v1196, %v1082
      %v1198 = vsel %vm1197, 0.0, %v1194
      %v1199 = vadd.f32 %v1189, %v1198
      %v1200 = vadd.f32 %v1190, %v1194
      %s1201 = scalar_lea.vmem %s1086, 88
      %v1202 = vld [vmem:[%s1201] sm:$0xff]
      %v1203 = vsel %vm1091, %v1202, 0.0
      %v1204 = vmul.f32 %v1203, %v1203
      %v1206 = vadd.s32 %v1085, 88
      %vm1207 = vcmp.eq.s32.totalorder %v1206, %v1082
      %v1208 = vsel %vm1207, 0.0, %v1204
      %v1209 = vadd.f32 %v1199, %v1208
      %v1210 = vadd.f32 %v1200, %v1204
      %s1211 = scalar_lea.vmem %s1086, 96
      %v1212 = vld [vmem:[%s1211] sm:$0xf]
      %v1213 = vsel %vm1091, %v1212, 0.0
      %v1214 = vmul.f32 %v1213, %v1213
      %v1216 = vadd.s32 %v1085, 96
      %vm1217 = vcmp.eq.s32.totalorder %v1216, %v1082
      %v1218 = vsel %vm1217, 0.0, %v1214
      %v1219 = vadd.f32 %v1209, %v1218
      %v1220 = vadd.f32 %v1210, %v1214
      %1221 = vadd.xlane.f32.xlu0 %v1220
      %v1222 = vpop.xlane.xlu0 %1221
      %v1223 = vrot.slane %v1222, 4
      %v1224 = vadd.f32 %v1222, %v1223
      %v1225 = vrot.slane %v1224, 2
      %v1226 = vadd.f32 %v1224, %v1225
      %v1227 = vrot.slane %v1226, 1
      %v1228 = vadd.f32 %v1226, %v1227
      %1229 = vadd.xlane.f32.xlu0 %v1219
      %v1230 = vpop.xlane.xlu0 %1229
      %v1231 = vrot.slane %v1230, 4
      %v1232 = vadd.f32 %v1230, %v1231
      %v1233 = vrot.slane %v1232, 2
      %v1234 = vadd.f32 %v1232, %v1233
      %v1235 = vrot.slane %v1234, 1
      %v1236 = vadd.f32 %v1234, %v1235
      %s1237 = vtos %v1236
      %s1238 = vtos %v1228
      %s1239 = smul.f32 1e-10, %s1238
      %p1240 = scmp.le.f32.partialorder %s1237, %s1239
      %p1241 = scmp.ge.s32.totalorder %s762, 15
      %p1242 = por %p1240, %p1241
    $region92: #{custom-call.2} parent=1 // loop_header_branch
      %5578 = sbr.rel (%p1242) target = $region96
    $region93: #{custom-call.2} parent=1 // loop_body
      loop: start=0, step=1, limit=199
      $region97: #{custom-call.2} parent=93 // loop_pre_header
        _
      $region98: #{custom-call.2} parent=93 // loop_header
        %s1244 = sphi 0, %s1248
        %p1245 = scmp.ge.s32.totalorder %s1244, 199
      $region99: #{custom-call.2} parent=93 // loop_header_branch
        %1247 = sbr.rel (%p1245) target = $region103
      $region100: #{custom-call.2} parent=93 // loop_body
        #allocation16 [shape = 'f32[1024]{0}', space=vmem, size = 0x1000, scoped, tag = 'a_tl_diag vmem']
        #allocation17 [shape = 'f32[1024]{0}', space=vmem, size = 0x1000, scoped, tag = 'a_tr_diag vmem']
        #allocation18 [shape = 'f32[1024]{0}', space=vmem, size = 0x1000, scoped, tag = 'a_br_diag vmem']
        #allocation19 [shape = 'f32[1024]{0}', space=vmem, size = 0x1000, scoped, tag = 'rt1 vmem']
        #allocation20 [shape = 'f32[1024]{0}', space=vmem, size = 0x1000, scoped, tag = 'rt2 vmem']
        #allocation21 [shape = 'f32[1024]{0}', space=vmem, size = 0x1000, scoped, tag = 'c vmem']
        #allocation22 [shape = 'f32[1024]{0}', space=vmem, size = 0x1000, scoped, tag = 's vmem']
        #allocation23 [shape = 'f32[53248]{0}', space=vmem, size = 0x34000, scoped, tag = 'c broadcast']
        #allocation24 [shape = 'f32[53248]{0}', space=vmem, size = 0x34000, scoped, tag = 's broadcast']
        %s1249 = smov [#allocation12]
        %s1250 = smov [#allocation16]
        %v1251 = vlaneseq
        %v1252 = vand.u32 %v1251, 127
        %v1253 = vmov %v1252
        %v1254 = vlaneseq
        %v1255 = vshrl.u32 %v1254, 7
        %v1256 = vmov %v1255
        %v1257 = vld [vmem:[%s1249] sm:$0xff]
        %vm1260 = vcmp.eq.s32.totalorder %v1256, %v1253
        %v1261 = vsel %vm1260, %v1257, 0.0
        %s1262 = scalar_lea.vmem %s1249, 8
        %v1263 = vld [vmem:[%s1262] sm:$0xff]
        %v1265 = vadd.s32 %v1256, 8
        %vm1266 = vcmp.eq.s32.totalorder %v1265, %v1253
        %v1267 = vsel %vm1266, %v1263, %v1261
        %s1268 = scalar_lea.vmem %s1249, 16
        %v1269 = vld [vmem:[%s1268] sm:$0xff]
        %v1271 = vadd.s32 %v1256, 16
        %vm1272 = vcmp.eq.s32.totalorder %v1271, %v1253
        %v1273 = vsel %vm1272, %v1269, %v1267
        %s1274 = scalar_lea.vmem %s1249, 24
        %v1275 = vld [vmem:[%s1274] sm:$0xff]
        %v1277 = vadd.s32 %v1256, 24
        %vm1278 = vcmp.eq.s32.totalorder %v1277, %v1253
        %v1279 = vsel %vm1278, %v1275, %v1273
        %s1280 = scalar_lea.vmem %s1249, 32
        %v1281 = vld [vmem:[%s1280] sm:$0xff]
        %v1283 = vadd.s32 %v1256, 32
        %vm1284 = vcmp.eq.s32.totalorder %v1283, %v1253
        %v1285 = vsel %vm1284, %v1281, %v1279
        %s1286 = scalar_lea.vmem %s1249, 40
        %v1287 = vld [vmem:[%s1286] sm:$0xff]
        %v1289 = vadd.s32 %v1256, 40
        %vm1290 = vcmp.eq.s32.totalorder %v1289, %v1253
        %v1291 = vsel %vm1290, %v1287, %v1285
        %s1292 = scalar_lea.vmem %s1249, 48
        %v1293 = vld [vmem:[%s1292] sm:$0xff]
        %v1295 = vadd.s32 %v1256, 48
        %vm1296 = vcmp.eq.s32.totalorder %v1295, %v1253
        %v1297 = vsel %vm1296, %v1293, %v1291
        %s1298 = scalar_lea.vmem %s1249, 56
        %v1299 = vld [vmem:[%s1298] sm:$0xff]
        %v1301 = vadd.s32 %v1256, 56
        %vm1302 = vcmp.eq.s32.totalorder %v1301, %v1253
        %v1303 = vsel %vm1302, %v1299, %v1297
        %s1304 = scalar_lea.vmem %s1249, 64
        %v1305 = vld [vmem:[%s1304] sm:$0xff]
        %v1307 = vadd.s32 %v1256, 64
        %vm1308 = vcmp.eq.s32.totalorder %v1307, %v1253
        %v1309 = vsel %vm1308, %v1305, %v1303
        %s1310 = scalar_lea.vmem %s1249, 72
        %v1311 = vld [vmem:[%s1310] sm:$0xff]
        %v1313 = vadd.s32 %v1256, 72
        %vm1314 = vcmp.eq.s32.totalorder %v1313, %v1253
        %v1315 = vsel %vm1314, %v1311, %v1309
        %s1316 = scalar_lea.vmem %s1249, 80
        %v1317 = vld [vmem:[%s1316] sm:$0xff]
        %v1319 = vadd.s32 %v1256, 80
        %vm1320 = vcmp.eq.s32.totalorder %v1319, %v1253
        %v1321 = vsel %vm1320, %v1317, %v1315
        %s1322 = scalar_lea.vmem %s1249, 88
        %v1323 = vld [vmem:[%s1322] sm:$0xff]
        %v1325 = vadd.s32 %v1256, 88
        %vm1326 = vcmp.eq.s32.totalorder %v1325, %v1253
        %v1327 = vsel %vm1326, %v1323, %v1321
        %s1328 = scalar_lea.vmem %s1249, 96
        %v1329 = vld [vmem:[%s1328] sm:$0xf]
        %v1331 = vadd.s32 %v1256, 96
        %vm1332 = vcmp.eq.s32.totalorder %v1331, %v1253
        %v1333 = vsel %vm1332, %v1329, %v1327
        %v1334 = vrot.slane %v1333, 4
        %v1335 = vadd.f32 %v1333, %v1334
        %v1336 = vrot.slane %v1335, 2
        %v1337 = vadd.f32 %v1335, %v1336
        %v1338 = vrot.slane %v1337, 1
        %v1339 = vadd.f32 %v1337, %v1338
        %1340 = vst [vmem:[%s1250] sm:$0x1] %v1339
        %s1341 = smov [#allocation13]
        %s1342 = smov [#allocation17]
        %v1343 = vlaneseq
        %v1344 = vand.u32 %v1343, 127
        %v1345 = vmov %v1344
        %v1346 = vlaneseq
        %v1347 = vshrl.u32 %v1346, 7
        %v1348 = vmov %v1347
        %v1349 = vld [vmem:[%s1341] sm:$0xff]
        %vm1352 = vcmp.eq.s32.totalorder %v1348, %v1345
        %v1353 = vsel %vm1352, %v1349, 0.0
        %s1354 = scalar_lea.vmem %s1341, 8
        %v1355 = vld [vmem:[%s1354] sm:$0xff]
        %v1357 = vadd.s32 %v1348, 8
        %vm1358 = vcmp.eq.s32.totalorder %v1357, %v1345
        %v1359 = vsel %vm1358, %v1355, %v1353
        %s1360 = scalar_lea.vmem %s1341, 16
        %v1361 = vld [vmem:[%s1360] sm:$0xff]
        %v1363 = vadd.s32 %v1348, 16
        %vm1364 = vcmp.eq.s32.totalorder %v1363, %v1345
        %v1365 = vsel %vm1364, %v1361, %v1359
        %s1366 = scalar_lea.vmem %s1341, 24
        %v1367 = vld [vmem:[%s1366] sm:$0xff]
        %v1369 = vadd.s32 %v1348, 24
        %vm1370 = vcmp.eq.s32.totalorder %v1369, %v1345
        %v1371 = vsel %vm1370, %v1367, %v1365
        %s1372 = scalar_lea.vmem %s1341, 32
        %v1373 = vld [vmem:[%s1372] sm:$0xff]
        %v1375 = vadd.s32 %v1348, 32
        %vm1376 = vcmp.eq.s32.totalorder %v1375, %v1345
        %v1377 = vsel %vm1376, %v1373, %v1371
        %s1378 = scalar_lea.vmem %s1341, 40
        %v1379 = vld [vmem:[%s1378] sm:$0xff]
        %v1381 = vadd.s32 %v1348, 40
        %vm1382 = vcmp.eq.s32.totalorder %v1381, %v1345
        %v1383 = vsel %vm1382, %v1379, %v1377
        %s1384 = scalar_lea.vmem %s1341, 48
        %v1385 = vld [vmem:[%s1384] sm:$0xff]
        %v1387 = vadd.s32 %v1348, 48
        %vm1388 = vcmp.eq.s32.totalorder %v1387, %v1345
        %v1389 = vsel %vm1388, %v1385, %v1383
        %s1390 = scalar_lea.vmem %s1341, 56
        %v1391 = vld [vmem:[%s1390] sm:$0xff]
        %v1393 = vadd.s32 %v1348, 56
        %vm1394 = vcmp.eq.s32.totalorder %v1393, %v1345
        %v1395 = vsel %vm1394, %v1391, %v1389
        %s1396 = scalar_lea.vmem %s1341, 64
        %v1397 = vld [vmem:[%s1396] sm:$0xff]
        %v1399 = vadd.s32 %v1348, 64
        %vm1400 = vcmp.eq.s32.totalorder %v1399, %v1345
        %v1401 = vsel %vm1400, %v1397, %v1395
        %s1402 = scalar_lea.vmem %s1341, 72
        %v1403 = vld [vmem:[%s1402] sm:$0xff]
        %v1405 = vadd.s32 %v1348, 72
        %vm1406 = vcmp.eq.s32.totalorder %v1405, %v1345
        %v1407 = vsel %vm1406, %v1403, %v1401
        %s1408 = scalar_lea.vmem %s1341, 80
        %v1409 = vld [vmem:[%s1408] sm:$0xff]
        %v1411 = vadd.s32 %v1348, 80
        %vm1412 = vcmp.eq.s32.totalorder %v1411, %v1345
        %v1413 = vsel %vm1412, %v1409, %v1407
        %s1414 = scalar_lea.vmem %s1341, 88
        %v1415 = vld [vmem:[%s1414] sm:$0xff]
        %v1417 = vadd.s32 %v1348, 88
        %vm1418 = vcmp.eq.s32.totalorder %v1417, %v1345
        %v1419 = vsel %vm1418, %v1415, %v1413
        %s1420 = scalar_lea.vmem %s1341, 96
        %v1421 = vld [vmem:[%s1420] sm:$0xf]
        %v1423 = vadd.s32 %v1348, 96
        %vm1424 = vcmp.eq.s32.totalorder %v1423, %v1345
        %v1425 = vsel %vm1424, %v1421, %v1419
        %v1426 = vrot.slane %v1425, 4
        %v1427 = vadd.f32 %v1425, %v1426
        %v1428 = vrot.slane %v1427, 2
        %v1429 = vadd.f32 %v1427, %v1428
        %v1430 = vrot.slane %v1429, 1
        %v1431 = vadd.f32 %v1429, %v1430
        %1432 = vst [vmem:[%s1342] sm:$0x1] %v1431
        %s1433 = smov [#allocation15]
        %s1434 = smov [#allocation18]
        %v1435 = vlaneseq
        %v1436 = vand.u32 %v1435, 127
        %v1437 = vmov %v1436
        %v1438 = vlaneseq
        %v1439 = vshrl.u32 %v1438, 7
        %v1440 = vmov %v1439
        %v1441 = vld [vmem:[%s1433] sm:$0xff]
        %vm1444 = vcmp.eq.s32.totalorder %v1440, %v1437
        %v1445 = vsel %vm1444, %v1441, 0.0
        %s1446 = scalar_lea.vmem %s1433, 8
        %v1447 = vld [vmem:[%s1446] sm:$0xff]
        %v1449 = vadd.s32 %v1440, 8
        %vm1450 = vcmp.eq.s32.totalorder %v1449, %v1437
        %v1451 = vsel %vm1450, %v1447, %v1445
        %s1452 = scalar_lea.vmem %s1433, 16
        %v1453 = vld [vmem:[%s1452] sm:$0xff]
        %v1455 = vadd.s32 %v1440, 16
        %vm1456 = vcmp.eq.s32.totalorder %v1455, %v1437
        %v1457 = vsel %vm1456, %v1453, %v1451
        %s1458 = scalar_lea.vmem %s1433, 24
        %v1459 = vld [vmem:[%s1458] sm:$0xff]
        %v1461 = vadd.s32 %v1440, 24
        %vm1462 = vcmp.eq.s32.totalorder %v1461, %v1437
        %v1463 = vsel %vm1462, %v1459, %v1457
        %s1464 = scalar_lea.vmem %s1433, 32
        %v1465 = vld [vmem:[%s1464] sm:$0xff]
        %v1467 = vadd.s32 %v1440, 32
        %vm1468 = vcmp.eq.s32.totalorder %v1467, %v1437
        %v1469 = vsel %vm1468, %v1465, %v1463
        %s1470 = scalar_lea.vmem %s1433, 40
        %v1471 = vld [vmem:[%s1470] sm:$0xff]
        %v1473 = vadd.s32 %v1440, 40
        %vm1474 = vcmp.eq.s32.totalorder %v1473, %v1437
        %v1475 = vsel %vm1474, %v1471, %v1469
        %s1476 = scalar_lea.vmem %s1433, 48
        %v1477 = vld [vmem:[%s1476] sm:$0xff]
        %v1479 = vadd.s32 %v1440, 48
        %vm1480 = vcmp.eq.s32.totalorder %v1479, %v1437
        %v1481 = vsel %vm1480, %v1477, %v1475
        %s1482 = scalar_lea.vmem %s1433, 56
        %v1483 = vld [vmem:[%s1482] sm:$0xff]
        %v1485 = vadd.s32 %v1440, 56
        %vm1486 = vcmp.eq.s32.totalorder %v1485, %v1437
        %v1487 = vsel %vm1486, %v1483, %v1481
        %s1488 = scalar_lea.vmem %s1433, 64
        %v1489 = vld [vmem:[%s1488] sm:$0xff]
        %v1491 = vadd.s32 %v1440, 64
        %vm1492 = vcmp.eq.s32.totalorder %v1491, %v1437
        %v1493 = vsel %vm1492, %v1489, %v1487
        %s1494 = scalar_lea.vmem %s1433, 72
        %v1495 = vld [vmem:[%s1494] sm:$0xff]
        %v1497 = vadd.s32 %v1440, 72
        %vm1498 = vcmp.eq.s32.totalorder %v1497, %v1437
        %v1499 = vsel %vm1498, %v1495, %v1493
        %s1500 = scalar_lea.vmem %s1433, 80
        %v1501 = vld [vmem:[%s1500] sm:$0xff]
        %v1503 = vadd.s32 %v1440, 80
        %vm1504 = vcmp.eq.s32.totalorder %v1503, %v1437
        %v1505 = vsel %vm1504, %v1501, %v1499
        %s1506 = scalar_lea.vmem %s1433, 88
        %v1507 = vld [vmem:[%s1506] sm:$0xff]
        %v1509 = vadd.s32 %v1440, 88
        %vm1510 = vcmp.eq.s32.totalorder %v1509, %v1437
        %v1511 = vsel %vm1510, %v1507, %v1505
        %s1512 = scalar_lea.vmem %s1433, 96
        %v1513 = vld [vmem:[%s1512] sm:$0xf]
        %v1515 = vadd.s32 %v1440, 96
        %vm1516 = vcmp.eq.s32.totalorder %v1515, %v1437
        %v1517 = vsel %vm1516, %v1513, %v1511
        %v1518 = vrot.slane %v1517, 4
        %v1519 = vadd.f32 %v1517, %v1518
        %v1520 = vrot.slane %v1519, 2
        %v1521 = vadd.f32 %v1519, %v1520
        %v1522 = vrot.slane %v1521, 1
        %v1523 = vadd.f32 %v1521, %v1522
        %1524 = vst [vmem:[%s1434] sm:$0x1] %v1523
        %s1525 = smov [#allocation21]
        %s1526 = smov [#allocation22]
        %s1527 = smov [#allocation16]
        %v1528 = vld [vmem:[%s1527] sm:$0xff]
        %s1529 = smov [#allocation17]
        %v1530 = vld [vmem:[%s1529] sm:$0xff]
        %s1531 = smov [#allocation18]
        %v1532 = vld [vmem:[%s1531] sm:$0xff]
        %v1533 = vsub.f32 %v1532, %v1528
        %v1534 = vmul.f32 2.0, %v1530
        %v1535 = vrcp.pop %v1534
        %v1536 = vmul.f32 %v1533, %v1535
        %vm1537 = vcmp.ge.f32.partialorder %v1536, 0.0
        %v1538 = vmul.f32 %v1536, %v1536
        %v1539 = vadd.f32 1.0, %v1538
        %v1540 = vrsqrt.pop %v1539
        %v1541 = vmul.f32 %v1539, %v1540
        %vm1542 = vcmp.eq.f32.partialorder %v1539, inf
        %v1543 = vsel %vm1542, %v1539, %v1541
        %vm1544 = vcmp.eq.f32.partialorder %v1539, 0.0
        %v1545 = vand.u32 %v1539, 2147483648
        %v1546 = vsel %vm1544, %v1545, %v1543
        %v1547 = vxor.u32 %v1546, 2147483648
        %v1548 = vsel %vm1537, %v1546, %v1547
        %v1549 = vadd.f32 %v1536, %v1548
        %v1550 = vrcp.pop %v1549
        %v1551 = vand.u32 2147483647, %v1528
        %v1552 = vand.u32 2147483647, %v1530
        %v1553 = vand.u32 2147483647, %v1532
        %v1554 = vmin.f32 %v1551, %v1553
        %v1555 = vmul.f32 1.1920929e-08, %v1554
        %vm1556 = vcmp.le.f32.partialorder %v1552, %v1555
        %v1557 = vsel %vm1556, 0.0, %v1550
        %v1558 = vmul.f32 %v1557, %v1557
        %v1559 = vadd.f32 1.0, %v1558
        %v1560 = vrsqrt.pop %v1559
        %v1561 = vmul.f32 %v1557, %v1560
        %v1562 = vmul.f32 %v1557, %v1530
        %v1563 = vsub.f32 %v1528, %v1562
        %v1564 = vmul.f32 %v1557, %v1530
        %v1565 = vadd.f32 %v1532, %v1564
        %s1566 = smov [#allocation19]
        %1567 = vst [vmem:[%s1566] sm:$0xff] %v1563
        %s1568 = smov [#allocation20]
        %1569 = vst [vmem:[%s1568] sm:$0xff] %v1565
        %s1570 = smov %s1525
        %1571 = vst [vmem:[%s1570] sm:$0xff] %v1560
        %s1572 = smov %s1526
        %1573 = vst [vmem:[%s1572] sm:$0xff] %v1561
        %s1574 = smov [#allocation21]
        %v1575 = vld [vmem:[%s1574] ss:$0 sm:$0xff]
        %v1576 = vlaneseq
        %v1577 = vand.u32 %v1576, 127
        %v1578 = vmov %v1577
        %v1579 = vlaneseq
        %v1580 = vshrl.u32 %v1579, 7
        %v1581 = vmov %v1580
        %vm1583 = vcmp.eq.s32.totalorder %v1581, %v1578
        %v1584 = vsel %vm1583, %v1575, 0.0
        %1585 = vadd.xlane.f32.xlu0 %v1584
        %v1586 = vpop.xlane.xlu0 %1585
        %s1587 = smov [#allocation23]
        %1588 = vst [vmem:[%s1587] sm:$0xff] %v1586
        %s1589 = smov [#allocation21]
        %v1590 = vld [vmem:[%s1589] ss:$0 sm:$0xff]
        %v1591 = vlaneseq
        %v1592 = vand.u32 %v1591, 127
        %v1593 = vmov %v1592
        %v1594 = vlaneseq
        %v1595 = vshrl.u32 %v1594, 7
        %v1596 = vmov %v1595
        %v1597 = vadd.s32 %v1596, 8
        %vm1598 = vcmp.eq.s32.totalorder %v1597, %v1593
        %v1599 = vsel %vm1598, %v1590, 0.0
        %1600 = vadd.xlane.f32.xlu0 %v1599
        %v1601 = vpop.xlane.xlu0 %1600
        %s1602 = smov [#allocation23]
        %s1603 = scalar_lea.vmem %s1602, 8
        %1604 = vst [vmem:[%s1603] sm:$0xff] %v1601
        %s1605 = smov [#allocation21]
        %v1606 = vld [vmem:[%s1605] ss:$0 sm:$0xff]
        %v1607 = vlaneseq
        %v1608 = vand.u32 %v1607, 127
        %v1609 = vmov %v1608
        %v1610 = vlaneseq
        %v1611 = vshrl.u32 %v1610, 7
        %v1612 = vmov %v1611
        %v1613 = vadd.s32 %v1612, 16
        %vm1614 = vcmp.eq.s32.totalorder %v1613, %v1609
        %v1615 = vsel %vm1614, %v1606, 0.0
        %1616 = vadd.xlane.f32.xlu0 %v1615
        %v1617 = vpop.xlane.xlu0 %1616
        %s1618 = smov [#allocation23]
        %s1619 = scalar_lea.vmem %s1618, 16
        %1620 = vst [vmem:[%s1619] sm:$0xff] %v1617
        %s1621 = smov [#allocation21]
        %v1622 = vld [vmem:[%s1621] ss:$0 sm:$0xff]
        %v1623 = vlaneseq
        %v1624 = vand.u32 %v1623, 127
        %v1625 = vmov %v1624
        %v1626 = vlaneseq
        %v1627 = vshrl.u32 %v1626, 7
        %v1628 = vmov %v1627
        %v1629 = vadd.s32 %v1628, 24
        %vm1630 = vcmp.eq.s32.totalorder %v1629, %v1625
        %v1631 = vsel %vm1630, %v1622, 0.0
        %1632 = vadd.xlane.f32.xlu0 %v1631
        %v1633 = vpop.xlane.xlu0 %1632
        %s1634 = smov [#allocation23]
        %s1635 = scalar_lea.vmem %s1634, 24
        %1636 = vst [vmem:[%s1635] sm:$0xff] %v1633
        %s1637 = smov [#allocation21]
        %v1638 = vld [vmem:[%s1637] ss:$0 sm:$0xff]
        %v1639 = vlaneseq
        %v1640 = vand.u32 %v1639, 127
        %v1641 = vmov %v1640
        %v1642 = vlaneseq
        %v1643 = vshrl.u32 %v1642, 7
        %v1644 = vmov %v1643
        %v1645 = vadd.s32 %v1644, 32
        %vm1646 = vcmp.eq.s32.totalorder %v1645, %v1641
        %v1647 = vsel %vm1646, %v1638, 0.0
        %1648 = vadd.xlane.f32.xlu0 %v1647
        %v1649 = vpop.xlane.xlu0 %1648
        %s1650 = smov [#allocation23]
        %s1651 = scalar_lea.vmem %s1650, 32
        %1652 = vst [vmem:[%s1651] sm:$0xff] %v1649
        %s1653 = smov [#allocation21]
        %v1654 = vld [vmem:[%s1653] ss:$0 sm:$0xff]
        %v1655 = vlaneseq
        %v1656 = vand.u32 %v1655, 127
        %v1657 = vmov %v1656
        %v1658 = vlaneseq
        %v1659 = vshrl.u32 %v1658, 7
        %v1660 = vmov %v1659
        %v1661 = vadd.s32 %v1660, 40
        %vm1662 = vcmp.eq.s32.totalorder %v1661, %v1657
        %v1663 = vsel %vm1662, %v1654, 0.0
        %1664 = vadd.xlane.f32.xlu0 %v1663
        %v1665 = vpop.xlane.xlu0 %1664
        %s1666 = smov [#allocation23]
        %s1667 = scalar_lea.vmem %s1666, 40
        %1668 = vst [vmem:[%s1667] sm:$0xff] %v1665
        %s1669 = smov [#allocation21]
        %v1670 = vld [vmem:[%s1669] ss:$0 sm:$0xff]
        %v1671 = vlaneseq
        %v1672 = vand.u32 %v1671, 127
        %v1673 = vmov %v1672
        %v1674 = vlaneseq
        %v1675 = vshrl.u32 %v1674, 7
        %v1676 = vmov %v1675
        %v1677 = vadd.s32 %v1676, 48
        %vm1678 = vcmp.eq.s32.totalorder %v1677, %v1673
        %v1679 = vsel %vm1678, %v1670, 0.0
        %1680 = vadd.xlane.f32.xlu0 %v1679
        %v1681 = vpop.xlane.xlu0 %1680
        %s1682 = smov [#allocation23]
        %s1683 = scalar_lea.vmem %s1682, 48
        %1684 = vst [vmem:[%s1683] sm:$0xff] %v1681
        %s1685 = smov [#allocation21]
        %v1686 = vld [vmem:[%s1685] ss:$0 sm:$0xff]
        %v1687 = vlaneseq
        %v1688 = vand.u32 %v1687, 127
        %v1689 = vmov %v1688
        %v1690 = vlaneseq
        %v1691 = vshrl.u32 %v1690, 7
        %v1692 = vmov %v1691
        %v1693 = vadd.s32 %v1692, 56
        %vm1694 = vcmp.eq.s32.totalorder %v1693, %v1689
        %v1695 = vsel %vm1694, %v1686, 0.0
        %1696 = vadd.xlane.f32.xlu0 %v1695
        %v1697 = vpop.xlane.xlu0 %1696
        %s1698 = smov [#allocation23]
        %s1699 = scalar_lea.vmem %s1698, 56
        %1700 = vst [vmem:[%s1699] sm:$0xff] %v1697
        %s1701 = smov [#allocation21]
        %v1702 = vld [vmem:[%s1701] ss:$0 sm:$0xff]
        %v1703 = vlaneseq
        %v1704 = vand.u32 %v1703, 127
        %v1705 = vmov %v1704
        %v1706 = vlaneseq
        %v1707 = vshrl.u32 %v1706, 7
        %v1708 = vmov %v1707
        %v1709 = vadd.s32 %v1708, 64
        %vm1710 = vcmp.eq.s32.totalorder %v1709, %v1705
        %v1711 = vsel %vm1710, %v1702, 0.0
        %1712 = vadd.xlane.f32.xlu0 %v1711
        %v1713 = vpop.xlane.xlu0 %1712
        %s1714 = smov [#allocation23]
        %s1715 = scalar_lea.vmem %s1714, 64
        %1716 = vst [vmem:[%s1715] sm:$0xff] %v1713
        %s1717 = smov [#allocation21]
        %v1718 = vld [vmem:[%s1717] ss:$0 sm:$0xff]
        %v1719 = vlaneseq
        %v1720 = vand.u32 %v1719, 127
        %v1721 = vmov %v1720
        %v1722 = vlaneseq
        %v1723 = vshrl.u32 %v1722, 7
        %v1724 = vmov %v1723
        %v1725 = vadd.s32 %v1724, 72
        %vm1726 = vcmp.eq.s32.totalorder %v1725, %v1721
        %v1727 = vsel %vm1726, %v1718, 0.0
        %1728 = vadd.xlane.f32.xlu0 %v1727
        %v1729 = vpop.xlane.xlu0 %1728
        %s1730 = smov [#allocation23]
        %s1731 = scalar_lea.vmem %s1730, 72
        %1732 = vst [vmem:[%s1731] sm:$0xff] %v1729
        %s1733 = smov [#allocation21]
        %v1734 = vld [vmem:[%s1733] ss:$0 sm:$0xff]
        %v1735 = vlaneseq
        %v1736 = vand.u32 %v1735, 127
        %v1737 = vmov %v1736
        %v1738 = vlaneseq
        %v1739 = vshrl.u32 %v1738, 7
        %v1740 = vmov %v1739
        %v1741 = vadd.s32 %v1740, 80
        %vm1742 = vcmp.eq.s32.totalorder %v1741, %v1737
        %v1743 = vsel %vm1742, %v1734, 0.0
        %1744 = vadd.xlane.f32.xlu0 %v1743
        %v1745 = vpop.xlane.xlu0 %1744
        %s1746 = smov [#allocation23]
        %s1747 = scalar_lea.vmem %s1746, 80
        %1748 = vst [vmem:[%s1747] sm:$0xff] %v1745
        %s1749 = smov [#allocation21]
        %v1750 = vld [vmem:[%s1749] ss:$0 sm:$0xff]
        %v1751 = vlaneseq
        %v1752 = vand.u32 %v1751, 127
        %v1753 = vmov %v1752
        %v1754 = vlaneseq
        %v1755 = vshrl.u32 %v1754, 7
        %v1756 = vmov %v1755
        %v1757 = vadd.s32 %v1756, 88
        %vm1758 = vcmp.eq.s32.totalorder %v1757, %v1753
        %v1759 = vsel %vm1758, %v1750, 0.0
        %1760 = vadd.xlane.f32.xlu0 %v1759
        %v1761 = vpop.xlane.xlu0 %1760
        %s1762 = smov [#allocation23]
        %s1763 = scalar_lea.vmem %s1762, 88
        %1764 = vst [vmem:[%s1763] sm:$0xff] %v1761
        %s1765 = smov [#allocation21]
        %v1766 = vld [vmem:[%s1765] ss:$0 sm:$0xff]
        %v1767 = vlaneseq
        %v1768 = vand.u32 %v1767, 127
        %v1769 = vmov %v1768
        %v1770 = vlaneseq
        %v1771 = vshrl.u32 %v1770, 7
        %v1772 = vmov %v1771
        %v1773 = vadd.s32 %v1772, 96
        %vm1774 = vcmp.eq.s32.totalorder %v1773, %v1769
        %v1775 = vsel %vm1774, %v1766, 0.0
        %1776 = vadd.xlane.f32.xlu0 %v1775
        %v1777 = vpop.xlane.xlu0 %1776
        %s1778 = smov [#allocation23]
        %s1779 = scalar_lea.vmem %s1778, 96
        %1780 = vst [vmem:[%s1779] sm:$0xff] %v1777
        %s1781 = smov [#allocation22]
        %v1782 = vld [vmem:[%s1781] ss:$0 sm:$0xff]
        %v1783 = vlaneseq
        %v1784 = vand.u32 %v1783, 127
        %v1785 = vmov %v1784
        %v1786 = vlaneseq
        %v1787 = vshrl.u32 %v1786, 7
        %v1788 = vmov %v1787
        %vm1790 = vcmp.eq.s32.totalorder %v1788, %v1785
        %v1791 = vsel %vm1790, %v1782, 0.0
        %1792 = vadd.xlane.f32.xlu0 %v1791
        %v1793 = vpop.xlane.xlu0 %1792
        %s1794 = smov [#allocation24]
        %1795 = vst [vmem:[%s1794] sm:$0xff] %v1793
        %s1796 = smov [#allocation22]
        %v1797 = vld [vmem:[%s1796] ss:$0 sm:$0xff]
        %v1798 = vlaneseq
        %v1799 = vand.u32 %v1798, 127
        %v1800 = vmov %v1799
        %v1801 = vlaneseq
        %v1802 = vshrl.u32 %v1801, 7
        %v1803 = vmov %v1802
        %v1804 = vadd.s32 %v1803, 8
        %vm1805 = vcmp.eq.s32.totalorder %v1804, %v1800
        %v1806 = vsel %vm1805, %v1797, 0.0
        %1807 = vadd.xlane.f32.xlu0 %v1806
        %v1808 = vpop.xlane.xlu0 %1807
        %s1809 = smov [#allocation24]
        %s1810 = scalar_lea.vmem %s1809, 8
        %1811 = vst [vmem:[%s1810] sm:$0xff] %v1808
        %s1812 = smov [#allocation22]
        %v1813 = vld [vmem:[%s1812] ss:$0 sm:$0xff]
        %v1814 = vlaneseq
        %v1815 = vand.u32 %v1814, 127
        %v1816 = vmov %v1815
        %v1817 = vlaneseq
        %v1818 = vshrl.u32 %v1817, 7
        %v1819 = vmov %v1818
        %v1820 = vadd.s32 %v1819, 16
        %vm1821 = vcmp.eq.s32.totalorder %v1820, %v1816
        %v1822 = vsel %vm1821, %v1813, 0.0
        %1823 = vadd.xlane.f32.xlu0 %v1822
        %v1824 = vpop.xlane.xlu0 %1823
        %s1825 = smov [#allocation24]
        %s1826 = scalar_lea.vmem %s1825, 16
        %1827 = vst [vmem:[%s1826] sm:$0xff] %v1824
        %s1828 = smov [#allocation22]
        %v1829 = vld [vmem:[%s1828] ss:$0 sm:$0xff]
        %v1830 = vlaneseq
        %v1831 = vand.u32 %v1830, 127
        %v1832 = vmov %v1831
        %v1833 = vlaneseq
        %v1834 = vshrl.u32 %v1833, 7
        %v1835 = vmov %v1834
        %v1836 = vadd.s32 %v1835, 24
        %vm1837 = vcmp.eq.s32.totalorder %v1836, %v1832
        %v1838 = vsel %vm1837, %v1829, 0.0
        %1839 = vadd.xlane.f32.xlu0 %v1838
        %v1840 = vpop.xlane.xlu0 %1839
        %s1841 = smov [#allocation24]
        %s1842 = scalar_lea.vmem %s1841, 24
        %1843 = vst [vmem:[%s1842] sm:$0xff] %v1840
        %s1844 = smov [#allocation22]
        %v1845 = vld [vmem:[%s1844] ss:$0 sm:$0xff]
        %v1846 = vlaneseq
        %v1847 = vand.u32 %v1846, 127
        %v1848 = vmov %v1847
        %v1849 = vlaneseq
        %v1850 = vshrl.u32 %v1849, 7
        %v1851 = vmov %v1850
        %v1852 = vadd.s32 %v1851, 32
        %vm1853 = vcmp.eq.s32.totalorder %v1852, %v1848
        %v1854 = vsel %vm1853, %v1845, 0.0
        %1855 = vadd.xlane.f32.xlu0 %v1854
        %v1856 = vpop.xlane.xlu0 %1855
        %s1857 = smov [#allocation24]
        %s1858 = scalar_lea.vmem %s1857, 32
        %1859 = vst [vmem:[%s1858] sm:$0xff] %v1856
        %s1860 = smov [#allocation22]
        %v1861 = vld [vmem:[%s1860] ss:$0 sm:$0xff]
        %v1862 = vlaneseq
        %v1863 = vand.u32 %v1862, 127
        %v1864 = vmov %v1863
        %v1865 = vlaneseq
        %v1866 = vshrl.u32 %v1865, 7
        %v1867 = vmov %v1866
        %v1868 = vadd.s32 %v1867, 40
        %vm1869 = vcmp.eq.s32.totalorder %v1868, %v1864
        %v1870 = vsel %vm1869, %v1861, 0.0
        %1871 = vadd.xlane.f32.xlu0 %v1870
        %v1872 = vpop.xlane.xlu0 %1871
        %s1873 = smov [#allocation24]
        %s1874 = scalar_lea.vmem %s1873, 40
        %1875 = vst [vmem:[%s1874] sm:$0xff] %v1872
        %s1876 = smov [#allocation22]
        %v1877 = vld [vmem:[%s1876] ss:$0 sm:$0xff]
        %v1878 = vlaneseq
        %v1879 = vand.u32 %v1878, 127
        %v1880 = vmov %v1879
        %v1881 = vlaneseq
        %v1882 = vshrl.u32 %v1881, 7
        %v1883 = vmov %v1882
        %v1884 = vadd.s32 %v1883, 48
        %vm1885 = vcmp.eq.s32.totalorder %v1884, %v1880
        %v1886 = vsel %vm1885, %v1877, 0.0
        %1887 = vadd.xlane.f32.xlu0 %v1886
        %v1888 = vpop.xlane.xlu0 %1887
        %s1889 = smov [#allocation24]
        %s1890 = scalar_lea.vmem %s1889, 48
        %1891 = vst [vmem:[%s1890] sm:$0xff] %v1888
        %s1892 = smov [#allocation22]
        %v1893 = vld [vmem:[%s1892] ss:$0 sm:$0xff]
        %v1894 = vlaneseq
        %v1895 = vand.u32 %v1894, 127
        %v1896 = vmov %v1895
        %v1897 = vlaneseq
        %v1898 = vshrl.u32 %v1897, 7
        %v1899 = vmov %v1898
        %v1900 = vadd.s32 %v1899, 56
        %vm1901 = vcmp.eq.s32.totalorder %v1900, %v1896
        %v1902 = vsel %vm1901, %v1893, 0.0
        %1903 = vadd.xlane.f32.xlu0 %v1902
        %v1904 = vpop.xlane.xlu0 %1903
        %s1905 = smov [#allocation24]
        %s1906 = scalar_lea.vmem %s1905, 56
        %1907 = vst [vmem:[%s1906] sm:$0xff] %v1904
        %s1908 = smov [#allocation22]
        %v1909 = vld [vmem:[%s1908] ss:$0 sm:$0xff]
        %v1910 = vlaneseq
        %v1911 = vand.u32 %v1910, 127
        %v1912 = vmov %v1911
        %v1913 = vlaneseq
        %v1914 = vshrl.u32 %v1913, 7
        %v1915 = vmov %v1914
        %v1916 = vadd.s32 %v1915, 64
        %vm1917 = vcmp.eq.s32.totalorder %v1916, %v1912
        %v1918 = vsel %vm1917, %v1909, 0.0
        %1919 = vadd.xlane.f32.xlu0 %v1918
        %v1920 = vpop.xlane.xlu0 %1919
        %s1921 = smov [#allocation24]
        %s1922 = scalar_lea.vmem %s1921, 64
        %1923 = vst [vmem:[%s1922] sm:$0xff] %v1920
        %s1924 = smov [#allocation22]
        %v1925 = vld [vmem:[%s1924] ss:$0 sm:$0xff]
        %v1926 = vlaneseq
        %v1927 = vand.u32 %v1926, 127
        %v1928 = vmov %v1927
        %v1929 = vlaneseq
        %v1930 = vshrl.u32 %v1929, 7
        %v1931 = vmov %v1930
        %v1932 = vadd.s32 %v1931, 72
        %vm1933 = vcmp.eq.s32.totalorder %v1932, %v1928
        %v1934 = vsel %vm1933, %v1925, 0.0
        %1935 = vadd.xlane.f32.xlu0 %v1934
        %v1936 = vpop.xlane.xlu0 %1935
        %s1937 = smov [#allocation24]
        %s1938 = scalar_lea.vmem %s1937, 72
        %1939 = vst [vmem:[%s1938] sm:$0xff] %v1936
        %s1940 = smov [#allocation22]
        %v1941 = vld [vmem:[%s1940] ss:$0 sm:$0xff]
        %v1942 = vlaneseq
        %v1943 = vand.u32 %v1942, 127
        %v1944 = vmov %v1943
        %v1945 = vlaneseq
        %v1946 = vshrl.u32 %v1945, 7
        %v1947 = vmov %v1946
        %v1948 = vadd.s32 %v1947, 80
        %vm1949 = vcmp.eq.s32.totalorder %v1948, %v1944
        %v1950 = vsel %vm1949, %v1941, 0.0
        %1951 = vadd.xlane.f32.xlu0 %v1950
        %v1952 = vpop.xlane.xlu0 %1951
        %s1953 = smov [#allocation24]
        %s1954 = scalar_lea.vmem %s1953, 80
        %1955 = vst [vmem:[%s1954] sm:$0xff] %v1952
        %s1956 = smov [#allocation22]
        %v1957 = vld [vmem:[%s1956] ss:$0 sm:$0xff]
        %v1958 = vlaneseq
        %v1959 = vand.u32 %v1958, 127
        %v1960 = vmov %v1959
        %v1961 = vlaneseq
        %v1962 = vshrl.u32 %v1961, 7
        %v1963 = vmov %v1962
        %v1964 = vadd.s32 %v1963, 88
        %vm1965 = vcmp.eq.s32.totalorder %v1964, %v1960
        %v1966 = vsel %vm1965, %v1957, 0.0
        %1967 = vadd.xlane.f32.xlu0 %v1966
        %v1968 = vpop.xlane.xlu0 %1967
        %s1969 = smov [#allocation24]
        %s1970 = scalar_lea.vmem %s1969, 88
        %1971 = vst [vmem:[%s1970] sm:$0xff] %v1968
        %s1972 = smov [#allocation22]
        %v1973 = vld [vmem:[%s1972] ss:$0 sm:$0xff]
        %v1974 = vlaneseq
        %v1975 = vand.u32 %v1974, 127
        %v1976 = vmov %v1975
        %v1977 = vlaneseq
        %v1978 = vshrl.u32 %v1977, 7
        %v1979 = vmov %v1978
        %v1980 = vadd.s32 %v1979, 96
        %vm1981 = vcmp.eq.s32.totalorder %v1980, %v1976
        %v1982 = vsel %vm1981, %v1973, 0.0
        %1983 = vadd.xlane.f32.xlu0 %v1982
        %v1984 = vpop.xlane.xlu0 %1983
        %s1985 = smov [#allocation24]
        %s1986 = scalar_lea.vmem %s1985, 96
        %1987 = vst [vmem:[%s1986] sm:$0xff] %v1984
        %s1988 = smov [#allocation23]
        %v1989 = vld [vmem:[%s1988] sm:$0xff]
        %s1990 = smov [#allocation24]
        %v1991 = vld [vmem:[%s1990] sm:$0xff]
        %s1992 = smov [#allocation12]
        %s1993 = smov [#allocation13]
        %s1994 = smov [#allocation14]
        %s1995 = smov [#allocation15]
        %v1996 = vld [vmem:[%s1992] sm:$0xff]
        %v1997 = vld [vmem:[%s1993] sm:$0xff]
        %v1998 = vld [vmem:[%s1994] sm:$0xff]
        %v1999 = vld [vmem:[%s1995] sm:$0xff]
        %v2000 = vmul.f32 %v1989, %v1996
        %v2001 = vmul.f32 %v1991, %v1998
        %v2002 = vsub.f32 %v2000, %v2001
        %v2003 = vmul.f32 %v1989, %v1997
        %v2004 = vmul.f32 %v1991, %v1999
        %v2005 = vsub.f32 %v2003, %v2004
        %v2006 = vmul.f32 %v1991, %v1996
        %v2007 = vmul.f32 %v1989, %v1998
        %v2008 = vadd.f32 %v2006, %v2007
        %v2009 = vmul.f32 %v1991, %v1997
        %v2010 = vmul.f32 %v1989, %v1999
        %v2011 = vadd.f32 %v2009, %v2010
        %2012 = vst [vmem:[%s1992] sm:$0xff] %v2002
        %2013 = vst [vmem:[%s1993] sm:$0xff] %v2005
        %2014 = vst [vmem:[%s1994] sm:$0xff] %v2008
        %2015 = vst [vmem:[%s1995] sm:$0xff] %v2011
        %s2016 = smov [#allocation23]
        %s2017 = scalar_lea.vmem %s2016, 8
        %v2018 = vld [vmem:[%s2017] sm:$0xff]
        %s2019 = smov [#allocation24]
        %s2020 = scalar_lea.vmem %s2019, 8
        %v2021 = vld [vmem:[%s2020] sm:$0xff]
        %s2022 = smov [#allocation12]
        %s2023 = scalar_lea.vmem %s2022, 8
        %s2024 = smov [#allocation13]
        %s2025 = scalar_lea.vmem %s2024, 8
        %s2026 = smov [#allocation14]
        %s2027 = scalar_lea.vmem %s2026, 8
        %s2028 = smov [#allocation15]
        %s2029 = scalar_lea.vmem %s2028, 8
        %v2030 = vld [vmem:[%s2023] sm:$0xff]
        %v2031 = vld [vmem:[%s2025] sm:$0xff]
        %v2032 = vld [vmem:[%s2027] sm:$0xff]
        %v2033 = vld [vmem:[%s2029] sm:$0xff]
        %v2034 = vmul.f32 %v2018, %v2030
        %v2035 = vmul.f32 %v2021, %v2032
        %v2036 = vsub.f32 %v2034, %v2035
        %v2037 = vmul.f32 %v2018, %v2031
        %v2038 = vmul.f32 %v2021, %v2033
        %v2039 = vsub.f32 %v2037, %v2038
        %v2040 = vmul.f32 %v2021, %v2030
        %v2041 = vmul.f32 %v2018, %v2032
        %v2042 = vadd.f32 %v2040, %v2041
        %v2043 = vmul.f32 %v2021, %v2031
        %v2044 = vmul.f32 %v2018, %v2033
        %v2045 = vadd.f32 %v2043, %v2044
        %2046 = vst [vmem:[%s2023] sm:$0xff] %v2036
        %2047 = vst [vmem:[%s2025] sm:$0xff] %v2039
        %2048 = vst [vmem:[%s2027] sm:$0xff] %v2042
        %2049 = vst [vmem:[%s2029] sm:$0xff] %v2045
        %s2050 = smov [#allocation23]
        %s2051 = scalar_lea.vmem %s2050, 16
        %v2052 = vld [vmem:[%s2051] sm:$0xff]
        %s2053 = smov [#allocation24]
        %s2054 = scalar_lea.vmem %s2053, 16
        %v2055 = vld [vmem:[%s2054] sm:$0xff]
        %s2056 = smov [#allocation12]
        %s2057 = scalar_lea.vmem %s2056, 16
        %s2058 = smov [#allocation13]
        %s2059 = scalar_lea.vmem %s2058, 16
        %s2060 = smov [#allocation14]
        %s2061 = scalar_lea.vmem %s2060, 16
        %s2062 = smov [#allocation15]
        %s2063 = scalar_lea.vmem %s2062, 16
        %v2064 = vld [vmem:[%s2057] sm:$0xff]
        %v2065 = vld [vmem:[%s2059] sm:$0xff]
        %v2066 = vld [vmem:[%s2061] sm:$0xff]
        %v2067 = vld [vmem:[%s2063] sm:$0xff]
        %v2068 = vmul.f32 %v2052, %v2064
        %v2069 = vmul.f32 %v2055, %v2066
        %v2070 = vsub.f32 %v2068, %v2069
        %v2071 = vmul.f32 %v2052, %v2065
        %v2072 = vmul.f32 %v2055, %v2067
        %v2073 = vsub.f32 %v2071, %v2072
        %v2074 = vmul.f32 %v2055, %v2064
        %v2075 = vmul.f32 %v2052, %v2066
        %v2076 = vadd.f32 %v2074, %v2075
        %v2077 = vmul.f32 %v2055, %v2065
        %v2078 = vmul.f32 %v2052, %v2067
        %v2079 = vadd.f32 %v2077, %v2078
        %2080 = vst [vmem:[%s2057] sm:$0xff] %v2070
        %2081 = vst [vmem:[%s2059] sm:$0xff] %v2073
        %2082 = vst [vmem:[%s2061] sm:$0xff] %v2076
        %2083 = vst [vmem:[%s2063] sm:$0xff] %v2079
        %s2084 = smov [#allocation23]
        %s2085 = scalar_lea.vmem %s2084, 24
        %v2086 = vld [vmem:[%s2085] sm:$0xff]
        %s2087 = smov [#allocation24]
        %s2088 = scalar_lea.vmem %s2087, 24
        %v2089 = vld [vmem:[%s2088] sm:$0xff]
        %s2090 = smov [#allocation12]
        %s2091 = scalar_lea.vmem %s2090, 24
        %s2092 = smov [#allocation13]
        %s2093 = scalar_lea.vmem %s2092, 24
        %s2094 = smov [#allocation14]
        %s2095 = scalar_lea.vmem %s2094, 24
        %s2096 = smov [#allocation15]
        %s2097 = scalar_lea.vmem %s2096, 24
        %v2098 = vld [vmem:[%s2091] sm:$0xff]
        %v2099 = vld [vmem:[%s2093] sm:$0xff]
        %v2100 = vld [vmem:[%s2095] sm:$0xff]
        %v2101 = vld [vmem:[%s2097] sm:$0xff]
        %v2102 = vmul.f32 %v2086, %v2098
        %v2103 = vmul.f32 %v2089, %v2100
        %v2104 = vsub.f32 %v2102, %v2103
        %v2105 = vmul.f32 %v2086, %v2099
        %v2106 = vmul.f32 %v2089, %v2101
        %v2107 = vsub.f32 %v2105, %v2106
        %v2108 = vmul.f32 %v2089, %v2098
        %v2109 = vmul.f32 %v2086, %v2100
        %v2110 = vadd.f32 %v2108, %v2109
        %v2111 = vmul.f32 %v2089, %v2099
        %v2112 = vmul.f32 %v2086, %v2101
        %v2113 = vadd.f32 %v2111, %v2112
        %2114 = vst [vmem:[%s2091] sm:$0xff] %v2104
        %2115 = vst [vmem:[%s2093] sm:$0xff] %v2107
        %2116 = vst [vmem:[%s2095] sm:$0xff] %v2110
        %2117 = vst [vmem:[%s2097] sm:$0xff] %v2113
        %s2118 = smov [#allocation23]
        %s2119 = scalar_lea.vmem %s2118, 32
        %v2120 = vld [vmem:[%s2119] sm:$0xff]
        %s2121 = smov [#allocation24]
        %s2122 = scalar_lea.vmem %s2121, 32
        %v2123 = vld [vmem:[%s2122] sm:$0xff]
        %s2124 = smov [#allocation12]
        %s2125 = scalar_lea.vmem %s2124, 32
        %s2126 = smov [#allocation13]
        %s2127 = scalar_lea.vmem %s2126, 32
        %s2128 = smov [#allocation14]
        %s2129 = scalar_lea.vmem %s2128, 32
        %s2130 = smov [#allocation15]
        %s2131 = scalar_lea.vmem %s2130, 32
        %v2132 = vld [vmem:[%s2125] sm:$0xff]
        %v2133 = vld [vmem:[%s2127] sm:$0xff]
        %v2134 = vld [vmem:[%s2129] sm:$0xff]
        %v2135 = vld [vmem:[%s2131] sm:$0xff]
        %v2136 = vmul.f32 %v2120, %v2132
        %v2137 = vmul.f32 %v2123, %v2134
        %v2138 = vsub.f32 %v2136, %v2137
        %v2139 = vmul.f32 %v2120, %v2133
        %v2140 = vmul.f32 %v2123, %v2135
        %v2141 = vsub.f32 %v2139, %v2140
        %v2142 = vmul.f32 %v2123, %v2132
        %v2143 = vmul.f32 %v2120, %v2134
        %v2144 = vadd.f32 %v2142, %v2143
        %v2145 = vmul.f32 %v2123, %v2133
        %v2146 = vmul.f32 %v2120, %v2135
        %v2147 = vadd.f32 %v2145, %v2146
        %2148 = vst [vmem:[%s2125] sm:$0xff] %v2138
        %2149 = vst [vmem:[%s2127] sm:$0xff] %v2141
        %2150 = vst [vmem:[%s2129] sm:$0xff] %v2144
        %2151 = vst [vmem:[%s2131] sm:$0xff] %v2147
        %s2152 = smov [#allocation23]
        %s2153 = scalar_lea.vmem %s2152, 40
        %v2154 = vld [vmem:[%s2153] sm:$0xff]
        %s2155 = smov [#allocation24]
        %s2156 = scalar_lea.vmem %s2155, 40
        %v2157 = vld [vmem:[%s2156] sm:$0xff]
        %s2158 = smov [#allocation12]
        %s2159 = scalar_lea.vmem %s2158, 40
        %s2160 = smov [#allocation13]
        %s2161 = scalar_lea.vmem %s2160, 40
        %s2162 = smov [#allocation14]
        %s2163 = scalar_lea.vmem %s2162, 40
        %s2164 = smov [#allocation15]
        %s2165 = scalar_lea.vmem %s2164, 40
        %v2166 = vld [vmem:[%s2159] sm:$0xff]
        %v2167 = vld [vmem:[%s2161] sm:$0xff]
        %v2168 = vld [vmem:[%s2163] sm:$0xff]
        %v2169 = vld [vmem:[%s2165] sm:$0xff]
        %v2170 = vmul.f32 %v2154, %v2166
        %v2171 = vmul.f32 %v2157, %v2168
        %v2172 = vsub.f32 %v2170, %v2171
        %v2173 = vmul.f32 %v2154, %v2167
        %v2174 = vmul.f32 %v2157, %v2169
        %v2175 = vsub.f32 %v2173, %v2174
        %v2176 = vmul.f32 %v2157, %v2166
        %v2177 = vmul.f32 %v2154, %v2168
        %v2178 = vadd.f32 %v2176, %v2177
        %v2179 = vmul.f32 %v2157, %v2167
        %v2180 = vmul.f32 %v2154, %v2169
        %v2181 = vadd.f32 %v2179, %v2180
        %2182 = vst [vmem:[%s2159] sm:$0xff] %v2172
        %2183 = vst [vmem:[%s2161] sm:$0xff] %v2175
        %2184 = vst [vmem:[%s2163] sm:$0xff] %v2178
        %2185 = vst [vmem:[%s2165] sm:$0xff] %v2181
        %s2186 = smov [#allocation23]
        %s2187 = scalar_lea.vmem %s2186, 48
        %v2188 = vld [vmem:[%s2187] sm:$0xff]
        %s2189 = smov [#allocation24]
        %s2190 = scalar_lea.vmem %s2189, 48
        %v2191 = vld [vmem:[%s2190] sm:$0xff]
        %s2192 = smov [#allocation12]
        %s2193 = scalar_lea.vmem %s2192, 48
        %s2194 = smov [#allocation13]
        %s2195 = scalar_lea.vmem %s2194, 48
        %s2196 = smov [#allocation14]
        %s2197 = scalar_lea.vmem %s2196, 48
        %s2198 = smov [#allocation15]
        %s2199 = scalar_lea.vmem %s2198, 48
        %v2200 = vld [vmem:[%s2193] sm:$0xff]
        %v2201 = vld [vmem:[%s2195] sm:$0xff]
        %v2202 = vld [vmem:[%s2197] sm:$0xff]
        %v2203 = vld [vmem:[%s2199] sm:$0xff]
        %v2204 = vmul.f32 %v2188, %v2200
        %v2205 = vmul.f32 %v2191, %v2202
        %v2206 = vsub.f32 %v2204, %v2205
        %v2207 = vmul.f32 %v2188, %v2201
        %v2208 = vmul.f32 %v2191, %v2203
        %v2209 = vsub.f32 %v2207, %v2208
        %v2210 = vmul.f32 %v2191, %v2200
        %v2211 = vmul.f32 %v2188, %v2202
        %v2212 = vadd.f32 %v2210, %v2211
        %v2213 = vmul.f32 %v2191, %v2201
        %v2214 = vmul.f32 %v2188, %v2203
        %v2215 = vadd.f32 %v2213, %v2214
        %2216 = vst [vmem:[%s2193] sm:$0xff] %v2206
        %2217 = vst [vmem:[%s2195] sm:$0xff] %v2209
        %2218 = vst [vmem:[%s2197] sm:$0xff] %v2212
        %2219 = vst [vmem:[%s2199] sm:$0xff] %v2215
        %s2220 = smov [#allocation23]
        %s2221 = scalar_lea.vmem %s2220, 56
        %v2222 = vld [vmem:[%s2221] sm:$0xff]
        %s2223 = smov [#allocation24]
        %s2224 = scalar_lea.vmem %s2223, 56
        %v2225 = vld [vmem:[%s2224] sm:$0xff]
        %s2226 = smov [#allocation12]
        %s2227 = scalar_lea.vmem %s2226, 56
        %s2228 = smov [#allocation13]
        %s2229 = scalar_lea.vmem %s2228, 56
        %s2230 = smov [#allocation14]
        %s2231 = scalar_lea.vmem %s2230, 56
        %s2232 = smov [#allocation15]
        %s2233 = scalar_lea.vmem %s2232, 56
        %v2234 = vld [vmem:[%s2227] sm:$0xff]
        %v2235 = vld [vmem:[%s2229] sm:$0xff]
        %v2236 = vld [vmem:[%s2231] sm:$0xff]
        %v2237 = vld [vmem:[%s2233] sm:$0xff]
        %v2238 = vmul.f32 %v2222, %v2234
        %v2239 = vmul.f32 %v2225, %v2236
        %v2240 = vsub.f32 %v2238, %v2239
        %v2241 = vmul.f32 %v2222, %v2235
        %v2242 = vmul.f32 %v2225, %v2237
        %v2243 = vsub.f32 %v2241, %v2242
        %v2244 = vmul.f32 %v2225, %v2234
        %v2245 = vmul.f32 %v2222, %v2236
        %v2246 = vadd.f32 %v2244, %v2245
        %v2247 = vmul.f32 %v2225, %v2235
        %v2248 = vmul.f32 %v2222, %v2237
        %v2249 = vadd.f32 %v2247, %v2248
        %2250 = vst [vmem:[%s2227] sm:$0xff] %v2240
        %2251 = vst [vmem:[%s2229] sm:$0xff] %v2243
        %2252 = vst [vmem:[%s2231] sm:$0xff] %v2246
        %2253 = vst [vmem:[%s2233] sm:$0xff] %v2249
        %s2254 = smov [#allocation23]
        %s2255 = scalar_lea.vmem %s2254, 64
        %v2256 = vld [vmem:[%s2255] sm:$0xff]
        %s2257 = smov [#allocation24]
        %s2258 = scalar_lea.vmem %s2257, 64
        %v2259 = vld [vmem:[%s2258] sm:$0xff]
        %s2260 = smov [#allocation12]
        %s2261 = scalar_lea.vmem %s2260, 64
        %s2262 = smov [#allocation13]
        %s2263 = scalar_lea.vmem %s2262, 64
        %s2264 = smov [#allocation14]
        %s2265 = scalar_lea.vmem %s2264, 64
        %s2266 = smov [#allocation15]
        %s2267 = scalar_lea.vmem %s2266, 64
        %v2268 = vld [vmem:[%s2261] sm:$0xff]
        %v2269 = vld [vmem:[%s2263] sm:$0xff]
        %v2270 = vld [vmem:[%s2265] sm:$0xff]
        %v2271 = vld [vmem:[%s2267] sm:$0xff]
        %v2272 = vmul.f32 %v2256, %v2268
        %v2273 = vmul.f32 %v2259, %v2270
        %v2274 = vsub.f32 %v2272, %v2273
        %v2275 = vmul.f32 %v2256, %v2269
        %v2276 = vmul.f32 %v2259, %v2271
        %v2277 = vsub.f32 %v2275, %v2276
        %v2278 = vmul.f32 %v2259, %v2268
        %v2279 = vmul.f32 %v2256, %v2270
        %v2280 = vadd.f32 %v2278, %v2279
        %v2281 = vmul.f32 %v2259, %v2269
        %v2282 = vmul.f32 %v2256, %v2271
        %v2283 = vadd.f32 %v2281, %v2282
        %2284 = vst [vmem:[%s2261] sm:$0xff] %v2274
        %2285 = vst [vmem:[%s2263] sm:$0xff] %v2277
        %2286 = vst [vmem:[%s2265] sm:$0xff] %v2280
        %2287 = vst [vmem:[%s2267] sm:$0xff] %v2283
        %s2288 = smov [#allocation23]
        %s2289 = scalar_lea.vmem %s2288, 72
        %v2290 = vld [vmem:[%s2289] sm:$0xff]
        %s2291 = smov [#allocation24]
        %s2292 = scalar_lea.vmem %s2291, 72
        %v2293 = vld [vmem:[%s2292] sm:$0xff]
        %s2294 = smov [#allocation12]
        %s2295 = scalar_lea.vmem %s2294, 72
        %s2296 = smov [#allocation13]
        %s2297 = scalar_lea.vmem %s2296, 72
        %s2298 = smov [#allocation14]
        %s2299 = scalar_lea.vmem %s2298, 72
        %s2300 = smov [#allocation15]
        %s2301 = scalar_lea.vmem %s2300, 72
        %v2302 = vld [vmem:[%s2295] sm:$0xff]
        %v2303 = vld [vmem:[%s2297] sm:$0xff]
        %v2304 = vld [vmem:[%s2299] sm:$0xff]
        %v2305 = vld [vmem:[%s2301] sm:$0xff]
        %v2306 = vmul.f32 %v2290, %v2302
        %v2307 = vmul.f32 %v2293, %v2304
        %v2308 = vsub.f32 %v2306, %v2307
        %v2309 = vmul.f32 %v2290, %v2303
        %v2310 = vmul.f32 %v2293, %v2305
        %v2311 = vsub.f32 %v2309, %v2310
        %v2312 = vmul.f32 %v2293, %v2302
        %v2313 = vmul.f32 %v2290, %v2304
        %v2314 = vadd.f32 %v2312, %v2313
        %v2315 = vmul.f32 %v2293, %v2303
        %v2316 = vmul.f32 %v2290, %v2305
        %v2317 = vadd.f32 %v2315, %v2316
        %2318 = vst [vmem:[%s2295] sm:$0xff] %v2308
        %2319 = vst [vmem:[%s2297] sm:$0xff] %v2311
        %2320 = vst [vmem:[%s2299] sm:$0xff] %v2314
        %2321 = vst [vmem:[%s2301] sm:$0xff] %v2317
        %s2322 = smov [#allocation23]
        %s2323 = scalar_lea.vmem %s2322, 80
        %v2324 = vld [vmem:[%s2323] sm:$0xff]
        %s2325 = smov [#allocation24]
        %s2326 = scalar_lea.vmem %s2325, 80
        %v2327 = vld [vmem:[%s2326] sm:$0xff]
        %s2328 = smov [#allocation12]
        %s2329 = scalar_lea.vmem %s2328, 80
        %s2330 = smov [#allocation13]
        %s2331 = scalar_lea.vmem %s2330, 80
        %s2332 = smov [#allocation14]
        %s2333 = scalar_lea.vmem %s2332, 80
        %s2334 = smov [#allocation15]
        %s2335 = scalar_lea.vmem %s2334, 80
        %v2336 = vld [vmem:[%s2329] sm:$0xff]
        %v2337 = vld [vmem:[%s2331] sm:$0xff]
        %v2338 = vld [vmem:[%s2333] sm:$0xff]
        %v2339 = vld [vmem:[%s2335] sm:$0xff]
        %v2340 = vmul.f32 %v2324, %v2336
        %v2341 = vmul.f32 %v2327, %v2338
        %v2342 = vsub.f32 %v2340, %v2341
        %v2343 = vmul.f32 %v2324, %v2337
        %v2344 = vmul.f32 %v2327, %v2339
        %v2345 = vsub.f32 %v2343, %v2344
        %v2346 = vmul.f32 %v2327, %v2336
        %v2347 = vmul.f32 %v2324, %v2338
        %v2348 = vadd.f32 %v2346, %v2347
        %v2349 = vmul.f32 %v2327, %v2337
        %v2350 = vmul.f32 %v2324, %v2339
        %v2351 = vadd.f32 %v2349, %v2350
        %2352 = vst [vmem:[%s2329] sm:$0xff] %v2342
        %2353 = vst [vmem:[%s2331] sm:$0xff] %v2345
        %2354 = vst [vmem:[%s2333] sm:$0xff] %v2348
        %2355 = vst [vmem:[%s2335] sm:$0xff] %v2351
        %s2356 = smov [#allocation23]
        %s2357 = scalar_lea.vmem %s2356, 88
        %v2358 = vld [vmem:[%s2357] sm:$0xff]
        %s2359 = smov [#allocation24]
        %s2360 = scalar_lea.vmem %s2359, 88
        %v2361 = vld [vmem:[%s2360] sm:$0xff]
        %s2362 = smov [#allocation12]
        %s2363 = scalar_lea.vmem %s2362, 88
        %s2364 = smov [#allocation13]
        %s2365 = scalar_lea.vmem %s2364, 88
        %s2366 = smov [#allocation14]
        %s2367 = scalar_lea.vmem %s2366, 88
        %s2368 = smov [#allocation15]
        %s2369 = scalar_lea.vmem %s2368, 88
        %v2370 = vld [vmem:[%s2363] sm:$0xff]
        %v2371 = vld [vmem:[%s2365] sm:$0xff]
        %v2372 = vld [vmem:[%s2367] sm:$0xff]
        %v2373 = vld [vmem:[%s2369] sm:$0xff]
        %v2374 = vmul.f32 %v2358, %v2370
        %v2375 = vmul.f32 %v2361, %v2372
        %v2376 = vsub.f32 %v2374, %v2375
        %v2377 = vmul.f32 %v2358, %v2371
        %v2378 = vmul.f32 %v2361, %v2373
        %v2379 = vsub.f32 %v2377, %v2378
        %v2380 = vmul.f32 %v2361, %v2370
        %v2381 = vmul.f32 %v2358, %v2372
        %v2382 = vadd.f32 %v2380, %v2381
        %v2383 = vmul.f32 %v2361, %v2371
        %v2384 = vmul.f32 %v2358, %v2373
        %v2385 = vadd.f32 %v2383, %v2384
        %2386 = vst [vmem:[%s2363] sm:$0xff] %v2376
        %2387 = vst [vmem:[%s2365] sm:$0xff] %v2379
        %2388 = vst [vmem:[%s2367] sm:$0xff] %v2382
        %2389 = vst [vmem:[%s2369] sm:$0xff] %v2385
        %s2390 = smov [#allocation23]
        %s2391 = scalar_lea.vmem %s2390, 96
        %v2392 = vld [vmem:[%s2391] sm:$0xff]
        %s2393 = smov [#allocation24]
        %s2394 = scalar_lea.vmem %s2393, 96
        %v2395 = vld [vmem:[%s2394] sm:$0xff]
        %s2396 = smov [#allocation12]
        %s2397 = scalar_lea.vmem %s2396, 96
        %s2398 = smov [#allocation13]
        %s2399 = scalar_lea.vmem %s2398, 96
        %s2400 = smov [#allocation14]
        %s2401 = scalar_lea.vmem %s2400, 96
        %s2402 = smov [#allocation15]
        %s2403 = scalar_lea.vmem %s2402, 96
        %v2404 = vld [vmem:[%s2397] sm:$0xf]
        %v2405 = vld [vmem:[%s2399] sm:$0xf]
        %v2406 = vld [vmem:[%s2401] sm:$0xf]
        %v2407 = vld [vmem:[%s2403] sm:$0xf]
        %v2408 = vmul.f32 %v2392, %v2404
        %v2409 = vmul.f32 %v2395, %v2406
        %v2410 = vsub.f32 %v2408, %v2409
        %v2411 = vmul.f32 %v2392, %v2405
        %v2412 = vmul.f32 %v2395, %v2407
        %v2413 = vsub.f32 %v2411, %v2412
        %v2414 = vmul.f32 %v2395, %v2404
        %v2415 = vmul.f32 %v2392, %v2406
        %v2416 = vadd.f32 %v2414, %v2415
        %v2417 = vmul.f32 %v2395, %v2405
        %v2418 = vmul.f32 %v2392, %v2407
        %v2419 = vadd.f32 %v2417, %v2418
        %2420 = vst [vmem:[%s2397] sm:$0xf] %v2410
        %2421 = vst [vmem:[%s2399] sm:$0xf] %v2413
        %2422 = vst [vmem:[%s2401] sm:$0xf] %v2416
        %2423 = vst [vmem:[%s2403] sm:$0xf] %v2419
        %s2424 = smov [#allocation21]
        %v2425 = vld [vmem:[%s2424] ss:$0 sm:$0xff]
        %s2426 = smov [#allocation22]
        %v2427 = vld [vmem:[%s2426] ss:$0 sm:$0xff]
        %s2428 = smov [#allocation12]
        %s2429 = smov [#allocation13]
        %s2430 = smov [#allocation14]
        %s2431 = smov [#allocation15]
        %v2432 = vld [vmem:[%s2428] sm:$0xff]
        %v2433 = vld [vmem:[%s2429] sm:$0xff]
        %v2434 = vld [vmem:[%s2430] sm:$0xff]
        %v2435 = vld [vmem:[%s2431] sm:$0xff]
        %v2436 = vmul.f32 %v2425, %v2432
        %v2437 = vmul.f32 %v2427, %v2433
        %v2438 = vsub.f32 %v2436, %v2437
        %v2439 = vmul.f32 %v2427, %v2432
        %v2440 = vmul.f32 %v2425, %v2433
        %v2441 = vadd.f32 %v2439, %v2440
        %v2442 = vmul.f32 %v2425, %v2434
        %v2443 = vmul.f32 %v2427, %v2435
        %v2444 = vsub.f32 %v2442, %v2443
        %v2445 = vmul.f32 %v2427, %v2434
        %v2446 = vmul.f32 %v2425, %v2435
        %v2447 = vadd.f32 %v2445, %v2446
        %2448 = vst [vmem:[%s2428] sm:$0xff] %v2438
        %2449 = vst [vmem:[%s2429] sm:$0xff] %v2441
        %2450 = vst [vmem:[%s2430] sm:$0xff] %v2444
        %2451 = vst [vmem:[%s2431] sm:$0xff] %v2447
        %s2452 = smov [#allocation12]
        %s2453 = scalar_lea.vmem %s2452, 8
        %s2454 = smov [#allocation13]
        %s2455 = scalar_lea.vmem %s2454, 8
        %s2456 = smov [#allocation14]
        %s2457 = scalar_lea.vmem %s2456, 8
        %s2458 = smov [#allocation15]
        %s2459 = scalar_lea.vmem %s2458, 8
        %v2460 = vld [vmem:[%s2453] sm:$0xff]
        %v2461 = vld [vmem:[%s2455] sm:$0xff]
        %v2462 = vld [vmem:[%s2457] sm:$0xff]
        %v2463 = vld [vmem:[%s2459] sm:$0xff]
        %v2464 = vmul.f32 %v2425, %v2460
        %v2465 = vmul.f32 %v2427, %v2461
        %v2466 = vsub.f32 %v2464, %v2465
        %v2467 = vmul.f32 %v2427, %v2460
        %v2468 = vmul.f32 %v2425, %v2461
        %v2469 = vadd.f32 %v2467, %v2468
        %v2470 = vmul.f32 %v2425, %v2462
        %v2471 = vmul.f32 %v2427, %v2463
        %v2472 = vsub.f32 %v2470, %v2471
        %v2473 = vmul.f32 %v2427, %v2462
        %v2474 = vmul.f32 %v2425, %v2463
        %v2475 = vadd.f32 %v2473, %v2474
        %2476 = vst [vmem:[%s2453] sm:$0xff] %v2466
        %2477 = vst [vmem:[%s2455] sm:$0xff] %v2469
        %2478 = vst [vmem:[%s2457] sm:$0xff] %v2472
        %2479 = vst [vmem:[%s2459] sm:$0xff] %v2475
        %s2480 = smov [#allocation12]
        %s2481 = scalar_lea.vmem %s2480, 16
        %s2482 = smov [#allocation13]
        %s2483 = scalar_lea.vmem %s2482, 16
        %s2484 = smov [#allocation14]
        %s2485 = scalar_lea.vmem %s2484, 16
        %s2486 = smov [#allocation15]
        %s2487 = scalar_lea.vmem %s2486, 16
        %v2488 = vld [vmem:[%s2481] sm:$0xff]
        %v2489 = vld [vmem:[%s2483] sm:$0xff]
        %v2490 = vld [vmem:[%s2485] sm:$0xff]
        %v2491 = vld [vmem:[%s2487] sm:$0xff]
        %v2492 = vmul.f32 %v2425, %v2488
        %v2493 = vmul.f32 %v2427, %v2489
        %v2494 = vsub.f32 %v2492, %v2493
        %v2495 = vmul.f32 %v2427, %v2488
        %v2496 = vmul.f32 %v2425, %v2489
        %v2497 = vadd.f32 %v2495, %v2496
        %v2498 = vmul.f32 %v2425, %v2490
        %v2499 = vmul.f32 %v2427, %v2491
        %v2500 = vsub.f32 %v2498, %v2499
        %v2501 = vmul.f32 %v2427, %v2490
        %v2502 = vmul.f32 %v2425, %v2491
        %v2503 = vadd.f32 %v2501, %v2502
        %2504 = vst [vmem:[%s2481] sm:$0xff] %v2494
        %2505 = vst [vmem:[%s2483] sm:$0xff] %v2497
        %2506 = vst [vmem:[%s2485] sm:$0xff] %v2500
        %2507 = vst [vmem:[%s2487] sm:$0xff] %v2503
        %s2508 = smov [#allocation12]
        %s2509 = scalar_lea.vmem %s2508, 24
        %s2510 = smov [#allocation13]
        %s2511 = scalar_lea.vmem %s2510, 24
        %s2512 = smov [#allocation14]
        %s2513 = scalar_lea.vmem %s2512, 24
        %s2514 = smov [#allocation15]
        %s2515 = scalar_lea.vmem %s2514, 24
        %v2516 = vld [vmem:[%s2509] sm:$0xff]
        %v2517 = vld [vmem:[%s2511] sm:$0xff]
        %v2518 = vld [vmem:[%s2513] sm:$0xff]
        %v2519 = vld [vmem:[%s2515] sm:$0xff]
        %v2520 = vmul.f32 %v2425, %v2516
        %v2521 = vmul.f32 %v2427, %v2517
        %v2522 = vsub.f32 %v2520, %v2521
        %v2523 = vmul.f32 %v2427, %v2516
        %v2524 = vmul.f32 %v2425, %v2517
        %v2525 = vadd.f32 %v2523, %v2524
        %v2526 = vmul.f32 %v2425, %v2518
        %v2527 = vmul.f32 %v2427, %v2519
        %v2528 = vsub.f32 %v2526, %v2527
        %v2529 = vmul.f32 %v2427, %v2518
        %v2530 = vmul.f32 %v2425, %v2519
        %v2531 = vadd.f32 %v2529, %v2530
        %2532 = vst [vmem:[%s2509] sm:$0xff] %v2522
        %2533 = vst [vmem:[%s2511] sm:$0xff] %v2525
        %2534 = vst [vmem:[%s2513] sm:$0xff] %v2528
        %2535 = vst [vmem:[%s2515] sm:$0xff] %v2531
        %s2536 = smov [#allocation12]
        %s2537 = scalar_lea.vmem %s2536, 32
        %s2538 = smov [#allocation13]
        %s2539 = scalar_lea.vmem %s2538, 32
        %s2540 = smov [#allocation14]
        %s2541 = scalar_lea.vmem %s2540, 32
        %s2542 = smov [#allocation15]
        %s2543 = scalar_lea.vmem %s2542, 32
        %v2544 = vld [vmem:[%s2537] sm:$0xff]
        %v2545 = vld [vmem:[%s2539] sm:$0xff]
        %v2546 = vld [vmem:[%s2541] sm:$0xff]
        %v2547 = vld [vmem:[%s2543] sm:$0xff]
        %v2548 = vmul.f32 %v2425, %v2544
        %v2549 = vmul.f32 %v2427, %v2545
        %v2550 = vsub.f32 %v2548, %v2549
        %v2551 = vmul.f32 %v2427, %v2544
        %v2552 = vmul.f32 %v2425, %v2545
        %v2553 = vadd.f32 %v2551, %v2552
        %v2554 = vmul.f32 %v2425, %v2546
        %v2555 = vmul.f32 %v2427, %v2547
        %v2556 = vsub.f32 %v2554, %v2555
        %v2557 = vmul.f32 %v2427, %v2546
        %v2558 = vmul.f32 %v2425, %v2547
        %v2559 = vadd.f32 %v2557, %v2558
        %2560 = vst [vmem:[%s2537] sm:$0xff] %v2550
        %2561 = vst [vmem:[%s2539] sm:$0xff] %v2553
        %2562 = vst [vmem:[%s2541] sm:$0xff] %v2556
        %2563 = vst [vmem:[%s2543] sm:$0xff] %v2559
        %s2564 = smov [#allocation12]
        %s2565 = scalar_lea.vmem %s2564, 40
        %s2566 = smov [#allocation13]
        %s2567 = scalar_lea.vmem %s2566, 40
        %s2568 = smov [#allocation14]
        %s2569 = scalar_lea.vmem %s2568, 40
        %s2570 = smov [#allocation15]
        %s2571 = scalar_lea.vmem %s2570, 40
        %v2572 = vld [vmem:[%s2565] sm:$0xff]
        %v2573 = vld [vmem:[%s2567] sm:$0xff]
        %v2574 = vld [vmem:[%s2569] sm:$0xff]
        %v2575 = vld [vmem:[%s2571] sm:$0xff]
        %v2576 = vmul.f32 %v2425, %v2572
        %v2577 = vmul.f32 %v2427, %v2573
        %v2578 = vsub.f32 %v2576, %v2577
        %v2579 = vmul.f32 %v2427, %v2572
        %v2580 = vmul.f32 %v2425, %v2573
        %v2581 = vadd.f32 %v2579, %v2580
        %v2582 = vmul.f32 %v2425, %v2574
        %v2583 = vmul.f32 %v2427, %v2575
        %v2584 = vsub.f32 %v2582, %v2583
        %v2585 = vmul.f32 %v2427, %v2574
        %v2586 = vmul.f32 %v2425, %v2575
        %v2587 = vadd.f32 %v2585, %v2586
        %2588 = vst [vmem:[%s2565] sm:$0xff] %v2578
        %2589 = vst [vmem:[%s2567] sm:$0xff] %v2581
        %2590 = vst [vmem:[%s2569] sm:$0xff] %v2584
        %2591 = vst [vmem:[%s2571] sm:$0xff] %v2587
        %s2592 = smov [#allocation12]
        %s2593 = scalar_lea.vmem %s2592, 48
        %s2594 = smov [#allocation13]
        %s2595 = scalar_lea.vmem %s2594, 48
        %s2596 = smov [#allocation14]
        %s2597 = scalar_lea.vmem %s2596, 48
        %s2598 = smov [#allocation15]
        %s2599 = scalar_lea.vmem %s2598, 48
        %v2600 = vld [vmem:[%s2593] sm:$0xff]
        %v2601 = vld [vmem:[%s2595] sm:$0xff]
        %v2602 = vld [vmem:[%s2597] sm:$0xff]
        %v2603 = vld [vmem:[%s2599] sm:$0xff]
        %v2604 = vmul.f32 %v2425, %v2600
        %v2605 = vmul.f32 %v2427, %v2601
        %v2606 = vsub.f32 %v2604, %v2605
        %v2607 = vmul.f32 %v2427, %v2600
        %v2608 = vmul.f32 %v2425, %v2601
        %v2609 = vadd.f32 %v2607, %v2608
        %v2610 = vmul.f32 %v2425, %v2602
        %v2611 = vmul.f32 %v2427, %v2603
        %v2612 = vsub.f32 %v2610, %v2611
        %v2613 = vmul.f32 %v2427, %v2602
        %v2614 = vmul.f32 %v2425, %v2603
        %v2615 = vadd.f32 %v2613, %v2614
        %2616 = vst [vmem:[%s2593] sm:$0xff] %v2606
        %2617 = vst [vmem:[%s2595] sm:$0xff] %v2609
        %2618 = vst [vmem:[%s2597] sm:$0xff] %v2612
        %2619 = vst [vmem:[%s2599] sm:$0xff] %v2615
        %s2620 = smov [#allocation12]
        %s2621 = scalar_lea.vmem %s2620, 56
        %s2622 = smov [#allocation13]
        %s2623 = scalar_lea.vmem %s2622, 56
        %s2624 = smov [#allocation14]
        %s2625 = scalar_lea.vmem %s2624, 56
        %s2626 = smov [#allocation15]
        %s2627 = scalar_lea.vmem %s2626, 56
        %v2628 = vld [vmem:[%s2621] sm:$0xff]
        %v2629 = vld [vmem:[%s2623] sm:$0xff]
        %v2630 = vld [vmem:[%s2625] sm:$0xff]
        %v2631 = vld [vmem:[%s2627] sm:$0xff]
        %v2632 = vmul.f32 %v2425, %v2628
        %v2633 = vmul.f32 %v2427, %v2629
        %v2634 = vsub.f32 %v2632, %v2633
        %v2635 = vmul.f32 %v2427, %v2628
        %v2636 = vmul.f32 %v2425, %v2629
        %v2637 = vadd.f32 %v2635, %v2636
        %v2638 = vmul.f32 %v2425, %v2630
        %v2639 = vmul.f32 %v2427, %v2631
        %v2640 = vsub.f32 %v2638, %v2639
        %v2641 = vmul.f32 %v2427, %v2630
        %v2642 = vmul.f32 %v2425, %v2631
        %v2643 = vadd.f32 %v2641, %v2642
        %2644 = vst [vmem:[%s2621] sm:$0xff] %v2634
        %2645 = vst [vmem:[%s2623] sm:$0xff] %v2637
        %2646 = vst [vmem:[%s2625] sm:$0xff] %v2640
        %2647 = vst [vmem:[%s2627] sm:$0xff] %v2643
        %s2648 = smov [#allocation12]
        %s2649 = scalar_lea.vmem %s2648, 64
        %s2650 = smov [#allocation13]
        %s2651 = scalar_lea.vmem %s2650, 64
        %s2652 = smov [#allocation14]
        %s2653 = scalar_lea.vmem %s2652, 64
        %s2654 = smov [#allocation15]
        %s2655 = scalar_lea.vmem %s2654, 64
        %v2656 = vld [vmem:[%s2649] sm:$0xff]
        %v2657 = vld [vmem:[%s2651] sm:$0xff]
        %v2658 = vld [vmem:[%s2653] sm:$0xff]
        %v2659 = vld [vmem:[%s2655] sm:$0xff]
        %v2660 = vmul.f32 %v2425, %v2656
        %v2661 = vmul.f32 %v2427, %v2657
        %v2662 = vsub.f32 %v2660, %v2661
        %v2663 = vmul.f32 %v2427, %v2656
        %v2664 = vmul.f32 %v2425, %v2657
        %v2665 = vadd.f32 %v2663, %v2664
        %v2666 = vmul.f32 %v2425, %v2658
        %v2667 = vmul.f32 %v2427, %v2659
        %v2668 = vsub.f32 %v2666, %v2667
        %v2669 = vmul.f32 %v2427, %v2658
        %v2670 = vmul.f32 %v2425, %v2659
        %v2671 = vadd.f32 %v2669, %v2670
        %2672 = vst [vmem:[%s2649] sm:$0xff] %v2662
        %2673 = vst [vmem:[%s2651] sm:$0xff] %v2665
        %2674 = vst [vmem:[%s2653] sm:$0xff] %v2668
        %2675 = vst [vmem:[%s2655] sm:$0xff] %v2671
        %s2676 = smov [#allocation12]
        %s2677 = scalar_lea.vmem %s2676, 72
        %s2678 = smov [#allocation13]
        %s2679 = scalar_lea.vmem %s2678, 72
        %s2680 = smov [#allocation14]
        %s2681 = scalar_lea.vmem %s2680, 72
        %s2682 = smov [#allocation15]
        %s2683 = scalar_lea.vmem %s2682, 72
        %v2684 = vld [vmem:[%s2677] sm:$0xff]
        %v2685 = vld [vmem:[%s2679] sm:$0xff]
        %v2686 = vld [vmem:[%s2681] sm:$0xff]
        %v2687 = vld [vmem:[%s2683] sm:$0xff]
        %v2688 = vmul.f32 %v2425, %v2684
        %v2689 = vmul.f32 %v2427, %v2685
        %v2690 = vsub.f32 %v2688, %v2689
        %v2691 = vmul.f32 %v2427, %v2684
        %v2692 = vmul.f32 %v2425, %v2685
        %v2693 = vadd.f32 %v2691, %v2692
        %v2694 = vmul.f32 %v2425, %v2686
        %v2695 = vmul.f32 %v2427, %v2687
        %v2696 = vsub.f32 %v2694, %v2695
        %v2697 = vmul.f32 %v2427, %v2686
        %v2698 = vmul.f32 %v2425, %v2687
        %v2699 = vadd.f32 %v2697, %v2698
        %2700 = vst [vmem:[%s2677] sm:$0xff] %v2690
        %2701 = vst [vmem:[%s2679] sm:$0xff] %v2693
        %2702 = vst [vmem:[%s2681] sm:$0xff] %v2696
        %2703 = vst [vmem:[%s2683] sm:$0xff] %v2699
        %s2704 = smov [#allocation12]
        %s2705 = scalar_lea.vmem %s2704, 80
        %s2706 = smov [#allocation13]
        %s2707 = scalar_lea.vmem %s2706, 80
        %s2708 = smov [#allocation14]
        %s2709 = scalar_lea.vmem %s2708, 80
        %s2710 = smov [#allocation15]
        %s2711 = scalar_lea.vmem %s2710, 80
        %v2712 = vld [vmem:[%s2705] sm:$0xff]
        %v2713 = vld [vmem:[%s2707] sm:$0xff]
        %v2714 = vld [vmem:[%s2709] sm:$0xff]
        %v2715 = vld [vmem:[%s2711] sm:$0xff]
        %v2716 = vmul.f32 %v2425, %v2712
        %v2717 = vmul.f32 %v2427, %v2713
        %v2718 = vsub.f32 %v2716, %v2717
        %v2719 = vmul.f32 %v2427, %v2712
        %v2720 = vmul.f32 %v2425, %v2713
        %v2721 = vadd.f32 %v2719, %v2720
        %v2722 = vmul.f32 %v2425, %v2714
        %v2723 = vmul.f32 %v2427, %v2715
        %v2724 = vsub.f32 %v2722, %v2723
        %v2725 = vmul.f32 %v2427, %v2714
        %v2726 = vmul.f32 %v2425, %v2715
        %v2727 = vadd.f32 %v2725, %v2726
        %2728 = vst [vmem:[%s2705] sm:$0xff] %v2718
        %2729 = vst [vmem:[%s2707] sm:$0xff] %v2721
        %2730 = vst [vmem:[%s2709] sm:$0xff] %v2724
        %2731 = vst [vmem:[%s2711] sm:$0xff] %v2727
        %s2732 = smov [#allocation12]
        %s2733 = scalar_lea.vmem %s2732, 88
        %s2734 = smov [#allocation13]
        %s2735 = scalar_lea.vmem %s2734, 88
        %s2736 = smov [#allocation14]
        %s2737 = scalar_lea.vmem %s2736, 88
        %s2738 = smov [#allocation15]
        %s2739 = scalar_lea.vmem %s2738, 88
        %v2740 = vld [vmem:[%s2733] sm:$0xff]
        %v2741 = vld [vmem:[%s2735] sm:$0xff]
        %v2742 = vld [vmem:[%s2737] sm:$0xff]
        %v2743 = vld [vmem:[%s2739] sm:$0xff]
        %v2744 = vmul.f32 %v2425, %v2740
        %v2745 = vmul.f32 %v2427, %v2741
        %v2746 = vsub.f32 %v2744, %v2745
        %v2747 = vmul.f32 %v2427, %v2740
        %v2748 = vmul.f32 %v2425, %v2741
        %v2749 = vadd.f32 %v2747, %v2748
        %v2750 = vmul.f32 %v2425, %v2742
        %v2751 = vmul.f32 %v2427, %v2743
        %v2752 = vsub.f32 %v2750, %v2751
        %v2753 = vmul.f32 %v2427, %v2742
        %v2754 = vmul.f32 %v2425, %v2743
        %v2755 = vadd.f32 %v2753, %v2754
        %2756 = vst [vmem:[%s2733] sm:$0xff] %v2746
        %2757 = vst [vmem:[%s2735] sm:$0xff] %v2749
        %2758 = vst [vmem:[%s2737] sm:$0xff] %v2752
        %2759 = vst [vmem:[%s2739] sm:$0xff] %v2755
        %s2760 = smov [#allocation12]
        %s2761 = scalar_lea.vmem %s2760, 96
        %s2762 = smov [#allocation13]
        %s2763 = scalar_lea.vmem %s2762, 96
        %s2764 = smov [#allocation14]
        %s2765 = scalar_lea.vmem %s2764, 96
        %s2766 = smov [#allocation15]
        %s2767 = scalar_lea.vmem %s2766, 96
        %v2768 = vld [vmem:[%s2761] sm:$0xf]
        %v2769 = vld [vmem:[%s2763] sm:$0xf]
        %v2770 = vld [vmem:[%s2765] sm:$0xf]
        %v2771 = vld [vmem:[%s2767] sm:$0xf]
        %v2772 = vmul.f32 %v2425, %v2768
        %v2773 = vmul.f32 %v2427, %v2769
        %v2774 = vsub.f32 %v2772, %v2773
        %v2775 = vmul.f32 %v2427, %v2768
        %v2776 = vmul.f32 %v2425, %v2769
        %v2777 = vadd.f32 %v2775, %v2776
        %v2778 = vmul.f32 %v2425, %v2770
        %v2779 = vmul.f32 %v2427, %v2771
        %v2780 = vsub.f32 %v2778, %v2779
        %v2781 = vmul.f32 %v2427, %v2770
        %v2782 = vmul.f32 %v2425, %v2771
        %v2783 = vadd.f32 %v2781, %v2782
        %2784 = vst [vmem:[%s2761] sm:$0xf] %v2774
        %2785 = vst [vmem:[%s2763] sm:$0xf] %v2777
        %2786 = vst [vmem:[%s2765] sm:$0xf] %v2780
        %2787 = vst [vmem:[%s2767] sm:$0xf] %v2783
        %s2788 = smov [#allocation12]
        %s2789 = smov [#allocation19]
        %v2790 = vlaneseq
        %v2791 = vand.u32 %v2790, 127
        %v2792 = vmov %v2791
        %v2793 = vlaneseq
        %v2794 = vshrl.u32 %v2793, 7
        %v2795 = vmov %v2794
        %v2796 = vld [vmem:[%s2789] ss:$0 sm:$0xff]
        %v2797 = vld [vmem:[%s2788] sm:$0xff]
        %vm2800 = vcmp.eq.s32.totalorder %v2795, %v2792
        %v2801 = vsel %vm2800, %v2796, %v2797
        %2802 = vst [vmem:[%s2788] sm:$0xff] %v2801
        %v2803 = vld [vmem:[%s2789] ss:$0 sm:$0xff]
        %s2804 = scalar_lea.vmem %s2788, 8
        %v2805 = vld [vmem:[%s2804] sm:$0xff]
        %v2807 = vadd.s32 %v2795, 8
        %vm2808 = vcmp.eq.s32.totalorder %v2807, %v2792
        %v2809 = vsel %vm2808, %v2803, %v2805
        %2810 = vst [vmem:[%s2804] sm:$0xff] %v2809
        %v2811 = vld [vmem:[%s2789] ss:$0 sm:$0xff]
        %s2812 = scalar_lea.vmem %s2788, 16
        %v2813 = vld [vmem:[%s2812] sm:$0xff]
        %v2815 = vadd.s32 %v2795, 16
        %vm2816 = vcmp.eq.s32.totalorder %v2815, %v2792
        %v2817 = vsel %vm2816, %v2811, %v2813
        %2818 = vst [vmem:[%s2812] sm:$0xff] %v2817
        %v2819 = vld [vmem:[%s2789] ss:$0 sm:$0xff]
        %s2820 = scalar_lea.vmem %s2788, 24
        %v2821 = vld [vmem:[%s2820] sm:$0xff]
        %v2823 = vadd.s32 %v2795, 24
        %vm2824 = vcmp.eq.s32.totalorder %v2823, %v2792
        %v2825 = vsel %vm2824, %v2819, %v2821
        %2826 = vst [vmem:[%s2820] sm:$0xff] %v2825
        %v2827 = vld [vmem:[%s2789] ss:$0 sm:$0xff]
        %s2828 = scalar_lea.vmem %s2788, 32
        %v2829 = vld [vmem:[%s2828] sm:$0xff]
        %v2831 = vadd.s32 %v2795, 32
        %vm2832 = vcmp.eq.s32.totalorder %v2831, %v2792
        %v2833 = vsel %vm2832, %v2827, %v2829
        %2834 = vst [vmem:[%s2828] sm:$0xff] %v2833
        %v2835 = vld [vmem:[%s2789] ss:$0 sm:$0xff]
        %s2836 = scalar_lea.vmem %s2788, 40
        %v2837 = vld [vmem:[%s2836] sm:$0xff]
        %v2839 = vadd.s32 %v2795, 40
        %vm2840 = vcmp.eq.s32.totalorder %v2839, %v2792
        %v2841 = vsel %vm2840, %v2835, %v2837
        %2842 = vst [vmem:[%s2836] sm:$0xff] %v2841
        %v2843 = vld [vmem:[%s2789] ss:$0 sm:$0xff]
        %s2844 = scalar_lea.vmem %s2788, 48
        %v2845 = vld [vmem:[%s2844] sm:$0xff]
        %v2847 = vadd.s32 %v2795, 48
        %vm2848 = vcmp.eq.s32.totalorder %v2847, %v2792
        %v2849 = vsel %vm2848, %v2843, %v2845
        %2850 = vst [vmem:[%s2844] sm:$0xff] %v2849
        %v2851 = vld [vmem:[%s2789] ss:$0 sm:$0xff]
        %s2852 = scalar_lea.vmem %s2788, 56
        %v2853 = vld [vmem:[%s2852] sm:$0xff]
        %v2855 = vadd.s32 %v2795, 56
        %vm2856 = vcmp.eq.s32.totalorder %v2855, %v2792
        %v2857 = vsel %vm2856, %v2851, %v2853
        %2858 = vst [vmem:[%s2852] sm:$0xff] %v2857
        %v2859 = vld [vmem:[%s2789] ss:$0 sm:$0xff]
        %s2860 = scalar_lea.vmem %s2788, 64
        %v2861 = vld [vmem:[%s2860] sm:$0xff]
        %v2863 = vadd.s32 %v2795, 64
        %vm2864 = vcmp.eq.s32.totalorder %v2863, %v2792
        %v2865 = vsel %vm2864, %v2859, %v2861
        %2866 = vst [vmem:[%s2860] sm:$0xff] %v2865
        %v2867 = vld [vmem:[%s2789] ss:$0 sm:$0xff]
        %s2868 = scalar_lea.vmem %s2788, 72
        %v2869 = vld [vmem:[%s2868] sm:$0xff]
        %v2871 = vadd.s32 %v2795, 72
        %vm2872 = vcmp.eq.s32.totalorder %v2871, %v2792
        %v2873 = vsel %vm2872, %v2867, %v2869
        %2874 = vst [vmem:[%s2868] sm:$0xff] %v2873
        %v2875 = vld [vmem:[%s2789] ss:$0 sm:$0xff]
        %s2876 = scalar_lea.vmem %s2788, 80
        %v2877 = vld [vmem:[%s2876] sm:$0xff]
        %v2879 = vadd.s32 %v2795, 80
        %vm2880 = vcmp.eq.s32.totalorder %v2879, %v2792
        %v2881 = vsel %vm2880, %v2875, %v2877
        %2882 = vst [vmem:[%s2876] sm:$0xff] %v2881
        %v2883 = vld [vmem:[%s2789] ss:$0 sm:$0xff]
        %s2884 = scalar_lea.vmem %s2788, 88
        %v2885 = vld [vmem:[%s2884] sm:$0xff]
        %v2887 = vadd.s32 %v2795, 88
        %vm2888 = vcmp.eq.s32.totalorder %v2887, %v2792
        %v2889 = vsel %vm2888, %v2883, %v2885
        %2890 = vst [vmem:[%s2884] sm:$0xff] %v2889
        %v2891 = vld [vmem:[%s2789] ss:$0 sm:$0xff]
        %s2892 = scalar_lea.vmem %s2788, 96
        %v2893 = vld [vmem:[%s2892] sm:$0xf]
        %v2895 = vadd.s32 %v2795, 96
        %vm2896 = vcmp.eq.s32.totalorder %v2895, %v2792
        %v2897 = vsel %vm2896, %v2891, %v2893
        %2898 = vst [vmem:[%s2892] sm:$0xf] %v2897
        %s2899 = smov [#allocation13]
        %v2900 = vlaneseq
        %v2901 = vand.u32 %v2900, 127
        %v2902 = vmov %v2901
        %v2903 = vlaneseq
        %v2904 = vshrl.u32 %v2903, 7
        %v2905 = vmov %v2904
        %v2906 = vld [vmem:[%s2899] sm:$0xff]
        %vm2909 = vcmp.eq.s32.totalorder %v2905, %v2902
        %v2910 = vsel %vm2909, 0.0, %v2906
        %2911 = vst [vmem:[%s2899] sm:$0xff] %v2910
        %s2912 = scalar_lea.vmem %s2899, 8
        %v2913 = vld [vmem:[%s2912] sm:$0xff]
        %v2915 = vadd.s32 %v2905, 8
        %vm2916 = vcmp.eq.s32.totalorder %v2915, %v2902
        %v2917 = vsel %vm2916, 0.0, %v2913
        %2918 = vst [vmem:[%s2912] sm:$0xff] %v2917
        %s2919 = scalar_lea.vmem %s2899, 16
        %v2920 = vld [vmem:[%s2919] sm:$0xff]
        %v2922 = vadd.s32 %v2905, 16
        %vm2923 = vcmp.eq.s32.totalorder %v2922, %v2902
        %v2924 = vsel %vm2923, 0.0, %v2920
        %2925 = vst [vmem:[%s2919] sm:$0xff] %v2924
        %s2926 = scalar_lea.vmem %s2899, 24
        %v2927 = vld [vmem:[%s2926] sm:$0xff]
        %v2929 = vadd.s32 %v2905, 24
        %vm2930 = vcmp.eq.s32.totalorder %v2929, %v2902
        %v2931 = vsel %vm2930, 0.0, %v2927
        %2932 = vst [vmem:[%s2926] sm:$0xff] %v2931
        %s2933 = scalar_lea.vmem %s2899, 32
        %v2934 = vld [vmem:[%s2933] sm:$0xff]
        %v2936 = vadd.s32 %v2905, 32
        %vm2937 = vcmp.eq.s32.totalorder %v2936, %v2902
        %v2938 = vsel %vm2937, 0.0, %v2934
        %2939 = vst [vmem:[%s2933] sm:$0xff] %v2938
        %s2940 = scalar_lea.vmem %s2899, 40
        %v2941 = vld [vmem:[%s2940] sm:$0xff]
        %v2943 = vadd.s32 %v2905, 40
        %vm2944 = vcmp.eq.s32.totalorder %v2943, %v2902
        %v2945 = vsel %vm2944, 0.0, %v2941
        %2946 = vst [vmem:[%s2940] sm:$0xff] %v2945
        %s2947 = scalar_lea.vmem %s2899, 48
        %v2948 = vld [vmem:[%s2947] sm:$0xff]
        %v2950 = vadd.s32 %v2905, 48
        %vm2951 = vcmp.eq.s32.totalorder %v2950, %v2902
        %v2952 = vsel %vm2951, 0.0, %v2948
        %2953 = vst [vmem:[%s2947] sm:$0xff] %v2952
        %s2954 = scalar_lea.vmem %s2899, 56
        %v2955 = vld [vmem:[%s2954] sm:$0xff]
        %v2957 = vadd.s32 %v2905, 56
        %vm2958 = vcmp.eq.s32.totalorder %v2957, %v2902
        %v2959 = vsel %vm2958, 0.0, %v2955
        %2960 = vst [vmem:[%s2954] sm:$0xff] %v2959
        %s2961 = scalar_lea.vmem %s2899, 64
        %v2962 = vld [vmem:[%s2961] sm:$0xff]
        %v2964 = vadd.s32 %v2905, 64
        %vm2965 = vcmp.eq.s32.totalorder %v2964, %v2902
        %v2966 = vsel %vm2965, 0.0, %v2962
        %2967 = vst [vmem:[%s2961] sm:$0xff] %v2966
        %s2968 = scalar_lea.vmem %s2899, 72
        %v2969 = vld [vmem:[%s2968] sm:$0xff]
        %v2971 = vadd.s32 %v2905, 72
        %vm2972 = vcmp.eq.s32.totalorder %v2971, %v2902
        %v2973 = vsel %vm2972, 0.0, %v2969
        %2974 = vst [vmem:[%s2968] sm:$0xff] %v2973
        %s2975 = scalar_lea.vmem %s2899, 80
        %v2976 = vld [vmem:[%s2975] sm:$0xff]
        %v2978 = vadd.s32 %v2905, 80
        %vm2979 = vcmp.eq.s32.totalorder %v2978, %v2902
        %v2980 = vsel %vm2979, 0.0, %v2976
        %2981 = vst [vmem:[%s2975] sm:$0xff] %v2980
        %s2982 = scalar_lea.vmem %s2899, 88
        %v2983 = vld [vmem:[%s2982] sm:$0xff]
        %v2985 = vadd.s32 %v2905, 88
        %vm2986 = vcmp.eq.s32.totalorder %v2985, %v2902
        %v2987 = vsel %vm2986, 0.0, %v2983
        %2988 = vst [vmem:[%s2982] sm:$0xff] %v2987
        %s2989 = scalar_lea.vmem %s2899, 96
        %v2990 = vld [vmem:[%s2989] sm:$0xf]
        %v2992 = vadd.s32 %v2905, 96
        %vm2993 = vcmp.eq.s32.totalorder %v2992, %v2902
        %v2994 = vsel %vm2993, 0.0, %v2990
        %2995 = vst [vmem:[%s2989] sm:$0xf] %v2994
        %s2996 = smov [#allocation14]
        %v2997 = vlaneseq
        %v2998 = vand.u32 %v2997, 127
        %v2999 = vmov %v2998
        %v3000 = vlaneseq
        %v3001 = vshrl.u32 %v3000, 7
        %v3002 = vmov %v3001
        %v3003 = vld [vmem:[%s2996] sm:$0xff]
        %vm3006 = vcmp.eq.s32.totalorder %v3002, %v2999
        %v3007 = vsel %vm3006, 0.0, %v3003
        %3008 = vst [vmem:[%s2996] sm:$0xff] %v3007
        %s3009 = scalar_lea.vmem %s2996, 8
        %v3010 = vld [vmem:[%s3009] sm:$0xff]
        %v3012 = vadd.s32 %v3002, 8
        %vm3013 = vcmp.eq.s32.totalorder %v3012, %v2999
        %v3014 = vsel %vm3013, 0.0, %v3010
        %3015 = vst [vmem:[%s3009] sm:$0xff] %v3014
        %s3016 = scalar_lea.vmem %s2996, 16
        %v3017 = vld [vmem:[%s3016] sm:$0xff]
        %v3019 = vadd.s32 %v3002, 16
        %vm3020 = vcmp.eq.s32.totalorder %v3019, %v2999
        %v3021 = vsel %vm3020, 0.0, %v3017
        %3022 = vst [vmem:[%s3016] sm:$0xff] %v3021
        %s3023 = scalar_lea.vmem %s2996, 24
        %v3024 = vld [vmem:[%s3023] sm:$0xff]
        %v3026 = vadd.s32 %v3002, 24
        %vm3027 = vcmp.eq.s32.totalorder %v3026, %v2999
        %v3028 = vsel %vm3027, 0.0, %v3024
        %3029 = vst [vmem:[%s3023] sm:$0xff] %v3028
        %s3030 = scalar_lea.vmem %s2996, 32
        %v3031 = vld [vmem:[%s3030] sm:$0xff]
        %v3033 = vadd.s32 %v3002, 32
        %vm3034 = vcmp.eq.s32.totalorder %v3033, %v2999
        %v3035 = vsel %vm3034, 0.0, %v3031
        %3036 = vst [vmem:[%s3030] sm:$0xff] %v3035
        %s3037 = scalar_lea.vmem %s2996, 40
        %v3038 = vld [vmem:[%s3037] sm:$0xff]
        %v3040 = vadd.s32 %v3002, 40
        %vm3041 = vcmp.eq.s32.totalorder %v3040, %v2999
        %v3042 = vsel %vm3041, 0.0, %v3038
        %3043 = vst [vmem:[%s3037] sm:$0xff] %v3042
        %s3044 = scalar_lea.vmem %s2996, 48
        %v3045 = vld [vmem:[%s3044] sm:$0xff]
        %v3047 = vadd.s32 %v3002, 48
        %vm3048 = vcmp.eq.s32.totalorder %v3047, %v2999
        %v3049 = vsel %vm3048, 0.0, %v3045
        %3050 = vst [vmem:[%s3044] sm:$0xff] %v3049
        %s3051 = scalar_lea.vmem %s2996, 56
        %v3052 = vld [vmem:[%s3051] sm:$0xff]
        %v3054 = vadd.s32 %v3002, 56
        %vm3055 = vcmp.eq.s32.totalorder %v3054, %v2999
        %v3056 = vsel %vm3055, 0.0, %v3052
        %3057 = vst [vmem:[%s3051] sm:$0xff] %v3056
        %s3058 = scalar_lea.vmem %s2996, 64
        %v3059 = vld [vmem:[%s3058] sm:$0xff]
        %v3061 = vadd.s32 %v3002, 64
        %vm3062 = vcmp.eq.s32.totalorder %v3061, %v2999
        %v3063 = vsel %vm3062, 0.0, %v3059
        %3064 = vst [vmem:[%s3058] sm:$0xff] %v3063
        %s3065 = scalar_lea.vmem %s2996, 72
        %v3066 = vld [vmem:[%s3065] sm:$0xff]
        %v3068 = vadd.s32 %v3002, 72
        %vm3069 = vcmp.eq.s32.totalorder %v3068, %v2999
        %v3070 = vsel %vm3069, 0.0, %v3066
        %3071 = vst [vmem:[%s3065] sm:$0xff] %v3070
        %s3072 = scalar_lea.vmem %s2996, 80
        %v3073 = vld [vmem:[%s3072] sm:$0xff]
        %v3075 = vadd.s32 %v3002, 80
        %vm3076 = vcmp.eq.s32.totalorder %v3075, %v2999
        %v3077 = vsel %vm3076, 0.0, %v3073
        %3078 = vst [vmem:[%s3072] sm:$0xff] %v3077
        %s3079 = scalar_lea.vmem %s2996, 88
        %v3080 = vld [vmem:[%s3079] sm:$0xff]
        %v3082 = vadd.s32 %v3002, 88
        %vm3083 = vcmp.eq.s32.totalorder %v3082, %v2999
        %v3084 = vsel %vm3083, 0.0, %v3080
        %3085 = vst [vmem:[%s3079] sm:$0xff] %v3084
        %s3086 = scalar_lea.vmem %s2996, 96
        %v3087 = vld [vmem:[%s3086] sm:$0xf]
        %v3089 = vadd.s32 %v3002, 96
        %vm3090 = vcmp.eq.s32.totalorder %v3089, %v2999
        %v3091 = vsel %vm3090, 0.0, %v3087
        %3092 = vst [vmem:[%s3086] sm:$0xf] %v3091
        %s3093 = smov [#allocation15]
        %s3094 = smov [#allocation20]
        %v3095 = vlaneseq
        %v3096 = vand.u32 %v3095, 127
        %v3097 = vmov %v3096
        %v3098 = vlaneseq
        %v3099 = vshrl.u32 %v3098, 7
        %v3100 = vmov %v3099
        %v3101 = vld [vmem:[%s3094] ss:$0 sm:$0xff]
        %v3102 = vld [vmem:[%s3093] sm:$0xff]
        %vm3105 = vcmp.eq.s32.totalorder %v3100, %v3097
        %v3106 = vsel %vm3105, %v3101, %v3102
        %3107 = vst [vmem:[%s3093] sm:$0xff] %v3106
        %v3108 = vld [vmem:[%s3094] ss:$0 sm:$0xff]
        %s3109 = scalar_lea.vmem %s3093, 8
        %v3110 = vld [vmem:[%s3109] sm:$0xff]
        %v3112 = vadd.s32 %v3100, 8
        %vm3113 = vcmp.eq.s32.totalorder %v3112, %v3097
        %v3114 = vsel %vm3113, %v3108, %v3110
        %3115 = vst [vmem:[%s3109] sm:$0xff] %v3114
        %v3116 = vld [vmem:[%s3094] ss:$0 sm:$0xff]
        %s3117 = scalar_lea.vmem %s3093, 16
        %v3118 = vld [vmem:[%s3117] sm:$0xff]
        %v3120 = vadd.s32 %v3100, 16
        %vm3121 = vcmp.eq.s32.totalorder %v3120, %v3097
        %v3122 = vsel %vm3121, %v3116, %v3118
        %3123 = vst [vmem:[%s3117] sm:$0xff] %v3122
        %v3124 = vld [vmem:[%s3094] ss:$0 sm:$0xff]
        %s3125 = scalar_lea.vmem %s3093, 24
        %v3126 = vld [vmem:[%s3125] sm:$0xff]
        %v3128 = vadd.s32 %v3100, 24
        %vm3129 = vcmp.eq.s32.totalorder %v3128, %v3097
        %v3130 = vsel %vm3129, %v3124, %v3126
        %3131 = vst [vmem:[%s3125] sm:$0xff] %v3130
        %v3132 = vld [vmem:[%s3094] ss:$0 sm:$0xff]
        %s3133 = scalar_lea.vmem %s3093, 32
        %v3134 = vld [vmem:[%s3133] sm:$0xff]
        %v3136 = vadd.s32 %v3100, 32
        %vm3137 = vcmp.eq.s32.totalorder %v3136, %v3097
        %v3138 = vsel %vm3137, %v3132, %v3134
        %3139 = vst [vmem:[%s3133] sm:$0xff] %v3138
        %v3140 = vld [vmem:[%s3094] ss:$0 sm:$0xff]
        %s3141 = scalar_lea.vmem %s3093, 40
        %v3142 = vld [vmem:[%s3141] sm:$0xff]
        %v3144 = vadd.s32 %v3100, 40
        %vm3145 = vcmp.eq.s32.totalorder %v3144, %v3097
        %v3146 = vsel %vm3145, %v3140, %v3142
        %3147 = vst [vmem:[%s3141] sm:$0xff] %v3146
        %v3148 = vld [vmem:[%s3094] ss:$0 sm:$0xff]
        %s3149 = scalar_lea.vmem %s3093, 48
        %v3150 = vld [vmem:[%s3149] sm:$0xff]
        %v3152 = vadd.s32 %v3100, 48
        %vm3153 = vcmp.eq.s32.totalorder %v3152, %v3097
        %v3154 = vsel %vm3153, %v3148, %v3150
        %3155 = vst [vmem:[%s3149] sm:$0xff] %v3154
        %v3156 = vld [vmem:[%s3094] ss:$0 sm:$0xff]
        %s3157 = scalar_lea.vmem %s3093, 56
        %v3158 = vld [vmem:[%s3157] sm:$0xff]
        %v3160 = vadd.s32 %v3100, 56
        %vm3161 = vcmp.eq.s32.totalorder %v3160, %v3097
        %v3162 = vsel %vm3161, %v3156, %v3158
        %3163 = vst [vmem:[%s3157] sm:$0xff] %v3162
        %v3164 = vld [vmem:[%s3094] ss:$0 sm:$0xff]
        %s3165 = scalar_lea.vmem %s3093, 64
        %v3166 = vld [vmem:[%s3165] sm:$0xff]
        %v3168 = vadd.s32 %v3100, 64
        %vm3169 = vcmp.eq.s32.totalorder %v3168, %v3097
        %v3170 = vsel %vm3169, %v3164, %v3166
        %3171 = vst [vmem:[%s3165] sm:$0xff] %v3170
        %v3172 = vld [vmem:[%s3094] ss:$0 sm:$0xff]
        %s3173 = scalar_lea.vmem %s3093, 72
        %v3174 = vld [vmem:[%s3173] sm:$0xff]
        %v3176 = vadd.s32 %v3100, 72
        %vm3177 = vcmp.eq.s32.totalorder %v3176, %v3097
        %v3178 = vsel %vm3177, %v3172, %v3174
        %3179 = vst [vmem:[%s3173] sm:$0xff] %v3178
        %v3180 = vld [vmem:[%s3094] ss:$0 sm:$0xff]
        %s3181 = scalar_lea.vmem %s3093, 80
        %v3182 = vld [vmem:[%s3181] sm:$0xff]
        %v3184 = vadd.s32 %v3100, 80
        %vm3185 = vcmp.eq.s32.totalorder %v3184, %v3097
        %v3186 = vsel %vm3185, %v3180, %v3182
        %3187 = vst [vmem:[%s3181] sm:$0xff] %v3186
        %v3188 = vld [vmem:[%s3094] ss:$0 sm:$0xff]
        %s3189 = scalar_lea.vmem %s3093, 88
        %v3190 = vld [vmem:[%s3189] sm:$0xff]
        %v3192 = vadd.s32 %v3100, 88
        %vm3193 = vcmp.eq.s32.totalorder %v3192, %v3097
        %v3194 = vsel %vm3193, %v3188, %v3190
        %3195 = vst [vmem:[%s3189] sm:$0xff] %v3194
        %v3196 = vld [vmem:[%s3094] ss:$0 sm:$0xff]
        %s3197 = scalar_lea.vmem %s3093, 96
        %v3198 = vld [vmem:[%s3197] sm:$0xf]
        %v3200 = vadd.s32 %v3100, 96
        %vm3201 = vcmp.eq.s32.totalorder %v3200, %v3097
        %v3202 = vsel %vm3201, %v3196, %v3198
        %3203 = vst [vmem:[%s3197] sm:$0xf] %v3202
        %s3204 = smov [#allocation12]
        %s3205 = smov [#allocation13]
        %v3206 = vld [vmem:[%s3205] sm:$0xff]
        %3207 = vrot.lane.b32.xlu0 %v3206, 1
        %v3208 = vpop.permute.xlu0 %3207
        %v3209 = vld [vmem:[%s3204] sm:$0xff]
        %v3210 = vld [vmem:[%s3204] sm:$0xff]
        %3211 = vrot.lane.b32.xlu0 %v3210, 1
        %v3212 = vpop.permute.xlu0 %3211
        %v3213 = vlaneseq
        %v3214 = vand.u32 %v3213, 127
        %vm3215 = vcmp.eq.s32.totalorder %v3214, 0
        %v3216 = vsel %vm3215, %v3210, %v3212
        %v3217 = vlaneseq
        %v3218 = vand.u32 %v3217, 127
        %vm3219 = vcmp.eq.s32.totalorder %v3218, 1
        %v3220 = vsel %vm3219, %v3208, %v3216
        %v3221 = vlaneseq
        %v3222 = vand.u32 %v3221, 127
        %vm3223 = vcmp.ge.s32.totalorder %v3222, 0
        %vm3224 = vcmp.lt.s32.totalorder %v3222, 100
        %vm3225 = vmand %vm3223, %vm3224
        %v3226 = vsel %vm3225, %v3220, 0.0
        %v3227 = vld [vmem:[%s3205] sm:$0xff]
        %3228 = vrot.lane.b32.xlu0 %v3227, 127
        %v3229 = vpop.permute.xlu0 %3228
        %v3230 = vlaneseq
        %v3231 = vand.u32 %v3230, 127
        %vm3232 = vcmp.eq.s32.totalorder %v3231, 99
        %v3233 = vsel %vm3232, %v3209, %v3229
        %s3234 = smov [#allocation12]
        %s3235 = scalar_lea.vmem %s3234, 8
        %s3236 = smov [#allocation13]
        %s3237 = scalar_lea.vmem %s3236, 8
        %v3238 = vld [vmem:[%s3237] sm:$0xff]
        %3239 = vrot.lane.b32.xlu0 %v3238, 1
        %v3240 = vpop.permute.xlu0 %3239
        %v3241 = vld [vmem:[%s3235] sm:$0xff]
        %v3242 = vld [vmem:[%s3235] sm:$0xff]
        %3243 = vrot.lane.b32.xlu0 %v3242, 1
        %v3244 = vpop.permute.xlu0 %3243
        %v3245 = vlaneseq
        %v3246 = vand.u32 %v3245, 127
        %vm3247 = vcmp.eq.s32.totalorder %v3246, 0
        %v3248 = vsel %vm3247, %v3242, %v3244
        %v3249 = vlaneseq
        %v3250 = vand.u32 %v3249, 127
        %vm3251 = vcmp.eq.s32.totalorder %v3250, 1
        %v3252 = vsel %vm3251, %v3240, %v3248
        %v3253 = vlaneseq
        %v3254 = vand.u32 %v3253, 127
        %vm3255 = vcmp.ge.s32.totalorder %v3254, 0
        %vm3256 = vcmp.lt.s32.totalorder %v3254, 100
        %vm3257 = vmand %vm3255, %vm3256
        %v3258 = vsel %vm3257, %v3252, 0.0
        %v3259 = vld [vmem:[%s3237] sm:$0xff]
        %3260 = vrot.lane.b32.xlu0 %v3259, 127
        %v3261 = vpop.permute.xlu0 %3260
        %v3262 = vlaneseq
        %v3263 = vand.u32 %v3262, 127
        %vm3264 = vcmp.eq.s32.totalorder %v3263, 99
        %v3265 = vsel %vm3264, %v3241, %v3261
        %s3266 = smov [#allocation12]
        %s3267 = scalar_lea.vmem %s3266, 16
        %s3268 = smov [#allocation13]
        %s3269 = scalar_lea.vmem %s3268, 16
        %v3270 = vld [vmem:[%s3269] sm:$0xff]
        %3271 = vrot.lane.b32.xlu0 %v3270, 1
        %v3272 = vpop.permute.xlu0 %3271
        %v3273 = vld [vmem:[%s3267] sm:$0xff]
        %v3274 = vld [vmem:[%s3267] sm:$0xff]
        %3275 = vrot.lane.b32.xlu0 %v3274, 1
        %v3276 = vpop.permute.xlu0 %3275
        %v3277 = vlaneseq
        %v3278 = vand.u32 %v3277, 127
        %vm3279 = vcmp.eq.s32.totalorder %v3278, 0
        %v3280 = vsel %vm3279, %v3274, %v3276
        %v3281 = vlaneseq
        %v3282 = vand.u32 %v3281, 127
        %vm3283 = vcmp.eq.s32.totalorder %v3282, 1
        %v3284 = vsel %vm3283, %v3272, %v3280
        %v3285 = vlaneseq
        %v3286 = vand.u32 %v3285, 127
        %vm3287 = vcmp.ge.s32.totalorder %v3286, 0
        %vm3288 = vcmp.lt.s32.totalorder %v3286, 100
        %vm3289 = vmand %vm3287, %vm3288
        %v3290 = vsel %vm3289, %v3284, 0.0
        %v3291 = vld [vmem:[%s3269] sm:$0xff]
        %3292 = vrot.lane.b32.xlu0 %v3291, 127
        %v3293 = vpop.permute.xlu0 %3292
        %v3294 = vlaneseq
        %v3295 = vand.u32 %v3294, 127
        %vm3296 = vcmp.eq.s32.totalorder %v3295, 99
        %v3297 = vsel %vm3296, %v3273, %v3293
        %s3298 = smov [#allocation12]
        %s3299 = scalar_lea.vmem %s3298, 24
        %s3300 = smov [#allocation13]
        %s3301 = scalar_lea.vmem %s3300, 24
        %v3302 = vld [vmem:[%s3301] sm:$0xff]
        %3303 = vrot.lane.b32.xlu0 %v3302, 1
        %v3304 = vpop.permute.xlu0 %3303
        %v3305 = vld [vmem:[%s3299] sm:$0xff]
        %v3306 = vld [vmem:[%s3299] sm:$0xff]
        %3307 = vrot.lane.b32.xlu0 %v3306, 1
        %v3308 = vpop.permute.xlu0 %3307
        %v3309 = vlaneseq
        %v3310 = vand.u32 %v3309, 127
        %vm3311 = vcmp.eq.s32.totalorder %v3310, 0
        %v3312 = vsel %vm3311, %v3306, %v3308
        %v3313 = vlaneseq
        %v3314 = vand.u32 %v3313, 127
        %vm3315 = vcmp.eq.s32.totalorder %v3314, 1
        %v3316 = vsel %vm3315, %v3304, %v3312
        %v3317 = vlaneseq
        %v3318 = vand.u32 %v3317, 127
        %vm3319 = vcmp.ge.s32.totalorder %v3318, 0
        %vm3320 = vcmp.lt.s32.totalorder %v3318, 100
        %vm3321 = vmand %vm3319, %vm3320
        %v3322 = vsel %vm3321, %v3316, 0.0
        %v3323 = vld [vmem:[%s3301] sm:$0xff]
        %3324 = vrot.lane.b32.xlu0 %v3323, 127
        %v3325 = vpop.permute.xlu0 %3324
        %v3326 = vlaneseq
        %v3327 = vand.u32 %v3326, 127
        %vm3328 = vcmp.eq.s32.totalorder %v3327, 99
        %v3329 = vsel %vm3328, %v3305, %v3325
        %s3330 = smov [#allocation12]
        %s3331 = scalar_lea.vmem %s3330, 32
        %s3332 = smov [#allocation13]
        %s3333 = scalar_lea.vmem %s3332, 32
        %v3334 = vld [vmem:[%s3333] sm:$0xff]
        %3335 = vrot.lane.b32.xlu0 %v3334, 1
        %v3336 = vpop.permute.xlu0 %3335
        %v3337 = vld [vmem:[%s3331] sm:$0xff]
        %v3338 = vld [vmem:[%s3331] sm:$0xff]
        %3339 = vrot.lane.b32.xlu0 %v3338, 1
        %v3340 = vpop.permute.xlu0 %3339
        %v3341 = vlaneseq
        %v3342 = vand.u32 %v3341, 127
        %vm3343 = vcmp.eq.s32.totalorder %v3342, 0
        %v3344 = vsel %vm3343, %v3338, %v3340
        %v3345 = vlaneseq
        %v3346 = vand.u32 %v3345, 127
        %vm3347 = vcmp.eq.s32.totalorder %v3346, 1
        %v3348 = vsel %vm3347, %v3336, %v3344
        %v3349 = vlaneseq
        %v3350 = vand.u32 %v3349, 127
        %vm3351 = vcmp.ge.s32.totalorder %v3350, 0
        %vm3352 = vcmp.lt.s32.totalorder %v3350, 100
        %vm3353 = vmand %vm3351, %vm3352
        %v3354 = vsel %vm3353, %v3348, 0.0
        %v3355 = vld [vmem:[%s3333] sm:$0xff]
        %3356 = vrot.lane.b32.xlu0 %v3355, 127
        %v3357 = vpop.permute.xlu0 %3356
        %v3358 = vlaneseq
        %v3359 = vand.u32 %v3358, 127
        %vm3360 = vcmp.eq.s32.totalorder %v3359, 99
        %v3361 = vsel %vm3360, %v3337, %v3357
        %s3362 = smov [#allocation12]
        %s3363 = scalar_lea.vmem %s3362, 40
        %s3364 = smov [#allocation13]
        %s3365 = scalar_lea.vmem %s3364, 40
        %v3366 = vld [vmem:[%s3365] sm:$0xff]
        %3367 = vrot.lane.b32.xlu0 %v3366, 1
        %v3368 = vpop.permute.xlu0 %3367
        %v3369 = vld [vmem:[%s3363] sm:$0xff]
        %v3370 = vld [vmem:[%s3363] sm:$0xff]
        %3371 = vrot.lane.b32.xlu0 %v3370, 1
        %v3372 = vpop.permute.xlu0 %3371
        %v3373 = vlaneseq
        %v3374 = vand.u32 %v3373, 127
        %vm3375 = vcmp.eq.s32.totalorder %v3374, 0
        %v3376 = vsel %vm3375, %v3370, %v3372
        %v3377 = vlaneseq
        %v3378 = vand.u32 %v3377, 127
        %vm3379 = vcmp.eq.s32.totalorder %v3378, 1
        %v3380 = vsel %vm3379, %v3368, %v3376
        %v3381 = vlaneseq
        %v3382 = vand.u32 %v3381, 127
        %vm3383 = vcmp.ge.s32.totalorder %v3382, 0
        %vm3384 = vcmp.lt.s32.totalorder %v3382, 100
        %vm3385 = vmand %vm3383, %vm3384
        %v3386 = vsel %vm3385, %v3380, 0.0
        %v3387 = vld [vmem:[%s3365] sm:$0xff]
        %3388 = vrot.lane.b32.xlu0 %v3387, 127
        %v3389 = vpop.permute.xlu0 %3388
        %v3390 = vlaneseq
        %v3391 = vand.u32 %v3390, 127
        %vm3392 = vcmp.eq.s32.totalorder %v3391, 99
        %v3393 = vsel %vm3392, %v3369, %v3389
        %s3394 = smov [#allocation12]
        %s3395 = scalar_lea.vmem %s3394, 48
        %s3396 = smov [#allocation13]
        %s3397 = scalar_lea.vmem %s3396, 48
        %v3398 = vld [vmem:[%s3397] sm:$0xff]
        %3399 = vrot.lane.b32.xlu0 %v3398, 1
        %v3400 = vpop.permute.xlu0 %3399
        %v3401 = vld [vmem:[%s3395] sm:$0xff]
        %v3402 = vld [vmem:[%s3395] sm:$0xff]
        %3403 = vrot.lane.b32.xlu0 %v3402, 1
        %v3404 = vpop.permute.xlu0 %3403
        %v3405 = vlaneseq
        %v3406 = vand.u32 %v3405, 127
        %vm3407 = vcmp.eq.s32.totalorder %v3406, 0
        %v3408 = vsel %vm3407, %v3402, %v3404
        %v3409 = vlaneseq
        %v3410 = vand.u32 %v3409, 127
        %vm3411 = vcmp.eq.s32.totalorder %v3410, 1
        %v3412 = vsel %vm3411, %v3400, %v3408
        %v3413 = vlaneseq
        %v3414 = vand.u32 %v3413, 127
        %vm3415 = vcmp.ge.s32.totalorder %v3414, 0
        %vm3416 = vcmp.lt.s32.totalorder %v3414, 100
        %vm3417 = vmand %vm3415, %vm3416
        %v3418 = vsel %vm3417, %v3412, 0.0
        %v3419 = vld [vmem:[%s3397] sm:$0xff]
        %3420 = vrot.lane.b32.xlu0 %v3419, 127
        %v3421 = vpop.permute.xlu0 %3420
        %v3422 = vlaneseq
        %v3423 = vand.u32 %v3422, 127
        %vm3424 = vcmp.eq.s32.totalorder %v3423, 99
        %v3425 = vsel %vm3424, %v3401, %v3421
        %s3426 = smov [#allocation12]
        %s3427 = scalar_lea.vmem %s3426, 56
        %s3428 = smov [#allocation13]
        %s3429 = scalar_lea.vmem %s3428, 56
        %v3430 = vld [vmem:[%s3429] sm:$0xff]
        %3431 = vrot.lane.b32.xlu0 %v3430, 1
        %v3432 = vpop.permute.xlu0 %3431
        %v3433 = vld [vmem:[%s3427] sm:$0xff]
        %v3434 = vld [vmem:[%s3427] sm:$0xff]
        %3435 = vrot.lane.b32.xlu0 %v3434, 1
        %v3436 = vpop.permute.xlu0 %3435
        %v3437 = vlaneseq
        %v3438 = vand.u32 %v3437, 127
        %vm3439 = vcmp.eq.s32.totalorder %v3438, 0
        %v3440 = vsel %vm3439, %v3434, %v3436
        %v3441 = vlaneseq
        %v3442 = vand.u32 %v3441, 127
        %vm3443 = vcmp.eq.s32.totalorder %v3442, 1
        %v3444 = vsel %vm3443, %v3432, %v3440
        %v3445 = vlaneseq
        %v3446 = vand.u32 %v3445, 127
        %vm3447 = vcmp.ge.s32.totalorder %v3446, 0
        %vm3448 = vcmp.lt.s32.totalorder %v3446, 100
        %vm3449 = vmand %vm3447, %vm3448
        %v3450 = vsel %vm3449, %v3444, 0.0
        %v3451 = vld [vmem:[%s3429] sm:$0xff]
        %3452 = vrot.lane.b32.xlu0 %v3451, 127
        %v3453 = vpop.permute.xlu0 %3452
        %v3454 = vlaneseq
        %v3455 = vand.u32 %v3454, 127
        %vm3456 = vcmp.eq.s32.totalorder %v3455, 99
        %v3457 = vsel %vm3456, %v3433, %v3453
        %s3458 = smov [#allocation12]
        %s3459 = scalar_lea.vmem %s3458, 64
        %s3460 = smov [#allocation13]
        %s3461 = scalar_lea.vmem %s3460, 64
        %v3462 = vld [vmem:[%s3461] sm:$0xff]
        %3463 = vrot.lane.b32.xlu0 %v3462, 1
        %v3464 = vpop.permute.xlu0 %3463
        %v3465 = vld [vmem:[%s3459] sm:$0xff]
        %v3466 = vld [vmem:[%s3459] sm:$0xff]
        %3467 = vrot.lane.b32.xlu0 %v3466, 1
        %v3468 = vpop.permute.xlu0 %3467
        %v3469 = vlaneseq
        %v3470 = vand.u32 %v3469, 127
        %vm3471 = vcmp.eq.s32.totalorder %v3470, 0
        %v3472 = vsel %vm3471, %v3466, %v3468
        %v3473 = vlaneseq
        %v3474 = vand.u32 %v3473, 127
        %vm3475 = vcmp.eq.s32.totalorder %v3474, 1
        %v3476 = vsel %vm3475, %v3464, %v3472
        %v3477 = vlaneseq
        %v3478 = vand.u32 %v3477, 127
        %vm3479 = vcmp.ge.s32.totalorder %v3478, 0
        %vm3480 = vcmp.lt.s32.totalorder %v3478, 100
        %vm3481 = vmand %vm3479, %vm3480
        %v3482 = vsel %vm3481, %v3476, 0.0
        %v3483 = vld [vmem:[%s3461] sm:$0xff]
        %3484 = vrot.lane.b32.xlu0 %v3483, 127
        %v3485 = vpop.permute.xlu0 %3484
        %v3486 = vlaneseq
        %v3487 = vand.u32 %v3486, 127
        %vm3488 = vcmp.eq.s32.totalorder %v3487, 99
        %v3489 = vsel %vm3488, %v3465, %v3485
        %s3490 = smov [#allocation12]
        %s3491 = scalar_lea.vmem %s3490, 72
        %s3492 = smov [#allocation13]
        %s3493 = scalar_lea.vmem %s3492, 72
        %v3494 = vld [vmem:[%s3493] sm:$0xff]
        %3495 = vrot.lane.b32.xlu0 %v3494, 1
        %v3496 = vpop.permute.xlu0 %3495
        %v3497 = vld [vmem:[%s3491] sm:$0xff]
        %v3498 = vld [vmem:[%s3491] sm:$0xff]
        %3499 = vrot.lane.b32.xlu0 %v3498, 1
        %v3500 = vpop.permute.xlu0 %3499
        %v3501 = vlaneseq
        %v3502 = vand.u32 %v3501, 127
        %vm3503 = vcmp.eq.s32.totalorder %v3502, 0
        %v3504 = vsel %vm3503, %v3498, %v3500
        %v3505 = vlaneseq
        %v3506 = vand.u32 %v3505, 127
        %vm3507 = vcmp.eq.s32.totalorder %v3506, 1
        %v3508 = vsel %vm3507, %v3496, %v3504
        %v3509 = vlaneseq
        %v3510 = vand.u32 %v3509, 127
        %vm3511 = vcmp.ge.s32.totalorder %v3510, 0
        %vm3512 = vcmp.lt.s32.totalorder %v3510, 100
        %vm3513 = vmand %vm3511, %vm3512
        %v3514 = vsel %vm3513, %v3508, 0.0
        %v3515 = vld [vmem:[%s3493] sm:$0xff]
        %3516 = vrot.lane.b32.xlu0 %v3515, 127
        %v3517 = vpop.permute.xlu0 %3516
        %v3518 = vlaneseq
        %v3519 = vand.u32 %v3518, 127
        %vm3520 = vcmp.eq.s32.totalorder %v3519, 99
        %v3521 = vsel %vm3520, %v3497, %v3517
        %s3522 = smov [#allocation12]
        %s3523 = scalar_lea.vmem %s3522, 80
        %s3524 = smov [#allocation13]
        %s3525 = scalar_lea.vmem %s3524, 80
        %v3526 = vld [vmem:[%s3525] sm:$0xff]
        %3527 = vrot.lane.b32.xlu0 %v3526, 1
        %v3528 = vpop.permute.xlu0 %3527
        %v3529 = vld [vmem:[%s3523] sm:$0xff]
        %v3530 = vld [vmem:[%s3523] sm:$0xff]
        %3531 = vrot.lane.b32.xlu0 %v3530, 1
        %v3532 = vpop.permute.xlu0 %3531
        %v3533 = vlaneseq
        %v3534 = vand.u32 %v3533, 127
        %vm3535 = vcmp.eq.s32.totalorder %v3534, 0
        %v3536 = vsel %vm3535, %v3530, %v3532
        %v3537 = vlaneseq
        %v3538 = vand.u32 %v3537, 127
        %vm3539 = vcmp.eq.s32.totalorder %v3538, 1
        %v3540 = vsel %vm3539, %v3528, %v3536
        %v3541 = vlaneseq
        %v3542 = vand.u32 %v3541, 127
        %vm3543 = vcmp.ge.s32.totalorder %v3542, 0
        %vm3544 = vcmp.lt.s32.totalorder %v3542, 100
        %vm3545 = vmand %vm3543, %vm3544
        %v3546 = vsel %vm3545, %v3540, 0.0
        %v3547 = vld [vmem:[%s3525] sm:$0xff]
        %3548 = vrot.lane.b32.xlu0 %v3547, 127
        %v3549 = vpop.permute.xlu0 %3548
        %v3550 = vlaneseq
        %v3551 = vand.u32 %v3550, 127
        %vm3552 = vcmp.eq.s32.totalorder %v3551, 99
        %v3553 = vsel %vm3552, %v3529, %v3549
        %s3554 = smov [#allocation12]
        %s3555 = scalar_lea.vmem %s3554, 88
        %s3556 = smov [#allocation13]
        %s3557 = scalar_lea.vmem %s3556, 88
        %v3558 = vld [vmem:[%s3557] sm:$0xff]
        %3559 = vrot.lane.b32.xlu0 %v3558, 1
        %v3560 = vpop.permute.xlu0 %3559
        %v3561 = vld [vmem:[%s3555] sm:$0xff]
        %v3562 = vld [vmem:[%s3555] sm:$0xff]
        %3563 = vrot.lane.b32.xlu0 %v3562, 1
        %v3564 = vpop.permute.xlu0 %3563
        %v3565 = vlaneseq
        %v3566 = vand.u32 %v3565, 127
        %vm3567 = vcmp.eq.s32.totalorder %v3566, 0
        %v3568 = vsel %vm3567, %v3562, %v3564
        %v3569 = vlaneseq
        %v3570 = vand.u32 %v3569, 127
        %vm3571 = vcmp.eq.s32.totalorder %v3570, 1
        %v3572 = vsel %vm3571, %v3560, %v3568
        %v3573 = vlaneseq
        %v3574 = vand.u32 %v3573, 127
        %vm3575 = vcmp.ge.s32.totalorder %v3574, 0
        %vm3576 = vcmp.lt.s32.totalorder %v3574, 100
        %vm3577 = vmand %vm3575, %vm3576
        %v3578 = vsel %vm3577, %v3572, 0.0
        %v3579 = vld [vmem:[%s3557] sm:$0xff]
        %3580 = vrot.lane.b32.xlu0 %v3579, 127
        %v3581 = vpop.permute.xlu0 %3580
        %v3582 = vlaneseq
        %v3583 = vand.u32 %v3582, 127
        %vm3584 = vcmp.eq.s32.totalorder %v3583, 99
        %v3585 = vsel %vm3584, %v3561, %v3581
        %s3586 = smov [#allocation12]
        %s3587 = scalar_lea.vmem %s3586, 96
        %s3588 = smov [#allocation13]
        %s3589 = scalar_lea.vmem %s3588, 96
        %v3590 = vld [vmem:[%s3589] sm:$0xf]
        %3591 = vrot.lane.b32.xlu0 %v3590, 1
        %v3592 = vpop.permute.xlu0 %3591
        %v3593 = vld [vmem:[%s3587] sm:$0xf]
        %v3594 = vld [vmem:[%s3587] sm:$0xf]
        %3595 = vrot.lane.b32.xlu0 %v3594, 1
        %v3596 = vpop.permute.xlu0 %3595
        %v3597 = vlaneseq
        %v3598 = vand.u32 %v3597, 127
        %vm3599 = vcmp.eq.s32.totalorder %v3598, 0
        %v3600 = vsel %vm3599, %v3594, %v3596
        %v3601 = vlaneseq
        %v3602 = vand.u32 %v3601, 127
        %vm3603 = vcmp.eq.s32.totalorder %v3602, 1
        %v3604 = vsel %vm3603, %v3592, %v3600
        %v3605 = vlaneseq
        %v3606 = vand.u32 %v3605, 127
        %vm3607 = vcmp.ge.s32.totalorder %v3606, 0
        %vm3608 = vcmp.lt.s32.totalorder %v3606, 100
        %vm3609 = vmand %vm3607, %vm3608
        %v3610 = vsel %vm3609, %v3604, 0.0
        %v3611 = vld [vmem:[%s3589] sm:$0xf]
        %3612 = vrot.lane.b32.xlu0 %v3611, 127
        %v3613 = vpop.permute.xlu0 %3612
        %v3614 = vlaneseq
        %v3615 = vand.u32 %v3614, 127
        %vm3616 = vcmp.eq.s32.totalorder %v3615, 99
        %v3617 = vsel %vm3616, %v3593, %v3613
        %3618 = vst [vmem:[%s3204] sm:$0xff] %v3226
        %3619 = vst [vmem:[%s3205] sm:$0xff] %v3233
        %3620 = vst [vmem:[%s3235] sm:$0xff] %v3258
        %3621 = vst [vmem:[%s3237] sm:$0xff] %v3265
        %3622 = vst [vmem:[%s3267] sm:$0xff] %v3290
        %3623 = vst [vmem:[%s3269] sm:$0xff] %v3297
        %3624 = vst [vmem:[%s3299] sm:$0xff] %v3322
        %3625 = vst [vmem:[%s3301] sm:$0xff] %v3329
        %3626 = vst [vmem:[%s3331] sm:$0xff] %v3354
        %3627 = vst [vmem:[%s3333] sm:$0xff] %v3361
        %3628 = vst [vmem:[%s3363] sm:$0xff] %v3386
        %3629 = vst [vmem:[%s3365] sm:$0xff] %v3393
        %3630 = vst [vmem:[%s3395] sm:$0xff] %v3418
        %3631 = vst [vmem:[%s3397] sm:$0xff] %v3425
        %3632 = vst [vmem:[%s3427] sm:$0xff] %v3450
        %3633 = vst [vmem:[%s3429] sm:$0xff] %v3457
        %3634 = vst [vmem:[%s3459] sm:$0xff] %v3482
        %3635 = vst [vmem:[%s3461] sm:$0xff] %v3489
        %3636 = vst [vmem:[%s3491] sm:$0xff] %v3514
        %3637 = vst [vmem:[%s3493] sm:$0xff] %v3521
        %3638 = vst [vmem:[%s3523] sm:$0xff] %v3546
        %3639 = vst [vmem:[%s3525] sm:$0xff] %v3553
        %3640 = vst [vmem:[%s3555] sm:$0xff] %v3578
        %3641 = vst [vmem:[%s3557] sm:$0xff] %v3585
        %3642 = vst [vmem:[%s3587] sm:$0xf] %v3610
        %3643 = vst [vmem:[%s3589] sm:$0xf] %v3617
        %s3644 = smov [#allocation14]
        %s3645 = smov [#allocation15]
        %v3646 = vld [vmem:[%s3645] sm:$0xff]
        %3647 = vrot.lane.b32.xlu0 %v3646, 1
        %v3648 = vpop.permute.xlu0 %3647
        %v3649 = vld [vmem:[%s3644] sm:$0xff]
        %v3650 = vld [vmem:[%s3644] sm:$0xff]
        %3651 = vrot.lane.b32.xlu0 %v3650, 1
        %v3652 = vpop.permute.xlu0 %3651
        %v3653 = vlaneseq
        %v3654 = vand.u32 %v3653, 127
        %vm3655 = vcmp.eq.s32.totalorder %v3654, 0
        %v3656 = vsel %vm3655, %v3650, %v3652
        %v3657 = vlaneseq
        %v3658 = vand.u32 %v3657, 127
        %vm3659 = vcmp.eq.s32.totalorder %v3658, 1
        %v3660 = vsel %vm3659, %v3648, %v3656
        %v3661 = vlaneseq
        %v3662 = vand.u32 %v3661, 127
        %vm3663 = vcmp.ge.s32.totalorder %v3662, 0
        %vm3664 = vcmp.lt.s32.totalorder %v3662, 100
        %vm3665 = vmand %vm3663, %vm3664
        %v3666 = vsel %vm3665, %v3660, 0.0
        %v3667 = vld [vmem:[%s3645] sm:$0xff]
        %3668 = vrot.lane.b32.xlu0 %v3667, 127
        %v3669 = vpop.permute.xlu0 %3668
        %v3670 = vlaneseq
        %v3671 = vand.u32 %v3670, 127
        %vm3672 = vcmp.eq.s32.totalorder %v3671, 99
        %v3673 = vsel %vm3672, %v3649, %v3669
        %s3674 = smov [#allocation14]
        %s3675 = scalar_lea.vmem %s3674, 8
        %s3676 = smov [#allocation15]
        %s3677 = scalar_lea.vmem %s3676, 8
        %v3678 = vld [vmem:[%s3677] sm:$0xff]
        %3679 = vrot.lane.b32.xlu0 %v3678, 1
        %v3680 = vpop.permute.xlu0 %3679
        %v3681 = vld [vmem:[%s3675] sm:$0xff]
        %v3682 = vld [vmem:[%s3675] sm:$0xff]
        %3683 = vrot.lane.b32.xlu0 %v3682, 1
        %v3684 = vpop.permute.xlu0 %3683
        %v3685 = vlaneseq
        %v3686 = vand.u32 %v3685, 127
        %vm3687 = vcmp.eq.s32.totalorder %v3686, 0
        %v3688 = vsel %vm3687, %v3682, %v3684
        %v3689 = vlaneseq
        %v3690 = vand.u32 %v3689, 127
        %vm3691 = vcmp.eq.s32.totalorder %v3690, 1
        %v3692 = vsel %vm3691, %v3680, %v3688
        %v3693 = vlaneseq
        %v3694 = vand.u32 %v3693, 127
        %vm3695 = vcmp.ge.s32.totalorder %v3694, 0
        %vm3696 = vcmp.lt.s32.totalorder %v3694, 100
        %vm3697 = vmand %vm3695, %vm3696
        %v3698 = vsel %vm3697, %v3692, 0.0
        %v3699 = vld [vmem:[%s3677] sm:$0xff]
        %3700 = vrot.lane.b32.xlu0 %v3699, 127
        %v3701 = vpop.permute.xlu0 %3700
        %v3702 = vlaneseq
        %v3703 = vand.u32 %v3702, 127
        %vm3704 = vcmp.eq.s32.totalorder %v3703, 99
        %v3705 = vsel %vm3704, %v3681, %v3701
        %s3706 = smov [#allocation14]
        %s3707 = scalar_lea.vmem %s3706, 16
        %s3708 = smov [#allocation15]
        %s3709 = scalar_lea.vmem %s3708, 16
        %v3710 = vld [vmem:[%s3709] sm:$0xff]
        %3711 = vrot.lane.b32.xlu0 %v3710, 1
        %v3712 = vpop.permute.xlu0 %3711
        %v3713 = vld [vmem:[%s3707] sm:$0xff]
        %v3714 = vld [vmem:[%s3707] sm:$0xff]
        %3715 = vrot.lane.b32.xlu0 %v3714, 1
        %v3716 = vpop.permute.xlu0 %3715
        %v3717 = vlaneseq
        %v3718 = vand.u32 %v3717, 127
        %vm3719 = vcmp.eq.s32.totalorder %v3718, 0
        %v3720 = vsel %vm3719, %v3714, %v3716
        %v3721 = vlaneseq
        %v3722 = vand.u32 %v3721, 127
        %vm3723 = vcmp.eq.s32.totalorder %v3722, 1
        %v3724 = vsel %vm3723, %v3712, %v3720
        %v3725 = vlaneseq
        %v3726 = vand.u32 %v3725, 127
        %vm3727 = vcmp.ge.s32.totalorder %v3726, 0
        %vm3728 = vcmp.lt.s32.totalorder %v3726, 100
        %vm3729 = vmand %vm3727, %vm3728
        %v3730 = vsel %vm3729, %v3724, 0.0
        %v3731 = vld [vmem:[%s3709] sm:$0xff]
        %3732 = vrot.lane.b32.xlu0 %v3731, 127
        %v3733 = vpop.permute.xlu0 %3732
        %v3734 = vlaneseq
        %v3735 = vand.u32 %v3734, 127
        %vm3736 = vcmp.eq.s32.totalorder %v3735, 99
        %v3737 = vsel %vm3736, %v3713, %v3733
        %s3738 = smov [#allocation14]
        %s3739 = scalar_lea.vmem %s3738, 24
        %s3740 = smov [#allocation15]
        %s3741 = scalar_lea.vmem %s3740, 24
        %v3742 = vld [vmem:[%s3741] sm:$0xff]
        %3743 = vrot.lane.b32.xlu0 %v3742, 1
        %v3744 = vpop.permute.xlu0 %3743
        %v3745 = vld [vmem:[%s3739] sm:$0xff]
        %v3746 = vld [vmem:[%s3739] sm:$0xff]
        %3747 = vrot.lane.b32.xlu0 %v3746, 1
        %v3748 = vpop.permute.xlu0 %3747
        %v3749 = vlaneseq
        %v3750 = vand.u32 %v3749, 127
        %vm3751 = vcmp.eq.s32.totalorder %v3750, 0
        %v3752 = vsel %vm3751, %v3746, %v3748
        %v3753 = vlaneseq
        %v3754 = vand.u32 %v3753, 127
        %vm3755 = vcmp.eq.s32.totalorder %v3754, 1
        %v3756 = vsel %vm3755, %v3744, %v3752
        %v3757 = vlaneseq
        %v3758 = vand.u32 %v3757, 127
        %vm3759 = vcmp.ge.s32.totalorder %v3758, 0
        %vm3760 = vcmp.lt.s32.totalorder %v3758, 100
        %vm3761 = vmand %vm3759, %vm3760
        %v3762 = vsel %vm3761, %v3756, 0.0
        %v3763 = vld [vmem:[%s3741] sm:$0xff]
        %3764 = vrot.lane.b32.xlu0 %v3763, 127
        %v3765 = vpop.permute.xlu0 %3764
        %v3766 = vlaneseq
        %v3767 = vand.u32 %v3766, 127
        %vm3768 = vcmp.eq.s32.totalorder %v3767, 99
        %v3769 = vsel %vm3768, %v3745, %v3765
        %s3770 = smov [#allocation14]
        %s3771 = scalar_lea.vmem %s3770, 32
        %s3772 = smov [#allocation15]
        %s3773 = scalar_lea.vmem %s3772, 32
        %v3774 = vld [vmem:[%s3773] sm:$0xff]
        %3775 = vrot.lane.b32.xlu0 %v3774, 1
        %v3776 = vpop.permute.xlu0 %3775
        %v3777 = vld [vmem:[%s3771] sm:$0xff]
        %v3778 = vld [vmem:[%s3771] sm:$0xff]
        %3779 = vrot.lane.b32.xlu0 %v3778, 1
        %v3780 = vpop.permute.xlu0 %3779
        %v3781 = vlaneseq
        %v3782 = vand.u32 %v3781, 127
        %vm3783 = vcmp.eq.s32.totalorder %v3782, 0
        %v3784 = vsel %vm3783, %v3778, %v3780
        %v3785 = vlaneseq
        %v3786 = vand.u32 %v3785, 127
        %vm3787 = vcmp.eq.s32.totalorder %v3786, 1
        %v3788 = vsel %vm3787, %v3776, %v3784
        %v3789 = vlaneseq
        %v3790 = vand.u32 %v3789, 127
        %vm3791 = vcmp.ge.s32.totalorder %v3790, 0
        %vm3792 = vcmp.lt.s32.totalorder %v3790, 100
        %vm3793 = vmand %vm3791, %vm3792
        %v3794 = vsel %vm3793, %v3788, 0.0
        %v3795 = vld [vmem:[%s3773] sm:$0xff]
        %3796 = vrot.lane.b32.xlu0 %v3795, 127
        %v3797 = vpop.permute.xlu0 %3796
        %v3798 = vlaneseq
        %v3799 = vand.u32 %v3798, 127
        %vm3800 = vcmp.eq.s32.totalorder %v3799, 99
        %v3801 = vsel %vm3800, %v3777, %v3797
        %s3802 = smov [#allocation14]
        %s3803 = scalar_lea.vmem %s3802, 40
        %s3804 = smov [#allocation15]
        %s3805 = scalar_lea.vmem %s3804, 40
        %v3806 = vld [vmem:[%s3805] sm:$0xff]
        %3807 = vrot.lane.b32.xlu0 %v3806, 1
        %v3808 = vpop.permute.xlu0 %3807
        %v3809 = vld [vmem:[%s3803] sm:$0xff]
        %v3810 = vld [vmem:[%s3803] sm:$0xff]
        %3811 = vrot.lane.b32.xlu0 %v3810, 1
        %v3812 = vpop.permute.xlu0 %3811
        %v3813 = vlaneseq
        %v3814 = vand.u32 %v3813, 127
        %vm3815 = vcmp.eq.s32.totalorder %v3814, 0
        %v3816 = vsel %vm3815, %v3810, %v3812
        %v3817 = vlaneseq
        %v3818 = vand.u32 %v3817, 127
        %vm3819 = vcmp.eq.s32.totalorder %v3818, 1
        %v3820 = vsel %vm3819, %v3808, %v3816
        %v3821 = vlaneseq
        %v3822 = vand.u32 %v3821, 127
        %vm3823 = vcmp.ge.s32.totalorder %v3822, 0
        %vm3824 = vcmp.lt.s32.totalorder %v3822, 100
        %vm3825 = vmand %vm3823, %vm3824
        %v3826 = vsel %vm3825, %v3820, 0.0
        %v3827 = vld [vmem:[%s3805] sm:$0xff]
        %3828 = vrot.lane.b32.xlu0 %v3827, 127
        %v3829 = vpop.permute.xlu0 %3828
        %v3830 = vlaneseq
        %v3831 = vand.u32 %v3830, 127
        %vm3832 = vcmp.eq.s32.totalorder %v3831, 99
        %v3833 = vsel %vm3832, %v3809, %v3829
        %s3834 = smov [#allocation14]
        %s3835 = scalar_lea.vmem %s3834, 48
        %s3836 = smov [#allocation15]
        %s3837 = scalar_lea.vmem %s3836, 48
        %v3838 = vld [vmem:[%s3837] sm:$0xff]
        %3839 = vrot.lane.b32.xlu0 %v3838, 1
        %v3840 = vpop.permute.xlu0 %3839
        %v3841 = vld [vmem:[%s3835] sm:$0xff]
        %v3842 = vld [vmem:[%s3835] sm:$0xff]
        %3843 = vrot.lane.b32.xlu0 %v3842, 1
        %v3844 = vpop.permute.xlu0 %3843
        %v3845 = vlaneseq
        %v3846 = vand.u32 %v3845, 127
        %vm3847 = vcmp.eq.s32.totalorder %v3846, 0
        %v3848 = vsel %vm3847, %v3842, %v3844
        %v3849 = vlaneseq
        %v3850 = vand.u32 %v3849, 127
        %vm3851 = vcmp.eq.s32.totalorder %v3850, 1
        %v3852 = vsel %vm3851, %v3840, %v3848
        %v3853 = vlaneseq
        %v3854 = vand.u32 %v3853, 127
        %vm3855 = vcmp.ge.s32.totalorder %v3854, 0
        %vm3856 = vcmp.lt.s32.totalorder %v3854, 100
        %vm3857 = vmand %vm3855, %vm3856
        %v3858 = vsel %vm3857, %v3852, 0.0
        %v3859 = vld [vmem:[%s3837] sm:$0xff]
        %3860 = vrot.lane.b32.xlu0 %v3859, 127
        %v3861 = vpop.permute.xlu0 %3860
        %v3862 = vlaneseq
        %v3863 = vand.u32 %v3862, 127
        %vm3864 = vcmp.eq.s32.totalorder %v3863, 99
        %v3865 = vsel %vm3864, %v3841, %v3861
        %s3866 = smov [#allocation14]
        %s3867 = scalar_lea.vmem %s3866, 56
        %s3868 = smov [#allocation15]
        %s3869 = scalar_lea.vmem %s3868, 56
        %v3870 = vld [vmem:[%s3869] sm:$0xff]
        %3871 = vrot.lane.b32.xlu0 %v3870, 1
        %v3872 = vpop.permute.xlu0 %3871
        %v3873 = vld [vmem:[%s3867] sm:$0xff]
        %v3874 = vld [vmem:[%s3867] sm:$0xff]
        %3875 = vrot.lane.b32.xlu0 %v3874, 1
        %v3876 = vpop.permute.xlu0 %3875
        %v3877 = vlaneseq
        %v3878 = vand.u32 %v3877, 127
        %vm3879 = vcmp.eq.s32.totalorder %v3878, 0
        %v3880 = vsel %vm3879, %v3874, %v3876
        %v3881 = vlaneseq
        %v3882 = vand.u32 %v3881, 127
        %vm3883 = vcmp.eq.s32.totalorder %v3882, 1
        %v3884 = vsel %vm3883, %v3872, %v3880
        %v3885 = vlaneseq
        %v3886 = vand.u32 %v3885, 127
        %vm3887 = vcmp.ge.s32.totalorder %v3886, 0
        %vm3888 = vcmp.lt.s32.totalorder %v3886, 100
        %vm3889 = vmand %vm3887, %vm3888
        %v3890 = vsel %vm3889, %v3884, 0.0
        %v3891 = vld [vmem:[%s3869] sm:$0xff]
        %3892 = vrot.lane.b32.xlu0 %v3891, 127
        %v3893 = vpop.permute.xlu0 %3892
        %v3894 = vlaneseq
        %v3895 = vand.u32 %v3894, 127
        %vm3896 = vcmp.eq.s32.totalorder %v3895, 99
        %v3897 = vsel %vm3896, %v3873, %v3893
        %s3898 = smov [#allocation14]
        %s3899 = scalar_lea.vmem %s3898, 64
        %s3900 = smov [#allocation15]
        %s3901 = scalar_lea.vmem %s3900, 64
        %v3902 = vld [vmem:[%s3901] sm:$0xff]
        %3903 = vrot.lane.b32.xlu0 %v3902, 1
        %v3904 = vpop.permute.xlu0 %3903
        %v3905 = vld [vmem:[%s3899] sm:$0xff]
        %v3906 = vld [vmem:[%s3899] sm:$0xff]
        %3907 = vrot.lane.b32.xlu0 %v3906, 1
        %v3908 = vpop.permute.xlu0 %3907
        %v3909 = vlaneseq
        %v3910 = vand.u32 %v3909, 127
        %vm3911 = vcmp.eq.s32.totalorder %v3910, 0
        %v3912 = vsel %vm3911, %v3906, %v3908
        %v3913 = vlaneseq
        %v3914 = vand.u32 %v3913, 127
        %vm3915 = vcmp.eq.s32.totalorder %v3914, 1
        %v3916 = vsel %vm3915, %v3904, %v3912
        %v3917 = vlaneseq
        %v3918 = vand.u32 %v3917, 127
        %vm3919 = vcmp.ge.s32.totalorder %v3918, 0
        %vm3920 = vcmp.lt.s32.totalorder %v3918, 100
        %vm3921 = vmand %vm3919, %vm3920
        %v3922 = vsel %vm3921, %v3916, 0.0
        %v3923 = vld [vmem:[%s3901] sm:$0xff]
        %3924 = vrot.lane.b32.xlu0 %v3923, 127
        %v3925 = vpop.permute.xlu0 %3924
        %v3926 = vlaneseq
        %v3927 = vand.u32 %v3926, 127
        %vm3928 = vcmp.eq.s32.totalorder %v3927, 99
        %v3929 = vsel %vm3928, %v3905, %v3925
        %s3930 = smov [#allocation14]
        %s3931 = scalar_lea.vmem %s3930, 72
        %s3932 = smov [#allocation15]
        %s3933 = scalar_lea.vmem %s3932, 72
        %v3934 = vld [vmem:[%s3933] sm:$0xff]
        %3935 = vrot.lane.b32.xlu0 %v3934, 1
        %v3936 = vpop.permute.xlu0 %3935
        %v3937 = vld [vmem:[%s3931] sm:$0xff]
        %v3938 = vld [vmem:[%s3931] sm:$0xff]
        %3939 = vrot.lane.b32.xlu0 %v3938, 1
        %v3940 = vpop.permute.xlu0 %3939
        %v3941 = vlaneseq
        %v3942 = vand.u32 %v3941, 127
        %vm3943 = vcmp.eq.s32.totalorder %v3942, 0
        %v3944 = vsel %vm3943, %v3938, %v3940
        %v3945 = vlaneseq
        %v3946 = vand.u32 %v3945, 127
        %vm3947 = vcmp.eq.s32.totalorder %v3946, 1
        %v3948 = vsel %vm3947, %v3936, %v3944
        %v3949 = vlaneseq
        %v3950 = vand.u32 %v3949, 127
        %vm3951 = vcmp.ge.s32.totalorder %v3950, 0
        %vm3952 = vcmp.lt.s32.totalorder %v3950, 100
        %vm3953 = vmand %vm3951, %vm3952
        %v3954 = vsel %vm3953, %v3948, 0.0
        %v3955 = vld [vmem:[%s3933] sm:$0xff]
        %3956 = vrot.lane.b32.xlu0 %v3955, 127
        %v3957 = vpop.permute.xlu0 %3956
        %v3958 = vlaneseq
        %v3959 = vand.u32 %v3958, 127
        %vm3960 = vcmp.eq.s32.totalorder %v3959, 99
        %v3961 = vsel %vm3960, %v3937, %v3957
        %s3962 = smov [#allocation14]
        %s3963 = scalar_lea.vmem %s3962, 80
        %s3964 = smov [#allocation15]
        %s3965 = scalar_lea.vmem %s3964, 80
        %v3966 = vld [vmem:[%s3965] sm:$0xff]
        %3967 = vrot.lane.b32.xlu0 %v3966, 1
        %v3968 = vpop.permute.xlu0 %3967
        %v3969 = vld [vmem:[%s3963] sm:$0xff]
        %v3970 = vld [vmem:[%s3963] sm:$0xff]
        %3971 = vrot.lane.b32.xlu0 %v3970, 1
        %v3972 = vpop.permute.xlu0 %3971
        %v3973 = vlaneseq
        %v3974 = vand.u32 %v3973, 127
        %vm3975 = vcmp.eq.s32.totalorder %v3974, 0
        %v3976 = vsel %vm3975, %v3970, %v3972
        %v3977 = vlaneseq
        %v3978 = vand.u32 %v3977, 127
        %vm3979 = vcmp.eq.s32.totalorder %v3978, 1
        %v3980 = vsel %vm3979, %v3968, %v3976
        %v3981 = vlaneseq
        %v3982 = vand.u32 %v3981, 127
        %vm3983 = vcmp.ge.s32.totalorder %v3982, 0
        %vm3984 = vcmp.lt.s32.totalorder %v3982, 100
        %vm3985 = vmand %vm3983, %vm3984
        %v3986 = vsel %vm3985, %v3980, 0.0
        %v3987 = vld [vmem:[%s3965] sm:$0xff]
        %3988 = vrot.lane.b32.xlu0 %v3987, 127
        %v3989 = vpop.permute.xlu0 %3988
        %v3990 = vlaneseq
        %v3991 = vand.u32 %v3990, 127
        %vm3992 = vcmp.eq.s32.totalorder %v3991, 99
        %v3993 = vsel %vm3992, %v3969, %v3989
        %s3994 = smov [#allocation14]
        %s3995 = scalar_lea.vmem %s3994, 88
        %s3996 = smov [#allocation15]
        %s3997 = scalar_lea.vmem %s3996, 88
        %v3998 = vld [vmem:[%s3997] sm:$0xff]
        %3999 = vrot.lane.b32.xlu0 %v3998, 1
        %v4000 = vpop.permute.xlu0 %3999
        %v4001 = vld [vmem:[%s3995] sm:$0xff]
        %v4002 = vld [vmem:[%s3995] sm:$0xff]
        %4003 = vrot.lane.b32.xlu0 %v4002, 1
        %v4004 = vpop.permute.xlu0 %4003
        %v4005 = vlaneseq
        %v4006 = vand.u32 %v4005, 127
        %vm4007 = vcmp.eq.s32.totalorder %v4006, 0
        %v4008 = vsel %vm4007, %v4002, %v4004
        %v4009 = vlaneseq
        %v4010 = vand.u32 %v4009, 127
        %vm4011 = vcmp.eq.s32.totalorder %v4010, 1
        %v4012 = vsel %vm4011, %v4000, %v4008
        %v4013 = vlaneseq
        %v4014 = vand.u32 %v4013, 127
        %vm4015 = vcmp.ge.s32.totalorder %v4014, 0
        %vm4016 = vcmp.lt.s32.totalorder %v4014, 100
        %vm4017 = vmand %vm4015, %vm4016
        %v4018 = vsel %vm4017, %v4012, 0.0
        %v4019 = vld [vmem:[%s3997] sm:$0xff]
        %4020 = vrot.lane.b32.xlu0 %v4019, 127
        %v4021 = vpop.permute.xlu0 %4020
        %v4022 = vlaneseq
        %v4023 = vand.u32 %v4022, 127
        %vm4024 = vcmp.eq.s32.totalorder %v4023, 99
        %v4025 = vsel %vm4024, %v4001, %v4021
        %s4026 = smov [#allocation14]
        %s4027 = scalar_lea.vmem %s4026, 96
        %s4028 = smov [#allocation15]
        %s4029 = scalar_lea.vmem %s4028, 96
        %v4030 = vld [vmem:[%s4029] sm:$0xf]
        %4031 = vrot.lane.b32.xlu0 %v4030, 1
        %v4032 = vpop.permute.xlu0 %4031
        %v4033 = vld [vmem:[%s4027] sm:$0xf]
        %v4034 = vld [vmem:[%s4027] sm:$0xf]
        %4035 = vrot.lane.b32.xlu0 %v4034, 1
        %v4036 = vpop.permute.xlu0 %4035
        %v4037 = vlaneseq
        %v4038 = vand.u32 %v4037, 127
        %vm4039 = vcmp.eq.s32.totalorder %v4038, 0
        %v4040 = vsel %vm4039, %v4034, %v4036
        %v4041 = vlaneseq
        %v4042 = vand.u32 %v4041, 127
        %vm4043 = vcmp.eq.s32.totalorder %v4042, 1
        %v4044 = vsel %vm4043, %v4032, %v4040
        %v4045 = vlaneseq
        %v4046 = vand.u32 %v4045, 127
        %vm4047 = vcmp.ge.s32.totalorder %v4046, 0
        %vm4048 = vcmp.lt.s32.totalorder %v4046, 100
        %vm4049 = vmand %vm4047, %vm4048
        %v4050 = vsel %vm4049, %v4044, 0.0
        %v4051 = vld [vmem:[%s4029] sm:$0xf]
        %4052 = vrot.lane.b32.xlu0 %v4051, 127
        %v4053 = vpop.permute.xlu0 %4052
        %v4054 = vlaneseq
        %v4055 = vand.u32 %v4054, 127
        %vm4056 = vcmp.eq.s32.totalorder %v4055, 99
        %v4057 = vsel %vm4056, %v4033, %v4053
        %4058 = vst [vmem:[%s3644] sm:$0xff] %v3666
        %4059 = vst [vmem:[%s3645] sm:$0xff] %v3673
        %4060 = vst [vmem:[%s3675] sm:$0xff] %v3698
        %4061 = vst [vmem:[%s3677] sm:$0xff] %v3705
        %4062 = vst [vmem:[%s3707] sm:$0xff] %v3730
        %4063 = vst [vmem:[%s3709] sm:$0xff] %v3737
        %4064 = vst [vmem:[%s3739] sm:$0xff] %v3762
        %4065 = vst [vmem:[%s3741] sm:$0xff] %v3769
        %4066 = vst [vmem:[%s3771] sm:$0xff] %v3794
        %4067 = vst [vmem:[%s3773] sm:$0xff] %v3801
        %4068 = vst [vmem:[%s3803] sm:$0xff] %v3826
        %4069 = vst [vmem:[%s3805] sm:$0xff] %v3833
        %4070 = vst [vmem:[%s3835] sm:$0xff] %v3858
        %4071 = vst [vmem:[%s3837] sm:$0xff] %v3865
        %4072 = vst [vmem:[%s3867] sm:$0xff] %v3890
        %4073 = vst [vmem:[%s3869] sm:$0xff] %v3897
        %4074 = vst [vmem:[%s3899] sm:$0xff] %v3922
        %4075 = vst [vmem:[%s3901] sm:$0xff] %v3929
        %4076 = vst [vmem:[%s3931] sm:$0xff] %v3954
        %4077 = vst [vmem:[%s3933] sm:$0xff] %v3961
        %4078 = vst [vmem:[%s3963] sm:$0xff] %v3986
        %4079 = vst [vmem:[%s3965] sm:$0xff] %v3993
        %4080 = vst [vmem:[%s3995] sm:$0xff] %v4018
        %4081 = vst [vmem:[%s3997] sm:$0xff] %v4025
        %4082 = vst [vmem:[%s4027] sm:$0xf] %v4050
        %4083 = vst [vmem:[%s4029] sm:$0xf] %v4057
        %s4084 = smov [#allocation12]
        %s4085 = smov [#allocation14]
        %v4086 = vld [vmem:[%s4084] ss:$0 sm:$0xff]
        %s4088 = scalar_lea.vmem %s4084, 4294967295
        %v4089 = vld [vmem:[%s4088] sm:$0xfe]
        %v4090 = vlaneseq
        %v4091 = vshrl.u32 %v4090, 7
        %vm4092 = vcmp.eq.s32.totalorder %v4091, 0
        %v4093 = vsel %vm4092, %v4086, %v4089
        %s4094 = scalar_lea.vmem %s4084, 7
        %v4095 = vld [vmem:[%s4094] ss:$0 sm:$0xff]
        %4096 = vst [vmem:[%s4084] sm:$0xff] %v4093
        %s4097 = scalar_lea.vmem %s4084, 8
        %s4099 = scalar_lea.vmem %s4097, 4294967295
        %v4100 = vld [vmem:[%s4099] sm:$0xfe]
        %v4101 = vlaneseq
        %v4102 = vshrl.u32 %v4101, 7
        %vm4103 = vcmp.eq.s32.totalorder %v4102, 0
        %v4104 = vsel %vm4103, %v4095, %v4100
        %s4105 = scalar_lea.vmem %s4097, 7
        %v4106 = vld [vmem:[%s4105] ss:$0 sm:$0xff]
        %4107 = vst [vmem:[%s4097] sm:$0xff] %v4104
        %s4108 = scalar_lea.vmem %s4084, 16
        %s4110 = scalar_lea.vmem %s4108, 4294967295
        %v4111 = vld [vmem:[%s4110] sm:$0xfe]
        %v4112 = vlaneseq
        %v4113 = vshrl.u32 %v4112, 7
        %vm4114 = vcmp.eq.s32.totalorder %v4113, 0
        %v4115 = vsel %vm4114, %v4106, %v4111
        %s4116 = scalar_lea.vmem %s4108, 7
        %v4117 = vld [vmem:[%s4116] ss:$0 sm:$0xff]
        %4118 = vst [vmem:[%s4108] sm:$0xff] %v4115
        %s4119 = scalar_lea.vmem %s4084, 24
        %s4121 = scalar_lea.vmem %s4119, 4294967295
        %v4122 = vld [vmem:[%s4121] sm:$0xfe]
        %v4123 = vlaneseq
        %v4124 = vshrl.u32 %v4123, 7
        %vm4125 = vcmp.eq.s32.totalorder %v4124, 0
        %v4126 = vsel %vm4125, %v4117, %v4122
        %s4127 = scalar_lea.vmem %s4119, 7
        %v4128 = vld [vmem:[%s4127] ss:$0 sm:$0xff]
        %4129 = vst [vmem:[%s4119] sm:$0xff] %v4126
        %s4130 = scalar_lea.vmem %s4084, 32
        %s4132 = scalar_lea.vmem %s4130, 4294967295
        %v4133 = vld [vmem:[%s4132] sm:$0xfe]
        %v4134 = vlaneseq
        %v4135 = vshrl.u32 %v4134, 7
        %vm4136 = vcmp.eq.s32.totalorder %v4135, 0
        %v4137 = vsel %vm4136, %v4128, %v4133
        %s4138 = scalar_lea.vmem %s4130, 7
        %v4139 = vld [vmem:[%s4138] ss:$0 sm:$0xff]
        %4140 = vst [vmem:[%s4130] sm:$0xff] %v4137
        %s4141 = scalar_lea.vmem %s4084, 40
        %s4143 = scalar_lea.vmem %s4141, 4294967295
        %v4144 = vld [vmem:[%s4143] sm:$0xfe]
        %v4145 = vlaneseq
        %v4146 = vshrl.u32 %v4145, 7
        %vm4147 = vcmp.eq.s32.totalorder %v4146, 0
        %v4148 = vsel %vm4147, %v4139, %v4144
        %s4149 = scalar_lea.vmem %s4141, 7
        %v4150 = vld [vmem:[%s4149] ss:$0 sm:$0xff]
        %4151 = vst [vmem:[%s4141] sm:$0xff] %v4148
        %s4152 = scalar_lea.vmem %s4084, 48
        %s4154 = scalar_lea.vmem %s4152, 4294967295
        %v4155 = vld [vmem:[%s4154] sm:$0xfe]
        %v4156 = vlaneseq
        %v4157 = vshrl.u32 %v4156, 7
        %vm4158 = vcmp.eq.s32.totalorder %v4157, 0
        %v4159 = vsel %vm4158, %v4150, %v4155
        %s4160 = scalar_lea.vmem %s4152, 7
        %v4161 = vld [vmem:[%s4160] ss:$0 sm:$0xff]
        %4162 = vst [vmem:[%s4152] sm:$0xff] %v4159
        %s4163 = scalar_lea.vmem %s4084, 56
        %s4165 = scalar_lea.vmem %s4163, 4294967295
        %v4166 = vld [vmem:[%s4165] sm:$0xfe]
        %v4167 = vlaneseq
        %v4168 = vshrl.u32 %v4167, 7
        %vm4169 = vcmp.eq.s32.totalorder %v4168, 0
        %v4170 = vsel %vm4169, %v4161, %v4166
        %s4171 = scalar_lea.vmem %s4163, 7
        %v4172 = vld [vmem:[%s4171] ss:$0 sm:$0xff]
        %4173 = vst [vmem:[%s4163] sm:$0xff] %v4170
        %s4174 = scalar_lea.vmem %s4084, 64
        %s4176 = scalar_lea.vmem %s4174, 4294967295
        %v4177 = vld [vmem:[%s4176] sm:$0xfe]
        %v4178 = vlaneseq
        %v4179 = vshrl.u32 %v4178, 7
        %vm4180 = vcmp.eq.s32.totalorder %v4179, 0
        %v4181 = vsel %vm4180, %v4172, %v4177
        %s4182 = scalar_lea.vmem %s4174, 7
        %v4183 = vld [vmem:[%s4182] ss:$0 sm:$0xff]
        %4184 = vst [vmem:[%s4174] sm:$0xff] %v4181
        %s4185 = scalar_lea.vmem %s4084, 72
        %s4187 = scalar_lea.vmem %s4185, 4294967295
        %v4188 = vld [vmem:[%s4187] sm:$0xfe]
        %v4189 = vlaneseq
        %v4190 = vshrl.u32 %v4189, 7
        %vm4191 = vcmp.eq.s32.totalorder %v4190, 0
        %v4192 = vsel %vm4191, %v4183, %v4188
        %s4193 = scalar_lea.vmem %s4185, 7
        %v4194 = vld [vmem:[%s4193] ss:$0 sm:$0xff]
        %4195 = vst [vmem:[%s4185] sm:$0xff] %v4192
        %s4196 = scalar_lea.vmem %s4084, 80
        %s4198 = scalar_lea.vmem %s4196, 4294967295
        %v4199 = vld [vmem:[%s4198] sm:$0xfe]
        %v4200 = vlaneseq
        %v4201 = vshrl.u32 %v4200, 7
        %vm4202 = vcmp.eq.s32.totalorder %v4201, 0
        %v4203 = vsel %vm4202, %v4194, %v4199
        %s4204 = scalar_lea.vmem %s4196, 7
        %v4205 = vld [vmem:[%s4204] ss:$0 sm:$0xff]
        %4206 = vst [vmem:[%s4196] sm:$0xff] %v4203
        %s4207 = scalar_lea.vmem %s4084, 88
        %s4209 = scalar_lea.vmem %s4207, 4294967295
        %v4210 = vld [vmem:[%s4209] sm:$0xfe]
        %v4211 = vlaneseq
        %v4212 = vshrl.u32 %v4211, 7
        %vm4213 = vcmp.eq.s32.totalorder %v4212, 0
        %v4214 = vsel %vm4213, %v4205, %v4210
        %s4215 = scalar_lea.vmem %s4207, 7
        %v4216 = vld [vmem:[%s4215] ss:$0 sm:$0xff]
        %4217 = vst [vmem:[%s4207] sm:$0xff] %v4214
        %s4218 = scalar_lea.vmem %s4084, 96
        %s4220 = scalar_lea.vmem %s4218, 4294967295
        %v4221 = vld [vmem:[%s4220] sm:$0xe]
        %v4222 = vlaneseq
        %v4223 = vshrl.u32 %v4222, 7
        %vm4224 = vcmp.eq.s32.totalorder %v4223, 0
        %v4225 = vsel %vm4224, %v4216, %v4221
        %s4226 = scalar_lea.vmem %s4218, 3
        %v4227 = vld [vmem:[%s4226] ss:$0 sm:$0xff]
        %4228 = vst [vmem:[%s4218] sm:$0xf] %v4225
        %v4229 = vld [vmem:[%s4085] ss:$0 sm:$0xff]
        %s4230 = scalar_lea.vmem %s4084, 1
        %4231 = vst [vmem:[%s4230] sm:$0x1] %v4229
        %s4232 = scalar_lea.vmem %s4085, 96
        %s4233 = scalar_lea.vmem %s4232, 1
        %v4234 = vld [vmem:[%s4233] sm:$0x7]
        %v4235 = vlaneseq
        %v4236 = vshrl.u32 %v4235, 7
        %vm4237 = vcmp.eq.s32.totalorder %v4236, 3
        %v4238 = vsel %vm4237, %v4227, %v4234
        %v4239 = vld [vmem:[%s4232] ss:$0 sm:$0xff]
        %4240 = vst [vmem:[%s4232] sm:$0xf] %v4238
        %s4241 = scalar_lea.vmem %s4085, 88
        %s4242 = scalar_lea.vmem %s4241, 1
        %v4243 = vld [vmem:[%s4242] sm:$0x7f]
        %v4244 = vlaneseq
        %v4245 = vshrl.u32 %v4244, 7
        %vm4246 = vcmp.eq.s32.totalorder %v4245, 7
        %v4247 = vsel %vm4246, %v4239, %v4243
        %v4248 = vld [vmem:[%s4241] ss:$0 sm:$0xff]
        %4249 = vst [vmem:[%s4241] sm:$0xff] %v4247
        %s4250 = scalar_lea.vmem %s4085, 80
        %s4251 = scalar_lea.vmem %s4250, 1
        %v4252 = vld [vmem:[%s4251] sm:$0x7f]
        %v4253 = vlaneseq
        %v4254 = vshrl.u32 %v4253, 7
        %vm4255 = vcmp.eq.s32.totalorder %v4254, 7
        %v4256 = vsel %vm4255, %v4248, %v4252
        %v4257 = vld [vmem:[%s4250] ss:$0 sm:$0xff]
        %4258 = vst [vmem:[%s4250] sm:$0xff] %v4256
        %s4259 = scalar_lea.vmem %s4085, 72
        %s4260 = scalar_lea.vmem %s4259, 1
        %v4261 = vld [vmem:[%s4260] sm:$0x7f]
        %v4262 = vlaneseq
        %v4263 = vshrl.u32 %v4262, 7
        %vm4264 = vcmp.eq.s32.totalorder %v4263, 7
        %v4265 = vsel %vm4264, %v4257, %v4261
        %v4266 = vld [vmem:[%s4259] ss:$0 sm:$0xff]
        %4267 = vst [vmem:[%s4259] sm:$0xff] %v4265
        %s4268 = scalar_lea.vmem %s4085, 64
        %s4269 = scalar_lea.vmem %s4268, 1
        %v4270 = vld [vmem:[%s4269] sm:$0x7f]
        %v4271 = vlaneseq
        %v4272 = vshrl.u32 %v4271, 7
        %vm4273 = vcmp.eq.s32.totalorder %v4272, 7
        %v4274 = vsel %vm4273, %v4266, %v4270
        %v4275 = vld [vmem:[%s4268] ss:$0 sm:$0xff]
        %4276 = vst [vmem:[%s4268] sm:$0xff] %v4274
        %s4277 = scalar_lea.vmem %s4085, 56
        %s4278 = scalar_lea.vmem %s4277, 1
        %v4279 = vld [vmem:[%s4278] sm:$0x7f]
        %v4280 = vlaneseq
        %v4281 = vshrl.u32 %v4280, 7
        %vm4282 = vcmp.eq.s32.totalorder %v4281, 7
        %v4283 = vsel %vm4282, %v4275, %v4279
        %v4284 = vld [vmem:[%s4277] ss:$0 sm:$0xff]
        %4285 = vst [vmem:[%s4277] sm:$0xff] %v4283
        %s4286 = scalar_lea.vmem %s4085, 48
        %s4287 = scalar_lea.vmem %s4286, 1
        %v4288 = vld [vmem:[%s4287] sm:$0x7f]
        %v4289 = vlaneseq
        %v4290 = vshrl.u32 %v4289, 7
        %vm4291 = vcmp.eq.s32.totalorder %v4290, 7
        %v4292 = vsel %vm4291, %v4284, %v4288
        %v4293 = vld [vmem:[%s4286] ss:$0 sm:$0xff]
        %4294 = vst [vmem:[%s4286] sm:$0xff] %v4292
        %s4295 = scalar_lea.vmem %s4085, 40
        %s4296 = scalar_lea.vmem %s4295, 1
        %v4297 = vld [vmem:[%s4296] sm:$0x7f]
        %v4298 = vlaneseq
        %v4299 = vshrl.u32 %v4298, 7
        %vm4300 = vcmp.eq.s32.totalorder %v4299, 7
        %v4301 = vsel %vm4300, %v4293, %v4297
        %v4302 = vld [vmem:[%s4295] ss:$0 sm:$0xff]
        %4303 = vst [vmem:[%s4295] sm:$0xff] %v4301
        %s4304 = scalar_lea.vmem %s4085, 32
        %s4305 = scalar_lea.vmem %s4304, 1
        %v4306 = vld [vmem:[%s4305] sm:$0x7f]
        %v4307 = vlaneseq
        %v4308 = vshrl.u32 %v4307, 7
        %vm4309 = vcmp.eq.s32.totalorder %v4308, 7
        %v4310 = vsel %vm4309, %v4302, %v4306
        %v4311 = vld [vmem:[%s4304] ss:$0 sm:$0xff]
        %4312 = vst [vmem:[%s4304] sm:$0xff] %v4310
        %s4313 = scalar_lea.vmem %s4085, 24
        %s4314 = scalar_lea.vmem %s4313, 1
        %v4315 = vld [vmem:[%s4314] sm:$0x7f]
        %v4316 = vlaneseq
        %v4317 = vshrl.u32 %v4316, 7
        %vm4318 = vcmp.eq.s32.totalorder %v4317, 7
        %v4319 = vsel %vm4318, %v4311, %v4315
        %v4320 = vld [vmem:[%s4313] ss:$0 sm:$0xff]
        %4321 = vst [vmem:[%s4313] sm:$0xff] %v4319
        %s4322 = scalar_lea.vmem %s4085, 16
        %s4323 = scalar_lea.vmem %s4322, 1
        %v4324 = vld [vmem:[%s4323] sm:$0x7f]
        %v4325 = vlaneseq
        %v4326 = vshrl.u32 %v4325, 7
        %vm4327 = vcmp.eq.s32.totalorder %v4326, 7
        %v4328 = vsel %vm4327, %v4320, %v4324
        %v4329 = vld [vmem:[%s4322] ss:$0 sm:$0xff]
        %4330 = vst [vmem:[%s4322] sm:$0xff] %v4328
        %s4331 = scalar_lea.vmem %s4085, 8
        %s4332 = scalar_lea.vmem %s4331, 1
        %v4333 = vld [vmem:[%s4332] sm:$0x7f]
        %v4334 = vlaneseq
        %v4335 = vshrl.u32 %v4334, 7
        %vm4336 = vcmp.eq.s32.totalorder %v4335, 7
        %v4337 = vsel %vm4336, %v4329, %v4333
        %v4338 = vld [vmem:[%s4331] ss:$0 sm:$0xff]
        %4339 = vst [vmem:[%s4331] sm:$0xff] %v4337
        %s4340 = scalar_lea.vmem %s4085, 1
        %v4341 = vld [vmem:[%s4340] sm:$0x7f]
        %v4342 = vlaneseq
        %v4343 = vshrl.u32 %v4342, 7
        %vm4344 = vcmp.eq.s32.totalorder %v4343, 7
        %v4345 = vsel %vm4344, %v4338, %v4341
        %v4346 = vld [vmem:[%s4085] ss:$0 sm:$0xff]
        %4347 = vst [vmem:[%s4085] sm:$0xff] %v4345
        %s4348 = smov [#allocation13]
        %s4349 = smov [#allocation15]
        %v4350 = vld [vmem:[%s4348] ss:$0 sm:$0xff]
        %s4352 = scalar_lea.vmem %s4348, 4294967295
        %v4353 = vld [vmem:[%s4352] sm:$0xfe]
        %v4354 = vlaneseq
        %v4355 = vshrl.u32 %v4354, 7
        %vm4356 = vcmp.eq.s32.totalorder %v4355, 0
        %v4357 = vsel %vm4356, %v4350, %v4353
        %s4358 = scalar_lea.vmem %s4348, 7
        %v4359 = vld [vmem:[%s4358] ss:$0 sm:$0xff]
        %4360 = vst [vmem:[%s4348] sm:$0xff] %v4357
        %s4361 = scalar_lea.vmem %s4348, 8
        %s4363 = scalar_lea.vmem %s4361, 4294967295
        %v4364 = vld [vmem:[%s4363] sm:$0xfe]
        %v4365 = vlaneseq
        %v4366 = vshrl.u32 %v4365, 7
        %vm4367 = vcmp.eq.s32.totalorder %v4366, 0
        %v4368 = vsel %vm4367, %v4359, %v4364
        %s4369 = scalar_lea.vmem %s4361, 7
        %v4370 = vld [vmem:[%s4369] ss:$0 sm:$0xff]
        %4371 = vst [vmem:[%s4361] sm:$0xff] %v4368
        %s4372 = scalar_lea.vmem %s4348, 16
        %s4374 = scalar_lea.vmem %s4372, 4294967295
        %v4375 = vld [vmem:[%s4374] sm:$0xfe]
        %v4376 = vlaneseq
        %v4377 = vshrl.u32 %v4376, 7
        %vm4378 = vcmp.eq.s32.totalorder %v4377, 0
        %v4379 = vsel %vm4378, %v4370, %v4375
        %s4380 = scalar_lea.vmem %s4372, 7
        %v4381 = vld [vmem:[%s4380] ss:$0 sm:$0xff]
        %4382 = vst [vmem:[%s4372] sm:$0xff] %v4379
        %s4383 = scalar_lea.vmem %s4348, 24
        %s4385 = scalar_lea.vmem %s4383, 4294967295
        %v4386 = vld [vmem:[%s4385] sm:$0xfe]
        %v4387 = vlaneseq
        %v4388 = vshrl.u32 %v4387, 7
        %vm4389 = vcmp.eq.s32.totalorder %v4388, 0
        %v4390 = vsel %vm4389, %v4381, %v4386
        %s4391 = scalar_lea.vmem %s4383, 7
        %v4392 = vld [vmem:[%s4391] ss:$0 sm:$0xff]
        %4393 = vst [vmem:[%s4383] sm:$0xff] %v4390
        %s4394 = scalar_lea.vmem %s4348, 32
        %s4396 = scalar_lea.vmem %s4394, 4294967295
        %v4397 = vld [vmem:[%s4396] sm:$0xfe]
        %v4398 = vlaneseq
        %v4399 = vshrl.u32 %v4398, 7
        %vm4400 = vcmp.eq.s32.totalorder %v4399, 0
        %v4401 = vsel %vm4400, %v4392, %v4397
        %s4402 = scalar_lea.vmem %s4394, 7
        %v4403 = vld [vmem:[%s4402] ss:$0 sm:$0xff]
        %4404 = vst [vmem:[%s4394] sm:$0xff] %v4401
        %s4405 = scalar_lea.vmem %s4348, 40
        %s4407 = scalar_lea.vmem %s4405, 4294967295
        %v4408 = vld [vmem:[%s4407] sm:$0xfe]
        %v4409 = vlaneseq
        %v4410 = vshrl.u32 %v4409, 7
        %vm4411 = vcmp.eq.s32.totalorder %v4410, 0
        %v4412 = vsel %vm4411, %v4403, %v4408
        %s4413 = scalar_lea.vmem %s4405, 7
        %v4414 = vld [vmem:[%s4413] ss:$0 sm:$0xff]
        %4415 = vst [vmem:[%s4405] sm:$0xff] %v4412
        %s4416 = scalar_lea.vmem %s4348, 48
        %s4418 = scalar_lea.vmem %s4416, 4294967295
        %v4419 = vld [vmem:[%s4418] sm:$0xfe]
        %v4420 = vlaneseq
        %v4421 = vshrl.u32 %v4420, 7
        %vm4422 = vcmp.eq.s32.totalorder %v4421, 0
        %v4423 = vsel %vm4422, %v4414, %v4419
        %s4424 = scalar_lea.vmem %s4416, 7
        %v4425 = vld [vmem:[%s4424] ss:$0 sm:$0xff]
        %4426 = vst [vmem:[%s4416] sm:$0xff] %v4423
        %s4427 = scalar_lea.vmem %s4348, 56
        %s4429 = scalar_lea.vmem %s4427, 4294967295
        %v4430 = vld [vmem:[%s4429] sm:$0xfe]
        %v4431 = vlaneseq
        %v4432 = vshrl.u32 %v4431, 7
        %vm4433 = vcmp.eq.s32.totalorder %v4432, 0
        %v4434 = vsel %vm4433, %v4425, %v4430
        %s4435 = scalar_lea.vmem %s4427, 7
        %v4436 = vld [vmem:[%s4435] ss:$0 sm:$0xff]
        %4437 = vst [vmem:[%s4427] sm:$0xff] %v4434
        %s4438 = scalar_lea.vmem %s4348, 64
        %s4440 = scalar_lea.vmem %s4438, 4294967295
        %v4441 = vld [vmem:[%s4440] sm:$0xfe]
        %v4442 = vlaneseq
        %v4443 = vshrl.u32 %v4442, 7
        %vm4444 = vcmp.eq.s32.totalorder %v4443, 0
        %v4445 = vsel %vm4444, %v4436, %v4441
        %s4446 = scalar_lea.vmem %s4438, 7
        %v4447 = vld [vmem:[%s4446] ss:$0 sm:$0xff]
        %4448 = vst [vmem:[%s4438] sm:$0xff] %v4445
        %s4449 = scalar_lea.vmem %s4348, 72
        %s4451 = scalar_lea.vmem %s4449, 4294967295
        %v4452 = vld [vmem:[%s4451] sm:$0xfe]
        %v4453 = vlaneseq
        %v4454 = vshrl.u32 %v4453, 7
        %vm4455 = vcmp.eq.s32.totalorder %v4454, 0
        %v4456 = vsel %vm4455, %v4447, %v4452
        %s4457 = scalar_lea.vmem %s4449, 7
        %v4458 = vld [vmem:[%s4457] ss:$0 sm:$0xff]
        %4459 = vst [vmem:[%s4449] sm:$0xff] %v4456
        %s4460 = scalar_lea.vmem %s4348, 80
        %s4462 = scalar_lea.vmem %s4460, 4294967295
        %v4463 = vld [vmem:[%s4462] sm:$0xfe]
        %v4464 = vlaneseq
        %v4465 = vshrl.u32 %v4464, 7
        %vm4466 = vcmp.eq.s32.totalorder %v4465, 0
        %v4467 = vsel %vm4466, %v4458, %v4463
        %s4468 = scalar_lea.vmem %s4460, 7
        %v4469 = vld [vmem:[%s4468] ss:$0 sm:$0xff]
        %4470 = vst [vmem:[%s4460] sm:$0xff] %v4467
        %s4471 = scalar_lea.vmem %s4348, 88
        %s4473 = scalar_lea.vmem %s4471, 4294967295
        %v4474 = vld [vmem:[%s4473] sm:$0xfe]
        %v4475 = vlaneseq
        %v4476 = vshrl.u32 %v4475, 7
        %vm4477 = vcmp.eq.s32.totalorder %v4476, 0
        %v4478 = vsel %vm4477, %v4469, %v4474
        %s4479 = scalar_lea.vmem %s4471, 7
        %v4480 = vld [vmem:[%s4479] ss:$0 sm:$0xff]
        %4481 = vst [vmem:[%s4471] sm:$0xff] %v4478
        %s4482 = scalar_lea.vmem %s4348, 96
        %s4484 = scalar_lea.vmem %s4482, 4294967295
        %v4485 = vld [vmem:[%s4484] sm:$0xe]
        %v4486 = vlaneseq
        %v4487 = vshrl.u32 %v4486, 7
        %vm4488 = vcmp.eq.s32.totalorder %v4487, 0
        %v4489 = vsel %vm4488, %v4480, %v4485
        %s4490 = scalar_lea.vmem %s4482, 3
        %v4491 = vld [vmem:[%s4490] ss:$0 sm:$0xff]
        %4492 = vst [vmem:[%s4482] sm:$0xf] %v4489
        %v4493 = vld [vmem:[%s4349] ss:$0 sm:$0xff]
        %s4494 = scalar_lea.vmem %s4348, 1
        %4495 = vst [vmem:[%s4494] sm:$0x1] %v4493
        %s4496 = scalar_lea.vmem %s4349, 96
        %s4497 = scalar_lea.vmem %s4496, 1
        %v4498 = vld [vmem:[%s4497] sm:$0x7]
        %v4499 = vlaneseq
        %v4500 = vshrl.u32 %v4499, 7
        %vm4501 = vcmp.eq.s32.totalorder %v4500, 3
        %v4502 = vsel %vm4501, %v4491, %v4498
        %v4503 = vld [vmem:[%s4496] ss:$0 sm:$0xff]
        %4504 = vst [vmem:[%s4496] sm:$0xf] %v4502
        %s4505 = scalar_lea.vmem %s4349, 88
        %s4506 = scalar_lea.vmem %s4505, 1
        %v4507 = vld [vmem:[%s4506] sm:$0x7f]
        %v4508 = vlaneseq
        %v4509 = vshrl.u32 %v4508, 7
        %vm4510 = vcmp.eq.s32.totalorder %v4509, 7
        %v4511 = vsel %vm4510, %v4503, %v4507
        %v4512 = vld [vmem:[%s4505] ss:$0 sm:$0xff]
        %4513 = vst [vmem:[%s4505] sm:$0xff] %v4511
        %s4514 = scalar_lea.vmem %s4349, 80
        %s4515 = scalar_lea.vmem %s4514, 1
        %v4516 = vld [vmem:[%s4515] sm:$0x7f]
        %v4517 = vlaneseq
        %v4518 = vshrl.u32 %v4517, 7
        %vm4519 = vcmp.eq.s32.totalorder %v4518, 7
        %v4520 = vsel %vm4519, %v4512, %v4516
        %v4521 = vld [vmem:[%s4514] ss:$0 sm:$0xff]
        %4522 = vst [vmem:[%s4514] sm:$0xff] %v4520
        %s4523 = scalar_lea.vmem %s4349, 72
        %s4524 = scalar_lea.vmem %s4523, 1
        %v4525 = vld [vmem:[%s4524] sm:$0x7f]
        %v4526 = vlaneseq
        %v4527 = vshrl.u32 %v4526, 7
        %vm4528 = vcmp.eq.s32.totalorder %v4527, 7
        %v4529 = vsel %vm4528, %v4521, %v4525
        %v4530 = vld [vmem:[%s4523] ss:$0 sm:$0xff]
        %4531 = vst [vmem:[%s4523] sm:$0xff] %v4529
        %s4532 = scalar_lea.vmem %s4349, 64
        %s4533 = scalar_lea.vmem %s4532, 1
        %v4534 = vld [vmem:[%s4533] sm:$0x7f]
        %v4535 = vlaneseq
        %v4536 = vshrl.u32 %v4535, 7
        %vm4537 = vcmp.eq.s32.totalorder %v4536, 7
        %v4538 = vsel %vm4537, %v4530, %v4534
        %v4539 = vld [vmem:[%s4532] ss:$0 sm:$0xff]
        %4540 = vst [vmem:[%s4532] sm:$0xff] %v4538
        %s4541 = scalar_lea.vmem %s4349, 56
        %s4542 = scalar_lea.vmem %s4541, 1
        %v4543 = vld [vmem:[%s4542] sm:$0x7f]
        %v4544 = vlaneseq
        %v4545 = vshrl.u32 %v4544, 7
        %vm4546 = vcmp.eq.s32.totalorder %v4545, 7
        %v4547 = vsel %vm4546, %v4539, %v4543
        %v4548 = vld [vmem:[%s4541] ss:$0 sm:$0xff]
        %4549 = vst [vmem:[%s4541] sm:$0xff] %v4547
        %s4550 = scalar_lea.vmem %s4349, 48
        %s4551 = scalar_lea.vmem %s4550, 1
        %v4552 = vld [vmem:[%s4551] sm:$0x7f]
        %v4553 = vlaneseq
        %v4554 = vshrl.u32 %v4553, 7
        %vm4555 = vcmp.eq.s32.totalorder %v4554, 7
        %v4556 = vsel %vm4555, %v4548, %v4552
        %v4557 = vld [vmem:[%s4550] ss:$0 sm:$0xff]
        %4558 = vst [vmem:[%s4550] sm:$0xff] %v4556
        %s4559 = scalar_lea.vmem %s4349, 40
        %s4560 = scalar_lea.vmem %s4559, 1
        %v4561 = vld [vmem:[%s4560] sm:$0x7f]
        %v4562 = vlaneseq
        %v4563 = vshrl.u32 %v4562, 7
        %vm4564 = vcmp.eq.s32.totalorder %v4563, 7
        %v4565 = vsel %vm4564, %v4557, %v4561
        %v4566 = vld [vmem:[%s4559] ss:$0 sm:$0xff]
        %4567 = vst [vmem:[%s4559] sm:$0xff] %v4565
        %s4568 = scalar_lea.vmem %s4349, 32
        %s4569 = scalar_lea.vmem %s4568, 1
        %v4570 = vld [vmem:[%s4569] sm:$0x7f]
        %v4571 = vlaneseq
        %v4572 = vshrl.u32 %v4571, 7
        %vm4573 = vcmp.eq.s32.totalorder %v4572, 7
        %v4574 = vsel %vm4573, %v4566, %v4570
        %v4575 = vld [vmem:[%s4568] ss:$0 sm:$0xff]
        %4576 = vst [vmem:[%s4568] sm:$0xff] %v4574
        %s4577 = scalar_lea.vmem %s4349, 24
        %s4578 = scalar_lea.vmem %s4577, 1
        %v4579 = vld [vmem:[%s4578] sm:$0x7f]
        %v4580 = vlaneseq
        %v4581 = vshrl.u32 %v4580, 7
        %vm4582 = vcmp.eq.s32.totalorder %v4581, 7
        %v4583 = vsel %vm4582, %v4575, %v4579
        %v4584 = vld [vmem:[%s4577] ss:$0 sm:$0xff]
        %4585 = vst [vmem:[%s4577] sm:$0xff] %v4583
        %s4586 = scalar_lea.vmem %s4349, 16
        %s4587 = scalar_lea.vmem %s4586, 1
        %v4588 = vld [vmem:[%s4587] sm:$0x7f]
        %v4589 = vlaneseq
        %v4590 = vshrl.u32 %v4589, 7
        %vm4591 = vcmp.eq.s32.totalorder %v4590, 7
        %v4592 = vsel %vm4591, %v4584, %v4588
        %v4593 = vld [vmem:[%s4586] ss:$0 sm:$0xff]
        %4594 = vst [vmem:[%s4586] sm:$0xff] %v4592
        %s4595 = scalar_lea.vmem %s4349, 8
        %s4596 = scalar_lea.vmem %s4595, 1
        %v4597 = vld [vmem:[%s4596] sm:$0x7f]
        %v4598 = vlaneseq
        %v4599 = vshrl.u32 %v4598, 7
        %vm4600 = vcmp.eq.s32.totalorder %v4599, 7
        %v4601 = vsel %vm4600, %v4593, %v4597
        %v4602 = vld [vmem:[%s4595] ss:$0 sm:$0xff]
        %4603 = vst [vmem:[%s4595] sm:$0xff] %v4601
        %s4604 = scalar_lea.vmem %s4349, 1
        %v4605 = vld [vmem:[%s4604] sm:$0x7f]
        %v4606 = vlaneseq
        %v4607 = vshrl.u32 %v4606, 7
        %vm4608 = vcmp.eq.s32.totalorder %v4607, 7
        %v4609 = vsel %vm4608, %v4602, %v4605
        %v4610 = vld [vmem:[%s4349] ss:$0 sm:$0xff]
        %4611 = vst [vmem:[%s4349] sm:$0xff] %v4609
        %s4612 = smov [#allocation23]
        %v4613 = vld [vmem:[%s4612] sm:$0xff]
        %s4614 = smov [#allocation24]
        %v4615 = vld [vmem:[%s4614] sm:$0xff]
        %s4616 = smov [#allocation8]
        %s4617 = smov [#allocation9]
        %s4618 = smov [#allocation10]
        %s4619 = smov [#allocation11]
        %v4620 = vld [vmem:[%s4616] sm:$0xff]
        %v4621 = vld [vmem:[%s4617] sm:$0xff]
        %v4622 = vld [vmem:[%s4618] sm:$0xff]
        %v4623 = vld [vmem:[%s4619] sm:$0xff]
        %v4624 = vmul.f32 %v4613, %v4620
        %v4625 = vmul.f32 %v4615, %v4622
        %v4626 = vsub.f32 %v4624, %v4625
        %v4627 = vmul.f32 %v4613, %v4621
        %v4628 = vmul.f32 %v4615, %v4623
        %v4629 = vsub.f32 %v4627, %v4628
        %v4630 = vmul.f32 %v4615, %v4620
        %v4631 = vmul.f32 %v4613, %v4622
        %v4632 = vadd.f32 %v4630, %v4631
        %v4633 = vmul.f32 %v4615, %v4621
        %v4634 = vmul.f32 %v4613, %v4623
        %v4635 = vadd.f32 %v4633, %v4634
        %4636 = vst [vmem:[%s4616] sm:$0xff] %v4626
        %4637 = vst [vmem:[%s4617] sm:$0xff] %v4629
        %4638 = vst [vmem:[%s4618] sm:$0xff] %v4632
        %4639 = vst [vmem:[%s4619] sm:$0xff] %v4635
        %s4640 = smov [#allocation23]
        %s4641 = scalar_lea.vmem %s4640, 8
        %v4642 = vld [vmem:[%s4641] sm:$0xff]
        %s4643 = smov [#allocation24]
        %s4644 = scalar_lea.vmem %s4643, 8
        %v4645 = vld [vmem:[%s4644] sm:$0xff]
        %s4646 = smov [#allocation8]
        %s4647 = scalar_lea.vmem %s4646, 8
        %s4648 = smov [#allocation9]
        %s4649 = scalar_lea.vmem %s4648, 8
        %s4650 = smov [#allocation10]
        %s4651 = scalar_lea.vmem %s4650, 8
        %s4652 = smov [#allocation11]
        %s4653 = scalar_lea.vmem %s4652, 8
        %v4654 = vld [vmem:[%s4647] sm:$0xff]
        %v4655 = vld [vmem:[%s4649] sm:$0xff]
        %v4656 = vld [vmem:[%s4651] sm:$0xff]
        %v4657 = vld [vmem:[%s4653] sm:$0xff]
        %v4658 = vmul.f32 %v4642, %v4654
        %v4659 = vmul.f32 %v4645, %v4656
        %v4660 = vsub.f32 %v4658, %v4659
        %v4661 = vmul.f32 %v4642, %v4655
        %v4662 = vmul.f32 %v4645, %v4657
        %v4663 = vsub.f32 %v4661, %v4662
        %v4664 = vmul.f32 %v4645, %v4654
        %v4665 = vmul.f32 %v4642, %v4656
        %v4666 = vadd.f32 %v4664, %v4665
        %v4667 = vmul.f32 %v4645, %v4655
        %v4668 = vmul.f32 %v4642, %v4657
        %v4669 = vadd.f32 %v4667, %v4668
        %4670 = vst [vmem:[%s4647] sm:$0xff] %v4660
        %4671 = vst [vmem:[%s4649] sm:$0xff] %v4663
        %4672 = vst [vmem:[%s4651] sm:$0xff] %v4666
        %4673 = vst [vmem:[%s4653] sm:$0xff] %v4669
        %s4674 = smov [#allocation23]
        %s4675 = scalar_lea.vmem %s4674, 16
        %v4676 = vld [vmem:[%s4675] sm:$0xff]
        %s4677 = smov [#allocation24]
        %s4678 = scalar_lea.vmem %s4677, 16
        %v4679 = vld [vmem:[%s4678] sm:$0xff]
        %s4680 = smov [#allocation8]
        %s4681 = scalar_lea.vmem %s4680, 16
        %s4682 = smov [#allocation9]
        %s4683 = scalar_lea.vmem %s4682, 16
        %s4684 = smov [#allocation10]
        %s4685 = scalar_lea.vmem %s4684, 16
        %s4686 = smov [#allocation11]
        %s4687 = scalar_lea.vmem %s4686, 16
        %v4688 = vld [vmem:[%s4681] sm:$0xff]
        %v4689 = vld [vmem:[%s4683] sm:$0xff]
        %v4690 = vld [vmem:[%s4685] sm:$0xff]
        %v4691 = vld [vmem:[%s4687] sm:$0xff]
        %v4692 = vmul.f32 %v4676, %v4688
        %v4693 = vmul.f32 %v4679, %v4690
        %v4694 = vsub.f32 %v4692, %v4693
        %v4695 = vmul.f32 %v4676, %v4689
        %v4696 = vmul.f32 %v4679, %v4691
        %v4697 = vsub.f32 %v4695, %v4696
        %v4698 = vmul.f32 %v4679, %v4688
        %v4699 = vmul.f32 %v4676, %v4690
        %v4700 = vadd.f32 %v4698, %v4699
        %v4701 = vmul.f32 %v4679, %v4689
        %v4702 = vmul.f32 %v4676, %v4691
        %v4703 = vadd.f32 %v4701, %v4702
        %4704 = vst [vmem:[%s4681] sm:$0xff] %v4694
        %4705 = vst [vmem:[%s4683] sm:$0xff] %v4697
        %4706 = vst [vmem:[%s4685] sm:$0xff] %v4700
        %4707 = vst [vmem:[%s4687] sm:$0xff] %v4703
        %s4708 = smov [#allocation23]
        %s4709 = scalar_lea.vmem %s4708, 24
        %v4710 = vld [vmem:[%s4709] sm:$0xff]
        %s4711 = smov [#allocation24]
        %s4712 = scalar_lea.vmem %s4711, 24
        %v4713 = vld [vmem:[%s4712] sm:$0xff]
        %s4714 = smov [#allocation8]
        %s4715 = scalar_lea.vmem %s4714, 24
        %s4716 = smov [#allocation9]
        %s4717 = scalar_lea.vmem %s4716, 24
        %s4718 = smov [#allocation10]
        %s4719 = scalar_lea.vmem %s4718, 24
        %s4720 = smov [#allocation11]
        %s4721 = scalar_lea.vmem %s4720, 24
        %v4722 = vld [vmem:[%s4715] sm:$0xff]
        %v4723 = vld [vmem:[%s4717] sm:$0xff]
        %v4724 = vld [vmem:[%s4719] sm:$0xff]
        %v4725 = vld [vmem:[%s4721] sm:$0xff]
        %v4726 = vmul.f32 %v4710, %v4722
        %v4727 = vmul.f32 %v4713, %v4724
        %v4728 = vsub.f32 %v4726, %v4727
        %v4729 = vmul.f32 %v4710, %v4723
        %v4730 = vmul.f32 %v4713, %v4725
        %v4731 = vsub.f32 %v4729, %v4730
        %v4732 = vmul.f32 %v4713, %v4722
        %v4733 = vmul.f32 %v4710, %v4724
        %v4734 = vadd.f32 %v4732, %v4733
        %v4735 = vmul.f32 %v4713, %v4723
        %v4736 = vmul.f32 %v4710, %v4725
        %v4737 = vadd.f32 %v4735, %v4736
        %4738 = vst [vmem:[%s4715] sm:$0xff] %v4728
        %4739 = vst [vmem:[%s4717] sm:$0xff] %v4731
        %4740 = vst [vmem:[%s4719] sm:$0xff] %v4734
        %4741 = vst [vmem:[%s4721] sm:$0xff] %v4737
        %s4742 = smov [#allocation23]
        %s4743 = scalar_lea.vmem %s4742, 32
        %v4744 = vld [vmem:[%s4743] sm:$0xff]
        %s4745 = smov [#allocation24]
        %s4746 = scalar_lea.vmem %s4745, 32
        %v4747 = vld [vmem:[%s4746] sm:$0xff]
        %s4748 = smov [#allocation8]
        %s4749 = scalar_lea.vmem %s4748, 32
        %s4750 = smov [#allocation9]
        %s4751 = scalar_lea.vmem %s4750, 32
        %s4752 = smov [#allocation10]
        %s4753 = scalar_lea.vmem %s4752, 32
        %s4754 = smov [#allocation11]
        %s4755 = scalar_lea.vmem %s4754, 32
        %v4756 = vld [vmem:[%s4749] sm:$0xff]
        %v4757 = vld [vmem:[%s4751] sm:$0xff]
        %v4758 = vld [vmem:[%s4753] sm:$0xff]
        %v4759 = vld [vmem:[%s4755] sm:$0xff]
        %v4760 = vmul.f32 %v4744, %v4756
        %v4761 = vmul.f32 %v4747, %v4758
        %v4762 = vsub.f32 %v4760, %v4761
        %v4763 = vmul.f32 %v4744, %v4757
        %v4764 = vmul.f32 %v4747, %v4759
        %v4765 = vsub.f32 %v4763, %v4764
        %v4766 = vmul.f32 %v4747, %v4756
        %v4767 = vmul.f32 %v4744, %v4758
        %v4768 = vadd.f32 %v4766, %v4767
        %v4769 = vmul.f32 %v4747, %v4757
        %v4770 = vmul.f32 %v4744, %v4759
        %v4771 = vadd.f32 %v4769, %v4770
        %4772 = vst [vmem:[%s4749] sm:$0xff] %v4762
        %4773 = vst [vmem:[%s4751] sm:$0xff] %v4765
        %4774 = vst [vmem:[%s4753] sm:$0xff] %v4768
        %4775 = vst [vmem:[%s4755] sm:$0xff] %v4771
        %s4776 = smov [#allocation23]
        %s4777 = scalar_lea.vmem %s4776, 40
        %v4778 = vld [vmem:[%s4777] sm:$0xff]
        %s4779 = smov [#allocation24]
        %s4780 = scalar_lea.vmem %s4779, 40
        %v4781 = vld [vmem:[%s4780] sm:$0xff]
        %s4782 = smov [#allocation8]
        %s4783 = scalar_lea.vmem %s4782, 40
        %s4784 = smov [#allocation9]
        %s4785 = scalar_lea.vmem %s4784, 40
        %s4786 = smov [#allocation10]
        %s4787 = scalar_lea.vmem %s4786, 40
        %s4788 = smov [#allocation11]
        %s4789 = scalar_lea.vmem %s4788, 40
        %v4790 = vld [vmem:[%s4783] sm:$0xff]
        %v4791 = vld [vmem:[%s4785] sm:$0xff]
        %v4792 = vld [vmem:[%s4787] sm:$0xff]
        %v4793 = vld [vmem:[%s4789] sm:$0xff]
        %v4794 = vmul.f32 %v4778, %v4790
        %v4795 = vmul.f32 %v4781, %v4792
        %v4796 = vsub.f32 %v4794, %v4795
        %v4797 = vmul.f32 %v4778, %v4791
        %v4798 = vmul.f32 %v4781, %v4793
        %v4799 = vsub.f32 %v4797, %v4798
        %v4800 = vmul.f32 %v4781, %v4790
        %v4801 = vmul.f32 %v4778, %v4792
        %v4802 = vadd.f32 %v4800, %v4801
        %v4803 = vmul.f32 %v4781, %v4791
        %v4804 = vmul.f32 %v4778, %v4793
        %v4805 = vadd.f32 %v4803, %v4804
        %4806 = vst [vmem:[%s4783] sm:$0xff] %v4796
        %4807 = vst [vmem:[%s4785] sm:$0xff] %v4799
        %4808 = vst [vmem:[%s4787] sm:$0xff] %v4802
        %4809 = vst [vmem:[%s4789] sm:$0xff] %v4805
        %s4810 = smov [#allocation23]
        %s4811 = scalar_lea.vmem %s4810, 48
        %v4812 = vld [vmem:[%s4811] sm:$0xff]
        %s4813 = smov [#allocation24]
        %s4814 = scalar_lea.vmem %s4813, 48
        %v4815 = vld [vmem:[%s4814] sm:$0xff]
        %s4816 = smov [#allocation8]
        %s4817 = scalar_lea.vmem %s4816, 48
        %s4818 = smov [#allocation9]
        %s4819 = scalar_lea.vmem %s4818, 48
        %s4820 = smov [#allocation10]
        %s4821 = scalar_lea.vmem %s4820, 48
        %s4822 = smov [#allocation11]
        %s4823 = scalar_lea.vmem %s4822, 48
        %v4824 = vld [vmem:[%s4817] sm:$0xff]
        %v4825 = vld [vmem:[%s4819] sm:$0xff]
        %v4826 = vld [vmem:[%s4821] sm:$0xff]
        %v4827 = vld [vmem:[%s4823] sm:$0xff]
        %v4828 = vmul.f32 %v4812, %v4824
        %v4829 = vmul.f32 %v4815, %v4826
        %v4830 = vsub.f32 %v4828, %v4829
        %v4831 = vmul.f32 %v4812, %v4825
        %v4832 = vmul.f32 %v4815, %v4827
        %v4833 = vsub.f32 %v4831, %v4832
        %v4834 = vmul.f32 %v4815, %v4824
        %v4835 = vmul.f32 %v4812, %v4826
        %v4836 = vadd.f32 %v4834, %v4835
        %v4837 = vmul.f32 %v4815, %v4825
        %v4838 = vmul.f32 %v4812, %v4827
        %v4839 = vadd.f32 %v4837, %v4838
        %4840 = vst [vmem:[%s4817] sm:$0xff] %v4830
        %4841 = vst [vmem:[%s4819] sm:$0xff] %v4833
        %4842 = vst [vmem:[%s4821] sm:$0xff] %v4836
        %4843 = vst [vmem:[%s4823] sm:$0xff] %v4839
        %s4844 = smov [#allocation23]
        %s4845 = scalar_lea.vmem %s4844, 56
        %v4846 = vld [vmem:[%s4845] sm:$0xff]
        %s4847 = smov [#allocation24]
        %s4848 = scalar_lea.vmem %s4847, 56
        %v4849 = vld [vmem:[%s4848] sm:$0xff]
        %s4850 = smov [#allocation8]
        %s4851 = scalar_lea.vmem %s4850, 56
        %s4852 = smov [#allocation9]
        %s4853 = scalar_lea.vmem %s4852, 56
        %s4854 = smov [#allocation10]
        %s4855 = scalar_lea.vmem %s4854, 56
        %s4856 = smov [#allocation11]
        %s4857 = scalar_lea.vmem %s4856, 56
        %v4858 = vld [vmem:[%s4851] sm:$0xff]
        %v4859 = vld [vmem:[%s4853] sm:$0xff]
        %v4860 = vld [vmem:[%s4855] sm:$0xff]
        %v4861 = vld [vmem:[%s4857] sm:$0xff]
        %v4862 = vmul.f32 %v4846, %v4858
        %v4863 = vmul.f32 %v4849, %v4860
        %v4864 = vsub.f32 %v4862, %v4863
        %v4865 = vmul.f32 %v4846, %v4859
        %v4866 = vmul.f32 %v4849, %v4861
        %v4867 = vsub.f32 %v4865, %v4866
        %v4868 = vmul.f32 %v4849, %v4858
        %v4869 = vmul.f32 %v4846, %v4860
        %v4870 = vadd.f32 %v4868, %v4869
        %v4871 = vmul.f32 %v4849, %v4859
        %v4872 = vmul.f32 %v4846, %v4861
        %v4873 = vadd.f32 %v4871, %v4872
        %4874 = vst [vmem:[%s4851] sm:$0xff] %v4864
        %4875 = vst [vmem:[%s4853] sm:$0xff] %v4867
        %4876 = vst [vmem:[%s4855] sm:$0xff] %v4870
        %4877 = vst [vmem:[%s4857] sm:$0xff] %v4873
        %s4878 = smov [#allocation23]
        %s4879 = scalar_lea.vmem %s4878, 64
        %v4880 = vld [vmem:[%s4879] sm:$0xff]
        %s4881 = smov [#allocation24]
        %s4882 = scalar_lea.vmem %s4881, 64
        %v4883 = vld [vmem:[%s4882] sm:$0xff]
        %s4884 = smov [#allocation8]
        %s4885 = scalar_lea.vmem %s4884, 64
        %s4886 = smov [#allocation9]
        %s4887 = scalar_lea.vmem %s4886, 64
        %s4888 = smov [#allocation10]
        %s4889 = scalar_lea.vmem %s4888, 64
        %s4890 = smov [#allocation11]
        %s4891 = scalar_lea.vmem %s4890, 64
        %v4892 = vld [vmem:[%s4885] sm:$0xff]
        %v4893 = vld [vmem:[%s4887] sm:$0xff]
        %v4894 = vld [vmem:[%s4889] sm:$0xff]
        %v4895 = vld [vmem:[%s4891] sm:$0xff]
        %v4896 = vmul.f32 %v4880, %v4892
        %v4897 = vmul.f32 %v4883, %v4894
        %v4898 = vsub.f32 %v4896, %v4897
        %v4899 = vmul.f32 %v4880, %v4893
        %v4900 = vmul.f32 %v4883, %v4895
        %v4901 = vsub.f32 %v4899, %v4900
        %v4902 = vmul.f32 %v4883, %v4892
        %v4903 = vmul.f32 %v4880, %v4894
        %v4904 = vadd.f32 %v4902, %v4903
        %v4905 = vmul.f32 %v4883, %v4893
        %v4906 = vmul.f32 %v4880, %v4895
        %v4907 = vadd.f32 %v4905, %v4906
        %4908 = vst [vmem:[%s4885] sm:$0xff] %v4898
        %4909 = vst [vmem:[%s4887] sm:$0xff] %v4901
        %4910 = vst [vmem:[%s4889] sm:$0xff] %v4904
        %4911 = vst [vmem:[%s4891] sm:$0xff] %v4907
        %s4912 = smov [#allocation23]
        %s4913 = scalar_lea.vmem %s4912, 72
        %v4914 = vld [vmem:[%s4913] sm:$0xff]
        %s4915 = smov [#allocation24]
        %s4916 = scalar_lea.vmem %s4915, 72
        %v4917 = vld [vmem:[%s4916] sm:$0xff]
        %s4918 = smov [#allocation8]
        %s4919 = scalar_lea.vmem %s4918, 72
        %s4920 = smov [#allocation9]
        %s4921 = scalar_lea.vmem %s4920, 72
        %s4922 = smov [#allocation10]
        %s4923 = scalar_lea.vmem %s4922, 72
        %s4924 = smov [#allocation11]
        %s4925 = scalar_lea.vmem %s4924, 72
        %v4926 = vld [vmem:[%s4919] sm:$0xff]
        %v4927 = vld [vmem:[%s4921] sm:$0xff]
        %v4928 = vld [vmem:[%s4923] sm:$0xff]
        %v4929 = vld [vmem:[%s4925] sm:$0xff]
        %v4930 = vmul.f32 %v4914, %v4926
        %v4931 = vmul.f32 %v4917, %v4928
        %v4932 = vsub.f32 %v4930, %v4931
        %v4933 = vmul.f32 %v4914, %v4927
        %v4934 = vmul.f32 %v4917, %v4929
        %v4935 = vsub.f32 %v4933, %v4934
        %v4936 = vmul.f32 %v4917, %v4926
        %v4937 = vmul.f32 %v4914, %v4928
        %v4938 = vadd.f32 %v4936, %v4937
        %v4939 = vmul.f32 %v4917, %v4927
        %v4940 = vmul.f32 %v4914, %v4929
        %v4941 = vadd.f32 %v4939, %v4940
        %4942 = vst [vmem:[%s4919] sm:$0xff] %v4932
        %4943 = vst [vmem:[%s4921] sm:$0xff] %v4935
        %4944 = vst [vmem:[%s4923] sm:$0xff] %v4938
        %4945 = vst [vmem:[%s4925] sm:$0xff] %v4941
        %s4946 = smov [#allocation23]
        %s4947 = scalar_lea.vmem %s4946, 80
        %v4948 = vld [vmem:[%s4947] sm:$0xff]
        %s4949 = smov [#allocation24]
        %s4950 = scalar_lea.vmem %s4949, 80
        %v4951 = vld [vmem:[%s4950] sm:$0xff]
        %s4952 = smov [#allocation8]
        %s4953 = scalar_lea.vmem %s4952, 80
        %s4954 = smov [#allocation9]
        %s4955 = scalar_lea.vmem %s4954, 80
        %s4956 = smov [#allocation10]
        %s4957 = scalar_lea.vmem %s4956, 80
        %s4958 = smov [#allocation11]
        %s4959 = scalar_lea.vmem %s4958, 80
        %v4960 = vld [vmem:[%s4953] sm:$0xff]
        %v4961 = vld [vmem:[%s4955] sm:$0xff]
        %v4962 = vld [vmem:[%s4957] sm:$0xff]
        %v4963 = vld [vmem:[%s4959] sm:$0xff]
        %v4964 = vmul.f32 %v4948, %v4960
        %v4965 = vmul.f32 %v4951, %v4962
        %v4966 = vsub.f32 %v4964, %v4965
        %v4967 = vmul.f32 %v4948, %v4961
        %v4968 = vmul.f32 %v4951, %v4963
        %v4969 = vsub.f32 %v4967, %v4968
        %v4970 = vmul.f32 %v4951, %v4960
        %v4971 = vmul.f32 %v4948, %v4962
        %v4972 = vadd.f32 %v4970, %v4971
        %v4973 = vmul.f32 %v4951, %v4961
        %v4974 = vmul.f32 %v4948, %v4963
        %v4975 = vadd.f32 %v4973, %v4974
        %4976 = vst [vmem:[%s4953] sm:$0xff] %v4966
        %4977 = vst [vmem:[%s4955] sm:$0xff] %v4969
        %4978 = vst [vmem:[%s4957] sm:$0xff] %v4972
        %4979 = vst [vmem:[%s4959] sm:$0xff] %v4975
        %s4980 = smov [#allocation23]
        %s4981 = scalar_lea.vmem %s4980, 88
        %v4982 = vld [vmem:[%s4981] sm:$0xff]
        %s4983 = smov [#allocation24]
        %s4984 = scalar_lea.vmem %s4983, 88
        %v4985 = vld [vmem:[%s4984] sm:$0xff]
        %s4986 = smov [#allocation8]
        %s4987 = scalar_lea.vmem %s4986, 88
        %s4988 = smov [#allocation9]
        %s4989 = scalar_lea.vmem %s4988, 88
        %s4990 = smov [#allocation10]
        %s4991 = scalar_lea.vmem %s4990, 88
        %s4992 = smov [#allocation11]
        %s4993 = scalar_lea.vmem %s4992, 88
        %v4994 = vld [vmem:[%s4987] sm:$0xff]
        %v4995 = vld [vmem:[%s4989] sm:$0xff]
        %v4996 = vld [vmem:[%s4991] sm:$0xff]
        %v4997 = vld [vmem:[%s4993] sm:$0xff]
        %v4998 = vmul.f32 %v4982, %v4994
        %v4999 = vmul.f32 %v4985, %v4996
        %v5000 = vsub.f32 %v4998, %v4999
        %v5001 = vmul.f32 %v4982, %v4995
        %v5002 = vmul.f32 %v4985, %v4997
        %v5003 = vsub.f32 %v5001, %v5002
        %v5004 = vmul.f32 %v4985, %v4994
        %v5005 = vmul.f32 %v4982, %v4996
        %v5006 = vadd.f32 %v5004, %v5005
        %v5007 = vmul.f32 %v4985, %v4995
        %v5008 = vmul.f32 %v4982, %v4997
        %v5009 = vadd.f32 %v5007, %v5008
        %5010 = vst [vmem:[%s4987] sm:$0xff] %v5000
        %5011 = vst [vmem:[%s4989] sm:$0xff] %v5003
        %5012 = vst [vmem:[%s4991] sm:$0xff] %v5006
        %5013 = vst [vmem:[%s4993] sm:$0xff] %v5009
        %s5014 = smov [#allocation23]
        %s5015 = scalar_lea.vmem %s5014, 96
        %v5016 = vld [vmem:[%s5015] sm:$0xff]
        %s5017 = smov [#allocation24]
        %s5018 = scalar_lea.vmem %s5017, 96
        %v5019 = vld [vmem:[%s5018] sm:$0xff]
        %s5020 = smov [#allocation8]
        %s5021 = scalar_lea.vmem %s5020, 96
        %s5022 = smov [#allocation9]
        %s5023 = scalar_lea.vmem %s5022, 96
        %s5024 = smov [#allocation10]
        %s5025 = scalar_lea.vmem %s5024, 96
        %s5026 = smov [#allocation11]
        %s5027 = scalar_lea.vmem %s5026, 96
        %v5028 = vld [vmem:[%s5021] sm:$0xf]
        %v5029 = vld [vmem:[%s5023] sm:$0xf]
        %v5030 = vld [vmem:[%s5025] sm:$0xf]
        %v5031 = vld [vmem:[%s5027] sm:$0xf]
        %v5032 = vmul.f32 %v5016, %v5028
        %v5033 = vmul.f32 %v5019, %v5030
        %v5034 = vsub.f32 %v5032, %v5033
        %v5035 = vmul.f32 %v5016, %v5029
        %v5036 = vmul.f32 %v5019, %v5031
        %v5037 = vsub.f32 %v5035, %v5036
        %v5038 = vmul.f32 %v5019, %v5028
        %v5039 = vmul.f32 %v5016, %v5030
        %v5040 = vadd.f32 %v5038, %v5039
        %v5041 = vmul.f32 %v5019, %v5029
        %v5042 = vmul.f32 %v5016, %v5031
        %v5043 = vadd.f32 %v5041, %v5042
        %5044 = vst [vmem:[%s5021] sm:$0xf] %v5034
        %5045 = vst [vmem:[%s5023] sm:$0xf] %v5037
        %5046 = vst [vmem:[%s5025] sm:$0xf] %v5040
        %5047 = vst [vmem:[%s5027] sm:$0xf] %v5043
        %s5048 = smov [#allocation8]
        %s5049 = smov [#allocation10]
        %v5050 = vld [vmem:[%s5048] ss:$0 sm:$0xff]
        %s5052 = scalar_lea.vmem %s5048, 4294967295
        %v5053 = vld [vmem:[%s5052] sm:$0xfe]
        %v5054 = vlaneseq
        %v5055 = vshrl.u32 %v5054, 7
        %vm5056 = vcmp.eq.s32.totalorder %v5055, 0
        %v5057 = vsel %vm5056, %v5050, %v5053
        %s5058 = scalar_lea.vmem %s5048, 7
        %v5059 = vld [vmem:[%s5058] ss:$0 sm:$0xff]
        %5060 = vst [vmem:[%s5048] sm:$0xff] %v5057
        %s5061 = scalar_lea.vmem %s5048, 8
        %s5063 = scalar_lea.vmem %s5061, 4294967295
        %v5064 = vld [vmem:[%s5063] sm:$0xfe]
        %v5065 = vlaneseq
        %v5066 = vshrl.u32 %v5065, 7
        %vm5067 = vcmp.eq.s32.totalorder %v5066, 0
        %v5068 = vsel %vm5067, %v5059, %v5064
        %s5069 = scalar_lea.vmem %s5061, 7
        %v5070 = vld [vmem:[%s5069] ss:$0 sm:$0xff]
        %5071 = vst [vmem:[%s5061] sm:$0xff] %v5068
        %s5072 = scalar_lea.vmem %s5048, 16
        %s5074 = scalar_lea.vmem %s5072, 4294967295
        %v5075 = vld [vmem:[%s5074] sm:$0xfe]
        %v5076 = vlaneseq
        %v5077 = vshrl.u32 %v5076, 7
        %vm5078 = vcmp.eq.s32.totalorder %v5077, 0
        %v5079 = vsel %vm5078, %v5070, %v5075
        %s5080 = scalar_lea.vmem %s5072, 7
        %v5081 = vld [vmem:[%s5080] ss:$0 sm:$0xff]
        %5082 = vst [vmem:[%s5072] sm:$0xff] %v5079
        %s5083 = scalar_lea.vmem %s5048, 24
        %s5085 = scalar_lea.vmem %s5083, 4294967295
        %v5086 = vld [vmem:[%s5085] sm:$0xfe]
        %v5087 = vlaneseq
        %v5088 = vshrl.u32 %v5087, 7
        %vm5089 = vcmp.eq.s32.totalorder %v5088, 0
        %v5090 = vsel %vm5089, %v5081, %v5086
        %s5091 = scalar_lea.vmem %s5083, 7
        %v5092 = vld [vmem:[%s5091] ss:$0 sm:$0xff]
        %5093 = vst [vmem:[%s5083] sm:$0xff] %v5090
        %s5094 = scalar_lea.vmem %s5048, 32
        %s5096 = scalar_lea.vmem %s5094, 4294967295
        %v5097 = vld [vmem:[%s5096] sm:$0xfe]
        %v5098 = vlaneseq
        %v5099 = vshrl.u32 %v5098, 7
        %vm5100 = vcmp.eq.s32.totalorder %v5099, 0
        %v5101 = vsel %vm5100, %v5092, %v5097
        %s5102 = scalar_lea.vmem %s5094, 7
        %v5103 = vld [vmem:[%s5102] ss:$0 sm:$0xff]
        %5104 = vst [vmem:[%s5094] sm:$0xff] %v5101
        %s5105 = scalar_lea.vmem %s5048, 40
        %s5107 = scalar_lea.vmem %s5105, 4294967295
        %v5108 = vld [vmem:[%s5107] sm:$0xfe]
        %v5109 = vlaneseq
        %v5110 = vshrl.u32 %v5109, 7
        %vm5111 = vcmp.eq.s32.totalorder %v5110, 0
        %v5112 = vsel %vm5111, %v5103, %v5108
        %s5113 = scalar_lea.vmem %s5105, 7
        %v5114 = vld [vmem:[%s5113] ss:$0 sm:$0xff]
        %5115 = vst [vmem:[%s5105] sm:$0xff] %v5112
        %s5116 = scalar_lea.vmem %s5048, 48
        %s5118 = scalar_lea.vmem %s5116, 4294967295
        %v5119 = vld [vmem:[%s5118] sm:$0xfe]
        %v5120 = vlaneseq
        %v5121 = vshrl.u32 %v5120, 7
        %vm5122 = vcmp.eq.s32.totalorder %v5121, 0
        %v5123 = vsel %vm5122, %v5114, %v5119
        %s5124 = scalar_lea.vmem %s5116, 7
        %v5125 = vld [vmem:[%s5124] ss:$0 sm:$0xff]
        %5126 = vst [vmem:[%s5116] sm:$0xff] %v5123
        %s5127 = scalar_lea.vmem %s5048, 56
        %s5129 = scalar_lea.vmem %s5127, 4294967295
        %v5130 = vld [vmem:[%s5129] sm:$0xfe]
        %v5131 = vlaneseq
        %v5132 = vshrl.u32 %v5131, 7
        %vm5133 = vcmp.eq.s32.totalorder %v5132, 0
        %v5134 = vsel %vm5133, %v5125, %v5130
        %s5135 = scalar_lea.vmem %s5127, 7
        %v5136 = vld [vmem:[%s5135] ss:$0 sm:$0xff]
        %5137 = vst [vmem:[%s5127] sm:$0xff] %v5134
        %s5138 = scalar_lea.vmem %s5048, 64
        %s5140 = scalar_lea.vmem %s5138, 4294967295
        %v5141 = vld [vmem:[%s5140] sm:$0xfe]
        %v5142 = vlaneseq
        %v5143 = vshrl.u32 %v5142, 7
        %vm5144 = vcmp.eq.s32.totalorder %v5143, 0
        %v5145 = vsel %vm5144, %v5136, %v5141
        %s5146 = scalar_lea.vmem %s5138, 7
        %v5147 = vld [vmem:[%s5146] ss:$0 sm:$0xff]
        %5148 = vst [vmem:[%s5138] sm:$0xff] %v5145
        %s5149 = scalar_lea.vmem %s5048, 72
        %s5151 = scalar_lea.vmem %s5149, 4294967295
        %v5152 = vld [vmem:[%s5151] sm:$0xfe]
        %v5153 = vlaneseq
        %v5154 = vshrl.u32 %v5153, 7
        %vm5155 = vcmp.eq.s32.totalorder %v5154, 0
        %v5156 = vsel %vm5155, %v5147, %v5152
        %s5157 = scalar_lea.vmem %s5149, 7
        %v5158 = vld [vmem:[%s5157] ss:$0 sm:$0xff]
        %5159 = vst [vmem:[%s5149] sm:$0xff] %v5156
        %s5160 = scalar_lea.vmem %s5048, 80
        %s5162 = scalar_lea.vmem %s5160, 4294967295
        %v5163 = vld [vmem:[%s5162] sm:$0xfe]
        %v5164 = vlaneseq
        %v5165 = vshrl.u32 %v5164, 7
        %vm5166 = vcmp.eq.s32.totalorder %v5165, 0
        %v5167 = vsel %vm5166, %v5158, %v5163
        %s5168 = scalar_lea.vmem %s5160, 7
        %v5169 = vld [vmem:[%s5168] ss:$0 sm:$0xff]
        %5170 = vst [vmem:[%s5160] sm:$0xff] %v5167
        %s5171 = scalar_lea.vmem %s5048, 88
        %s5173 = scalar_lea.vmem %s5171, 4294967295
        %v5174 = vld [vmem:[%s5173] sm:$0xfe]
        %v5175 = vlaneseq
        %v5176 = vshrl.u32 %v5175, 7
        %vm5177 = vcmp.eq.s32.totalorder %v5176, 0
        %v5178 = vsel %vm5177, %v5169, %v5174
        %s5179 = scalar_lea.vmem %s5171, 7
        %v5180 = vld [vmem:[%s5179] ss:$0 sm:$0xff]
        %5181 = vst [vmem:[%s5171] sm:$0xff] %v5178
        %s5182 = scalar_lea.vmem %s5048, 96
        %s5184 = scalar_lea.vmem %s5182, 4294967295
        %v5185 = vld [vmem:[%s5184] sm:$0xe]
        %v5186 = vlaneseq
        %v5187 = vshrl.u32 %v5186, 7
        %vm5188 = vcmp.eq.s32.totalorder %v5187, 0
        %v5189 = vsel %vm5188, %v5180, %v5185
        %s5190 = scalar_lea.vmem %s5182, 3
        %v5191 = vld [vmem:[%s5190] ss:$0 sm:$0xff]
        %5192 = vst [vmem:[%s5182] sm:$0xf] %v5189
        %v5193 = vld [vmem:[%s5049] ss:$0 sm:$0xff]
        %s5194 = scalar_lea.vmem %s5048, 1
        %5195 = vst [vmem:[%s5194] sm:$0x1] %v5193
        %s5196 = scalar_lea.vmem %s5049, 96
        %s5197 = scalar_lea.vmem %s5196, 1
        %v5198 = vld [vmem:[%s5197] sm:$0x7]
        %v5199 = vlaneseq
        %v5200 = vshrl.u32 %v5199, 7
        %vm5201 = vcmp.eq.s32.totalorder %v5200, 3
        %v5202 = vsel %vm5201, %v5191, %v5198
        %v5203 = vld [vmem:[%s5196] ss:$0 sm:$0xff]
        %5204 = vst [vmem:[%s5196] sm:$0xf] %v5202
        %s5205 = scalar_lea.vmem %s5049, 88
        %s5206 = scalar_lea.vmem %s5205, 1
        %v5207 = vld [vmem:[%s5206] sm:$0x7f]
        %v5208 = vlaneseq
        %v5209 = vshrl.u32 %v5208, 7
        %vm5210 = vcmp.eq.s32.totalorder %v5209, 7
        %v5211 = vsel %vm5210, %v5203, %v5207
        %v5212 = vld [vmem:[%s5205] ss:$0 sm:$0xff]
        %5213 = vst [vmem:[%s5205] sm:$0xff] %v5211
        %s5214 = scalar_lea.vmem %s5049, 80
        %s5215 = scalar_lea.vmem %s5214, 1
        %v5216 = vld [vmem:[%s5215] sm:$0x7f]
        %v5217 = vlaneseq
        %v5218 = vshrl.u32 %v5217, 7
        %vm5219 = vcmp.eq.s32.totalorder %v5218, 7
        %v5220 = vsel %vm5219, %v5212, %v5216
        %v5221 = vld [vmem:[%s5214] ss:$0 sm:$0xff]
        %5222 = vst [vmem:[%s5214] sm:$0xff] %v5220
        %s5223 = scalar_lea.vmem %s5049, 72
        %s5224 = scalar_lea.vmem %s5223, 1
        %v5225 = vld [vmem:[%s5224] sm:$0x7f]
        %v5226 = vlaneseq
        %v5227 = vshrl.u32 %v5226, 7
        %vm5228 = vcmp.eq.s32.totalorder %v5227, 7
        %v5229 = vsel %vm5228, %v5221, %v5225
        %v5230 = vld [vmem:[%s5223] ss:$0 sm:$0xff]
        %5231 = vst [vmem:[%s5223] sm:$0xff] %v5229
        %s5232 = scalar_lea.vmem %s5049, 64
        %s5233 = scalar_lea.vmem %s5232, 1
        %v5234 = vld [vmem:[%s5233] sm:$0x7f]
        %v5235 = vlaneseq
        %v5236 = vshrl.u32 %v5235, 7
        %vm5237 = vcmp.eq.s32.totalorder %v5236, 7
        %v5238 = vsel %vm5237, %v5230, %v5234
        %v5239 = vld [vmem:[%s5232] ss:$0 sm:$0xff]
        %5240 = vst [vmem:[%s5232] sm:$0xff] %v5238
        %s5241 = scalar_lea.vmem %s5049, 56
        %s5242 = scalar_lea.vmem %s5241, 1
        %v5243 = vld [vmem:[%s5242] sm:$0x7f]
        %v5244 = vlaneseq
        %v5245 = vshrl.u32 %v5244, 7
        %vm5246 = vcmp.eq.s32.totalorder %v5245, 7
        %v5247 = vsel %vm5246, %v5239, %v5243
        %v5248 = vld [vmem:[%s5241] ss:$0 sm:$0xff]
        %5249 = vst [vmem:[%s5241] sm:$0xff] %v5247
        %s5250 = scalar_lea.vmem %s5049, 48
        %s5251 = scalar_lea.vmem %s5250, 1
        %v5252 = vld [vmem:[%s5251] sm:$0x7f]
        %v5253 = vlaneseq
        %v5254 = vshrl.u32 %v5253, 7
        %vm5255 = vcmp.eq.s32.totalorder %v5254, 7
        %v5256 = vsel %vm5255, %v5248, %v5252
        %v5257 = vld [vmem:[%s5250] ss:$0 sm:$0xff]
        %5258 = vst [vmem:[%s5250] sm:$0xff] %v5256
        %s5259 = scalar_lea.vmem %s5049, 40
        %s5260 = scalar_lea.vmem %s5259, 1
        %v5261 = vld [vmem:[%s5260] sm:$0x7f]
        %v5262 = vlaneseq
        %v5263 = vshrl.u32 %v5262, 7
        %vm5264 = vcmp.eq.s32.totalorder %v5263, 7
        %v5265 = vsel %vm5264, %v5257, %v5261
        %v5266 = vld [vmem:[%s5259] ss:$0 sm:$0xff]
        %5267 = vst [vmem:[%s5259] sm:$0xff] %v5265
        %s5268 = scalar_lea.vmem %s5049, 32
        %s5269 = scalar_lea.vmem %s5268, 1
        %v5270 = vld [vmem:[%s5269] sm:$0x7f]
        %v5271 = vlaneseq
        %v5272 = vshrl.u32 %v5271, 7
        %vm5273 = vcmp.eq.s32.totalorder %v5272, 7
        %v5274 = vsel %vm5273, %v5266, %v5270
        %v5275 = vld [vmem:[%s5268] ss:$0 sm:$0xff]
        %5276 = vst [vmem:[%s5268] sm:$0xff] %v5274
        %s5277 = scalar_lea.vmem %s5049, 24
        %s5278 = scalar_lea.vmem %s5277, 1
        %v5279 = vld [vmem:[%s5278] sm:$0x7f]
        %v5280 = vlaneseq
        %v5281 = vshrl.u32 %v5280, 7
        %vm5282 = vcmp.eq.s32.totalorder %v5281, 7
        %v5283 = vsel %vm5282, %v5275, %v5279
        %v5284 = vld [vmem:[%s5277] ss:$0 sm:$0xff]
        %5285 = vst [vmem:[%s5277] sm:$0xff] %v5283
        %s5286 = scalar_lea.vmem %s5049, 16
        %s5287 = scalar_lea.vmem %s5286, 1
        %v5288 = vld [vmem:[%s5287] sm:$0x7f]
        %v5289 = vlaneseq
        %v5290 = vshrl.u32 %v5289, 7
        %vm5291 = vcmp.eq.s32.totalorder %v5290, 7
        %v5292 = vsel %vm5291, %v5284, %v5288
        %v5293 = vld [vmem:[%s5286] ss:$0 sm:$0xff]
        %5294 = vst [vmem:[%s5286] sm:$0xff] %v5292
        %s5295 = scalar_lea.vmem %s5049, 8
        %s5296 = scalar_lea.vmem %s5295, 1
        %v5297 = vld [vmem:[%s5296] sm:$0x7f]
        %v5298 = vlaneseq
        %v5299 = vshrl.u32 %v5298, 7
        %vm5300 = vcmp.eq.s32.totalorder %v5299, 7
        %v5301 = vsel %vm5300, %v5293, %v5297
        %v5302 = vld [vmem:[%s5295] ss:$0 sm:$0xff]
        %5303 = vst [vmem:[%s5295] sm:$0xff] %v5301
        %s5304 = scalar_lea.vmem %s5049, 1
        %v5305 = vld [vmem:[%s5304] sm:$0x7f]
        %v5306 = vlaneseq
        %v5307 = vshrl.u32 %v5306, 7
        %vm5308 = vcmp.eq.s32.totalorder %v5307, 7
        %v5309 = vsel %vm5308, %v5302, %v5305
        %v5310 = vld [vmem:[%s5049] ss:$0 sm:$0xff]
        %5311 = vst [vmem:[%s5049] sm:$0xff] %v5309
        %s5312 = smov [#allocation9]
        %s5313 = smov [#allocation11]
        %v5314 = vld [vmem:[%s5312] ss:$0 sm:$0xff]
        %s5316 = scalar_lea.vmem %s5312, 4294967295
        %v5317 = vld [vmem:[%s5316] sm:$0xfe]
        %v5318 = vlaneseq
        %v5319 = vshrl.u32 %v5318, 7
        %vm5320 = vcmp.eq.s32.totalorder %v5319, 0
        %v5321 = vsel %vm5320, %v5314, %v5317
        %s5322 = scalar_lea.vmem %s5312, 7
        %v5323 = vld [vmem:[%s5322] ss:$0 sm:$0xff]
        %5324 = vst [vmem:[%s5312] sm:$0xff] %v5321
        %s5325 = scalar_lea.vmem %s5312, 8
        %s5327 = scalar_lea.vmem %s5325, 4294967295
        %v5328 = vld [vmem:[%s5327] sm:$0xfe]
        %v5329 = vlaneseq
        %v5330 = vshrl.u32 %v5329, 7
        %vm5331 = vcmp.eq.s32.totalorder %v5330, 0
        %v5332 = vsel %vm5331, %v5323, %v5328
        %s5333 = scalar_lea.vmem %s5325, 7
        %v5334 = vld [vmem:[%s5333] ss:$0 sm:$0xff]
        %5335 = vst [vmem:[%s5325] sm:$0xff] %v5332
        %s5336 = scalar_lea.vmem %s5312, 16
        %s5338 = scalar_lea.vmem %s5336, 4294967295
        %v5339 = vld [vmem:[%s5338] sm:$0xfe]
        %v5340 = vlaneseq
        %v5341 = vshrl.u32 %v5340, 7
        %vm5342 = vcmp.eq.s32.totalorder %v5341, 0
        %v5343 = vsel %vm5342, %v5334, %v5339
        %s5344 = scalar_lea.vmem %s5336, 7
        %v5345 = vld [vmem:[%s5344] ss:$0 sm:$0xff]
        %5346 = vst [vmem:[%s5336] sm:$0xff] %v5343
        %s5347 = scalar_lea.vmem %s5312, 24
        %s5349 = scalar_lea.vmem %s5347, 4294967295
        %v5350 = vld [vmem:[%s5349] sm:$0xfe]
        %v5351 = vlaneseq
        %v5352 = vshrl.u32 %v5351, 7
        %vm5353 = vcmp.eq.s32.totalorder %v5352, 0
        %v5354 = vsel %vm5353, %v5345, %v5350
        %s5355 = scalar_lea.vmem %s5347, 7
        %v5356 = vld [vmem:[%s5355] ss:$0 sm:$0xff]
        %5357 = vst [vmem:[%s5347] sm:$0xff] %v5354
        %s5358 = scalar_lea.vmem %s5312, 32
        %s5360 = scalar_lea.vmem %s5358, 4294967295
        %v5361 = vld [vmem:[%s5360] sm:$0xfe]
        %v5362 = vlaneseq
        %v5363 = vshrl.u32 %v5362, 7
        %vm5364 = vcmp.eq.s32.totalorder %v5363, 0
        %v5365 = vsel %vm5364, %v5356, %v5361
        %s5366 = scalar_lea.vmem %s5358, 7
        %v5367 = vld [vmem:[%s5366] ss:$0 sm:$0xff]
        %5368 = vst [vmem:[%s5358] sm:$0xff] %v5365
        %s5369 = scalar_lea.vmem %s5312, 40
        %s5371 = scalar_lea.vmem %s5369, 4294967295
        %v5372 = vld [vmem:[%s5371] sm:$0xfe]
        %v5373 = vlaneseq
        %v5374 = vshrl.u32 %v5373, 7
        %vm5375 = vcmp.eq.s32.totalorder %v5374, 0
        %v5376 = vsel %vm5375, %v5367, %v5372
        %s5377 = scalar_lea.vmem %s5369, 7
        %v5378 = vld [vmem:[%s5377] ss:$0 sm:$0xff]
        %5379 = vst [vmem:[%s5369] sm:$0xff] %v5376
        %s5380 = scalar_lea.vmem %s5312, 48
        %s5382 = scalar_lea.vmem %s5380, 4294967295
        %v5383 = vld [vmem:[%s5382] sm:$0xfe]
        %v5384 = vlaneseq
        %v5385 = vshrl.u32 %v5384, 7
        %vm5386 = vcmp.eq.s32.totalorder %v5385, 0
        %v5387 = vsel %vm5386, %v5378, %v5383
        %s5388 = scalar_lea.vmem %s5380, 7
        %v5389 = vld [vmem:[%s5388] ss:$0 sm:$0xff]
        %5390 = vst [vmem:[%s5380] sm:$0xff] %v5387
        %s5391 = scalar_lea.vmem %s5312, 56
        %s5393 = scalar_lea.vmem %s5391, 4294967295
        %v5394 = vld [vmem:[%s5393] sm:$0xfe]
        %v5395 = vlaneseq
        %v5396 = vshrl.u32 %v5395, 7
        %vm5397 = vcmp.eq.s32.totalorder %v5396, 0
        %v5398 = vsel %vm5397, %v5389, %v5394
        %s5399 = scalar_lea.vmem %s5391, 7
        %v5400 = vld [vmem:[%s5399] ss:$0 sm:$0xff]
        %5401 = vst [vmem:[%s5391] sm:$0xff] %v5398
        %s5402 = scalar_lea.vmem %s5312, 64
        %s5404 = scalar_lea.vmem %s5402, 4294967295
        %v5405 = vld [vmem:[%s5404] sm:$0xfe]
        %v5406 = vlaneseq
        %v5407 = vshrl.u32 %v5406, 7
        %vm5408 = vcmp.eq.s32.totalorder %v5407, 0
        %v5409 = vsel %vm5408, %v5400, %v5405
        %s5410 = scalar_lea.vmem %s5402, 7
        %v5411 = vld [vmem:[%s5410] ss:$0 sm:$0xff]
        %5412 = vst [vmem:[%s5402] sm:$0xff] %v5409
        %s5413 = scalar_lea.vmem %s5312, 72
        %s5415 = scalar_lea.vmem %s5413, 4294967295
        %v5416 = vld [vmem:[%s5415] sm:$0xfe]
        %v5417 = vlaneseq
        %v5418 = vshrl.u32 %v5417, 7
        %vm5419 = vcmp.eq.s32.totalorder %v5418, 0
        %v5420 = vsel %vm5419, %v5411, %v5416
        %s5421 = scalar_lea.vmem %s5413, 7
        %v5422 = vld [vmem:[%s5421] ss:$0 sm:$0xff]
        %5423 = vst [vmem:[%s5413] sm:$0xff] %v5420
        %s5424 = scalar_lea.vmem %s5312, 80
        %s5426 = scalar_lea.vmem %s5424, 4294967295
        %v5427 = vld [vmem:[%s5426] sm:$0xfe]
        %v5428 = vlaneseq
        %v5429 = vshrl.u32 %v5428, 7
        %vm5430 = vcmp.eq.s32.totalorder %v5429, 0
        %v5431 = vsel %vm5430, %v5422, %v5427
        %s5432 = scalar_lea.vmem %s5424, 7
        %v5433 = vld [vmem:[%s5432] ss:$0 sm:$0xff]
        %5434 = vst [vmem:[%s5424] sm:$0xff] %v5431
        %s5435 = scalar_lea.vmem %s5312, 88
        %s5437 = scalar_lea.vmem %s5435, 4294967295
        %v5438 = vld [vmem:[%s5437] sm:$0xfe]
        %v5439 = vlaneseq
        %v5440 = vshrl.u32 %v5439, 7
        %vm5441 = vcmp.eq.s32.totalorder %v5440, 0
        %v5442 = vsel %vm5441, %v5433, %v5438
        %s5443 = scalar_lea.vmem %s5435, 7
        %v5444 = vld [vmem:[%s5443] ss:$0 sm:$0xff]
        %5445 = vst [vmem:[%s5435] sm:$0xff] %v5442
        %s5446 = scalar_lea.vmem %s5312, 96
        %s5448 = scalar_lea.vmem %s5446, 4294967295
        %v5449 = vld [vmem:[%s5448] sm:$0xe]
        %v5450 = vlaneseq
        %v5451 = vshrl.u32 %v5450, 7
        %vm5452 = vcmp.eq.s32.totalorder %v5451, 0
        %v5453 = vsel %vm5452, %v5444, %v5449
        %s5454 = scalar_lea.vmem %s5446, 3
        %v5455 = vld [vmem:[%s5454] ss:$0 sm:$0xff]
        %5456 = vst [vmem:[%s5446] sm:$0xf] %v5453
        %v5457 = vld [vmem:[%s5313] ss:$0 sm:$0xff]
        %s5458 = scalar_lea.vmem %s5312, 1
        %5459 = vst [vmem:[%s5458] sm:$0x1] %v5457
        %s5460 = scalar_lea.vmem %s5313, 96
        %s5461 = scalar_lea.vmem %s5460, 1
        %v5462 = vld [vmem:[%s5461] sm:$0x7]
        %v5463 = vlaneseq
        %v5464 = vshrl.u32 %v5463, 7
        %vm5465 = vcmp.eq.s32.totalorder %v5464, 3
        %v5466 = vsel %vm5465, %v5455, %v5462
        %v5467 = vld [vmem:[%s5460] ss:$0 sm:$0xff]
        %5468 = vst [vmem:[%s5460] sm:$0xf] %v5466
        %s5469 = scalar_lea.vmem %s5313, 88
        %s5470 = scalar_lea.vmem %s5469, 1
        %v5471 = vld [vmem:[%s5470] sm:$0x7f]
        %v5472 = vlaneseq
        %v5473 = vshrl.u32 %v5472, 7
        %vm5474 = vcmp.eq.s32.totalorder %v5473, 7
        %v5475 = vsel %vm5474, %v5467, %v5471
        %v5476 = vld [vmem:[%s5469] ss:$0 sm:$0xff]
        %5477 = vst [vmem:[%s5469] sm:$0xff] %v5475
        %s5478 = scalar_lea.vmem %s5313, 80
        %s5479 = scalar_lea.vmem %s5478, 1
        %v5480 = vld [vmem:[%s5479] sm:$0x7f]
        %v5481 = vlaneseq
        %v5482 = vshrl.u32 %v5481, 7
        %vm5483 = vcmp.eq.s32.totalorder %v5482, 7
        %v5484 = vsel %vm5483, %v5476, %v5480
        %v5485 = vld [vmem:[%s5478] ss:$0 sm:$0xff]
        %5486 = vst [vmem:[%s5478] sm:$0xff] %v5484
        %s5487 = scalar_lea.vmem %s5313, 72
        %s5488 = scalar_lea.vmem %s5487, 1
        %v5489 = vld [vmem:[%s5488] sm:$0x7f]
        %v5490 = vlaneseq
        %v5491 = vshrl.u32 %v5490, 7
        %vm5492 = vcmp.eq.s32.totalorder %v5491, 7
        %v5493 = vsel %vm5492, %v5485, %v5489
        %v5494 = vld [vmem:[%s5487] ss:$0 sm:$0xff]
        %5495 = vst [vmem:[%s5487] sm:$0xff] %v5493
        %s5496 = scalar_lea.vmem %s5313, 64
        %s5497 = scalar_lea.vmem %s5496, 1
        %v5498 = vld [vmem:[%s5497] sm:$0x7f]
        %v5499 = vlaneseq
        %v5500 = vshrl.u32 %v5499, 7
        %vm5501 = vcmp.eq.s32.totalorder %v5500, 7
        %v5502 = vsel %vm5501, %v5494, %v5498
        %v5503 = vld [vmem:[%s5496] ss:$0 sm:$0xff]
        %5504 = vst [vmem:[%s5496] sm:$0xff] %v5502
        %s5505 = scalar_lea.vmem %s5313, 56
        %s5506 = scalar_lea.vmem %s5505, 1
        %v5507 = vld [vmem:[%s5506] sm:$0x7f]
        %v5508 = vlaneseq
        %v5509 = vshrl.u32 %v5508, 7
        %vm5510 = vcmp.eq.s32.totalorder %v5509, 7
        %v5511 = vsel %vm5510, %v5503, %v5507
        %v5512 = vld [vmem:[%s5505] ss:$0 sm:$0xff]
        %5513 = vst [vmem:[%s5505] sm:$0xff] %v5511
        %s5514 = scalar_lea.vmem %s5313, 48
        %s5515 = scalar_lea.vmem %s5514, 1
        %v5516 = vld [vmem:[%s5515] sm:$0x7f]
        %v5517 = vlaneseq
        %v5518 = vshrl.u32 %v5517, 7
        %vm5519 = vcmp.eq.s32.totalorder %v5518, 7
        %v5520 = vsel %vm5519, %v5512, %v5516
        %v5521 = vld [vmem:[%s5514] ss:$0 sm:$0xff]
        %5522 = vst [vmem:[%s5514] sm:$0xff] %v5520
        %s5523 = scalar_lea.vmem %s5313, 40
        %s5524 = scalar_lea.vmem %s5523, 1
        %v5525 = vld [vmem:[%s5524] sm:$0x7f]
        %v5526 = vlaneseq
        %v5527 = vshrl.u32 %v5526, 7
        %vm5528 = vcmp.eq.s32.totalorder %v5527, 7
        %v5529 = vsel %vm5528, %v5521, %v5525
        %v5530 = vld [vmem:[%s5523] ss:$0 sm:$0xff]
        %5531 = vst [vmem:[%s5523] sm:$0xff] %v5529
        %s5532 = scalar_lea.vmem %s5313, 32
        %s5533 = scalar_lea.vmem %s5532, 1
        %v5534 = vld [vmem:[%s5533] sm:$0x7f]
        %v5535 = vlaneseq
        %v5536 = vshrl.u32 %v5535, 7
        %vm5537 = vcmp.eq.s32.totalorder %v5536, 7
        %v5538 = vsel %vm5537, %v5530, %v5534
        %v5539 = vld [vmem:[%s5532] ss:$0 sm:$0xff]
        %5540 = vst [vmem:[%s5532] sm:$0xff] %v5538
        %s5541 = scalar_lea.vmem %s5313, 24
        %s5542 = scalar_lea.vmem %s5541, 1
        %v5543 = vld [vmem:[%s5542] sm:$0x7f]
        %v5544 = vlaneseq
        %v5545 = vshrl.u32 %v5544, 7
        %vm5546 = vcmp.eq.s32.totalorder %v5545, 7
        %v5547 = vsel %vm5546, %v5539, %v5543
        %v5548 = vld [vmem:[%s5541] ss:$0 sm:$0xff]
        %5549 = vst [vmem:[%s5541] sm:$0xff] %v5547
        %s5550 = scalar_lea.vmem %s5313, 16
        %s5551 = scalar_lea.vmem %s5550, 1
        %v5552 = vld [vmem:[%s5551] sm:$0x7f]
        %v5553 = vlaneseq
        %v5554 = vshrl.u32 %v5553, 7
        %vm5555 = vcmp.eq.s32.totalorder %v5554, 7
        %v5556 = vsel %vm5555, %v5548, %v5552
        %v5557 = vld [vmem:[%s5550] ss:$0 sm:$0xff]
        %5558 = vst [vmem:[%s5550] sm:$0xff] %v5556
        %s5559 = scalar_lea.vmem %s5313, 8
        %s5560 = scalar_lea.vmem %s5559, 1
        %v5561 = vld [vmem:[%s5560] sm:$0x7f]
        %v5562 = vlaneseq
        %v5563 = vshrl.u32 %v5562, 7
        %vm5564 = vcmp.eq.s32.totalorder %v5563, 7
        %v5565 = vsel %vm5564, %v5557, %v5561
        %v5566 = vld [vmem:[%s5559] ss:$0 sm:$0xff]
        %5567 = vst [vmem:[%s5559] sm:$0xff] %v5565
        %s5568 = scalar_lea.vmem %s5313, 1
        %v5569 = vld [vmem:[%s5568] sm:$0x7f]
        %v5570 = vlaneseq
        %v5571 = vshrl.u32 %v5570, 7
        %vm5572 = vcmp.eq.s32.totalorder %v5571, 7
        %v5573 = vsel %vm5572, %v5566, %v5569
        %v5574 = vld [vmem:[%s5313] ss:$0 sm:$0xff]
        %5575 = vst [vmem:[%s5313] sm:$0xff] %v5573
      $region101: #{custom-call.2} parent=93 // loop_footer
        %s1248 = sadd.s32 1, %s1244
      $region102: #{custom-call.2} parent=93 // loop_footer_branch
        %1243 = sbr.rel target = $region98
      $region103: #{custom-call.2} parent=93 // loop_exit
        _
      %s5576 = sadd.s32 %s762, 1
    $region94: #{custom-call.2} parent=1 // loop_footer
      _
    $region95: #{custom-call.2} parent=1 // loop_footer_branch
      %761 = sbr.rel target = $region91
    $region96: #{custom-call.2} parent=1 // loop_exit
      _
    %s5579 = smov [#allocation12]
    %s5580 = smov [#allocation4]
    %v5581 = vlaneseq
    %v5582 = vand.u32 %v5581, 127
    %v5583 = vmov %v5582
    %v5584 = vlaneseq
    %v5585 = vshrl.u32 %v5584, 7
    %v5586 = vmov %v5585
    %v5587 = vld [vmem:[%s5579] sm:$0xff]
    %vm5590 = vcmp.eq.s32.totalorder %v5586, %v5583
    %v5591 = vsel %vm5590, %v5587, 0.0
    %s5592 = scalar_lea.vmem %s5579, 8
    %v5593 = vld [vmem:[%s5592] sm:$0xff]
    %v5595 = vadd.s32 %v5586, 8
    %vm5596 = vcmp.eq.s32.totalorder %v5595, %v5583
    %v5597 = vsel %vm5596, %v5593, %v5591
    %s5598 = scalar_lea.vmem %s5579, 16
    %v5599 = vld [vmem:[%s5598] sm:$0xff]
    %v5601 = vadd.s32 %v5586, 16
    %vm5602 = vcmp.eq.s32.totalorder %v5601, %v5583
    %v5603 = vsel %vm5602, %v5599, %v5597
    %s5604 = scalar_lea.vmem %s5579, 24
    %v5605 = vld [vmem:[%s5604] sm:$0xff]
    %v5607 = vadd.s32 %v5586, 24
    %vm5608 = vcmp.eq.s32.totalorder %v5607, %v5583
    %v5609 = vsel %vm5608, %v5605, %v5603
    %s5610 = scalar_lea.vmem %s5579, 32
    %v5611 = vld [vmem:[%s5610] sm:$0xff]
    %v5613 = vadd.s32 %v5586, 32
    %vm5614 = vcmp.eq.s32.totalorder %v5613, %v5583
    %v5615 = vsel %vm5614, %v5611, %v5609
    %s5616 = scalar_lea.vmem %s5579, 40
    %v5617 = vld [vmem:[%s5616] sm:$0xff]
    %v5619 = vadd.s32 %v5586, 40
    %vm5620 = vcmp.eq.s32.totalorder %v5619, %v5583
    %v5621 = vsel %vm5620, %v5617, %v5615
    %s5622 = scalar_lea.vmem %s5579, 48
    %v5623 = vld [vmem:[%s5622] sm:$0xff]
    %v5625 = vadd.s32 %v5586, 48
    %vm5626 = vcmp.eq.s32.totalorder %v5625, %v5583
    %v5627 = vsel %vm5626, %v5623, %v5621
    %s5628 = scalar_lea.vmem %s5579, 56
    %v5629 = vld [vmem:[%s5628] sm:$0xff]
    %v5631 = vadd.s32 %v5586, 56
    %vm5632 = vcmp.eq.s32.totalorder %v5631, %v5583
    %v5633 = vsel %vm5632, %v5629, %v5627
    %s5634 = scalar_lea.vmem %s5579, 64
    %v5635 = vld [vmem:[%s5634] sm:$0xff]
    %v5637 = vadd.s32 %v5586, 64
    %vm5638 = vcmp.eq.s32.totalorder %v5637, %v5583
    %v5639 = vsel %vm5638, %v5635, %v5633
    %s5640 = scalar_lea.vmem %s5579, 72
    %v5641 = vld [vmem:[%s5640] sm:$0xff]
    %v5643 = vadd.s32 %v5586, 72
    %vm5644 = vcmp.eq.s32.totalorder %v5643, %v5583
    %v5645 = vsel %vm5644, %v5641, %v5639
    %s5646 = scalar_lea.vmem %s5579, 80
    %v5647 = vld [vmem:[%s5646] sm:$0xff]
    %v5649 = vadd.s32 %v5586, 80
    %vm5650 = vcmp.eq.s32.totalorder %v5649, %v5583
    %v5651 = vsel %vm5650, %v5647, %v5645
    %s5652 = scalar_lea.vmem %s5579, 88
    %v5653 = vld [vmem:[%s5652] sm:$0xff]
    %v5655 = vadd.s32 %v5586, 88
    %vm5656 = vcmp.eq.s32.totalorder %v5655, %v5583
    %v5657 = vsel %vm5656, %v5653, %v5651
    %s5658 = scalar_lea.vmem %s5579, 96
    %v5659 = vld [vmem:[%s5658] sm:$0xf]
    %v5661 = vadd.s32 %v5586, 96
    %vm5662 = vcmp.eq.s32.totalorder %v5661, %v5583
    %v5663 = vsel %vm5662, %v5659, %v5657
    %v5664 = vrot.slane %v5663, 4
    %v5665 = vadd.f32 %v5663, %v5664
    %v5666 = vrot.slane %v5665, 2
    %v5667 = vadd.f32 %v5665, %v5666
    %v5668 = vrot.slane %v5667, 1
    %v5669 = vadd.f32 %v5667, %v5668
    %5670 = vst [vmem:[%s5580] sm:$0x1] %v5669
    %s5671 = smov [#allocation15]
    %s5672 = smov [#allocation6]
    %v5673 = vlaneseq
    %v5674 = vand.u32 %v5673, 127
    %v5675 = vmov %v5674
    %v5676 = vlaneseq
    %v5677 = vshrl.u32 %v5676, 7
    %v5678 = vmov %v5677
    %v5679 = vld [vmem:[%s5671] sm:$0xff]
    %vm5682 = vcmp.eq.s32.totalorder %v5678, %v5675
    %v5683 = vsel %vm5682, %v5679, 0.0
    %s5684 = scalar_lea.vmem %s5671, 8
    %v5685 = vld [vmem:[%s5684] sm:$0xff]
    %v5687 = vadd.s32 %v5678, 8
    %vm5688 = vcmp.eq.s32.totalorder %v5687, %v5675
    %v5689 = vsel %vm5688, %v5685, %v5683
    %s5690 = scalar_lea.vmem %s5671, 16
    %v5691 = vld [vmem:[%s5690] sm:$0xff]
    %v5693 = vadd.s32 %v5678, 16
    %vm5694 = vcmp.eq.s32.totalorder %v5693, %v5675
    %v5695 = vsel %vm5694, %v5691, %v5689
    %s5696 = scalar_lea.vmem %s5671, 24
    %v5697 = vld [vmem:[%s5696] sm:$0xff]
    %v5699 = vadd.s32 %v5678, 24
    %vm5700 = vcmp.eq.s32.totalorder %v5699, %v5675
    %v5701 = vsel %vm5700, %v5697, %v5695
    %s5702 = scalar_lea.vmem %s5671, 32
    %v5703 = vld [vmem:[%s5702] sm:$0xff]
    %v5705 = vadd.s32 %v5678, 32
    %vm5706 = vcmp.eq.s32.totalorder %v5705, %v5675
    %v5707 = vsel %vm5706, %v5703, %v5701
    %s5708 = scalar_lea.vmem %s5671, 40
    %v5709 = vld [vmem:[%s5708] sm:$0xff]
    %v5711 = vadd.s32 %v5678, 40
    %vm5712 = vcmp.eq.s32.totalorder %v5711, %v5675
    %v5713 = vsel %vm5712, %v5709, %v5707
    %s5714 = scalar_lea.vmem %s5671, 48
    %v5715 = vld [vmem:[%s5714] sm:$0xff]
    %v5717 = vadd.s32 %v5678, 48
    %vm5718 = vcmp.eq.s32.totalorder %v5717, %v5675
    %v5719 = vsel %vm5718, %v5715, %v5713
    %s5720 = scalar_lea.vmem %s5671, 56
    %v5721 = vld [vmem:[%s5720] sm:$0xff]
    %v5723 = vadd.s32 %v5678, 56
    %vm5724 = vcmp.eq.s32.totalorder %v5723, %v5675
    %v5725 = vsel %vm5724, %v5721, %v5719
    %s5726 = scalar_lea.vmem %s5671, 64
    %v5727 = vld [vmem:[%s5726] sm:$0xff]
    %v5729 = vadd.s32 %v5678, 64
    %vm5730 = vcmp.eq.s32.totalorder %v5729, %v5675
    %v5731 = vsel %vm5730, %v5727, %v5725
    %s5732 = scalar_lea.vmem %s5671, 72
    %v5733 = vld [vmem:[%s5732] sm:$0xff]
    %v5735 = vadd.s32 %v5678, 72
    %vm5736 = vcmp.eq.s32.totalorder %v5735, %v5675
    %v5737 = vsel %vm5736, %v5733, %v5731
    %s5738 = scalar_lea.vmem %s5671, 80
    %v5739 = vld [vmem:[%s5738] sm:$0xff]
    %v5741 = vadd.s32 %v5678, 80
    %vm5742 = vcmp.eq.s32.totalorder %v5741, %v5675
    %v5743 = vsel %vm5742, %v5739, %v5737
    %s5744 = scalar_lea.vmem %s5671, 88
    %v5745 = vld [vmem:[%s5744] sm:$0xff]
    %v5747 = vadd.s32 %v5678, 88
    %vm5748 = vcmp.eq.s32.totalorder %v5747, %v5675
    %v5749 = vsel %vm5748, %v5745, %v5743
    %s5750 = scalar_lea.vmem %s5671, 96
    %v5751 = vld [vmem:[%s5750] sm:$0xf]
    %v5753 = vadd.s32 %v5678, 96
    %vm5754 = vcmp.eq.s32.totalorder %v5753, %v5675
    %v5755 = vsel %vm5754, %v5751, %v5749
    %v5756 = vrot.slane %v5755, 4
    %v5757 = vadd.f32 %v5755, %v5756
    %v5758 = vrot.slane %v5757, 2
    %v5759 = vadd.f32 %v5757, %v5758
    %v5760 = vrot.slane %v5759, 1
    %v5761 = vadd.f32 %v5759, %v5760
    %5762 = vst [vmem:[%s5672] sm:$0x1] %v5761
    %s5764 = sshll.u32 1, 1
    %s5765 = ssub.s32 %s5764, 1
    %v5767 = vld [vmem:[#allocation4] sm:%s5765]
    %s5768 = sshll.u32 1, 1
    %s5769 = ssub.s32 %s5768, 1
    %5770 = vst [vmem:[#allocation5] sm:%s5769] %v5767
    %s5772 = sshll.u32 1, 1
    %s5773 = ssub.s32 %s5772, 1
    %v5775 = vld [vmem:[#allocation6] sm:%s5773]
    %s5776 = sshll.u32 1, 1
    %s5777 = ssub.s32 %s5776, 1
    %5778 = vst [vmem:[#allocation7] sm:%s5777] %v5775
    // Predicated region
    $region104: #{custom-call.2} parent=1 // pred_check
      _
    $region105: #{custom-call.2} parent=1 // pred_check_branch
      %5780 = sbr.rel (0) target = $region107
    $region106: #{custom-call.2} parent=1 // pred_region
      %p5782 = scmp.gt.s32.totalorder 1, 0
      // Predicated region
      $region108: #{custom-call.2} parent=106 // pred_check
        %p5783 = pneg %p5782
      $region109: #{custom-call.2} parent=106 // pred_check_branch
        %5785 = sbr.rel (%p5783) target = $region111
      $region110: #{custom-call.2} parent=106 // pred_region
        %s5786 = sshra.s32 1, 3
        %p5787 = scmp.gt.s32.totalorder %s5786, 0
        // Predicated region
        $region112: #{custom-call.2} parent=110 // pred_check
          %p5788 = pneg %p5787
        $region113: #{custom-call.2} parent=110 // pred_check_branch
          %5790 = sbr.rel (%p5788) target = $region115
        $region114: #{custom-call.2} parent=110 // pred_region
          %s5791 = ssub.s32 %s5786, 1
          %s5792 = smul.u32 %s5791, 128
          %s5793 = sshra.s32 %s5792, 4
          %s5794 = scalar_lea.vmem [#allocation5], %s5793
          %v5795 = vld [vmem:[#allocation5] sm:$0xff]
          // While loop
          $region116: #{custom-call.2} parent=114 // loop_pre_header
            _
          $region117: #{custom-call.2} parent=114 // loop_header
            %s5796 = sphi [#allocation5], %s5818
            %s5797 = sphi %s4, %s5819
            %v5798 = vphi %v5795, %v5820
            %s5799 = ssub.s32 %s5794, 64
            %p5800 = scmp.gt.s32.totalorder %s5796, %s5799
          $region118: #{custom-call.2} parent=114 // loop_header_branch
            %5802 = sbr.rel (%p5800) target = $region122
          $region119: #{custom-call.2} parent=114 // loop_body
            %5803 = vst [vmem:[%s5797] sm:$0xff] %v5798
            %v5804 = vld [vmem:[%s5796 + $0x8] sm:$0xff]
            %5805 = vst [vmem:[%s5797 + $0x8] sm:$0xff] %v5804
            %v5806 = vld [vmem:[%s5796 + $0x10] sm:$0xff]
            %5807 = vst [vmem:[%s5797 + $0x10] sm:$0xff] %v5806
            %v5808 = vld [vmem:[%s5796 + $0x18] sm:$0xff]
            %5809 = vst [vmem:[%s5797 + $0x18] sm:$0xff] %v5808
            %v5810 = vld [vmem:[%s5796 + $0x20] sm:$0xff]
            %5811 = vst [vmem:[%s5797 + $0x20] sm:$0xff] %v5810
            %v5812 = vld [vmem:[%s5796 + $0x28] sm:$0xff]
            %5813 = vst [vmem:[%s5797 + $0x28] sm:$0xff] %v5812
            %v5814 = vld [vmem:[%s5796 + $0x30] sm:$0xff]
            %5815 = vst [vmem:[%s5797 + $0x30] sm:$0xff] %v5814
            %v5816 = vld [vmem:[%s5796 + $0x38] sm:$0xff]
            %5817 = vst [vmem:[%s5797 + $0x38] sm:$0xff] %v5816
          $region120: #{custom-call.2} parent=114 // loop_footer
            %s5818 = scalar_lea.vmem %s5796, 64
            %s5819 = scalar_lea.vmem %s5797, 64
            %v5820 = vld [vmem:[%s5796 + $0x40] sm:$0xff]
          $region121: #{custom-call.2} parent=114 // loop_footer_branch
            %5821 = sbr.rel target = $region117
          $region122: #{custom-call.2} parent=114 // loop_exit
            _
          // While loop
          $region123: #{custom-call.2} parent=114 // loop_pre_header
            _
          $region124: #{custom-call.2} parent=114 // loop_header
            %s5822 = sphi %s5796, %s5830
            %s5823 = sphi %s5797, %s5831
            %v5824 = vphi %v5798, %v5824
            %p5825 = scmp.gt.s32.totalorder %s5822, %s5794
          $region125: #{custom-call.2} parent=114 // loop_header_branch
            %5827 = sbr.rel (%p5825) target = $region129
          $region126: #{custom-call.2} parent=114 // loop_body
            %v5828 = vld [vmem:[%s5822] sm:$0xff]
            %5829 = vst [vmem:[%s5823] sm:$0xff] %v5828
          $region127: #{custom-call.2} parent=114 // loop_footer
            %s5830 = scalar_lea.vmem %s5822, 8
            %s5831 = scalar_lea.vmem %s5823, 8
          $region128: #{custom-call.2} parent=114 // loop_footer_branch
            %5832 = sbr.rel target = $region124
          $region129: #{custom-call.2} parent=114 // loop_exit
            _
        $region115: #{custom-call.2} parent=110 // pred_fallthru
          _
        %s5833 = sand.u32 1, 7
        %s5834 = sshll.u32 1, %s5833
        %s5835 = ssub.s32 %s5834, 1
        %s5836 = smul.u32 %s5786, 128
        %s5837 = sshra.s32 %s5836, 4
        %s5838 = scalar_lea.vmem %s4, %s5837
        %s5839 = smul.u32 %s5786, 128
        %s5840 = sshra.s32 %s5839, 4
        %s5841 = scalar_lea.vmem [#allocation5], %s5840
        %v5842 = vld [vmem:[%s5841] sm:%s5835]
        %5843 = vst [vmem:[%s5838] sm:%s5835] %v5842
      $region111: #{custom-call.2} parent=106 // pred_fallthru
        _
    $region107: #{custom-call.2} parent=1 // pred_fallthru
      _
    // Predicated region
    $region130: #{custom-call.2} parent=1 // pred_check
      _
    $region131: #{custom-call.2} parent=1 // pred_check_branch
      %5845 = sbr.rel (0) target = $region133
    $region132: #{custom-call.2} parent=1 // pred_region
      %p5847 = scmp.gt.s32.totalorder 1, 0
      // Predicated region
      $region134: #{custom-call.2} parent=132 // pred_check
        %p5848 = pneg %p5847
      $region135: #{custom-call.2} parent=132 // pred_check_branch
        %5850 = sbr.rel (%p5848) target = $region137
      $region136: #{custom-call.2} parent=132 // pred_region
        %s5851 = sshra.s32 1, 3
        %p5852 = scmp.gt.s32.totalorder %s5851, 0
        // Predicated region
        $region138: #{custom-call.2} parent=136 // pred_check
          %p5853 = pneg %p5852
        $region139: #{custom-call.2} parent=136 // pred_check_branch
          %5855 = sbr.rel (%p5853) target = $region141
        $region140: #{custom-call.2} parent=136 // pred_region
          %s5856 = ssub.s32 %s5851, 1
          %s5857 = smul.u32 %s5856, 128
          %s5858 = sshra.s32 %s5857, 4
          %s5859 = scalar_lea.vmem [#allocation7], %s5858
          %v5860 = vld [vmem:[#allocation7] sm:$0xff]
          // While loop
          $region142: #{custom-call.2} parent=140 // loop_pre_header
            _
          $region143: #{custom-call.2} parent=140 // loop_header
            %s5861 = sphi [#allocation7], %s5883
            %s5862 = sphi %s5, %s5884
            %v5863 = vphi %v5860, %v5885
            %s5864 = ssub.s32 %s5859, 64
            %p5865 = scmp.gt.s32.totalorder %s5861, %s5864
          $region144: #{custom-call.2} parent=140 // loop_header_branch
            %5867 = sbr.rel (%p5865) target = $region148
          $region145: #{custom-call.2} parent=140 // loop_body
            %5868 = vst [vmem:[%s5862] sm:$0xff] %v5863
            %v5869 = vld [vmem:[%s5861 + $0x8] sm:$0xff]
            %5870 = vst [vmem:[%s5862 + $0x8] sm:$0xff] %v5869
            %v5871 = vld [vmem:[%s5861 + $0x10] sm:$0xff]
            %5872 = vst [vmem:[%s5862 + $0x10] sm:$0xff] %v5871
            %v5873 = vld [vmem:[%s5861 + $0x18] sm:$0xff]
            %5874 = vst [vmem:[%s5862 + $0x18] sm:$0xff] %v5873
            %v5875 = vld [vmem:[%s5861 + $0x20] sm:$0xff]
            %5876 = vst [vmem:[%s5862 + $0x20] sm:$0xff] %v5875
            %v5877 = vld [vmem:[%s5861 + $0x28] sm:$0xff]
            %5878 = vst [vmem:[%s5862 + $0x28] sm:$0xff] %v5877
            %v5879 = vld [vmem:[%s5861 + $0x30] sm:$0xff]
            %5880 = vst [vmem:[%s5862 + $0x30] sm:$0xff] %v5879
            %v5881 = vld [vmem:[%s5861 + $0x38] sm:$0xff]
            %5882 = vst [vmem:[%s5862 + $0x38] sm:$0xff] %v5881
          $region146: #{custom-call.2} parent=140 // loop_footer
            %s5883 = scalar_lea.vmem %s5861, 64
            %s5884 = scalar_lea.vmem %s5862, 64
            %v5885 = vld [vmem:[%s5861 + $0x40] sm:$0xff]
          $region147: #{custom-call.2} parent=140 // loop_footer_branch
            %5886 = sbr.rel target = $region143
          $region148: #{custom-call.2} parent=140 // loop_exit
            _
          // While loop
          $region149: #{custom-call.2} parent=140 // loop_pre_header
            _
          $region150: #{custom-call.2} parent=140 // loop_header
            %s5887 = sphi %s5861, %s5895
            %s5888 = sphi %s5862, %s5896
            %v5889 = vphi %v5863, %v5889
            %p5890 = scmp.gt.s32.totalorder %s5887, %s5859
          $region151: #{custom-call.2} parent=140 // loop_header_branch
            %5892 = sbr.rel (%p5890) target = $region155
          $region152: #{custom-call.2} parent=140 // loop_body
            %v5893 = vld [vmem:[%s5887] sm:$0xff]
            %5894 = vst [vmem:[%s5888] sm:$0xff] %v5893
          $region153: #{custom-call.2} parent=140 // loop_footer
            %s5895 = scalar_lea.vmem %s5887, 8
            %s5896 = scalar_lea.vmem %s5888, 8
          $region154: #{custom-call.2} parent=140 // loop_footer_branch
            %5897 = sbr.rel target = $region150
          $region155: #{custom-call.2} parent=140 // loop_exit
            _
        $region141: #{custom-call.2} parent=136 // pred_fallthru
          _
        %s5898 = sand.u32 1, 7
        %s5899 = sshll.u32 1, %s5898
        %s5900 = ssub.s32 %s5899, 1
        %s5901 = smul.u32 %s5851, 128
        %s5902 = sshra.s32 %s5901, 4
        %s5903 = scalar_lea.vmem %s5, %s5902
        %s5904 = smul.u32 %s5851, 128
        %s5905 = sshra.s32 %s5904, 4
        %s5906 = scalar_lea.vmem [#allocation7], %s5905
        %v5907 = vld [vmem:[%s5906] sm:%s5900]
        %5908 = vst [vmem:[%s5903] sm:%s5900] %v5907
      $region137: #{custom-call.2} parent=132 // pred_fallthru
        _
    $region133: #{custom-call.2} parent=1 // pred_fallthru
      _
    %p5910 = scmp.gt.s32.totalorder 104, 0
    // Predicated region
    $region156: #{custom-call.2} parent=1 // pred_check
      %p5911 = pneg %p5910
    $region157: #{custom-call.2} parent=1 // pred_check_branch
      %5913 = sbr.rel (%p5911) target = $region159
    $region158: #{custom-call.2} parent=1 // pred_region
      %s5914 = sshra.s32 104, 3
      %p5915 = scmp.gt.s32.totalorder %s5914, 0
      // Predicated region
      $region160: #{custom-call.2} parent=158 // pred_check
        %p5916 = pneg %p5915
      $region161: #{custom-call.2} parent=158 // pred_check_branch
        %5918 = sbr.rel (%p5916) target = $region163
      $region162: #{custom-call.2} parent=158 // pred_region
        %s5919 = ssub.s32 %s5914, 1
        %s5920 = smul.u32 %s5919, 128
        %s5921 = sshra.s32 %s5920, 4
        %s5922 = scalar_lea.vmem [#allocation8], %s5921
        %v5923 = vld [vmem:[#allocation8] sm:$0xff]
        // While loop
        $region164: #{custom-call.2} parent=162 // loop_pre_header
          _
        $region165: #{custom-call.2} parent=162 // loop_header
          %s5924 = sphi [#allocation8], %s5946
          %s5925 = sphi %s6, %s5947
          %v5926 = vphi %v5923, %v5948
          %s5927 = ssub.s32 %s5922, 64
          %p5928 = scmp.gt.s32.totalorder %s5924, %s5927
        $region166: #{custom-call.2} parent=162 // loop_header_branch
          %5930 = sbr.rel (%p5928) target = $region170
        $region167: #{custom-call.2} parent=162 // loop_body
          %5931 = vst [vmem:[%s5925] sm:$0xff] %v5926
          %v5932 = vld [vmem:[%s5924 + $0x8] sm:$0xff]
          %5933 = vst [vmem:[%s5925 + $0x8] sm:$0xff] %v5932
          %v5934 = vld [vmem:[%s5924 + $0x10] sm:$0xff]
          %5935 = vst [vmem:[%s5925 + $0x10] sm:$0xff] %v5934
          %v5936 = vld [vmem:[%s5924 + $0x18] sm:$0xff]
          %5937 = vst [vmem:[%s5925 + $0x18] sm:$0xff] %v5936
          %v5938 = vld [vmem:[%s5924 + $0x20] sm:$0xff]
          %5939 = vst [vmem:[%s5925 + $0x20] sm:$0xff] %v5938
          %v5940 = vld [vmem:[%s5924 + $0x28] sm:$0xff]
          %5941 = vst [vmem:[%s5925 + $0x28] sm:$0xff] %v5940
          %v5942 = vld [vmem:[%s5924 + $0x30] sm:$0xff]
          %5943 = vst [vmem:[%s5925 + $0x30] sm:$0xff] %v5942
          %v5944 = vld [vmem:[%s5924 + $0x38] sm:$0xff]
          %5945 = vst [vmem:[%s5925 + $0x38] sm:$0xff] %v5944
        $region168: #{custom-call.2} parent=162 // loop_footer
          %s5946 = scalar_lea.vmem %s5924, 64
          %s5947 = scalar_lea.vmem %s5925, 64
          %v5948 = vld [vmem:[%s5924 + $0x40] sm:$0xff]
        $region169: #{custom-call.2} parent=162 // loop_footer_branch
          %5949 = sbr.rel target = $region165
        $region170: #{custom-call.2} parent=162 // loop_exit
          _
        // While loop
        $region171: #{custom-call.2} parent=162 // loop_pre_header
          _
        $region172: #{custom-call.2} parent=162 // loop_header
          %s5950 = sphi %s5924, %s5958
          %s5951 = sphi %s5925, %s5959
          %v5952 = vphi %v5926, %v5952
          %p5953 = scmp.gt.s32.totalorder %s5950, %s5922
        $region173: #{custom-call.2} parent=162 // loop_header_branch
          %5955 = sbr.rel (%p5953) target = $region177
        $region174: #{custom-call.2} parent=162 // loop_body
          %v5956 = vld [vmem:[%s5950] sm:$0xff]
          %5957 = vst [vmem:[%s5951] sm:$0xff] %v5956
        $region175: #{custom-call.2} parent=162 // loop_footer
          %s5958 = scalar_lea.vmem %s5950, 8
          %s5959 = scalar_lea.vmem %s5951, 8
        $region176: #{custom-call.2} parent=162 // loop_footer_branch
          %5960 = sbr.rel target = $region172
        $region177: #{custom-call.2} parent=162 // loop_exit
          _
      $region163: #{custom-call.2} parent=158 // pred_fallthru
        _
      %s5961 = sand.u32 104, 7
      %s5962 = sshll.u32 1, %s5961
      %s5963 = ssub.s32 %s5962, 1
      %s5964 = smul.u32 %s5914, 128
      %s5965 = sshra.s32 %s5964, 4
      %s5966 = scalar_lea.vmem %s6, %s5965
      %s5967 = smul.u32 %s5914, 128
      %s5968 = sshra.s32 %s5967, 4
      %s5969 = scalar_lea.vmem [#allocation8], %s5968
      %v5970 = vld [vmem:[%s5969] sm:%s5963]
      %5971 = vst [vmem:[%s5966] sm:%s5963] %v5970
    $region159: #{custom-call.2} parent=1 // pred_fallthru
      _
    %p5973 = scmp.gt.s32.totalorder 104, 0
    // Predicated region
    $region178: #{custom-call.2} parent=1 // pred_check
      %p5974 = pneg %p5973
    $region179: #{custom-call.2} parent=1 // pred_check_branch
      %5976 = sbr.rel (%p5974) target = $region181
    $region180: #{custom-call.2} parent=1 // pred_region
      %s5977 = sshra.s32 104, 3
      %p5978 = scmp.gt.s32.totalorder %s5977, 0
      // Predicated region
      $region182: #{custom-call.2} parent=180 // pred_check
        %p5979 = pneg %p5978
      $region183: #{custom-call.2} parent=180 // pred_check_branch
        %5981 = sbr.rel (%p5979) target = $region185
      $region184: #{custom-call.2} parent=180 // pred_region
        %s5982 = ssub.s32 %s5977, 1
        %s5983 = smul.u32 %s5982, 128
        %s5984 = sshra.s32 %s5983, 4
        %s5985 = scalar_lea.vmem [#allocation9], %s5984
        %v5986 = vld [vmem:[#allocation9] sm:$0xff]
        // While loop
        $region186: #{custom-call.2} parent=184 // loop_pre_header
          _
        $region187: #{custom-call.2} parent=184 // loop_header
          %s5987 = sphi [#allocation9], %s6009
          %s5988 = sphi %s7, %s6010
          %v5989 = vphi %v5986, %v6011
          %s5990 = ssub.s32 %s5985, 64
          %p5991 = scmp.gt.s32.totalorder %s5987, %s5990
        $region188: #{custom-call.2} parent=184 // loop_header_branch
          %5993 = sbr.rel (%p5991) target = $region192
        $region189: #{custom-call.2} parent=184 // loop_body
          %5994 = vst [vmem:[%s5988] sm:$0xff] %v5989
          %v5995 = vld [vmem:[%s5987 + $0x8] sm:$0xff]
          %5996 = vst [vmem:[%s5988 + $0x8] sm:$0xff] %v5995
          %v5997 = vld [vmem:[%s5987 + $0x10] sm:$0xff]
          %5998 = vst [vmem:[%s5988 + $0x10] sm:$0xff] %v5997
          %v5999 = vld [vmem:[%s5987 + $0x18] sm:$0xff]
          %6000 = vst [vmem:[%s5988 + $0x18] sm:$0xff] %v5999
          %v6001 = vld [vmem:[%s5987 + $0x20] sm:$0xff]
          %6002 = vst [vmem:[%s5988 + $0x20] sm:$0xff] %v6001
          %v6003 = vld [vmem:[%s5987 + $0x28] sm:$0xff]
          %6004 = vst [vmem:[%s5988 + $0x28] sm:$0xff] %v6003
          %v6005 = vld [vmem:[%s5987 + $0x30] sm:$0xff]
          %6006 = vst [vmem:[%s5988 + $0x30] sm:$0xff] %v6005
          %v6007 = vld [vmem:[%s5987 + $0x38] sm:$0xff]
          %6008 = vst [vmem:[%s5988 + $0x38] sm:$0xff] %v6007
        $region190: #{custom-call.2} parent=184 // loop_footer
          %s6009 = scalar_lea.vmem %s5987, 64
          %s6010 = scalar_lea.vmem %s5988, 64
          %v6011 = vld [vmem:[%s5987 + $0x40] sm:$0xff]
        $region191: #{custom-call.2} parent=184 // loop_footer_branch
          %6012 = sbr.rel target = $region187
        $region192: #{custom-call.2} parent=184 // loop_exit
          _
        // While loop
        $region193: #{custom-call.2} parent=184 // loop_pre_header
          _
        $region194: #{custom-call.2} parent=184 // loop_header
          %s6013 = sphi %s5987, %s6021
          %s6014 = sphi %s5988, %s6022
          %v6015 = vphi %v5989, %v6015
          %p6016 = scmp.gt.s32.totalorder %s6013, %s5985
        $region195: #{custom-call.2} parent=184 // loop_header_branch
          %6018 = sbr.rel (%p6016) target = $region199
        $region196: #{custom-call.2} parent=184 // loop_body
          %v6019 = vld [vmem:[%s6013] sm:$0xff]
          %6020 = vst [vmem:[%s6014] sm:$0xff] %v6019
        $region197: #{custom-call.2} parent=184 // loop_footer
          %s6021 = scalar_lea.vmem %s6013, 8
          %s6022 = scalar_lea.vmem %s6014, 8
        $region198: #{custom-call.2} parent=184 // loop_footer_branch
          %6023 = sbr.rel target = $region194
        $region199: #{custom-call.2} parent=184 // loop_exit
          _
      $region185: #{custom-call.2} parent=180 // pred_fallthru
        _
      %s6024 = sand.u32 104, 7
      %s6025 = sshll.u32 1, %s6024
      %s6026 = ssub.s32 %s6025, 1
      %s6027 = smul.u32 %s5977, 128
      %s6028 = sshra.s32 %s6027, 4
      %s6029 = scalar_lea.vmem %s7, %s6028
      %s6030 = smul.u32 %s5977, 128
      %s6031 = sshra.s32 %s6030, 4
      %s6032 = scalar_lea.vmem [#allocation9], %s6031
      %v6033 = vld [vmem:[%s6032] sm:%s6026]
      %6034 = vst [vmem:[%s6029] sm:%s6026] %v6033
    $region181: #{custom-call.2} parent=1 // pred_fallthru
      _
    %p6036 = scmp.gt.s32.totalorder 104, 0
    // Predicated region
    $region200: #{custom-call.2} parent=1 // pred_check
      %p6037 = pneg %p6036
    $region201: #{custom-call.2} parent=1 // pred_check_branch
      %6039 = sbr.rel (%p6037) target = $region203
    $region202: #{custom-call.2} parent=1 // pred_region
      %s6040 = sshra.s32 104, 3
      %p6041 = scmp.gt.s32.totalorder %s6040, 0
      // Predicated region
      $region204: #{custom-call.2} parent=202 // pred_check
        %p6042 = pneg %p6041
      $region205: #{custom-call.2} parent=202 // pred_check_branch
        %6044 = sbr.rel (%p6042) target = $region207
      $region206: #{custom-call.2} parent=202 // pred_region
        %s6045 = ssub.s32 %s6040, 1
        %s6046 = smul.u32 %s6045, 128
        %s6047 = sshra.s32 %s6046, 4
        %s6048 = scalar_lea.vmem [#allocation10], %s6047
        %v6049 = vld [vmem:[#allocation10] sm:$0xff]
        // While loop
        $region208: #{custom-call.2} parent=206 // loop_pre_header
          _
        $region209: #{custom-call.2} parent=206 // loop_header
          %s6050 = sphi [#allocation10], %s6072
          %s6051 = sphi %s8, %s6073
          %v6052 = vphi %v6049, %v6074
          %s6053 = ssub.s32 %s6048, 64
          %p6054 = scmp.gt.s32.totalorder %s6050, %s6053
        $region210: #{custom-call.2} parent=206 // loop_header_branch
          %6056 = sbr.rel (%p6054) target = $region214
        $region211: #{custom-call.2} parent=206 // loop_body
          %6057 = vst [vmem:[%s6051] sm:$0xff] %v6052
          %v6058 = vld [vmem:[%s6050 + $0x8] sm:$0xff]
          %6059 = vst [vmem:[%s6051 + $0x8] sm:$0xff] %v6058
          %v6060 = vld [vmem:[%s6050 + $0x10] sm:$0xff]
          %6061 = vst [vmem:[%s6051 + $0x10] sm:$0xff] %v6060
          %v6062 = vld [vmem:[%s6050 + $0x18] sm:$0xff]
          %6063 = vst [vmem:[%s6051 + $0x18] sm:$0xff] %v6062
          %v6064 = vld [vmem:[%s6050 + $0x20] sm:$0xff]
          %6065 = vst [vmem:[%s6051 + $0x20] sm:$0xff] %v6064
          %v6066 = vld [vmem:[%s6050 + $0x28] sm:$0xff]
          %6067 = vst [vmem:[%s6051 + $0x28] sm:$0xff] %v6066
          %v6068 = vld [vmem:[%s6050 + $0x30] sm:$0xff]
          %6069 = vst [vmem:[%s6051 + $0x30] sm:$0xff] %v6068
          %v6070 = vld [vmem:[%s6050 + $0x38] sm:$0xff]
          %6071 = vst [vmem:[%s6051 + $0x38] sm:$0xff] %v6070
        $region212: #{custom-call.2} parent=206 // loop_footer
          %s6072 = scalar_lea.vmem %s6050, 64
          %s6073 = scalar_lea.vmem %s6051, 64
          %v6074 = vld [vmem:[%s6050 + $0x40] sm:$0xff]
        $region213: #{custom-call.2} parent=206 // loop_footer_branch
          %6075 = sbr.rel target = $region209
        $region214: #{custom-call.2} parent=206 // loop_exit
          _
        // While loop
        $region215: #{custom-call.2} parent=206 // loop_pre_header
          _
        $region216: #{custom-call.2} parent=206 // loop_header
          %s6076 = sphi %s6050, %s6084
          %s6077 = sphi %s6051, %s6085
          %v6078 = vphi %v6052, %v6078
          %p6079 = scmp.gt.s32.totalorder %s6076, %s6048
        $region217: #{custom-call.2} parent=206 // loop_header_branch
          %6081 = sbr.rel (%p6079) target = $region221
        $region218: #{custom-call.2} parent=206 // loop_body
          %v6082 = vld [vmem:[%s6076] sm:$0xff]
          %6083 = vst [vmem:[%s6077] sm:$0xff] %v6082
        $region219: #{custom-call.2} parent=206 // loop_footer
          %s6084 = scalar_lea.vmem %s6076, 8
          %s6085 = scalar_lea.vmem %s6077, 8
        $region220: #{custom-call.2} parent=206 // loop_footer_branch
          %6086 = sbr.rel target = $region216
        $region221: #{custom-call.2} parent=206 // loop_exit
          _
      $region207: #{custom-call.2} parent=202 // pred_fallthru
        _
      %s6087 = sand.u32 104, 7
      %s6088 = sshll.u32 1, %s6087
      %s6089 = ssub.s32 %s6088, 1
      %s6090 = smul.u32 %s6040, 128
      %s6091 = sshra.s32 %s6090, 4
      %s6092 = scalar_lea.vmem %s8, %s6091
      %s6093 = smul.u32 %s6040, 128
      %s6094 = sshra.s32 %s6093, 4
      %s6095 = scalar_lea.vmem [#allocation10], %s6094
      %v6096 = vld [vmem:[%s6095] sm:%s6089]
      %6097 = vst [vmem:[%s6092] sm:%s6089] %v6096
    $region203: #{custom-call.2} parent=1 // pred_fallthru
      _
    %p6099 = scmp.gt.s32.totalorder 104, 0
    // Predicated region
    $region222: #{custom-call.2} parent=1 // pred_check
      %p6100 = pneg %p6099
    $region223: #{custom-call.2} parent=1 // pred_check_branch
      %6102 = sbr.rel (%p6100) target = $region225
    $region224: #{custom-call.2} parent=1 // pred_region
      %s6103 = sshra.s32 104, 3
      %p6104 = scmp.gt.s32.totalorder %s6103, 0
      // Predicated region
      $region226: #{custom-call.2} parent=224 // pred_check
        %p6105 = pneg %p6104
      $region227: #{custom-call.2} parent=224 // pred_check_branch
        %6107 = sbr.rel (%p6105) target = $region229
      $region228: #{custom-call.2} parent=224 // pred_region
        %s6108 = ssub.s32 %s6103, 1
        %s6109 = smul.u32 %s6108, 128
        %s6110 = sshra.s32 %s6109, 4
        %s6111 = scalar_lea.vmem [#allocation11], %s6110
        %v6112 = vld [vmem:[#allocation11] sm:$0xff]
        // While loop
        $region230: #{custom-call.2} parent=228 // loop_pre_header
          _
        $region231: #{custom-call.2} parent=228 // loop_header
          %s6113 = sphi [#allocation11], %s6135
          %s6114 = sphi %s9, %s6136
          %v6115 = vphi %v6112, %v6137
          %s6116 = ssub.s32 %s6111, 64
          %p6117 = scmp.gt.s32.totalorder %s6113, %s6116
        $region232: #{custom-call.2} parent=228 // loop_header_branch
          %6119 = sbr.rel (%p6117) target = $region236
        $region233: #{custom-call.2} parent=228 // loop_body
          %6120 = vst [vmem:[%s6114] sm:$0xff] %v6115
          %v6121 = vld [vmem:[%s6113 + $0x8] sm:$0xff]
          %6122 = vst [vmem:[%s6114 + $0x8] sm:$0xff] %v6121
          %v6123 = vld [vmem:[%s6113 + $0x10] sm:$0xff]
          %6124 = vst [vmem:[%s6114 + $0x10] sm:$0xff] %v6123
          %v6125 = vld [vmem:[%s6113 + $0x18] sm:$0xff]
          %6126 = vst [vmem:[%s6114 + $0x18] sm:$0xff] %v6125
          %v6127 = vld [vmem:[%s6113 + $0x20] sm:$0xff]
          %6128 = vst [vmem:[%s6114 + $0x20] sm:$0xff] %v6127
          %v6129 = vld [vmem:[%s6113 + $0x28] sm:$0xff]
          %6130 = vst [vmem:[%s6114 + $0x28] sm:$0xff] %v6129
          %v6131 = vld [vmem:[%s6113 + $0x30] sm:$0xff]
          %6132 = vst [vmem:[%s6114 + $0x30] sm:$0xff] %v6131
          %v6133 = vld [vmem:[%s6113 + $0x38] sm:$0xff]
          %6134 = vst [vmem:[%s6114 + $0x38] sm:$0xff] %v6133
        $region234: #{custom-call.2} parent=228 // loop_footer
          %s6135 = scalar_lea.vmem %s6113, 64
          %s6136 = scalar_lea.vmem %s6114, 64
          %v6137 = vld [vmem:[%s6113 + $0x40] sm:$0xff]
        $region235: #{custom-call.2} parent=228 // loop_footer_branch
          %6138 = sbr.rel target = $region231
        $region236: #{custom-call.2} parent=228 // loop_exit
          _
        // While loop
        $region237: #{custom-call.2} parent=228 // loop_pre_header
          _
        $region238: #{custom-call.2} parent=228 // loop_header
          %s6139 = sphi %s6113, %s6147
          %s6140 = sphi %s6114, %s6148
          %v6141 = vphi %v6115, %v6141
          %p6142 = scmp.gt.s32.totalorder %s6139, %s6111
        $region239: #{custom-call.2} parent=228 // loop_header_branch
          %6144 = sbr.rel (%p6142) target = $region243
        $region240: #{custom-call.2} parent=228 // loop_body
          %v6145 = vld [vmem:[%s6139] sm:$0xff]
          %6146 = vst [vmem:[%s6140] sm:$0xff] %v6145
        $region241: #{custom-call.2} parent=228 // loop_footer
          %s6147 = scalar_lea.vmem %s6139, 8
          %s6148 = scalar_lea.vmem %s6140, 8
        $region242: #{custom-call.2} parent=228 // loop_footer_branch
          %6149 = sbr.rel target = $region238
        $region243: #{custom-call.2} parent=228 // loop_exit
          _
      $region229: #{custom-call.2} parent=224 // pred_fallthru
        _
      %s6150 = sand.u32 104, 7
      %s6151 = sshll.u32 1, %s6150
      %s6152 = ssub.s32 %s6151, 1
      %s6153 = smul.u32 %s6103, 128
      %s6154 = sshra.s32 %s6153, 4
      %s6155 = scalar_lea.vmem %s9, %s6154
      %s6156 = smul.u32 %s6103, 128
      %s6157 = sshra.s32 %s6156, 4
      %s6158 = scalar_lea.vmem [#allocation11], %s6157
      %v6159 = vld [vmem:[%s6158] sm:%s6152]
      %6160 = vst [vmem:[%s6155] sm:%s6152] %v6159
    $region225: #{custom-call.2} parent=1 // pred_fallthru
      _
    // Predicated region
    $region244: #{custom-call.2} parent=1 // pred_check
      _
    $region245: #{custom-call.2} parent=1 // pred_check_branch
      %6162 = sbr.rel (0) target = $region247
    $region246: #{custom-call.2} parent=1 // pred_region
      _
    $region247: #{custom-call.2} parent=1 // pred_fallthru
      _
    // Predicated region
    $region248: #{custom-call.2} parent=1 // pred_check
      _
    $region249: #{custom-call.2} parent=1 // pred_check_branch
      %6164 = sbr.rel (0) target = $region251
    $region250: #{custom-call.2} parent=1 // pred_region
      _
    $region251: #{custom-call.2} parent=1 // pred_fallthru
      _

// kernel: pca_forward.2
$region0: #{pca_forward.2}
  #allocation0 [shape = 'u32[]', space=smem, size = 0x4, offset = 0x4, fixed_abs, tag = 'smem constant byte address 0x4 - core index']
  #allocation1 [shape = 'u32[144,128]{1,0:T(1,128)}', space=vmem, size = 0x12000, scoped, tag = 'internal scratch']
  %s0 = inlined_call_operand.vmem [shape: f32[1,256], index: 0, kind: input, shape index: {}, may-alias: {0,1}]
  %s1 = inlined_call_operand.vmem [shape: f32[1,256], index: 1, kind: input, shape index: {}, may-alias: {0,1}]
  %s2 = inlined_call_operand.vmem [shape: f32[50,256], index: 2, kind: input, shape index: {}, may-alias: {2,3}]
  %s3 = inlined_call_operand.vmem [shape: f32[50,256], index: 3, kind: input, shape index: {}, may-alias: {2,3}]
  %s4 = inlined_call_operand.vmem [shape: f32[256,256], index: 4, kind: output, shape index: {}]
  %s5 = sld [smem:[#allocation0]]
  $region191: #{pca_forward.2} parent=0
    _
  %s7 = ssub.s32 1, %s5
  %s8 = scalar_select 0, %s7, %s5
  $region1: #{pca_forward.2} parent=0
    #allocation2 [shape = 'u8[16384]{0}', space=vmem, size = 0x4000, scoped, tag = 'input window, operand 2']
    #allocation3 [shape = 'u8[16384]{0}', space=vmem, size = 0x4000, scoped, tag = 'input window, operand 3']
    #allocation4 [shape = 'u8[131072]{0}', space=vmem, size = 0x20000, scoped, tag = 'output window, operand 0']
    loop: start=0, step=1, limit=18
    $region2: #{pca_forward.2} parent=1 // loop_pre_header
      _
    $region3: #{pca_forward.2} parent=1 // loop_header
      %s10 = sphi 0, %s14
      %p11 = scmp.ge.s32.totalorder %s10, 18
      %s17 = sphi 0, %s36
      %s18 = sphi 0, %s32
      %s19 = sphi 0, %s28
      %s20 = sphi 0, %s17
      %s21 = sphi 0, %s18
      %s22 = sphi 0, %s19
      %s23 = sphi 0, %s20
      %s24 = sphi 0, %s21
      %s25 = sphi 0, %s22
      %s39 = sphi 0, %s41
      %s42 = sphi 0, %s39
      %s43 = sphi 0, %s42
      %s59 = sphi 0, %s43
      %s65 = sphi 0, %s67
      %s68 = sphi 0, %s65
      %s69 = sphi 0, %s68
      %s85 = sphi 0, %s69
      %s93 = sphi 0, %s95
      %s96 = sphi 0, %s93
      %s97 = sphi 0, %s96
      %s113 = sphi 0, %s97
      %s121 = sphi 0, %s123
      %s124 = sphi 0, %s121
      %s125 = sphi 0, %s124
      %s141 = sphi 0, %s125
      %s149 = sphi 0, %s151
      %s152 = sphi 0, %s149
      %s153 = sphi 0, %s152
      %s169 = sphi 0, %s153
    $region4: #{pca_forward.2} parent=1 // loop_header_branch
      %13 = sbr.rel (%p11) target = $region8
    $region5: #{pca_forward.2} parent=1 // loop_body
      %s15 = ssub.s32 %s10, 1
      %s16 = ssub.s32 %s10, 2
      %s26 = sadd.s32 1, %s19
      %p27 = scmp.ge.s32.totalorder %s26, 4
      %s28 = scalar_select %p27, 0, %s26
      %s29 = sadd.s32 1, %s18
      %s30 = scalar_select %p27, %s29, %s18
      %p31 = scmp.ge.s32.totalorder %s30, 2
      %s32 = scalar_select %p31, 0, %s30
      %s33 = sadd.s32 1, %s17
      %s34 = scalar_select %p31, %s33, %s17
      %p35 = scmp.ge.s32.totalorder %s34, 2
      %s36 = scalar_select %p35, 0, %s34
      %s37 = ssub.s32 %s17, %s36
      %p38 = scmp.eq.s32.totalorder %s37, 0
      %s40 = sadd.s32 %s39, 1
      %s41 = scalar_select %p38, %s39, %s40
      %p44 = pneg %p38
      %p45 = scmp.eq.s32.totalorder %s10, 15
      %p46 = por %p44, %p45
      %p47 = scmp.ne.s32.totalorder %s39, %s42
      %p48 = scmp.eq.s32.totalorder %s10, 0
      %p49 = por %p47, %p48
      %p50 = scmp.ne.s32.totalorder %s39, %s42
      %p51 = scmp.eq.s32.totalorder %s15, 15
      %p52 = por %p50, %p51
      %p53 = scmp.ne.s32.totalorder %s42, %s43
      %p54 = scmp.eq.s32.totalorder %s15, 0
      %p55 = por %p53, %p54
      %p56 = scmp.ne.s32.totalorder %s42, %s43
      %p57 = scmp.eq.s32.totalorder %s16, 15
      %p58 = por %p56, %p57
      %p60 = scmp.ne.s32.totalorder %s43, %s59
      %p61 = scmp.eq.s32.totalorder %s16, 0
      %p62 = por %p60, %p61
      %s63 = ssub.s32 %s18, %s32
      %p64 = scmp.eq.s32.totalorder %s63, 0
      %s66 = sadd.s32 %s65, 1
      %s67 = scalar_select %p64, %s65, %s66
      %p70 = pneg %p64
      %p71 = scmp.eq.s32.totalorder %s10, 15
      %p72 = por %p70, %p71
      %p73 = scmp.ne.s32.totalorder %s65, %s68
      %p74 = scmp.eq.s32.totalorder %s10, 0
      %p75 = por %p73, %p74
      %p76 = scmp.ne.s32.totalorder %s65, %s68
      %p77 = scmp.eq.s32.totalorder %s15, 15
      %p78 = por %p76, %p77
      %p79 = scmp.ne.s32.totalorder %s68, %s69
      %p80 = scmp.eq.s32.totalorder %s15, 0
      %p81 = por %p79, %p80
      %p82 = scmp.ne.s32.totalorder %s68, %s69
      %p83 = scmp.eq.s32.totalorder %s16, 15
      %p84 = por %p82, %p83
      %p86 = scmp.ne.s32.totalorder %s69, %s85
      %p87 = scmp.eq.s32.totalorder %s16, 0
      %p88 = por %p86, %p87
      %s89 = ssub.s32 %s19, %s28
      %s90 = ssub.s32 %s17, %s36
      %s91 = sor.u32 %s89, %s90
      %p92 = scmp.eq.s32.totalorder %s91, 0
      %s94 = sadd.s32 %s93, 1
      %s95 = scalar_select %p92, %s93, %s94
      %p98 = pneg %p92
      %p99 = scmp.eq.s32.totalorder %s10, 15
      %p100 = por %p98, %p99
      %p101 = scmp.ne.s32.totalorder %s93, %s96
      %p102 = scmp.eq.s32.totalorder %s10, 0
      %p103 = por %p101, %p102
      %p104 = scmp.ne.s32.totalorder %s93, %s96
      %p105 = scmp.eq.s32.totalorder %s15, 15
      %p106 = por %p104, %p105
      %p107 = scmp.ne.s32.totalorder %s96, %s97
      %p108 = scmp.eq.s32.totalorder %s15, 0
      %p109 = por %p107, %p108
      %p110 = scmp.ne.s32.totalorder %s96, %s97
      %p111 = scmp.eq.s32.totalorder %s16, 15
      %p112 = por %p110, %p111
      %p114 = scmp.ne.s32.totalorder %s97, %s113
      %p115 = scmp.eq.s32.totalorder %s16, 0
      %p116 = por %p114, %p115
      %s117 = ssub.s32 %s19, %s28
      %s118 = ssub.s32 %s18, %s32
      %s119 = sor.u32 %s117, %s118
      %p120 = scmp.eq.s32.totalorder %s119, 0
      %s122 = sadd.s32 %s121, 1
      %s123 = scalar_select %p120, %s121, %s122
      %p126 = pneg %p120
      %p127 = scmp.eq.s32.totalorder %s10, 15
      %p128 = por %p126, %p127
      %p129 = scmp.ne.s32.totalorder %s121, %s124
      %p130 = scmp.eq.s32.totalorder %s10, 0
      %p131 = por %p129, %p130
      %p132 = scmp.ne.s32.totalorder %s121, %s124
      %p133 = scmp.eq.s32.totalorder %s15, 15
      %p134 = por %p132, %p133
      %p135 = scmp.ne.s32.totalorder %s124, %s125
      %p136 = scmp.eq.s32.totalorder %s15, 0
      %p137 = por %p135, %p136
      %p138 = scmp.ne.s32.totalorder %s124, %s125
      %p139 = scmp.eq.s32.totalorder %s16, 15
      %p140 = por %p138, %p139
      %p142 = scmp.ne.s32.totalorder %s125, %s141
      %p143 = scmp.eq.s32.totalorder %s16, 0
      %p144 = por %p142, %p143
      %s145 = ssub.s32 %s17, %s36
      %s146 = ssub.s32 %s18, %s32
      %s147 = sor.u32 %s145, %s146
      %p148 = scmp.eq.s32.totalorder %s147, 0
      %s150 = sadd.s32 %s149, 1
      %s151 = scalar_select %p148, %s149, %s150
      %p154 = pneg %p148
      %p155 = scmp.eq.s32.totalorder %s10, 15
      %p156 = por %p154, %p155
      %p157 = scmp.ne.s32.totalorder %s149, %s152
      %p158 = scmp.eq.s32.totalorder %s10, 0
      %p159 = por %p157, %p158
      %p160 = scmp.ne.s32.totalorder %s149, %s152
      %p161 = scmp.eq.s32.totalorder %s15, 15
      %p162 = por %p160, %p161
      %p163 = scmp.ne.s32.totalorder %s152, %s153
      %p164 = scmp.eq.s32.totalorder %s15, 0
      %p165 = por %p163, %p164
      %p166 = scmp.ne.s32.totalorder %s152, %s153
      %p167 = scmp.eq.s32.totalorder %s16, 15
      %p168 = por %p166, %p167
      %p170 = scmp.ne.s32.totalorder %s153, %s169
      %p171 = scmp.eq.s32.totalorder %s16, 0
      %p172 = por %p170, %p171
      %p173 = scmp.le.s32.totalorder 1, %s10
      %p174 = scmp.lt.s32.totalorder %s10, 17
      %p175 = pnand %p173, %p174
      %p176 = pneg %p175
      // Predicated region
      $region9: #{pca_forward.2} parent=5 // pred_check
        _
      $region10: #{pca_forward.2} parent=5 // pred_check_branch
        %178 = sbr.rel (%p175) target = $region12
      $region11: #{pca_forward.2} parent=5 // pred_region
        %s179 = ssub.s32 %s10, 1
      $region12: #{pca_forward.2} parent=5 // pred_fallthru
        _
      %p180 = scmp.lt.s32.totalorder %s10, 16
      // Predicated region
      $region13: #{pca_forward.2} parent=5 // pred_check
        %p181 = pneg %p180
      $region14: #{pca_forward.2} parent=5 // pred_check_branch
        %183 = sbr.rel (%p181) target = $region16
      $region15: #{pca_forward.2} parent=5 // pred_region
        // Predicated region
        $region17: #{pca_forward.2} parent=15 // pred_check
          %p184 = pneg %p49
        $region18: #{pca_forward.2} parent=15 // pred_check_branch
          %186 = sbr.rel (%p184) target = $region20
        $region19: #{pca_forward.2} parent=15 // pred_region
          %p187 = scmp.lt.s32.totalorder %s17, 1
          %s188 = scalar_select %p187, %s17, 1
          %s189 = scalar_lea.vmem %s0, %s188
        $region20: #{pca_forward.2} parent=15 // pred_fallthru
          _
        // Predicated region
        $region21: #{pca_forward.2} parent=15 // pred_check
          %p190 = pneg %p75
        $region22: #{pca_forward.2} parent=15 // pred_check_branch
          %192 = sbr.rel (%p190) target = $region24
        $region23: #{pca_forward.2} parent=15 // pred_region
          %p193 = scmp.lt.s32.totalorder %s18, 1
          %s194 = scalar_select %p193, %s18, 1
          %s195 = scalar_lea.vmem %s1, %s194
        $region24: #{pca_forward.2} parent=15 // pred_fallthru
          _
        // Predicated region
        $region25: #{pca_forward.2} parent=15 // pred_check
          %p196 = pneg %p103
        $region26: #{pca_forward.2} parent=15 // pred_check_branch
          %198 = sbr.rel (%p196) target = $region28
        $region27: #{pca_forward.2} parent=15 // pred_region
          %s199 = sand.u32 %s93, 1
          %s200 = sand.u32 %s93, 1
          %s201 = smul.addr %s200, 16
          %s202 = scalar_lea.vmem [#allocation2], %s201
          %s203 = smul.u32 2, %s19
          %s204 = ssub.s32 7, %s203
          %p205 = scmp.lt.s32.totalorder %s204, 2
          %s206 = scalar_select %p205, %s204, 2
          %s207 = smul.u32 128, %s206
          %p208 = scmp.ne.s32.totalorder 0, %s207
          %s209 = smul.addr %s203, 2
          %s210 = sadd.s32 %s17, %s209
          %s211 = smul.addr %s210, 8
          %s212 = scalar_lea.vmem %s2, %s211
          // Predicated region
          $region29: #{pca_forward.2} parent=27 // pred_check
            %p213 = pneg %p208
          $region30: #{pca_forward.2} parent=27 // pred_check_branch
            %215 = sbr.rel (%p213) target = $region32
          $region31: #{pca_forward.2} parent=27 // pred_region
            // Predicated region
            $region33: #{pca_forward.2} parent=31 // pred_check
              _
            $region34: #{pca_forward.2} parent=31 // pred_check_branch
              %217 = sbr.rel (0) target = $region36
            $region35: #{pca_forward.2} parent=31 // pred_region
              // Predicated region
              $region55: #{pca_forward.2} parent=35 // pred_check
                _
              $region56: #{pca_forward.2} parent=35 // pred_check_branch
                %269 = sbr.rel (0) target = $region58
              $region57: #{pca_forward.2} parent=35 // pred_region
                %s270 = sshrl.u32 %s206, 1
                // While loop
                $region59: #{pca_forward.2} parent=57 // loop_pre_header
                  _
                $region60: #{pca_forward.2} parent=57 // loop_header
                  %s272 = sphi 0, %s274
                  %p273 = scmp.ge.s32.totalorder %s272, %s270
                  %s277 = sphi 0, %s286
                  %s278 = sphi %s212, %s289
                  %s279 = sphi %s202, %s290
                $region61: #{pca_forward.2} parent=57 // loop_header_branch
                  %276 = sbr.rel (%p273) target = $region65
                $region62: #{pca_forward.2} parent=57 // loop_body
                  %v280 = vld [vmem:[%s278] sm:$0xff]
                  %281 = vst [vmem:[%s279] sm:$0xff] %v280
                  %v282 = vld [vmem:[%s278 + $0x10] sm:$0xff]
                  %283 = vst [vmem:[%s279 + $0x8] sm:$0xff] %v282
                  %s284 = sadd.s32 1, %s277
                  %p285 = scmp.ge.s32.totalorder %s284, %s270
                  %s286 = scalar_select %p285, 0, %s284
                  %s287 = smul.u32 %s286, 32
                  %s288 = smul.u32 %s286, 16
                  %s289 = scalar_lea.vmem %s212, %s287
                  %s290 = scalar_lea.vmem %s202, %s288 [#allocation2]
                $region63: #{pca_forward.2} parent=57 // loop_footer
                  %s274 = sadd.s32 %s272, 1
                $region64: #{pca_forward.2} parent=57 // loop_footer_branch
                  %271 = sbr.rel target = $region60
                $region65: #{pca_forward.2} parent=57 // loop_exit
                  _
                %s291 = sshrl.u32 %s206, 1
                %s292 = sand.u32 %s206, 1
                %s293 = smul.u32 %s291, 2
                %s294 = smul.u32 16, %s293
                %s295 = scalar_lea.vmem %s212, %s294
                %s296 = smul.u32 8, %s293
                %s297 = scalar_lea.vmem %s202, %s296 [#allocation2]
                // While loop
                $region66: #{pca_forward.2} parent=57 // loop_pre_header
                  _
                $region67: #{pca_forward.2} parent=57 // loop_header
                  %s299 = sphi 0, %s301
                  %p300 = scmp.ge.s32.totalorder %s299, %s292
                  %s304 = sphi 0, %s311
                  %s305 = sphi %s295, %s314
                  %s306 = sphi %s297, %s315
                $region68: #{pca_forward.2} parent=57 // loop_header_branch
                  %303 = sbr.rel (%p300) target = $region72
                $region69: #{pca_forward.2} parent=57 // loop_body
                  %v307 = vld [vmem:[%s305] sm:$0xff]
                  %308 = vst [vmem:[%s306] sm:$0xff] %v307
                  %s309 = sadd.s32 1, %s304
                  %p310 = scmp.ge.s32.totalorder %s309, %s292
                  %s311 = scalar_select %p310, 0, %s309
                  %s312 = smul.u32 %s311, 16
                  %s313 = smul.u32 %s311, 8
                  %s314 = scalar_lea.vmem %s295, %s312
                  %s315 = scalar_lea.vmem %s297, %s313 [#allocation2]
                $region70: #{pca_forward.2} parent=57 // loop_footer
                  %s301 = sadd.s32 %s299, 1
                $region71: #{pca_forward.2} parent=57 // loop_footer_branch
                  %298 = sbr.rel target = $region67
                $region72: #{pca_forward.2} parent=57 // loop_exit
                  _
              $region58: #{pca_forward.2} parent=35 // pred_fallthru
                _
              // Predicated region
              $region73: #{pca_forward.2} parent=35 // pred_check
                _
              $region74: #{pca_forward.2} parent=35 // pred_check_branch
                %317 = sbr.rel target = $region76
              $region75: #{pca_forward.2} parent=35 // pred_region
                _
              $region76: #{pca_forward.2} parent=35 // pred_fallthru
                _
            $region36: #{pca_forward.2} parent=31 // pred_fallthru
              _
            // Predicated region
            $region37: #{pca_forward.2} parent=31 // pred_check
              _
            $region38: #{pca_forward.2} parent=31 // pred_check_branch
              %219 = sbr.rel target = $region40
            $region39: #{pca_forward.2} parent=31 // pred_region
              %s221 = ssub.s32 256, 1
              %s222 = sshrl.u32 %s206, 1
              // While loop
              $region41: #{pca_forward.2} parent=39 // loop_pre_header
                _
              $region42: #{pca_forward.2} parent=39 // loop_header
                %s224 = sphi 0, %s226
                %p225 = scmp.ge.s32.totalorder %s224, %s222
                %s229 = sphi 0, %s238
                %s230 = sphi %s212, %s241
                %s231 = sphi %s202, %s242
              $region43: #{pca_forward.2} parent=39 // loop_header_branch
                %228 = sbr.rel (%p225) target = $region47
              $region44: #{pca_forward.2} parent=39 // loop_body
                %v232 = vld [vmem:[%s230] sm:%s221]
                %233 = vst [vmem:[%s231] sm:%s221] %v232
                %v234 = vld [vmem:[%s230 + $0x10] sm:%s221]
                %235 = vst [vmem:[%s231 + $0x8] sm:%s221] %v234
                %s236 = sadd.s32 1, %s229
                %p237 = scmp.ge.s32.totalorder %s236, %s222
                %s238 = scalar_select %p237, 0, %s236
                %s239 = smul.u32 %s238, 32
                %s240 = smul.u32 %s238, 16
                %s241 = scalar_lea.vmem %s212, %s239
                %s242 = scalar_lea.vmem %s202, %s240 [#allocation2]
              $region45: #{pca_forward.2} parent=39 // loop_footer
                %s226 = sadd.s32 %s224, 1
              $region46: #{pca_forward.2} parent=39 // loop_footer_branch
                %223 = sbr.rel target = $region42
              $region47: #{pca_forward.2} parent=39 // loop_exit
                _
              %s243 = sshrl.u32 %s206, 1
              %s244 = sand.u32 %s206, 1
              %s245 = smul.u32 %s243, 2
              %s246 = smul.u32 16, %s245
              %s247 = scalar_lea.vmem %s212, %s246
              %s248 = smul.u32 8, %s245
              %s249 = scalar_lea.vmem %s202, %s248 [#allocation2]
              // While loop
              $region48: #{pca_forward.2} parent=39 // loop_pre_header
                _
              $region49: #{pca_forward.2} parent=39 // loop_header
                %s251 = sphi 0, %s253
                %p252 = scmp.ge.s32.totalorder %s251, %s244
                %s256 = sphi 0, %s263
                %s257 = sphi %s247, %s266
                %s258 = sphi %s249, %s267
              $region50: #{pca_forward.2} parent=39 // loop_header_branch
                %255 = sbr.rel (%p252) target = $region54
              $region51: #{pca_forward.2} parent=39 // loop_body
                %v259 = vld [vmem:[%s257] sm:%s221]
                %260 = vst [vmem:[%s258] sm:%s221] %v259
                %s261 = sadd.s32 1, %s256
                %p262 = scmp.ge.s32.totalorder %s261, %s244
                %s263 = scalar_select %p262, 0, %s261
                %s264 = smul.u32 %s263, 16
                %s265 = smul.u32 %s263, 8
                %s266 = scalar_lea.vmem %s247, %s264
                %s267 = scalar_lea.vmem %s249, %s265 [#allocation2]
              $region52: #{pca_forward.2} parent=39 // loop_footer
                %s253 = sadd.s32 %s251, 1
              $region53: #{pca_forward.2} parent=39 // loop_footer_branch
                %250 = sbr.rel target = $region49
              $region54: #{pca_forward.2} parent=39 // loop_exit
                _
            $region40: #{pca_forward.2} parent=31 // pred_fallthru
              _
          $region32: #{pca_forward.2} parent=27 // pred_fallthru
            _
          %318 = vnop
        $region28: #{pca_forward.2} parent=15 // pred_fallthru
          _
        // Predicated region
        $region77: #{pca_forward.2} parent=15 // pred_check
          %p319 = pneg %p131
        $region78: #{pca_forward.2} parent=15 // pred_check_branch
          %321 = sbr.rel (%p319) target = $region80
        $region79: #{pca_forward.2} parent=15 // pred_region
          %s322 = sand.u32 %s121, 1
          %s323 = sand.u32 %s121, 1
          %s324 = smul.addr %s323, 16
          %s325 = scalar_lea.vmem [#allocation3], %s324
          %s326 = smul.u32 2, %s19
          %s327 = ssub.s32 7, %s326
          %p328 = scmp.lt.s32.totalorder %s327, 2
          %s329 = scalar_select %p328, %s327, 2
          %s330 = smul.u32 128, %s329
          %p331 = scmp.ne.s32.totalorder 0, %s330
          %s332 = smul.addr %s326, 2
          %s333 = sadd.s32 %s18, %s332
          %s334 = smul.addr %s333, 8
          %s335 = scalar_lea.vmem %s3, %s334
          // Predicated region
          $region81: #{pca_forward.2} parent=79 // pred_check
            %p336 = pneg %p331
          $region82: #{pca_forward.2} parent=79 // pred_check_branch
            %338 = sbr.rel (%p336) target = $region84
          $region83: #{pca_forward.2} parent=79 // pred_region
            // Predicated region
            $region85: #{pca_forward.2} parent=83 // pred_check
              _
            $region86: #{pca_forward.2} parent=83 // pred_check_branch
              %340 = sbr.rel (0) target = $region88
            $region87: #{pca_forward.2} parent=83 // pred_region
              // Predicated region
              $region107: #{pca_forward.2} parent=87 // pred_check
                _
              $region108: #{pca_forward.2} parent=87 // pred_check_branch
                %392 = sbr.rel (0) target = $region110
              $region109: #{pca_forward.2} parent=87 // pred_region
                %s393 = sshrl.u32 %s329, 1
                // While loop
                $region111: #{pca_forward.2} parent=109 // loop_pre_header
                  _
                $region112: #{pca_forward.2} parent=109 // loop_header
                  %s395 = sphi 0, %s397
                  %p396 = scmp.ge.s32.totalorder %s395, %s393
                  %s400 = sphi 0, %s409
                  %s401 = sphi %s335, %s412
                  %s402 = sphi %s325, %s413
                $region113: #{pca_forward.2} parent=109 // loop_header_branch
                  %399 = sbr.rel (%p396) target = $region117
                $region114: #{pca_forward.2} parent=109 // loop_body
                  %v403 = vld [vmem:[%s401] sm:$0xff]
                  %404 = vst [vmem:[%s402] sm:$0xff] %v403
                  %v405 = vld [vmem:[%s401 + $0x10] sm:$0xff]
                  %406 = vst [vmem:[%s402 + $0x8] sm:$0xff] %v405
                  %s407 = sadd.s32 1, %s400
                  %p408 = scmp.ge.s32.totalorder %s407, %s393
                  %s409 = scalar_select %p408, 0, %s407
                  %s410 = smul.u32 %s409, 32
                  %s411 = smul.u32 %s409, 16
                  %s412 = scalar_lea.vmem %s335, %s410
                  %s413 = scalar_lea.vmem %s325, %s411 [#allocation3]
                $region115: #{pca_forward.2} parent=109 // loop_footer
                  %s397 = sadd.s32 %s395, 1
                $region116: #{pca_forward.2} parent=109 // loop_footer_branch
                  %394 = sbr.rel target = $region112
                $region117: #{pca_forward.2} parent=109 // loop_exit
                  _
                %s414 = sshrl.u32 %s329, 1
                %s415 = sand.u32 %s329, 1
                %s416 = smul.u32 %s414, 2
                %s417 = smul.u32 16, %s416
                %s418 = scalar_lea.vmem %s335, %s417
                %s419 = smul.u32 8, %s416
                %s420 = scalar_lea.vmem %s325, %s419 [#allocation3]
                // While loop
                $region118: #{pca_forward.2} parent=109 // loop_pre_header
                  _
                $region119: #{pca_forward.2} parent=109 // loop_header
                  %s422 = sphi 0, %s424
                  %p423 = scmp.ge.s32.totalorder %s422, %s415
                  %s427 = sphi 0, %s434
                  %s428 = sphi %s418, %s437
                  %s429 = sphi %s420, %s438
                $region120: #{pca_forward.2} parent=109 // loop_header_branch
                  %426 = sbr.rel (%p423) target = $region124
                $region121: #{pca_forward.2} parent=109 // loop_body
                  %v430 = vld [vmem:[%s428] sm:$0xff]
                  %431 = vst [vmem:[%s429] sm:$0xff] %v430
                  %s432 = sadd.s32 1, %s427
                  %p433 = scmp.ge.s32.totalorder %s432, %s415
                  %s434 = scalar_select %p433, 0, %s432
                  %s435 = smul.u32 %s434, 16
                  %s436 = smul.u32 %s434, 8
                  %s437 = scalar_lea.vmem %s418, %s435
                  %s438 = scalar_lea.vmem %s420, %s436 [#allocation3]
                $region122: #{pca_forward.2} parent=109 // loop_footer
                  %s424 = sadd.s32 %s422, 1
                $region123: #{pca_forward.2} parent=109 // loop_footer_branch
                  %421 = sbr.rel target = $region119
                $region124: #{pca_forward.2} parent=109 // loop_exit
                  _
              $region110: #{pca_forward.2} parent=87 // pred_fallthru
                _
              // Predicated region
              $region125: #{pca_forward.2} parent=87 // pred_check
                _
              $region126: #{pca_forward.2} parent=87 // pred_check_branch
                %440 = sbr.rel target = $region128
              $region127: #{pca_forward.2} parent=87 // pred_region
                _
              $region128: #{pca_forward.2} parent=87 // pred_fallthru
                _
            $region88: #{pca_forward.2} parent=83 // pred_fallthru
              _
            // Predicated region
            $region89: #{pca_forward.2} parent=83 // pred_check
              _
            $region90: #{pca_forward.2} parent=83 // pred_check_branch
              %342 = sbr.rel target = $region92
            $region91: #{pca_forward.2} parent=83 // pred_region
              %s344 = ssub.s32 256, 1
              %s345 = sshrl.u32 %s329, 1
              // While loop
              $region93: #{pca_forward.2} parent=91 // loop_pre_header
                _
              $region94: #{pca_forward.2} parent=91 // loop_header
                %s347 = sphi 0, %s349
                %p348 = scmp.ge.s32.totalorder %s347, %s345
                %s352 = sphi 0, %s361
                %s353 = sphi %s335, %s364
                %s354 = sphi %s325, %s365
              $region95: #{pca_forward.2} parent=91 // loop_header_branch
                %351 = sbr.rel (%p348) target = $region99
              $region96: #{pca_forward.2} parent=91 // loop_body
                %v355 = vld [vmem:[%s353] sm:%s344]
                %356 = vst [vmem:[%s354] sm:%s344] %v355
                %v357 = vld [vmem:[%s353 + $0x10] sm:%s344]
                %358 = vst [vmem:[%s354 + $0x8] sm:%s344] %v357
                %s359 = sadd.s32 1, %s352
                %p360 = scmp.ge.s32.totalorder %s359, %s345
                %s361 = scalar_select %p360, 0, %s359
                %s362 = smul.u32 %s361, 32
                %s363 = smul.u32 %s361, 16
                %s364 = scalar_lea.vmem %s335, %s362
                %s365 = scalar_lea.vmem %s325, %s363 [#allocation3]
              $region97: #{pca_forward.2} parent=91 // loop_footer
                %s349 = sadd.s32 %s347, 1
              $region98: #{pca_forward.2} parent=91 // loop_footer_branch
                %346 = sbr.rel target = $region94
              $region99: #{pca_forward.2} parent=91 // loop_exit
                _
              %s366 = sshrl.u32 %s329, 1
              %s367 = sand.u32 %s329, 1
              %s368 = smul.u32 %s366, 2
              %s369 = smul.u32 16, %s368
              %s370 = scalar_lea.vmem %s335, %s369
              %s371 = smul.u32 8, %s368
              %s372 = scalar_lea.vmem %s325, %s371 [#allocation3]
              // While loop
              $region100: #{pca_forward.2} parent=91 // loop_pre_header
                _
              $region101: #{pca_forward.2} parent=91 // loop_header
                %s374 = sphi 0, %s376
                %p375 = scmp.ge.s32.totalorder %s374, %s367
                %s379 = sphi 0, %s386
                %s380 = sphi %s370, %s389
                %s381 = sphi %s372, %s390
              $region102: #{pca_forward.2} parent=91 // loop_header_branch
                %378 = sbr.rel (%p375) target = $region106
              $region103: #{pca_forward.2} parent=91 // loop_body
                %v382 = vld [vmem:[%s380] sm:%s344]
                %383 = vst [vmem:[%s381] sm:%s344] %v382
                %s384 = sadd.s32 1, %s379
                %p385 = scmp.ge.s32.totalorder %s384, %s367
                %s386 = scalar_select %p385, 0, %s384
                %s387 = smul.u32 %s386, 16
                %s388 = smul.u32 %s386, 8
                %s389 = scalar_lea.vmem %s370, %s387
                %s390 = scalar_lea.vmem %s372, %s388 [#allocation3]
              $region104: #{pca_forward.2} parent=91 // loop_footer
                %s376 = sadd.s32 %s374, 1
              $region105: #{pca_forward.2} parent=91 // loop_footer_branch
                %373 = sbr.rel target = $region101
              $region106: #{pca_forward.2} parent=91 // loop_exit
                _
            $region92: #{pca_forward.2} parent=83 // pred_fallthru
              _
          $region84: #{pca_forward.2} parent=79 // pred_fallthru
            _
          %441 = vnop
        $region80: #{pca_forward.2} parent=15 // pred_fallthru
          _
      $region16: #{pca_forward.2} parent=5 // pred_fallthru
        _
      %p442 = scmp.le.s32.totalorder 1, %s10
      %p443 = scmp.lt.s32.totalorder %s10, 17
      %p444 = pnand %p442, %p443
      %p445 = pneg %p444
      // Predicated region
      $region129: #{pca_forward.2} parent=5 // pred_check
        _
      $region130: #{pca_forward.2} parent=5 // pred_check_branch
        %447 = sbr.rel (%p444) target = $region132
      $region131: #{pca_forward.2} parent=5 // pred_region
        %s448 = ssub.s32 %s10, 1
        %s449 = sand.u32 %s96, 1
        %s450 = sand.u32 %s96, 1
        %s451 = smul.addr %s450, 16
        %s452 = scalar_lea.vmem [#allocation2], %s451
        // Predicated region
        $region133: #{pca_forward.2} parent=131 // pred_check
          %p453 = pneg %p109
        $region134: #{pca_forward.2} parent=131 // pred_check_branch
          %455 = sbr.rel (%p453) target = $region136
        $region135: #{pca_forward.2} parent=131 // pred_region
          _
        $region136: #{pca_forward.2} parent=131 // pred_fallthru
          _
        %s456 = sand.u32 %s124, 1
        %s457 = sand.u32 %s124, 1
        %s458 = smul.addr %s457, 16
        %s459 = scalar_lea.vmem [#allocation3], %s458
        // Predicated region
        $region137: #{pca_forward.2} parent=131 // pred_check
          %p460 = pneg %p137
        $region138: #{pca_forward.2} parent=131 // pred_check_branch
          %462 = sbr.rel (%p460) target = $region140
        $region139: #{pca_forward.2} parent=131 // pred_region
          _
        $region140: #{pca_forward.2} parent=131 // pred_fallthru
          _
        %p463 = scmp.lt.s32.totalorder %s20, 1
        %s464 = scalar_select %p463, %s20, 1
        %s465 = scalar_lea.vmem %s0, %s464
        %p466 = pneg %p55
        %p467 = pneg %p52
        %p468 = scmp.lt.s32.totalorder %s21, 1
        %s469 = scalar_select %p468, %s21, 1
        %s470 = scalar_lea.vmem %s1, %s469
        %p471 = pneg %p81
        %p472 = pneg %p78
        %s473 = sand.u32 %s96, 1
        %s474 = sand.u32 %s96, 1
        %s475 = smul.addr %s474, 16
        %s476 = scalar_lea.vmem [#allocation2], %s475
        %p477 = pneg %p109
        %p478 = pneg %p106
        %s479 = sand.u32 %s124, 1
        %s480 = sand.u32 %s124, 1
        %s481 = smul.addr %s480, 16
        %s482 = scalar_lea.vmem [#allocation3], %s481
        %p483 = pneg %p137
        %p484 = pneg %p134
        %p485 = pneg %p165
        %p486 = pneg %p162
        %s487 = sand.u32 %s152, 1
        %s488 = sand.u32 %s152, 1
        %s489 = smul.addr %s488, 128
        %s490 = scalar_lea.vmem [#allocation4], %s489
        %p491 = scmp.lt.s32.totalorder %s20, 1
        %s492 = scalar_select %p491, %s20, 1
        %s493 = scalar_lea.vmem %s0, %s492
        %p494 = scmp.lt.s32.totalorder %s21, 1
        %s495 = scalar_select %p494, %s21, 1
        %s496 = scalar_lea.vmem %s1, %s495
        %s497 = smul.u32 2, %s22
        %s498 = ssub.s32 7, %s497
        %p499 = scmp.lt.s32.totalorder %s498, 2
        %s500 = scalar_select %p499, %s498, 2
        %s501 = smul.u32 128, %s500
        %s502 = smul.u32 2, %s22
        %s503 = ssub.s32 7, %s502
        %p504 = scmp.lt.s32.totalorder %s503, 2
        %s505 = scalar_select %p504, %s503, 2
        %s506 = smul.u32 128, %s505
        %s507 = smul.u32 16, %s20
        %p508 = scmp.eq.s32.totalorder %s22, 0
        // Predicated region
        $region141: #{pca_forward.2} parent=131 // pred_check
          %p509 = pneg %p508
        $region142: #{pca_forward.2} parent=131 // pred_check_branch
          %511 = sbr.rel (%p509) target = $region144
        $region143: #{pca_forward.2} parent=131 // pred_region
          %512 = vst [vmem:[%s490] sm:$0xff] 0.0
          %513 = vst [vmem:[%s490 + $0x8] sm:$0xff] 0.0
          %514 = vst [vmem:[%s490 + $0x10] sm:$0xff] 0.0
          %515 = vst [vmem:[%s490 + $0x18] sm:$0xff] 0.0
          %516 = vst [vmem:[%s490 + $0x20] sm:$0xff] 0.0
          %517 = vst [vmem:[%s490 + $0x28] sm:$0xff] 0.0
          %518 = vst [vmem:[%s490 + $0x30] sm:$0xff] 0.0
          %519 = vst [vmem:[%s490 + $0x38] sm:$0xff] 0.0
          %520 = vst [vmem:[%s490 + $0x40] sm:$0xff] 0.0
          %521 = vst [vmem:[%s490 + $0x48] sm:$0xff] 0.0
          %522 = vst [vmem:[%s490 + $0x50] sm:$0xff] 0.0
          %523 = vst [vmem:[%s490 + $0x58] sm:$0xff] 0.0
          %524 = vst [vmem:[%s490 + $0x60] sm:$0xff] 0.0
          %525 = vst [vmem:[%s490 + $0x68] sm:$0xff] 0.0
          %526 = vst [vmem:[%s490 + $0x70] sm:$0xff] 0.0
          %527 = vst [vmem:[%s490 + $0x78] sm:$0xff] 0.0
        $region144: #{pca_forward.2} parent=131 // pred_fallthru
          _
        %v528 = vld [vmem:[%s452] sm:$0xff]
        %v529 = vld [vmem:[%s452 + $0x8] sm:$0xff]
        %v530 = vld [vmem:[%s493] sm:$0x1]
        %v532 = vlaneseq
        %v533 = vshrl.u32 %v532, 7
        %v534 = vsub.s32 0, %v533
        %v535 = vrot.slane %v530, %v534
        %v537 = vsub.f32 %v528, %v535
        %v538 = vsub.f32 %v529, %v535
        %v539 = vld [vmem:[%s459] sm:$0xff]
        %v540 = vld [vmem:[%s459 + $0x8] sm:$0xff]
        %v541 = vld [vmem:[%s496] sm:$0x1]
        %v543 = vlaneseq
        %v544 = vshrl.u32 %v543, 7
        %v545 = vsub.s32 0, %v544
        %v546 = vrot.slane %v541, %v545
        %v548 = vsub.f32 %v539, %v546
        %v549 = vsub.f32 %v540, %v546
        %v550 = vlaneseq
        %v551 = vshrl.u32 %v550, 7
        %v552 = vadd.s32 %v551, 8
        %s553 = smul.u32 %s22, 16
        %v554 = vstv %s553
        %v555 = vadd.s32 %v551, %v554
        %v556 = vadd.s32 %v552, %v554
        %vm557 = vcmp.lt.s32.totalorder %v555, 50
        %vm558 = vcmp.lt.s32.totalorder %v556, 50
        %v559 = vsel %vm557, %v537, 0.0
        %v560 = vsel %vm558, %v538, 0.0
        %v561 = vsel %vm557, %v548, 0.0
        %v562 = vsel %vm558, %v549, 0.0
        %v563 = vld [vmem:[%s490] sm:$0xff]
        %v564 = vld [vmem:[%s490 + $0x8] sm:$0xff]
        %v565 = vld [vmem:[%s490 + $0x10] sm:$0xff]
        %v566 = vld [vmem:[%s490 + $0x18] sm:$0xff]
        %v567 = vld [vmem:[%s490 + $0x20] sm:$0xff]
        %v568 = vld [vmem:[%s490 + $0x28] sm:$0xff]
        %v569 = vld [vmem:[%s490 + $0x30] sm:$0xff]
        %v570 = vld [vmem:[%s490 + $0x38] sm:$0xff]
        %v571 = vld [vmem:[%s490 + $0x40] sm:$0xff]
        %v572 = vld [vmem:[%s490 + $0x48] sm:$0xff]
        %v573 = vld [vmem:[%s490 + $0x50] sm:$0xff]
        %v574 = vld [vmem:[%s490 + $0x58] sm:$0xff]
        %v575 = vld [vmem:[%s490 + $0x60] sm:$0xff]
        %v576 = vld [vmem:[%s490 + $0x68] sm:$0xff]
        %v577 = vld [vmem:[%s490 + $0x70] sm:$0xff]
        %v578 = vld [vmem:[%s490 + $0x78] sm:$0xff]
        %579 = vxpose.xlu0.b32.start [1/16] %v559, 128
        %580 = vxpose.xlu0.b32.cont [2/16] %v560, 128
        %581 = vxpose.xlu0.b32.cont [3/16] 0.0, 128
        %582 = vxpose.xlu0.b32.cont [4/16] 0.0, 128
        %583 = vxpose.xlu0.b32.cont [5/16] 0.0, 128
        %584 = vxpose.xlu0.b32.cont [6/16] 0.0, 128
        %585 = vxpose.xlu0.b32.cont [7/16] 0.0, 128
        %586 = vxpose.xlu0.b32.cont [8/16] 0.0, 128
        %587 = vxpose.xlu0.b32.cont [9/16] 0.0, 128
        %588 = vxpose.xlu0.b32.cont [10/16] 0.0, 128
        %589 = vxpose.xlu0.b32.cont [11/16] 0.0, 128
        %590 = vxpose.xlu0.b32.cont [12/16] 0.0, 128
        %591 = vxpose.xlu0.b32.cont [13/16] 0.0, 128
        %592 = vxpose.xlu0.b32.cont [14/16] 0.0, 128
        %593 = vxpose.xlu0.b32.cont [15/16] 0.0, 128
        %594 = vxpose.xlu0.b32.end [16/16] 0.0, 128
        %v595 = vpop.trf.xlu0
        %v596 = vpop.trf.xlu0
        %v597 = vpop.trf.xlu0
        %v598 = vpop.trf.xlu0
        %v599 = vpop.trf.xlu0
        %v600 = vpop.trf.xlu0
        %v601 = vpop.trf.xlu0
        %v602 = vpop.trf.xlu0
        %v603 = vpop.trf.xlu0
        %v604 = vpop.trf.xlu0
        %v605 = vpop.trf.xlu0
        %v606 = vpop.trf.xlu0
        %v607 = vpop.trf.xlu0
        %v608 = vpop.trf.xlu0
        %v609 = vpop.trf.xlu0
        %v610 = vpop.trf.xlu0
        %vm611 = vcmask 130048
        %v613 = vsel %vm611, %v595, 0
        %v616 = vsel %vm611, %v596, 0
        %v619 = vsel %vm611, %v597, 0
        %v622 = vsel %vm611, %v598, 0
        %v625 = vsel %vm611, %v599, 0
        %v628 = vsel %vm611, %v600, 0
        %v631 = vsel %vm611, %v601, 0
        %v634 = vsel %vm611, %v602, 0
        %v637 = vsel %vm611, %v603, 0
        %v640 = vsel %vm611, %v604, 0
        %v643 = vsel %vm611, %v605, 0
        %v646 = vsel %vm611, %v606, 0
        %v649 = vsel %vm611, %v607, 0
        %v652 = vsel %vm611, %v608, 0
        %v655 = vsel %vm611, %v609, 0
        %v658 = vsel %vm611, %v610, 0
        %660 = vmatprep.subr.mxu0 0.0
        %661 = vmatpush1.msra.mxu0 0.0
        %662 = vmatprep.subr.mxu0 0.0
        %663 = vmatpush1.msra.mxu0 0.0
        %664 = vmatprep.subr.mxu0 0.0
        %665 = vmatpush1.msra.mxu0 0.0
        %666 = vmatprep.subr.mxu0 0.0
        %667 = vmatpush1.msra.mxu0 0.0
        %668 = vmatprep.subr.mxu0 0.0
        %669 = vmatpush1.msra.mxu0 0.0
        %670 = vmatprep.subr.mxu0 0.0
        %671 = vmatpush1.msra.mxu0 0.0
        %672 = vmatprep.subr.mxu0 0.0
        %673 = vmatpush1.msra.mxu0 0.0
        %674 = vmatprep.subr.mxu0 0.0
        %675 = vmatpush1.msra.mxu0 0.0
        %676 = vmatprep.subr.mxu0 0.0
        %677 = vmatpush1.msra.mxu0 0.0
        %678 = vmatprep.subr.mxu0 0.0
        %679 = vmatpush1.msra.mxu0 0.0
        %680 = vmatprep.subr.mxu0 0.0
        %681 = vmatpush1.msra.mxu0 0.0
        %682 = vmatprep.subr.mxu0 0.0
        %683 = vmatpush1.msra.mxu0 0.0
        %684 = vmatprep.subr.mxu0 0.0
        %685 = vmatpush1.msra.mxu0 0.0
        %686 = vmatprep.subr.mxu0 0.0
        %687 = vmatpush1.msra.mxu0 0.0
        %688 = vmatprep.subr.mxu0 0.0
        %689 = vmatpush1.msra.mxu0 %v562
        %690 = vmatprep.subr.mxu0 0.0
        %691 = vmatpush1.msra.mxu0 %v561
        %692 = vmatprep.subr.mxu0 0.0
        %693 = vmatpush2.msra.mxu0 0.0
        %694 = vmatprep.subr.mxu0 0.0
        %695 = vmatpush2.msra.mxu0 0.0
        %696 = vmatprep.subr.mxu0 0.0
        %697 = vmatpush2.msra.mxu0 0.0
        %698 = vmatprep.subr.mxu0 0.0
        %699 = vmatpush2.msra.mxu0 0.0
        %700 = vmatprep.subr.mxu0 0.0
        %701 = vmatpush2.msra.mxu0 0.0
        %702 = vmatprep.subr.mxu0 0.0
        %703 = vmatpush2.msra.mxu0 0.0
        %704 = vmatprep.subr.mxu0 0.0
        %705 = vmatpush2.msra.mxu0 0.0
        %706 = vmatprep.subr.mxu0 0.0
        %707 = vmatpush2.msra.mxu0 0.0
        %708 = vmatprep.subr.mxu0 0.0
        %709 = vmatpush2.msra.mxu0 0.0
        %710 = vmatprep.subr.mxu0 0.0
        %711 = vmatpush2.msra.mxu0 0.0
        %712 = vmatprep.subr.mxu0 0.0
        %713 = vmatpush2.msra.mxu0 0.0
        %714 = vmatprep.subr.mxu0 0.0
        %715 = vmatpush2.msra.mxu0 0.0
        %716 = vmatprep.subr.mxu0 0.0
        %717 = vmatpush2.msra.mxu0 0.0
        %718 = vmatprep.subr.mxu0 0.0
        %719 = vmatpush2.msra.mxu0 0.0
        %720 = vmatprep.subr.mxu0 0.0
        %721 = vmatpush2.msra.mxu0 0.0
        %722 = vmatprep.subr.mxu0 0.0
        %723 = vmatpush2.msra.mxu0 0.0
        %724 = vmatprep.mubr.f32.mxu0 0.0
        %725 = vmatmul.mubr.f32.gmra.mxu0 %v613
        %v726 = vpop.f32.mrf.mxu0
        %v727 = vadd.f32 0.0, %v726
        %v728 = vpop.f32.mrf.mxu0
        %729 = vmatprep.mubr.f32.mxu0 0.0
        %730 = vmatmul.mubr.f32.gmra.mxu0 %v616
        %v731 = vpop.f32.mrf.mxu0
        %v732 = vadd.f32 0.0, %v731
        %v733 = vpop.f32.mrf.mxu0
        %734 = vmatprep.mubr.f32.mxu0 0.0
        %735 = vmatmul.mubr.f32.gmra.mxu0 %v619
        %v736 = vpop.f32.mrf.mxu0
        %v737 = vadd.f32 0.0, %v736
        %v738 = vpop.f32.mrf.mxu0
        %739 = vmatprep.mubr.f32.mxu0 0.0
        %740 = vmatmul.mubr.f32.gmra.mxu0 %v622
        %v741 = vpop.f32.mrf.mxu0
        %v742 = vadd.f32 0.0, %v741
        %v743 = vpop.f32.mrf.mxu0
        %744 = vmatprep.mubr.f32.mxu0 0.0
        %745 = vmatmul.mubr.f32.gmra.mxu0 %v625
        %v746 = vpop.f32.mrf.mxu0
        %v747 = vadd.f32 0.0, %v746
        %v748 = vpop.f32.mrf.mxu0
        %749 = vmatprep.mubr.f32.mxu0 0.0
        %750 = vmatmul.mubr.f32.gmra.mxu0 %v628
        %v751 = vpop.f32.mrf.mxu0
        %v752 = vadd.f32 0.0, %v751
        %v753 = vpop.f32.mrf.mxu0
        %754 = vmatprep.mubr.f32.mxu0 0.0
        %755 = vmatmul.mubr.f32.gmra.mxu0 %v631
        %v756 = vpop.f32.mrf.mxu0
        %v757 = vadd.f32 0.0, %v756
        %v758 = vpop.f32.mrf.mxu0
        %759 = vmatprep.mubr.f32.mxu0 0.0
        %760 = vmatmul.mubr.f32.gmra.mxu0 %v634
        %v761 = vpop.f32.mrf.mxu0
        %v762 = vadd.f32 0.0, %v761
        %v763 = vpop.f32.mrf.mxu0
        %764 = vmatprep.mubr.f32.mxu0 0.0
        %765 = vmatmul.mubr.f32.gmra.mxu0 %v637
        %v766 = vpop.f32.mrf.mxu0
        %v767 = vadd.f32 0.0, %v766
        %v768 = vpop.f32.mrf.mxu0
        %769 = vmatprep.mubr.f32.mxu0 0.0
        %770 = vmatmul.mubr.f32.gmra.mxu0 %v640
        %v771 = vpop.f32.mrf.mxu0
        %v772 = vadd.f32 0.0, %v771
        %v773 = vpop.f32.mrf.mxu0
        %774 = vmatprep.mubr.f32.mxu0 0.0
        %775 = vmatmul.mubr.f32.gmra.mxu0 %v643
        %v776 = vpop.f32.mrf.mxu0
        %v777 = vadd.f32 0.0, %v776
        %v778 = vpop.f32.mrf.mxu0
        %779 = vmatprep.mubr.f32.mxu0 0.0
        %780 = vmatmul.mubr.f32.gmra.mxu0 %v646
        %v781 = vpop.f32.mrf.mxu0
        %v782 = vadd.f32 0.0, %v781
        %v783 = vpop.f32.mrf.mxu0
        %784 = vmatprep.mubr.f32.mxu0 0.0
        %785 = vmatmul.mubr.f32.gmra.mxu0 %v649
        %v786 = vpop.f32.mrf.mxu0
        %v787 = vadd.f32 0.0, %v786
        %v788 = vpop.f32.mrf.mxu0
        %789 = vmatprep.mubr.f32.mxu0 0.0
        %790 = vmatmul.mubr.f32.gmra.mxu0 %v652
        %v791 = vpop.f32.mrf.mxu0
        %v792 = vadd.f32 0.0, %v791
        %v793 = vpop.f32.mrf.mxu0
        %794 = vmatprep.mubr.f32.mxu0 0.0
        %795 = vmatmul.mubr.f32.gmra.mxu0 %v655
        %v796 = vpop.f32.mrf.mxu0
        %v797 = vadd.f32 0.0, %v796
        %v798 = vpop.f32.mrf.mxu0
        %799 = vmatprep.mubr.f32.mxu0 0.0
        %800 = vmatmul.mubr.f32.gmra.mxu0 %v658
        %v801 = vpop.f32.mrf.mxu0
        %v802 = vadd.f32 0.0, %v801
        %v803 = vpop.f32.mrf.mxu0
        %804 = vdwg.mxu0
        %v805 = vadd.f32 %v563, %v727
        %v806 = vadd.f32 %v564, %v732
        %v807 = vadd.f32 %v565, %v737
        %v808 = vadd.f32 %v566, %v742
        %v809 = vadd.f32 %v567, %v747
        %v810 = vadd.f32 %v568, %v752
        %v811 = vadd.f32 %v569, %v757
        %v812 = vadd.f32 %v570, %v762
        %v813 = vadd.f32 %v571, %v767
        %v814 = vadd.f32 %v572, %v772
        %v815 = vadd.f32 %v573, %v777
        %v816 = vadd.f32 %v574, %v782
        %v817 = vadd.f32 %v575, %v787
        %v818 = vadd.f32 %v576, %v792
        %v819 = vadd.f32 %v577, %v797
        %v820 = vadd.f32 %v578, %v802
        %821 = vst [vmem:[%s490] sm:$0xff] %v805
        %822 = vst [vmem:[%s490 + $0x8] sm:$0xff] %v806
        %823 = vst [vmem:[%s490 + $0x10] sm:$0xff] %v807
        %824 = vst [vmem:[%s490 + $0x18] sm:$0xff] %v808
        %825 = vst [vmem:[%s490 + $0x20] sm:$0xff] %v809
        %826 = vst [vmem:[%s490 + $0x28] sm:$0xff] %v810
        %827 = vst [vmem:[%s490 + $0x30] sm:$0xff] %v811
        %828 = vst [vmem:[%s490 + $0x38] sm:$0xff] %v812
        %829 = vst [vmem:[%s490 + $0x40] sm:$0xff] %v813
        %830 = vst [vmem:[%s490 + $0x48] sm:$0xff] %v814
        %831 = vst [vmem:[%s490 + $0x50] sm:$0xff] %v815
        %832 = vst [vmem:[%s490 + $0x58] sm:$0xff] %v816
        %833 = vst [vmem:[%s490 + $0x60] sm:$0xff] %v817
        %834 = vst [vmem:[%s490 + $0x68] sm:$0xff] %v818
        %835 = vst [vmem:[%s490 + $0x70] sm:$0xff] %v819
        %836 = vst [vmem:[%s490 + $0x78] sm:$0xff] %v820
        %s837 = sand.u32 %s152, 1
        %s838 = sand.u32 %s152, 1
        %s839 = smul.addr %s838, 128
        %s840 = scalar_lea.vmem [#allocation4], %s839
        // Predicated region
        $region145: #{pca_forward.2} parent=131 // pred_check
          %p841 = pneg %p162
        $region146: #{pca_forward.2} parent=131 // pred_check_branch
          %843 = sbr.rel (%p841) target = $region148
        $region147: #{pca_forward.2} parent=131 // pred_region
          %s844 = smul.u32 16, %s20
          %s845 = smul.addr %s844, 2
          %s846 = sadd.s32 %s21, %s845
          %s847 = smul.addr %s846, 8
          %s848 = scalar_lea.vmem %s4, %s847
          // Predicated region
          $region149: #{pca_forward.2} parent=147 // pred_check
            _
          $region150: #{pca_forward.2} parent=147 // pred_check_branch
            %850 = sbr.rel (0) target = $region152
          $region151: #{pca_forward.2} parent=147 // pred_region
            // Predicated region
            $region153: #{pca_forward.2} parent=151 // pred_check
              _
            $region154: #{pca_forward.2} parent=151 // pred_check_branch
              %852 = sbr.rel (0) target = $region156
            $region155: #{pca_forward.2} parent=151 // pred_region
              // Predicated region
              $region168: #{pca_forward.2} parent=155 // pred_check
                _
              $region169: #{pca_forward.2} parent=155 // pred_check_branch
                %898 = sbr.rel (0) target = $region171
              $region170: #{pca_forward.2} parent=155 // pred_region
                loop: start=0, step=1, limit=1
                $region172: #{pca_forward.2} parent=170 // loop_pre_header
                  _
                $region173: #{pca_forward.2} parent=170 // loop_header
                  %s900 = sphi 0, %s904
                  %p901 = scmp.ge.s32.totalorder %s900, 1
                  %s905 = sphi %s840, %s840
                  %s906 = sphi %s848, %s848
                $region174: #{pca_forward.2} parent=170 // loop_header_branch
                  %903 = sbr.rel (%p901) target = $region178
                $region175: #{pca_forward.2} parent=170 // loop_body
                  %v907 = vld [vmem:[%s905] sm:$0xff]
                  %908 = vst [vmem:[%s906] sm:$0xff] %v907
                  %v909 = vld [vmem:[%s905 + $0x8] sm:$0xff]
                  %910 = vst [vmem:[%s906 + $0x10] sm:$0xff] %v909
                  %v911 = vld [vmem:[%s905 + $0x10] sm:$0xff]
                  %912 = vst [vmem:[%s906 + $0x20] sm:$0xff] %v911
                  %v913 = vld [vmem:[%s905 + $0x18] sm:$0xff]
                  %914 = vst [vmem:[%s906 + $0x30] sm:$0xff] %v913
                  %v915 = vld [vmem:[%s905 + $0x20] sm:$0xff]
                  %916 = vst [vmem:[%s906 + $0x40] sm:$0xff] %v915
                  %v917 = vld [vmem:[%s905 + $0x28] sm:$0xff]
                  %918 = vst [vmem:[%s906 + $0x50] sm:$0xff] %v917
                  %v919 = vld [vmem:[%s905 + $0x30] sm:$0xff]
                  %920 = vst [vmem:[%s906 + $0x60] sm:$0xff] %v919
                  %v921 = vld [vmem:[%s905 + $0x38] sm:$0xff]
                  %922 = vst [vmem:[%s906 + $0x70] sm:$0xff] %v921
                  %v923 = vld [vmem:[%s905 + $0x40] sm:$0xff]
                  %924 = vst [vmem:[%s906 + $0x80] sm:$0xff] %v923
                  %v925 = vld [vmem:[%s905 + $0x48] sm:$0xff]
                  %926 = vst [vmem:[%s906 + $0x90] sm:$0xff] %v925
                  %v927 = vld [vmem:[%s905 + $0x50] sm:$0xff]
                  %928 = vst [vmem:[%s906 + $0xa0] sm:$0xff] %v927
                  %v929 = vld [vmem:[%s905 + $0x58] sm:$0xff]
                  %930 = vst [vmem:[%s906 + $0xb0] sm:$0xff] %v929
                  %v931 = vld [vmem:[%s905 + $0x60] sm:$0xff]
                  %932 = vst [vmem:[%s906 + $0xc0] sm:$0xff] %v931
                  %v933 = vld [vmem:[%s905 + $0x68] sm:$0xff]
                  %934 = vst [vmem:[%s906 + $0xd0] sm:$0xff] %v933
                  %v935 = vld [vmem:[%s905 + $0x70] sm:$0xff]
                  %936 = vst [vmem:[%s906 + $0xe0] sm:$0xff] %v935
                  %v937 = vld [vmem:[%s905 + $0x78] sm:$0xff]
                  %938 = vst [vmem:[%s906 + $0xf0] sm:$0xff] %v937
                $region176: #{pca_forward.2} parent=170 // loop_footer
                  %s904 = sadd.s32 1, %s900
                $region177: #{pca_forward.2} parent=170 // loop_footer_branch
                  %899 = sbr.rel target = $region173
                $region178: #{pca_forward.2} parent=170 // loop_exit
                  _
              $region171: #{pca_forward.2} parent=155 // pred_fallthru
                _
              // Predicated region
              $region179: #{pca_forward.2} parent=155 // pred_check
                _
              $region180: #{pca_forward.2} parent=155 // pred_check_branch
                %940 = sbr.rel target = $region182
              $region181: #{pca_forward.2} parent=155 // pred_region
                _
              $region182: #{pca_forward.2} parent=155 // pred_fallthru
                _
            $region156: #{pca_forward.2} parent=151 // pred_fallthru
              _
            // Predicated region
            $region157: #{pca_forward.2} parent=151 // pred_check
              _
            $region158: #{pca_forward.2} parent=151 // pred_check_branch
              %854 = sbr.rel target = $region160
            $region159: #{pca_forward.2} parent=151 // pred_region
              %s856 = ssub.s32 256, 1
              loop: start=0, step=1, limit=1
              $region161: #{pca_forward.2} parent=159 // loop_pre_header
                _
              $region162: #{pca_forward.2} parent=159 // loop_header
                %s858 = sphi 0, %s862
                %p859 = scmp.ge.s32.totalorder %s858, 1
                %s863 = sphi %s840, %s840
                %s864 = sphi %s848, %s848
              $region163: #{pca_forward.2} parent=159 // loop_header_branch
                %861 = sbr.rel (%p859) target = $region167
              $region164: #{pca_forward.2} parent=159 // loop_body
                %v865 = vld [vmem:[%s863] sm:%s856]
                %866 = vst [vmem:[%s864] sm:%s856] %v865
                %v867 = vld [vmem:[%s863 + $0x8] sm:%s856]
                %868 = vst [vmem:[%s864 + $0x10] sm:%s856] %v867
                %v869 = vld [vmem:[%s863 + $0x10] sm:%s856]
                %870 = vst [vmem:[%s864 + $0x20] sm:%s856] %v869
                %v871 = vld [vmem:[%s863 + $0x18] sm:%s856]
                %872 = vst [vmem:[%s864 + $0x30] sm:%s856] %v871
                %v873 = vld [vmem:[%s863 + $0x20] sm:%s856]
                %874 = vst [vmem:[%s864 + $0x40] sm:%s856] %v873
                %v875 = vld [vmem:[%s863 + $0x28] sm:%s856]
                %876 = vst [vmem:[%s864 + $0x50] sm:%s856] %v875
                %v877 = vld [vmem:[%s863 + $0x30] sm:%s856]
                %878 = vst [vmem:[%s864 + $0x60] sm:%s856] %v877
                %v879 = vld [vmem:[%s863 + $0x38] sm:%s856]
                %880 = vst [vmem:[%s864 + $0x70] sm:%s856] %v879
                %v881 = vld [vmem:[%s863 + $0x40] sm:%s856]
                %882 = vst [vmem:[%s864 + $0x80] sm:%s856] %v881
                %v883 = vld [vmem:[%s863 + $0x48] sm:%s856]
                %884 = vst [vmem:[%s864 + $0x90] sm:%s856] %v883
                %v885 = vld [vmem:[%s863 + $0x50] sm:%s856]
                %886 = vst [vmem:[%s864 + $0xa0] sm:%s856] %v885
                %v887 = vld [vmem:[%s863 + $0x58] sm:%s856]
                %888 = vst [vmem:[%s864 + $0xb0] sm:%s856] %v887
                %v889 = vld [vmem:[%s863 + $0x60] sm:%s856]
                %890 = vst [vmem:[%s864 + $0xc0] sm:%s856] %v889
                %v891 = vld [vmem:[%s863 + $0x68] sm:%s856]
                %892 = vst [vmem:[%s864 + $0xd0] sm:%s856] %v891
                %v893 = vld [vmem:[%s863 + $0x70] sm:%s856]
                %894 = vst [vmem:[%s864 + $0xe0] sm:%s856] %v893
                %v895 = vld [vmem:[%s863 + $0x78] sm:%s856]
                %896 = vst [vmem:[%s864 + $0xf0] sm:%s856] %v895
              $region165: #{pca_forward.2} parent=159 // loop_footer
                %s862 = sadd.s32 1, %s858
              $region166: #{pca_forward.2} parent=159 // loop_footer_branch
                %857 = sbr.rel target = $region162
              $region167: #{pca_forward.2} parent=159 // loop_exit
                _
            $region160: #{pca_forward.2} parent=151 // pred_fallthru
              _
          $region152: #{pca_forward.2} parent=147 // pred_fallthru
            _
          %941 = vnop
        $region148: #{pca_forward.2} parent=131 // pred_fallthru
          _
      $region132: #{pca_forward.2} parent=5 // pred_fallthru
        _
      %p942 = scmp.le.s32.totalorder 2, %s10
      // Predicated region
      $region183: #{pca_forward.2} parent=5 // pred_check
        %p943 = pneg %p942
      $region184: #{pca_forward.2} parent=5 // pred_check_branch
        %945 = sbr.rel (%p943) target = $region186
      $region185: #{pca_forward.2} parent=5 // pred_region
        %s946 = ssub.s32 %s10, 2
        // Predicated region
        $region187: #{pca_forward.2} parent=185 // pred_check
          %p947 = pneg %p168
        $region188: #{pca_forward.2} parent=185 // pred_check_branch
          %949 = sbr.rel (%p947) target = $region190
        $region189: #{pca_forward.2} parent=185 // pred_region
          %s950 = sand.u32 %s153, 1
          %s951 = sand.u32 %s153, 1
          %s952 = smul.addr %s951, 128
          %s953 = scalar_lea.vmem [#allocation4], %s952
        $region190: #{pca_forward.2} parent=185 // pred_fallthru
          _
      $region186: #{pca_forward.2} parent=5 // pred_fallthru
        _
    $region6: #{pca_forward.2} parent=1 // loop_footer
      %s14 = sadd.s32 1, %s10
    $region7: #{pca_forward.2} parent=1 // loop_footer_branch
      %9 = sbr.rel target = $region3
    $region8: #{pca_forward.2} parent=1 // loop_exit
      _

// kernel: neg.1
$region0: #{neg.1}
  #allocation0 [shape = 's32[1]{0}', space=sflag, size = 0x4, scoped, tag = 'scoped memory for neg.1']
  %s0 = inlined_call_operand.vmem [shape: f32[200], index: 0, kind: input, shape index: {}]
  %s1 = inlined_call_operand.vmem [shape: f32[200], index: 1, kind: output, shape index: {}]
  %v2 = vld [vmem:[%s0] sm:$0x3]
  %3 = xla_tuple %v2
  %4 = xla_tuple %3
  %v5 = vxor.u32 %v2, 2147483648
  %6 = xla_tuple %v5
  %7 = vst [vmem:[%s1] sm:$0x3] %v5

// kernel: pca_forward.3
$region0: #{pca_forward.3}
  #allocation0 [shape = 'u32[]', space=smem, size = 0x4, offset = 0x4, fixed_abs, tag = 'smem constant byte address 0x4 - core index']
  #allocation1 [shape = 'u32[144,128]{1,0:T(1,128)}', space=vmem, size = 0x12000, scoped, tag = 'internal scratch']
  %s0 = inlined_call_operand.vmem [shape: f32[50,256], index: 0, kind: input, shape index: {}]
  %s1 = inlined_call_operand.vmem [shape: f32[256,128], index: 1, kind: input, shape index: {}]
  %s2 = inlined_call_operand.vmem [shape: f32[1,128], index: 2, kind: input, shape index: {}]
  %s3 = inlined_call_operand.vmem [shape: f32[64,128], index: 3, kind: output, shape index: {}]
  %s4 = sld [smem:[#allocation0]]
  $region45: #{pca_forward.3} parent=0
    _
  %s6 = ssub.s32 1, %s4
  %s7 = scalar_select 0, %s6, %s4
  loop: start=0, step=1, limit=6
  $region2: #{pca_forward.3} parent=0 // loop_pre_header
    _
  $region3: #{pca_forward.3} parent=0 // loop_header
    %s9 = sphi 0, %s13
    %p10 = scmp.ge.s32.totalorder %s9, 6
    %s16 = sphi 0, %s28
    %s17 = sphi 0, %s24
    %s18 = sphi 0, %s16
    %s19 = sphi 0, %s17
    %s20 = sphi 0, %s18
    %s21 = sphi 0, %s19
    %s31 = sphi 0, %s33
    %s34 = sphi 0, %s31
    %s35 = sphi 0, %s34
    %s51 = sphi 0, %s35
    %s57 = sphi 0, %s59
    %s60 = sphi 0, %s57
    %s61 = sphi 0, %s60
    %s77 = sphi 0, %s61
    %s83 = sphi 0, %s85
    %s86 = sphi 0, %s83
    %s87 = sphi 0, %s86
    %s103 = sphi 0, %s87
    %s111 = sphi 0, %s113
    %s114 = sphi 0, %s111
    %s115 = sphi 0, %s114
    %s131 = sphi 0, %s115
  $region4: #{pca_forward.3} parent=0 // loop_header_branch
    %12 = sbr.rel (%p10) target = $region8
  $region5: #{pca_forward.3} parent=0 // loop_body
    %s14 = ssub.s32 %s9, 1
    %s15 = ssub.s32 %s9, 2
    %s22 = sadd.s32 1, %s17
    %p23 = scmp.ge.s32.totalorder %s22, 1
    %s24 = scalar_select %p23, 0, %s22
    %s25 = sadd.s32 1, %s16
    %s26 = scalar_select %p23, %s25, %s16
    %p27 = scmp.ge.s32.totalorder %s26, 4
    %s28 = scalar_select %p27, 0, %s26
    %s29 = ssub.s32 %s16, %s28
    %p30 = scmp.eq.s32.totalorder %s29, 0
    %s32 = sadd.s32 %s31, 1
    %s33 = scalar_select %p30, %s31, %s32
    %p36 = pneg %p30
    %p37 = scmp.eq.s32.totalorder %s9, 3
    %p38 = por %p36, %p37
    %p39 = scmp.ne.s32.totalorder %s31, %s34
    %p40 = scmp.eq.s32.totalorder %s9, 0
    %p41 = por %p39, %p40
    %p42 = scmp.ne.s32.totalorder %s31, %s34
    %p43 = scmp.eq.s32.totalorder %s14, 3
    %p44 = por %p42, %p43
    %p45 = scmp.ne.s32.totalorder %s34, %s35
    %p46 = scmp.eq.s32.totalorder %s14, 0
    %p47 = por %p45, %p46
    %p48 = scmp.ne.s32.totalorder %s34, %s35
    %p49 = scmp.eq.s32.totalorder %s15, 3
    %p50 = por %p48, %p49
    %p52 = scmp.ne.s32.totalorder %s35, %s51
    %p53 = scmp.eq.s32.totalorder %s15, 0
    %p54 = por %p52, %p53
    %s55 = ssub.s32 %s17, %s24
    %p56 = scmp.eq.s32.totalorder %s55, 0
    %s58 = sadd.s32 %s57, 1
    %s59 = scalar_select %p56, %s57, %s58
    %p62 = pneg %p56
    %p63 = scmp.eq.s32.totalorder %s9, 3
    %p64 = por %p62, %p63
    %p65 = scmp.ne.s32.totalorder %s57, %s60
    %p66 = scmp.eq.s32.totalorder %s9, 0
    %p67 = por %p65, %p66
    %p68 = scmp.ne.s32.totalorder %s57, %s60
    %p69 = scmp.eq.s32.totalorder %s14, 3
    %p70 = por %p68, %p69
    %p71 = scmp.ne.s32.totalorder %s60, %s61
    %p72 = scmp.eq.s32.totalorder %s14, 0
    %p73 = por %p71, %p72
    %p74 = scmp.ne.s32.totalorder %s60, %s61
    %p75 = scmp.eq.s32.totalorder %s15, 3
    %p76 = por %p74, %p75
    %p78 = scmp.ne.s32.totalorder %s61, %s77
    %p79 = scmp.eq.s32.totalorder %s15, 0
    %p80 = por %p78, %p79
    %s81 = ssub.s32 %s17, %s24
    %p82 = scmp.eq.s32.totalorder %s81, 0
    %s84 = sadd.s32 %s83, 1
    %s85 = scalar_select %p82, %s83, %s84
    %p88 = pneg %p82
    %p89 = scmp.eq.s32.totalorder %s9, 3
    %p90 = por %p88, %p89
    %p91 = scmp.ne.s32.totalorder %s83, %s86
    %p92 = scmp.eq.s32.totalorder %s9, 0
    %p93 = por %p91, %p92
    %p94 = scmp.ne.s32.totalorder %s83, %s86
    %p95 = scmp.eq.s32.totalorder %s14, 3
    %p96 = por %p94, %p95
    %p97 = scmp.ne.s32.totalorder %s86, %s87
    %p98 = scmp.eq.s32.totalorder %s14, 0
    %p99 = por %p97, %p98
    %p100 = scmp.ne.s32.totalorder %s86, %s87
    %p101 = scmp.eq.s32.totalorder %s15, 3
    %p102 = por %p100, %p101
    %p104 = scmp.ne.s32.totalorder %s87, %s103
    %p105 = scmp.eq.s32.totalorder %s15, 0
    %p106 = por %p104, %p105
    %s107 = ssub.s32 %s16, %s28
    %s108 = ssub.s32 %s17, %s24
    %s109 = sor.u32 %s107, %s108
    %p110 = scmp.eq.s32.totalorder %s109, 0
    %s112 = sadd.s32 %s111, 1
    %s113 = scalar_select %p110, %s111, %s112
    %p116 = pneg %p110
    %p117 = scmp.eq.s32.totalorder %s9, 3
    %p118 = por %p116, %p117
    %p119 = scmp.ne.s32.totalorder %s111, %s114
    %p120 = scmp.eq.s32.totalorder %s9, 0
    %p121 = por %p119, %p120
    %p122 = scmp.ne.s32.totalorder %s111, %s114
    %p123 = scmp.eq.s32.totalorder %s14, 3
    %p124 = por %p122, %p123
    %p125 = scmp.ne.s32.totalorder %s114, %s115
    %p126 = scmp.eq.s32.totalorder %s14, 0
    %p127 = por %p125, %p126
    %p128 = scmp.ne.s32.totalorder %s114, %s115
    %p129 = scmp.eq.s32.totalorder %s15, 3
    %p130 = por %p128, %p129
    %p132 = scmp.ne.s32.totalorder %s115, %s131
    %p133 = scmp.eq.s32.totalorder %s15, 0
    %p134 = por %p132, %p133
    %p135 = scmp.le.s32.totalorder 1, %s9
    %p136 = scmp.lt.s32.totalorder %s9, 5
    %p137 = pnand %p135, %p136
    %p138 = pneg %p137
    // Predicated region
    $region9: #{pca_forward.3} parent=5 // pred_check
      _
    $region10: #{pca_forward.3} parent=5 // pred_check_branch
      %140 = sbr.rel (%p137) target = $region12
    $region11: #{pca_forward.3} parent=5 // pred_region
      %s141 = ssub.s32 %s9, 1
      // Predicated region
      $region13: #{pca_forward.3} parent=11 // pred_check
        %p142 = pneg %p73
      $region14: #{pca_forward.3} parent=11 // pred_check_branch
        %144 = sbr.rel (%p142) target = $region16
      $region15: #{pca_forward.3} parent=11 // pred_region
        %p145 = scmp.lt.s32.totalorder %s19, 0
        %s146 = scalar_select %p145, %s19, 0
        %s147 = smul.addr %s146, 8
        %s148 = scalar_lea.vmem %s1, %s147
      $region16: #{pca_forward.3} parent=11 // pred_fallthru
        _
      // Predicated region
      $region17: #{pca_forward.3} parent=11 // pred_check
        %p149 = pneg %p99
      $region18: #{pca_forward.3} parent=11 // pred_check_branch
        %151 = sbr.rel (%p149) target = $region20
      $region19: #{pca_forward.3} parent=11 // pred_region
        %p152 = scmp.lt.s32.totalorder %s19, 0
        %s153 = scalar_select %p152, %s19, 0
        %s154 = scalar_lea.vmem %s2, %s153
      $region20: #{pca_forward.3} parent=11 // pred_fallthru
        _
    $region12: #{pca_forward.3} parent=5 // pred_fallthru
      _
    %p155 = scmp.lt.s32.totalorder %s9, 4
    // Predicated region
    $region21: #{pca_forward.3} parent=5 // pred_check
      %p156 = pneg %p155
    $region22: #{pca_forward.3} parent=5 // pred_check_branch
      %158 = sbr.rel (%p156) target = $region24
    $region23: #{pca_forward.3} parent=5 // pred_region
      // Predicated region
      $region25: #{pca_forward.3} parent=23 // pred_check
        %p159 = pneg %p41
      $region26: #{pca_forward.3} parent=23 // pred_check_branch
        %161 = sbr.rel (%p159) target = $region28
      $region27: #{pca_forward.3} parent=23 // pred_region
        %s162 = smul.u32 2, %s16
        %s163 = ssub.s32 7, %s162
        %p164 = scmp.lt.s32.totalorder %s163, 2
        %s165 = scalar_select %p164, %s163, 2
        %s166 = smul.u32 128, %s165
        %s167 = smul.u32 %s166, 2
        %p168 = scmp.lt.s32.totalorder %s162, 6
        %s169 = scalar_select %p168, %s162, 6
        %s170 = smul.addr %s169, 2
        %s171 = smul.addr %s170, 8
        %s172 = scalar_lea.vmem %s0, %s171
        %s173 = smul.u32 2, %s16
        %s174 = ssub.s32 7, %s173
        %p175 = scmp.lt.s32.totalorder %s174, 2
        %s176 = scalar_select %p175, %s174, 2
        %s177 = smul.u32 128, %s176
        %s178 = smul.u32 %s177, 2
      $region28: #{pca_forward.3} parent=23 // pred_fallthru
        _
    $region24: #{pca_forward.3} parent=5 // pred_fallthru
      _
    %p179 = scmp.le.s32.totalorder 1, %s9
    %p180 = scmp.lt.s32.totalorder %s9, 5
    %p181 = pnand %p179, %p180
    %p182 = pneg %p181
    // Predicated region
    $region29: #{pca_forward.3} parent=5 // pred_check
      _
    $region30: #{pca_forward.3} parent=5 // pred_check_branch
      %184 = sbr.rel (%p181) target = $region32
    $region31: #{pca_forward.3} parent=5 // pred_region
      %s185 = ssub.s32 %s9, 1
      %s186 = smul.u32 2, %s18
      %s187 = ssub.s32 7, %s186
      %p188 = scmp.lt.s32.totalorder %s187, 2
      %s189 = scalar_select %p188, %s187, 2
      %s190 = smul.u32 128, %s189
      %s191 = smul.u32 %s190, 2
      %p192 = scmp.lt.s32.totalorder %s186, 6
      %s193 = scalar_select %p192, %s186, 6
      %s194 = smul.addr %s193, 2
      %s195 = smul.addr %s194, 8
      %s196 = scalar_lea.vmem %s0, %s195
      %p197 = pneg %p47
      %p198 = pneg %p44
      %p199 = scmp.lt.s32.totalorder %s19, 0
      %s200 = scalar_select %p199, %s19, 0
      %s201 = smul.addr %s200, 8
      %s202 = scalar_lea.vmem %s1, %s201
      %p203 = pneg %p73
      %p204 = pneg %p70
      %p205 = scmp.lt.s32.totalorder %s19, 0
      %s206 = scalar_select %p205, %s19, 0
      %s207 = scalar_lea.vmem %s2, %s206
      %p208 = pneg %p99
      %p209 = pneg %p96
      %p210 = pneg %p127
      %p211 = pneg %p124
      %s212 = smul.u32 2, %s18
      %p213 = scmp.lt.s32.totalorder %s212, 7
      %s214 = scalar_select %p213, %s212, 7
      %p215 = scmp.lt.s32.totalorder %s19, 0
      %s216 = scalar_select %p215, %s19, 0
      %s217 = sadd.s32 %s216, %s214
      %s218 = smul.addr %s217, 8
      %s219 = scalar_lea.vmem %s3, %s218
      %s220 = smul.u32 2, %s18
      %s221 = ssub.s32 7, %s220
      %p222 = scmp.lt.s32.totalorder %s221, 2
      %s223 = scalar_select %p222, %s221, 2
      %s224 = smul.u32 128, %s223
      %s225 = smul.u32 %s224, 2
      %p226 = scmp.lt.s32.totalorder %s220, 6
      %s227 = scalar_select %p226, %s220, 6
      %s228 = smul.addr %s227, 2
      %s229 = smul.addr %s228, 8
      %s230 = scalar_lea.vmem %s0, %s229
      %s231 = smul.u32 2, %s18
      %s232 = ssub.s32 7, %s231
      %p233 = scmp.lt.s32.totalorder %s232, 2
      %s234 = scalar_select %p233, %s232, 2
      %s235 = smul.u32 128, %s234
      %s236 = smul.u32 %s235, 2
      %p237 = scmp.lt.s32.totalorder %s19, 0
      %s238 = scalar_select %p237, %s19, 0
      %s239 = smul.addr %s238, 8
      %s240 = scalar_lea.vmem %s1, %s239
      %p241 = scmp.lt.s32.totalorder %s19, 0
      %s242 = scalar_select %p241, %s19, 0
      %s243 = scalar_lea.vmem %s2, %s242
      %s244 = smul.u32 2, %s18
      %p245 = scmp.lt.s32.totalorder %s244, 7
      %s246 = scalar_select %p245, %s244, 7
      %p247 = scmp.lt.s32.totalorder %s19, 0
      %s248 = scalar_select %p247, %s19, 0
      %s249 = sadd.s32 %s248, %s246
      %s250 = smul.addr %s249, 8
      %s251 = scalar_lea.vmem %s3, %s250
      %s252 = smul.u32 2, %s18
      %v253 = vld [vmem:[%s230] sm:$0xff]
      %v254 = vld [vmem:[%s230 + $0x8] sm:$0xff]
      %v255 = vld [vmem:[%s230 + $0x10] sm:$0xff]
      %v256 = vld [vmem:[%s230 + $0x18] sm:$0xff]
      %v257 = vld [vmem:[%s240] sm:$0xff]
      %v258 = vld [vmem:[%s240 + $0x8] sm:$0xff]
      %v259 = vld [vmem:[%s240 + $0x10] sm:$0xff]
      %v260 = vld [vmem:[%s240 + $0x18] sm:$0xff]
      %v261 = vld [vmem:[%s240 + $0x20] sm:$0xff]
      %v262 = vld [vmem:[%s240 + $0x28] sm:$0xff]
      %v263 = vld [vmem:[%s240 + $0x30] sm:$0xff]
      %v264 = vld [vmem:[%s240 + $0x38] sm:$0xff]
      %v265 = vld [vmem:[%s240 + $0x40] sm:$0xff]
      %v266 = vld [vmem:[%s240 + $0x48] sm:$0xff]
      %v267 = vld [vmem:[%s240 + $0x50] sm:$0xff]
      %v268 = vld [vmem:[%s240 + $0x58] sm:$0xff]
      %v269 = vld [vmem:[%s240 + $0x60] sm:$0xff]
      %v270 = vld [vmem:[%s240 + $0x68] sm:$0xff]
      %v271 = vld [vmem:[%s240 + $0x70] sm:$0xff]
      %v272 = vld [vmem:[%s240 + $0x78] sm:$0xff]
      %v273 = vld [vmem:[%s240 + $0x80] sm:$0xff]
      %v274 = vld [vmem:[%s240 + $0x88] sm:$0xff]
      %v275 = vld [vmem:[%s240 + $0x90] sm:$0xff]
      %v276 = vld [vmem:[%s240 + $0x98] sm:$0xff]
      %v277 = vld [vmem:[%s240 + $0xa0] sm:$0xff]
      %v278 = vld [vmem:[%s240 + $0xa8] sm:$0xff]
      %v279 = vld [vmem:[%s240 + $0xb0] sm:$0xff]
      %v280 = vld [vmem:[%s240 + $0xb8] sm:$0xff]
      %v281 = vld [vmem:[%s240 + $0xc0] sm:$0xff]
      %v282 = vld [vmem:[%s240 + $0xc8] sm:$0xff]
      %v283 = vld [vmem:[%s240 + $0xd0] sm:$0xff]
      %v284 = vld [vmem:[%s240 + $0xd8] sm:$0xff]
      %v285 = vld [vmem:[%s240 + $0xe0] sm:$0xff]
      %v286 = vld [vmem:[%s240 + $0xe8] sm:$0xff]
      %v287 = vld [vmem:[%s240 + $0xf0] sm:$0xff]
      %v288 = vld [vmem:[%s240 + $0xf8] sm:$0xff]
      %289 = vmatprep.subr.mxu0 0.0
      %290 = vmatpush1.msra.mxu0 %v272
      %291 = vmatprep.subr.mxu0 0.0
      %292 = vmatpush1.msra.mxu0 %v271
      %293 = vmatprep.subr.mxu0 0.0
      %294 = vmatpush1.msra.mxu0 %v270
      %295 = vmatprep.subr.mxu0 0.0
      %296 = vmatpush1.msra.mxu0 %v269
      %297 = vmatprep.subr.mxu0 0.0
      %298 = vmatpush1.msra.mxu0 %v268
      %299 = vmatprep.subr.mxu0 0.0
      %300 = vmatpush1.msra.mxu0 %v267
      %301 = vmatprep.subr.mxu0 0.0
      %302 = vmatpush1.msra.mxu0 %v266
      %303 = vmatprep.subr.mxu0 0.0
      %304 = vmatpush1.msra.mxu0 %v265
      %305 = vmatprep.subr.mxu0 0.0
      %306 = vmatpush1.msra.mxu0 %v264
      %307 = vmatprep.subr.mxu0 0.0
      %308 = vmatpush1.msra.mxu0 %v263
      %309 = vmatprep.subr.mxu0 0.0
      %310 = vmatpush1.msra.mxu0 %v262
      %311 = vmatprep.subr.mxu0 0.0
      %312 = vmatpush1.msra.mxu0 %v261
      %313 = vmatprep.subr.mxu0 0.0
      %314 = vmatpush1.msra.mxu0 %v260
      %315 = vmatprep.subr.mxu0 0.0
      %316 = vmatpush1.msra.mxu0 %v259
      %317 = vmatprep.subr.mxu0 0.0
      %318 = vmatpush1.msra.mxu0 %v258
      %319 = vmatprep.subr.mxu0 0.0
      %320 = vmatpush1.msra.mxu0 %v257
      %321 = vmatprep.subr.mxu0 0.0
      %322 = vmatpush2.msra.mxu0 %v288
      %323 = vmatprep.subr.mxu0 0.0
      %324 = vmatpush2.msra.mxu0 %v287
      %325 = vmatprep.subr.mxu0 0.0
      %326 = vmatpush2.msra.mxu0 %v286
      %327 = vmatprep.subr.mxu0 0.0
      %328 = vmatpush2.msra.mxu0 %v285
      %329 = vmatprep.subr.mxu0 0.0
      %330 = vmatpush2.msra.mxu0 %v284
      %331 = vmatprep.subr.mxu0 0.0
      %332 = vmatpush2.msra.mxu0 %v283
      %333 = vmatprep.subr.mxu0 0.0
      %334 = vmatpush2.msra.mxu0 %v282
      %335 = vmatprep.subr.mxu0 0.0
      %336 = vmatpush2.msra.mxu0 %v281
      %337 = vmatprep.subr.mxu0 0.0
      %338 = vmatpush2.msra.mxu0 %v280
      %339 = vmatprep.subr.mxu0 0.0
      %340 = vmatpush2.msra.mxu0 %v279
      %341 = vmatprep.subr.mxu0 0.0
      %342 = vmatpush2.msra.mxu0 %v278
      %343 = vmatprep.subr.mxu0 0.0
      %344 = vmatpush2.msra.mxu0 %v277
      %345 = vmatprep.subr.mxu0 0.0
      %346 = vmatpush2.msra.mxu0 %v276
      %347 = vmatprep.subr.mxu0 0.0
      %348 = vmatpush2.msra.mxu0 %v275
      %349 = vmatprep.subr.mxu0 0.0
      %350 = vmatpush2.msra.mxu0 %v274
      %351 = vmatprep.subr.mxu0 0.0
      %352 = vmatpush2.msra.mxu0 %v273
      %353 = vmatprep.mubr.f32.mxu0 %v254
      %354 = vmatmul.mubr.f32.gmra.mxu0 %v253
      %v355 = vpop.f32.mrf.mxu0
      %v356 = vadd.f32 0.0, %v355
      %v357 = vpop.f32.mrf.mxu0
      %358 = vmatprep.mubr.f32.mxu0 %v256
      %359 = vmatmul.mubr.f32.gmra.mxu0 %v255
      %v360 = vpop.f32.mrf.mxu0
      %v361 = vadd.f32 0.0, %v360
      %v362 = vpop.f32.mrf.mxu0
      %363 = vdwg.mxu0
      %v364 = vld [vmem:[%s243] sm:$0x1]
      %v366 = vlaneseq
      %v367 = vshrl.u32 %v366, 7
      %v368 = vsub.s32 0, %v367
      %v369 = vrot.slane %v364, %v368
      %v371 = vsub.f32 %v356, %v369
      %v372 = vsub.f32 %v361, %v369
      %373 = vst [vmem:[%s251] sm:$0xff] %v371
      %374 = vst [vmem:[%s251 + $0x8] sm:$0xff] %v372
      %s375 = smul.u32 2, %s18
      %p376 = scmp.lt.s32.totalorder %s375, 7
      %s377 = scalar_select %p376, %s375, 7
      %p378 = scmp.lt.s32.totalorder %s19, 0
      %s379 = scalar_select %p378, %s19, 0
      %s380 = sadd.s32 %s379, %s377
      %s381 = smul.addr %s380, 8
      %s382 = scalar_lea.vmem %s3, %s381
      // Predicated region
      $region33: #{pca_forward.3} parent=31 // pred_check
        %p383 = pneg %p124
      $region34: #{pca_forward.3} parent=31 // pred_check_branch
        %385 = sbr.rel (%p383) target = $region36
      $region35: #{pca_forward.3} parent=31 // pred_region
        %s386 = smul.u32 2, %s18
      $region36: #{pca_forward.3} parent=31 // pred_fallthru
        _
    $region32: #{pca_forward.3} parent=5 // pred_fallthru
      _
    %p387 = scmp.le.s32.totalorder 2, %s9
    // Predicated region
    $region37: #{pca_forward.3} parent=5 // pred_check
      %p388 = pneg %p387
    $region38: #{pca_forward.3} parent=5 // pred_check_branch
      %390 = sbr.rel (%p388) target = $region40
    $region39: #{pca_forward.3} parent=5 // pred_region
      %s391 = ssub.s32 %s9, 2
      // Predicated region
      $region41: #{pca_forward.3} parent=39 // pred_check
        %p392 = pneg %p130
      $region42: #{pca_forward.3} parent=39 // pred_check_branch
        %394 = sbr.rel (%p392) target = $region44
      $region43: #{pca_forward.3} parent=39 // pred_region
        %s395 = smul.u32 2, %s20
        %p396 = scmp.lt.s32.totalorder %s395, 7
        %s397 = scalar_select %p396, %s395, 7
        %p398 = scmp.lt.s32.totalorder %s21, 0
        %s399 = scalar_select %p398, %s21, 0
        %s400 = sadd.s32 %s399, %s397
        %s401 = smul.addr %s400, 8
        %s402 = scalar_lea.vmem %s3, %s401
      $region44: #{pca_forward.3} parent=39 // pred_fallthru
        _
    $region40: #{pca_forward.3} parent=5 // pred_fallthru
      _
  $region6: #{pca_forward.3} parent=0 // loop_footer
    %s13 = sadd.s32 1, %s9
  $region7: #{pca_forward.3} parent=0 // loop_footer_branch
    %8 = sbr.rel target = $region3
  $region8: #{pca_forward.3} parent=0 // loop_exit
    _

</llo_original>
